<compile_context>
chip_gen: v5e
topology: v5e:2x2
jax: 0.10.0
libtpu: 0.0.40
codegen_flags: <defaults>
</compile_context>

<pallas_src>
import jax
import jax.numpy as jnp
import numpy as np
from jax import lax
from jax.experimental import pallas as pl
from jax.experimental.pallas import tpu as pltpu


# ---------------------------------------------------------------------------
# In-kernel helpers (values + VMEM scratch refs only)
# ---------------------------------------------------------------------------
def _conv3x3_s1(x3d, w2d, pad_ref, im_ref):
    """3x3, stride-1, zero-pad-1 convolution of one feature map.

    x3d    : (H, W, Cin)   f32 value
    w2d    : (9*Cin, Cout) f32 value (HWIO weights flattened (kh, kw, cin))
    pad_ref: VMEM scratch (H+2, W+2, Cin)   -- zero padding done in VMEM
    im_ref : VMEM scratch (H*W, 9*Cin)      -- im2col patch matrix (None if Cin==1)
    returns: (H*W, Cout) f32
    """
    H, W, Cin = x3d.shape
    Cout = w2d.shape[1]

    pad_ref[...] = jnp.zeros(pad_ref.shape, pad_ref.dtype)
    pad_ref[1:H + 1, 1:W + 1, :] = x3d

    if Cin == 1:
        # K = 9 is too shallow for the MXU: 9 broadcast FMAs on the VPU instead.
        acc = jnp.zeros((H * W, Cout), jnp.float32)
        for kh in range(3):
            for kw in range(3):
                tap = pad_ref[kh:kh + H, kw:kw + W, :].reshape(H * W, 1)
                k = 3 * kh + kw
                acc = acc + tap * w2d[k:k + 1, :]
        return acc

    # im2col: build (H*W, 9*Cin) patch matrix in VMEM, one deep-K MXU matmul.
    for kh in range(3):
        for kw in range(3):
            tap = pad_ref[kh:kh + H, kw:kw + W, :].reshape(H * W, Cin)
            c0 = (3 * kh + kw) * Cin
            im_ref[:, c0:c0 + Cin] = tap
    return jnp.dot(im_ref[...], w2d, preferred_element_type=jnp.float32)


def _fixup_unit(x3d, R, w1, w2, wd, b1a, b1b, b2a, b2b, scale,
                pad1_ref, im1_ref, pad2_ref, im2_ref):
    """One FixupResUnit (stride 2), fully VMEM-resident.

    x3d: (H, W, Cin) -> (H/2, W/2, Cout).
    R  : (Ho*Wo, H*W) one-hot selection matrix (even spatial positions);
         jnp.dot(R, .) == stride-2 subsampling, fused on the MXU.
    """
    H, W, Cin = x3d.shape
    Ho, Wo = H // 2, W // 2
    Cout = w1.shape[1]

    xb = x3d + b1a

    # conv1: stride-1 3x3 conv + fused one-hot selection == stride-2 3x3 conv
    h_full = _conv3x3_s1(xb, w1, pad1_ref, im1_ref)             # (H*W, Cout)
    h = jnp.dot(R, h_full, preferred_element_type=jnp.float32)  # (Ho*Wo, Cout)
    h = jnp.maximum(h + b1b, 0.0)

    # 1x1 stride-2 downsample shortcut (bias-free)
    xs = jnp.dot(R, xb.reshape(H * W, Cin),
                 preferred_element_type=jnp.float32)            # (Ho*Wo, Cin)
    if Cin == 1:
        sc = xs * wd                                            # (Ho*Wo,1)*(1,Cout)
    else:
        sc = jnp.dot(xs, wd, preferred_element_type=jnp.float32)

    # conv2 (stride 1) + scale + bias + shortcut + ReLU
    h3d = h.reshape(Ho, Wo, Cout) + b2a
    o = _conv3x3_s1(h3d, w2, pad2_ref, im2_ref)                 # (Ho*Wo, Cout)
    o = jnp.maximum(o * scale + b2b + sc, 0.0)
    return o.reshape(Ho, Wo, Cout)


def _make_encoder_kernel(n_units):
    """Fused encoder kernel: 3 FixupResUnits + global average pool, one image/step."""
    def kernel(*refs):
        x_ref, sc_ref = refs[0], refs[1]
        unit_refs = refs[2:2 + 4 * n_units]
        z_ref = refs[2 + 4 * n_units]
        pads = refs[3 + 4 * n_units: 3 + 4 * n_units + n_units + 1]
        ims = refs[3 + 4 * n_units + n_units + 1:]

        h = x_ref[0].astype(jnp.float32)                        # (H, W, 1)
        for u in range(n_units):
            R, w1, w2, wd = unit_refs[4 * u: 4 * u + 4]
            b1a = sc_ref[5 * u + 0]
            b1b = sc_ref[5 * u + 1]
            b2a = sc_ref[5 * u + 2]
            b2b = sc_ref[5 * u + 3]
            scl = sc_ref[5 * u + 4]
            h = _fixup_unit(h, R[...], w1[...], w2[...], wd[...],
                            b1a, b1b, b2a, b2b, scl,
                            pads[u], None if u == 0 else ims[u - 1],
                            pads[u + 1], ims[u])
        Ho, Wo, C = h.shape
        gap = jnp.sum(h.reshape(Ho * Wo, C), axis=0, keepdims=True) * (1.0 / (Ho * Wo))
        z_ref[...] = gap.reshape(1, 1, C).astype(z_ref.dtype)
    return kernel


def _pair_fc_kernel(z_ref, w_ref, b_ref, o_ref):
    """o = ((z1 - z2)**2) @ w + b, where z = [z1; z2] stacked along batch."""
    nb = o_ref.shape[0]
    z = z_ref[...]
    d = z[:nb, :] - z[nb:, :]
    o_ref[...] = (jnp.dot(d * d, w_ref[...], preferred_element_type=jnp.float32)
                  + b_ref[...]).astype(o_ref.dtype)


# ---------------------------------------------------------------------------
# Pallas wrappers
# ---------------------------------------------------------------------------
def _make_sel(h, w):
    """One-hot (Ho*Wo, H*W) matrix selecting rows at even (h, w) positions."""
    ho, wo = h // 2, w // 2
    rows = jnp.arange(ho * wo)
    cols = 2 * (rows // wo) * w + 2 * (rows % wo)
    return jnp.zeros((ho * wo, h * w), jnp.float32).at[rows, cols].set(1.0)


def encode_gap(x_nhwc, units):
    """(N, H, W, 1) -> (N, dim_hids): fused 3x FixupResUnit + GAP, one pallas_call."""
    N, H, W, Cin0 = x_nhwc.shape
    assert Cin0 == 1, "encoder expects single-channel input"

    dims = []
    h, w, cin = H, W, Cin0
    for p in units:
        cout = p["w1"].shape[-1]
        dims.append((h, w, cin, cout))
        h, w, cin = h // 2, w // 2, cout
    D = dims[-1][3]

    scalars = jnp.stack(sum([[p["bias1a"], p["bias1b"], p["bias2a"],
                              p["bias2b"], p["scale"]] for p in units], [])
                        ).astype(jnp.float32)

    flat_inputs = [x_nhwc.astype(jnp.float32), scalars]
    in_specs = [
        pl.BlockSpec((1, H, W, Cin0), lambda b: (b, 0, 0, 0)),
        pl.BlockSpec(memory_space=pltpu.MemorySpace.SMEM),
    ]
    for (hh, ww, ci, co), p in zip(dims, units):
        R = _make_sel(hh, ww)
        w1 = p["w1"].astype(jnp.float32).reshape(9 * ci, co)
        w2 = p["w2"].astype(jnp.float32).reshape(9 * co, co)
        wd = p["wd"].astype(jnp.float32)
        for a in (R, w1, w2, wd):
            flat_inputs.append(a)
            in_specs.append(pl.BlockSpec(a.shape, lambda b: (0, 0)))

    # VMEM scratch: padded buffers (shared between adjacent convs) + im2col buffers.
    scratch = [pltpu.VMEM((H + 2, W + 2, Cin0), jnp.float32)]
    for (hh, ww, ci, co) in dims:
        scratch.append(pltpu.VMEM((hh // 2 + 2, ww // 2 + 2, co), jnp.float32))
    for (hh, ww, ci, co) in dims:
        scratch.append(pltpu.VMEM(((hh // 2) * (ww // 2), 9 * co), jnp.float32))

    z = pl.pallas_call(
        _make_encoder_kernel(len(units)),
        out_shape=jax.ShapeDtypeStruct((N, 1, D), jnp.float32),
        grid=(N,),
        in_specs=in_specs,
        out_specs=pl.BlockSpec((1, 1, D), lambda b: (b, 0, 0)),
        scratch_shapes=scratch,
        compiler_params=pltpu.CompilerParams(
            dimension_semantics=("parallel",)),
    )(*flat_inputs)
    return z[:, 0, :]


def pair_head(z, w, b):
    n2 = z.shape[0]
    nb = n2 // 2
    return pl.pallas_call(
        _pair_fc_kernel,
        out_shape=jax.ShapeDtypeStruct((nb, 1), jnp.float32),
        in_specs=[pl.BlockSpec(memory_space=pltpu.MemorySpace.VMEM)] * 3,
        out_specs=pl.BlockSpec(memory_space=pltpu.MemorySpace.VMEM),
    )(z, w, b)


@jax.jit
def classify_pair(x1_nchw, x2_nchw, params):
    # PyTorch NCHW inputs -> one NHWC batch of 2B images (single encoder launch).
    x = jnp.concatenate([x1_nchw, x2_nchw], axis=0)            # (2B, 1, H, W)
    x = jnp.transpose(x, (0, 2, 3, 1)).astype(jnp.float32)     # (2B, H, W, 1)
    z = encode_gap(x, params["units"])                         # (2B, dim_hids)
    out = pair_head(z, params["fc_w"], params["fc_b"])         # (B, 1)
    return out[:, 0]                                           # .squeeze(-1)


# ---------------------------------------------------------------------------
# Deterministic parameter init (synthetic; mirrors the module's shapes)
# ---------------------------------------------------------------------------
def init_params(key, dim_hids):
    specs = [(1, 16), (16, 32), (32, dim_hids)]
    units = []
    for cin, cout in specs:
        key, kw1, kw2, kwd, ks = jax.random.split(key, 5)
        b = 0.05 * jax.random.normal(ks, (5,), jnp.float32)
        units.append({
            "w1": 0.1 * jax.random.normal(kw1, (3, 3, cin, cout), jnp.float32),
            "w2": 0.1 * jax.random.normal(kw2, (3, 3, cout, cout), jnp.float32),
            "wd": 0.1 * jax.random.normal(kwd, (cin, cout), jnp.float32),
            "bias1a": b[0], "bias1b": b[1],
            "bias2a": b[2], "bias2b": b[3],
            "scale": 1.0 + b[4],
        })
    key, kfw, kfb = jax.random.split(key, 3)
    return {
        "units": units,
        "fc_w": 0.1 * jax.random.normal(kfw, (dim_hids, 1), jnp.float32),
        "fc_b": 0.1 * jax.random.normal(kfb, (1, 1), jnp.float32),
    }


# ---------------------------------------------------------------------------
# Pure-JAX reference (semantics check only)
# ---------------------------------------------------------------------------
def _conv_ref(x, w, stride):
    return lax.conv_general_dilated(
        x, w, (stride, stride), ((1, 1), (1, 1)),
        dimension_numbers=("NHWC", "HWIO", "NHWC"))


def _ref_res_unit(x, p):
    xb = x + p["bias1a"]
    h = _conv_ref(xb, p["w1"], 2)
    h = jax.nn.relu(h + p["bias1b"])
    h = _conv_ref(h + p["bias2a"], p["w2"], 1)
    h = h * p["scale"] + p["bias2b"]
    sc = jnp.einsum("bhwc,cd->bhwd", xb[:, ::2, ::2, :], p["wd"])
    return jax.nn.relu(h + sc)


def ref_forward(x1_nchw, x2_nchw, params):
    def enc(x):
        h = jnp.transpose(x, (0, 2, 3, 1)).astype(jnp.float32)
        for p in params["units"]:
            h = _ref_res_unit(h, p)
        return jnp.mean(h, axis=(1, 2))
    d = (enc(x1_nchw) - enc(x2_nchw)) ** 2
    return (d @ params["fc_w"] + params["fc_b"])[:, 0]


# ---------------------------------------------------------------------------
if __name__ == "__main__":
    dim_hids = 32   # constructor arg kept small (module default is 128)
    key = jax.random.PRNGKey(0)
    kp, k1, k2 = jax.random.split(key, 3)
    params = init_params(kp, dim_hids)

    # PyTorch-convention NCHW inputs: (B=2, C=1, H=16, W=16)
    x1 = jax.random.normal(k1, (2, 1, 16, 16), jnp.float32)
    x2 = jax.random.normal(k2, (2, 1, 16, 16), jnp.float32)

    out = jax.block_until_ready(classify_pair(x1, x2, params))
    assert out.shape == (2,)

    ref = jax.block_until_ready(ref_forward(x1, x2, params))
    if not np.allclose(np.asarray(out), np.asarray(ref), rtol=1e-3, atol=1e-3):
        raise AssertionError(f"Pallas/reference mismatch: {out} vs {ref}")

    print("KERNEL_OK")
</pallas_src>

<mosaic_0001>
module attributes {stable_mosaic.version = 11 : i64} {
  func.func @_pair_fc_kernel(%arg0: memref<4x32xf32, #tpu.memory_space<vmem>>, %arg1: memref<32x1xf32, #tpu.memory_space<vmem>>, %arg2: memref<1x1xf32, #tpu.memory_space<vmem>>, %arg3: memref<2x1xf32, #tpu.memory_space<vmem>>) attributes {dimension_semantics = [], scalar_prefetch = 0 : i64, scratch_operands = 0 : i64, tpu.core_type = #tpu.core_type<tc>} {
    %c0 = arith.constant 0 : index
    %c0_0 = arith.constant 0 : index
    %0 = vector.load %arg0[%c0, %c0_0] : memref<4x32xf32, #tpu.memory_space<vmem>>, vector<4x32xf32>
    %1 = vector.extract_strided_slice %0 {offsets = [0, 0], sizes = [2, 32], strides = [1, 1]} : vector<4x32xf32> to vector<2x32xf32>
    %2 = vector.extract_strided_slice %0 {offsets = [2, 0], sizes = [2, 32], strides = [1, 1]} : vector<4x32xf32> to vector<2x32xf32>
    %3 = arith.subf %1, %2 : vector<2x32xf32>
    %4 = arith.mulf %3, %3 : vector<2x32xf32>
    %c0_1 = arith.constant 0 : index
    %c0_2 = arith.constant 0 : index
    %5 = vector.load %arg1[%c0_1, %c0_2] : memref<32x1xf32, #tpu.memory_space<vmem>>, vector<32x1xf32>
    %cst = arith.constant dense<0.000000e+00> : vector<2x1xf32>
    %6 = tpu.matmul %4, %5, %cst {dimension_numbers = #tpu.dot_dimension_numbers<[1], [0], [0], [1], [0, 0, 1, 1], [], []>} : vector<2x32xf32>, vector<32x1xf32>, vector<2x1xf32> -> vector<2x1xf32>
    %c0_3 = arith.constant 0 : index
    %c0_4 = arith.constant 0 : index
    %7 = vector.load %arg2[%c0_3, %c0_4] : memref<1x1xf32, #tpu.memory_space<vmem>>, vector<1x1xf32>
    %8 = vector.broadcast %7 : vector<1x1xf32> to vector<2x1xf32>
    %9 = arith.addf %6, %8 : vector<2x1xf32>
    %c0_5 = arith.constant 0 : index
    %c0_6 = arith.constant 0 : index
    %10 = vector.load %arg3[%c0_5, %c0_6] : memref<2x1xf32, #tpu.memory_space<vmem>>, vector<2x1xf32>
    tpu.vector_store %arg3[%c0_5, %c0_6], %9 {strides = array<i32>} : memref<2x1xf32, #tpu.memory_space<vmem>>, vector<2x1xf32>,
    return
  }
}

module attributes {stable_mosaic.version = 11 : i64} {
  func.func @kernel(%arg0: i32, %arg1: memref<1x16x16x1xf32, #tpu.memory_space<vmem>>, %arg2: memref<15xf32, #tpu.memory_space<smem>>, %arg3: memref<64x256xf32, #tpu.memory_space<vmem>>, %arg4: memref<9x16xf32, #tpu.memory_space<vmem>>, %arg5: memref<144x16xf32, #tpu.memory_space<vmem>>, %arg6: memref<1x16xf32, #tpu.memory_space<vmem>>, %arg7: memref<16x64xf32, #tpu.memory_space<vmem>>, %arg8: memref<144x32xf32, #tpu.memory_space<vmem>>, %arg9: memref<288x32xf32, #tpu.memory_space<vmem>>, %arg10: memref<16x32xf32, #tpu.memory_space<vmem>>, %arg11: memref<4x16xf32, #tpu.memory_space<vmem>>, %arg12: memref<288x32xf32, #tpu.memory_space<vmem>>, %arg13: memref<288x32xf32, #tpu.memory_space<vmem>>, %arg14: memref<32x32xf32, #tpu.memory_space<vmem>>, %arg15: memref<1x1x32xf32, #tpu.memory_space<vmem>>, %arg16: memref<18x18x1xf32, #tpu.memory_space<vmem>>, %arg17: memref<10x10x16xf32, #tpu.memory_space<vmem>>, %arg18: memref<6x6x32xf32, #tpu.memory_space<vmem>>, %arg19: memref<4x4x32xf32, #tpu.memory_space<vmem>>, %arg20: memref<64x144xf32, #tpu.memory_space<vmem>>, %arg21: memref<16x288xf32, #tpu.memory_space<vmem>>, %arg22: memref<4x288xf32, #tpu.memory_space<vmem>>) attributes {dimension_semantics = [#tpu.dimension_semantics<parallel>], iteration_bounds = array<i64: 4>, scalar_prefetch = 0 : i64, scratch_operands = 7 : i64, tpu.core_type = #tpu.core_type<tc>, window_params = [{transform_indices = @transform_0, window_bounds = array<i64: 1, 16, 16, 1>}, {transform_indices = @transform_1, window_bounds = array<i64: 15>}, {pipeline_mode = #tpu.pipeline_mode<synchronous>, transform_indices = @transform_2, window_bounds = array<i64: 64, 256>}, {pipeline_mode = #tpu.pipeline_mode<synchronous>, transform_indices = @transform_3, window_bounds = array<i64: 9, 16>}, {pipeline_mode = #tpu.pipeline_mode<synchronous>, transform_indices = @transform_4, window_bounds = array<i64: 144, 16>}, {pipeline_mode = #tpu.pipeline_mode<synchronous>, transform_indices = @transform_5, window_bounds = array<i64: 1, 16>}, {pipeline_mode = #tpu.pipeline_mode<synchronous>, transform_indices = @transform_6, window_bounds = array<i64: 16, 64>}, {pipeline_mode = #tpu.pipeline_mode<synchronous>, transform_indices = @transform_7, window_bounds = array<i64: 144, 32>}, {pipeline_mode = #tpu.pipeline_mode<synchronous>, transform_indices = @transform_8, window_bounds = array<i64: 288, 32>}, {pipeline_mode = #tpu.pipeline_mode<synchronous>, transform_indices = @transform_9, window_bounds = array<i64: 16, 32>}, {pipeline_mode = #tpu.pipeline_mode<synchronous>, transform_indices = @transform_10, window_bounds = array<i64: 4, 16>}, {pipeline_mode = #tpu.pipeline_mode<synchronous>, transform_indices = @transform_11, window_bounds = array<i64: 288, 32>}, {pipeline_mode = #tpu.pipeline_mode<synchronous>, transform_indices = @transform_12, window_bounds = array<i64: 288, 32>}, {pipeline_mode = #tpu.pipeline_mode<synchronous>, transform_indices = @transform_13, window_bounds = array<i64: 32, 32>}, {transform_indices = @transform_14, window_bounds = array<i64: 1, 1, 32>}]} {
    %c0 = arith.constant 0 : index
    %c0_0 = arith.constant 0 : index
    %c0_1 = arith.constant 0 : index
    %c0_2 = arith.constant 0 : index
    %0 = vector.load %arg1[%c0, %c0_0, %c0_1, %c0_2] : memref<1x16x16x1xf32, #tpu.memory_space<vmem>>, vector<1x16x16x1xf32>
    %1 = vector.shape_cast %0 : vector<1x16x16x1xf32> to vector<16x16x1xf32>
    %c0_3 = arith.constant 0 : index
    %2 = memref.load %arg2[%c0_3] : memref<15xf32, #tpu.memory_space<smem>>
    %c1 = arith.constant 1 : index
    %3 = memref.load %arg2[%c1] : memref<15xf32, #tpu.memory_space<smem>>
    %c2 = arith.constant 2 : index
    %4 = memref.load %arg2[%c2] : memref<15xf32, #tpu.memory_space<smem>>
    %c3 = arith.constant 3 : index
    %5 = memref.load %arg2[%c3] : memref<15xf32, #tpu.memory_space<smem>>
    %c4 = arith.constant 4 : index
    %6 = memref.load %arg2[%c4] : memref<15xf32, #tpu.memory_space<smem>>
    %c0_4 = arith.constant 0 : index
    %c0_5 = arith.constant 0 : index
    %7 = vector.load %arg3[%c0_4, %c0_5] : memref<64x256xf32, #tpu.memory_space<vmem>>, vector<64x256xf32>
    %c0_6 = arith.constant 0 : index
    %c0_7 = arith.constant 0 : index
    %8 = vector.load %arg4[%c0_6, %c0_7] : memref<9x16xf32, #tpu.memory_space<vmem>>, vector<9x16xf32>
    %c0_8 = arith.constant 0 : index
    %c0_9 = arith.constant 0 : index
    %9 = vector.load %arg5[%c0_8, %c0_9] : memref<144x16xf32, #tpu.memory_space<vmem>>, vector<144x16xf32>
    %c0_10 = arith.constant 0 : index
    %c0_11 = arith.constant 0 : index
    %10 = vector.load %arg6[%c0_10, %c0_11] : memref<1x16xf32, #tpu.memory_space<vmem>>, vector<1x16xf32>
    %11 = vector.broadcast %2 : f32 to vector<16x16x1xf32>
    %12 = arith.addf %1, %11 : vector<16x16x1xf32>
    %cst = arith.constant 0.000000e+00 : f32
    %13 = vector.broadcast %cst : f32 to vector<18x18x1xf32>
    %c0_12 = arith.constant 0 : index
    %c0_13 = arith.constant 0 : index
    %c0_14 = arith.constant 0 : index
    %14 = vector.load %arg16[%c0_12, %c0_13, %c0_14] : memref<18x18x1xf32, #tpu.memory_space<vmem>>, vector<18x18x1xf32>
    tpu.vector_store %arg16[%c0_12, %c0_13, %c0_14], %13 {strides = array<i32>} : memref<18x18x1xf32, #tpu.memory_space<vmem>>, vector<18x18x1xf32>,
    %c1_15 = arith.constant 1 : index
    %c1_16 = arith.constant 1 : index
    %c0_17 = arith.constant 0 : index
    %15 = vector.load %arg16[%c1_15, %c1_16, %c0_17] : memref<18x18x1xf32, #tpu.memory_space<vmem>>, vector<16x16x1xf32>
    tpu.vector_store %arg16[%c1_15, %c1_16, %c0_17], %12 {strides = array<i32>} : memref<18x18x1xf32, #tpu.memory_space<vmem>>, vector<16x16x1xf32>,
    %cst_18 = arith.constant 0.000000e+00 : f32
    %16 = vector.broadcast %cst_18 : f32 to vector<256x16xf32>
    %c0_19 = arith.constant 0 : index
    %c0_20 = arith.constant 0 : index
    %c0_21 = arith.constant 0 : index
    %17 = vector.load %arg16[%c0_19, %c0_20, %c0_21] : memref<18x18x1xf32, #tpu.memory_space<vmem>>, vector<16x16x1xf32>
    %18 = vector.shape_cast %17 : vector<16x16x1xf32> to vector<256x1xf32>
    %19 = vector.extract_strided_slice %8 {offsets = [0, 0], sizes = [1, 16], strides = [1, 1]} : vector<9x16xf32> to vector<1x16xf32>
    %20 = vector.broadcast %18 : vector<256x1xf32> to vector<256x16xf32>
    %21 = vector.broadcast %19 : vector<1x16xf32> to vector<256x16xf32>
    %22 = arith.mulf %20, %21 : vector<256x16xf32>
    %23 = arith.addf %16, %22 : vector<256x16xf32>
    %c0_22 = arith.constant 0 : index
    %c1_23 = arith.constant 1 : index
    %c0_24 = arith.constant 0 : index
    %24 = vector.load %arg16[%c0_22, %c1_23, %c0_24] : memref<18x18x1xf32, #tpu.memory_space<vmem>>, vector<16x16x1xf32>
    %25 = vector.shape_cast %24 : vector<16x16x1xf32> to vector<256x1xf32>
    %26 = vector.extract_strided_slice %8 {offsets = [1, 0], sizes = [1, 16], strides = [1, 1]} : vector<9x16xf32> to vector<1x16xf32>
    %27 = vector.broadcast %25 : vector<256x1xf32> to vector<256x16xf32>
    %28 = vector.broadcast %26 : vector<1x16xf32> to vector<256x16xf32>
    %29 = arith.mulf %27, %28 : vector<256x16xf32>
    %30 = arith.addf %23, %29 : vector<256x16xf32>
    %c0_25 = arith.constant 0 : index
    %c2_26 = arith.constant 2 : index
    %c0_27 = arith.constant 0 : index
    %31 = vector.load %arg16[%c0_25, %c2_26, %c0_27] : memref<18x18x1xf32, #tpu.memory_space<vmem>>, vector<16x16x1xf32>
    %32 = vector.shape_cast %31 : vector<16x16x1xf32> to vector<256x1xf32>
    %33 = vector.extract_strided_slice %8 {offsets = [2, 0], sizes = [1, 16], strides = [1, 1]} : vector<9x16xf32> to vector<1x16xf32>
    %34 = vector.broadcast %32 : vector<256x1xf32> to vector<256x16xf32>
    %35 = vector.broadcast %33 : vector<1x16xf32> to vector<256x16xf32>
    %36 = arith.mulf %34, %35 : vector<256x16xf32>
    %37 = arith.addf %30, %36 : vector<256x16xf32>
    %c1_28 = arith.constant 1 : index
    %c0_29 = arith.constant 0 : index
    %c0_30 = arith.constant 0 : index
    %38 = vector.load %arg16[%c1_28, %c0_29, %c0_30] : memref<18x18x1xf32, #tpu.memory_space<vmem>>, vector<16x16x1xf32>
    %39 = vector.shape_cast %38 : vector<16x16x1xf32> to vector<256x1xf32>
    %40 = vector.extract_strided_slice %8 {offsets = [3, 0], sizes = [1, 16], strides = [1, 1]} : vector<9x16xf32> to vector<1x16xf32>
    %41 = vector.broadcast %39 : vector<256x1xf32> to vector<256x16xf32>
    %42 = vector.broadcast %40 : vector<1x16xf32> to vector<256x16xf32>
    %43 = arith.mulf %41, %42 : vector<256x16xf32>
    %44 = arith.addf %37, %43 : vector<256x16xf32>
    %c1_31 = arith.constant 1 : index
    %c1_32 = arith.constant 1 : index
    %c0_33 = arith.constant 0 : index
    %45 = vector.load %arg16[%c1_31, %c1_32, %c0_33] : memref<18x18x1xf32, #tpu.memory_space<vmem>>, vector<16x16x1xf32>
    %46 = vector.shape_cast %45 : vector<16x16x1xf32> to vector<256x1xf32>
    %47 = vector.extract_strided_slice %8 {offsets = [4, 0], sizes = [1, 16], strides = [1, 1]} : vector<9x16xf32> to vector<1x16xf32>
    %48 = vector.broadcast %46 : vector<256x1xf32> to vector<256x16xf32>
    %49 = vector.broadcast %47 : vector<1x16xf32> to vector<256x16xf32>
    %50 = arith.mulf %48, %49 : vector<256x16xf32>
    %51 = arith.addf %44, %50 : vector<256x16xf32>
    %c1_34 = arith.constant 1 : index
    %c2_35 = arith.constant 2 : index
    %c0_36 = arith.constant 0 : index
    %52 = vector.load %arg16[%c1_34, %c2_35, %c0_36] : memref<18x18x1xf32, #tpu.memory_space<vmem>>, vector<16x16x1xf32>
    %53 = vector.shape_cast %52 : vector<16x16x1xf32> to vector<256x1xf32>
    %54 = vector.extract_strided_slice %8 {offsets = [5, 0], sizes = [1, 16], strides = [1, 1]} : vector<9x16xf32> to vector<1x16xf32>
    %55 = vector.broadcast %53 : vector<256x1xf32> to vector<256x16xf32>
    %56 = vector.broadcast %54 : vector<1x16xf32> to vector<256x16xf32>
    %57 = arith.mulf %55, %56 : vector<256x16xf32>
    %58 = arith.addf %51, %57 : vector<256x16xf32>
    %c2_37 = arith.constant 2 : index
    %c0_38 = arith.constant 0 : index
    %c0_39 = arith.constant 0 : index
    %59 = vector.load %arg16[%c2_37, %c0_38, %c0_39] : memref<18x18x1xf32, #tpu.memory_space<vmem>>, vector<16x16x1xf32>
    %60 = vector.shape_cast %59 : vector<16x16x1xf32> to vector<256x1xf32>
    %61 = vector.extract_strided_slice %8 {offsets = [6, 0], sizes = [1, 16], strides = [1, 1]} : vector<9x16xf32> to vector<1x16xf32>
    %62 = vector.broadcast %60 : vector<256x1xf32> to vector<256x16xf32>
    %63 = vector.broadcast %61 : vector<1x16xf32> to vector<256x16xf32>
    %64 = arith.mulf %62, %63 : vector<256x16xf32>
    %65 = arith.addf %58, %64 : vector<256x16xf32>
    %c2_40 = arith.constant 2 : index
    %c1_41 = arith.constant 1 : index
    %c0_42 = arith.constant 0 : index
    %66 = vector.load %arg16[%c2_40, %c1_41, %c0_42] : memref<18x18x1xf32, #tpu.memory_space<vmem>>, vector<16x16x1xf32>
    %67 = vector.shape_cast %66 : vector<16x16x1xf32> to vector<256x1xf32>
    %68 = vector.extract_strided_slice %8 {offsets = [7, 0], sizes = [1, 16], strides = [1, 1]} : vector<9x16xf32> to vector<1x16xf32>
    %69 = vector.broadcast %67 : vector<256x1xf32> to vector<256x16xf32>
    %70 = vector.broadcast %68 : vector<1x16xf32> to vector<256x16xf32>
    %71 = arith.mulf %69, %70 : vector<256x16xf32>
    %72 = arith.addf %65, %71 : vector<256x16xf32>
    %c2_43 = arith.constant 2 : index
    %c2_44 = arith.constant 2 : index
    %c0_45 = arith.constant 0 : index
    %73 = vector.load %arg16[%c2_43, %c2_44, %c0_45] : memref<18x18x1xf32, #tpu.memory_space<vmem>>, vector<16x16x1xf32>
    %74 = vector.shape_cast %73 : vector<16x16x1xf32> to vector<256x1xf32>
    %75 = vector.extract_strided_slice %8 {offsets = [8, 0], sizes = [1, 16], strides = [1, 1]} : vector<9x16xf32> to vector<1x16xf32>
    %76 = vector.broadcast %74 : vector<256x1xf32> to vector<256x16xf32>
    %77 = vector.broadcast %75 : vector<1x16xf32> to vector<256x16xf32>
    %78 = arith.mulf %76, %77 : vector<256x16xf32>
    %79 = arith.addf %72, %78 : vector<256x16xf32>
    %cst_46 = arith.constant dense<0.000000e+00> : vector<64x16xf32>
    %80 = tpu.matmul %7, %79, %cst_46 {dimension_numbers = #tpu.dot_dimension_numbers<[1], [0], [0], [1], [0, 0, 1, 1], [], []>} : vector<64x256xf32>, vector<256x16xf32>, vector<64x16xf32> -> vector<64x16xf32>
    %81 = vector.broadcast %3 : f32 to vector<64x16xf32>
    %82 = arith.addf %80, %81 : vector<64x16xf32>
    %cst_47 = arith.constant 0.000000e+00 : f32
    %83 = vector.broadcast %cst_47 : f32 to vector<64x16xf32>
    %84 = arith.maximumf %82, %83 : vector<64x16xf32>
    %85 = vector.shape_cast %12 : vector<16x16x1xf32> to vector<256x1xf32>
    %cst_48 = arith.constant dense<0.000000e+00> : vector<64x1xf32>
    %86 = tpu.matmul %7, %85, %cst_48 {dimension_numbers = #tpu.dot_dimension_numbers<[1], [0], [0], [1], [0, 0, 1, 1], [], []>} : vector<64x256xf32>, vector<256x1xf32>, vector<64x1xf32> -> vector<64x1xf32>
    %87 = vector.broadcast %86 : vector<64x1xf32> to vector<64x16xf32>
    %88 = vector.broadcast %10 : vector<1x16xf32> to vector<64x16xf32>
    %89 = arith.mulf %87, %88 : vector<64x16xf32>
    %90 = vector.shape_cast %84 : vector<64x16xf32> to vector<8x8x16xf32>
    %91 = vector.broadcast %4 : f32 to vector<8x8x16xf32>
    %92 = arith.addf %90, %91 : vector<8x8x16xf32>
    %cst_49 = arith.constant 0.000000e+00 : f32
    %93 = vector.broadcast %cst_49 : f32 to vector<10x10x16xf32>
    %c0_50 = arith.constant 0 : index
    %c0_51 = arith.constant 0 : index
    %c0_52 = arith.constant 0 : index
    %94 = vector.load %arg17[%c0_50, %c0_51, %c0_52] : memref<10x10x16xf32, #tpu.memory_space<vmem>>, vector<10x10x16xf32>
    tpu.vector_store %arg17[%c0_50, %c0_51, %c0_52], %93 {strides = array<i32>} : memref<10x10x16xf32, #tpu.memory_space<vmem>>, vector<10x10x16xf32>,
    %c1_53 = arith.constant 1 : index
    %c1_54 = arith.constant 1 : index
    %c0_55 = arith.constant 0 : index
    %95 = vector.load %arg17[%c1_53, %c1_54, %c0_55] : memref<10x10x16xf32, #tpu.memory_space<vmem>>, vector<8x8x16xf32>
    tpu.vector_store %arg17[%c1_53, %c1_54, %c0_55], %92 {strides = array<i32>} : memref<10x10x16xf32, #tpu.memory_space<vmem>>, vector<8x8x16xf32>,
    %c0_56 = arith.constant 0 : index
    %c0_57 = arith.constant 0 : index
    %c0_58 = arith.constant 0 : index
    %96 = vector.load %arg17[%c0_56, %c0_57, %c0_58] : memref<10x10x16xf32, #tpu.memory_space<vmem>>, vector<8x8x16xf32>
    %97 = vector.shape_cast %96 : vector<8x8x16xf32> to vector<64x16xf32>
    %c0_59 = arith.constant 0 : index
    %c0_60 = arith.constant 0 : index
    %98 = vector.load %arg20[%c0_59, %c0_60] : memref<64x144xf32, #tpu.memory_space<vmem>>, vector<64x16xf32>
    tpu.vector_store %arg20[%c0_59, %c0_60], %97 {strides = array<i32>} : memref<64x144xf32, #tpu.memory_space<vmem>>, vector<64x16xf32>,
    %c0_61 = arith.constant 0 : index
    %c1_62 = arith.constant 1 : index
    %c0_63 = arith.constant 0 : index
    %99 = vector.load %arg17[%c0_61, %c1_62, %c0_63] : memref<10x10x16xf32, #tpu.memory_space<vmem>>, vector<8x8x16xf32>
    %100 = vector.shape_cast %99 : vector<8x8x16xf32> to vector<64x16xf32>
    %c0_64 = arith.constant 0 : index
    %c16 = arith.constant 16 : index
    %101 = vector.load %arg20[%c0_64, %c16] : memref<64x144xf32, #tpu.memory_space<vmem>>, vector<64x16xf32>
    tpu.vector_store %arg20[%c0_64, %c16], %100 {strides = array<i32>} : memref<64x144xf32, #tpu.memory_space<vmem>>, vector<64x16xf32>,
    %c0_65 = arith.constant 0 : index
    %c2_66 = arith.constant 2 : index
    %c0_67 = arith.constant 0 : index
    %102 = vector.load %arg17[%c0_65, %c2_66, %c0_67] : memref<10x10x16xf32, #tpu.memory_space<vmem>>, vector<8x8x16xf32>
    %103 = vector.shape_cast %102 : vector<8x8x16xf32> to vector<64x16xf32>
    %c0_68 = arith.constant 0 : index
    %c32 = arith.constant 32 : index
    %104 = vector.load %arg20[%c0_68, %c32] : memref<64x144xf32, #tpu.memory_space<vmem>>, vector<64x16xf32>
    tpu.vector_store %arg20[%c0_68, %c32], %103 {strides = array<i32>} : memref<64x144xf32, #tpu.memory_space<vmem>>, vector<64x16xf32>,
    %c1_69 = arith.constant 1 : index
    %c0_70 = arith.constant 0 : index
    %c0_71 = arith.constant 0 : index
    %105 = vector.load %arg17[%c1_69, %c0_70, %c0_71] : memref<10x10x16xf32, #tpu.memory_space<vmem>>, vector<8x8x16xf32>
    %106 = vector.shape_cast %105 : vector<8x8x16xf32> to vector<64x16xf32>
    %c0_72 = arith.constant 0 : index
    %c48 = arith.constant 48 : index
    %107 = vector.load %arg20[%c0_72, %c48] : memref<64x144xf32, #tpu.memory_space<vmem>>, vector<64x16xf32>
    tpu.vector_store %arg20[%c0_72, %c48], %106 {strides = array<i32>} : memref<64x144xf32, #tpu.memory_space<vmem>>, vector<64x16xf32>,
    %c1_73 = arith.constant 1 : index
    %c1_74 = arith.constant 1 : index
    %c0_75 = arith.constant 0 : index
    %108 = vector.load %arg17[%c1_73, %c1_74, %c0_75] : memref<10x10x16xf32, #tpu.memory_space<vmem>>, vector<8x8x16xf32>
    %109 = vector.shape_cast %108 : vector<8x8x16xf32> to vector<64x16xf32>
    %c0_76 = arith.constant 0 : index
    %c64 = arith.constant 64 : index
    %110 = vector.load %arg20[%c0_76, %c64] : memref<64x144xf32, #tpu.memory_space<vmem>>, vector<64x16xf32>
    tpu.vector_store %arg20[%c0_76, %c64], %109 {strides = array<i32>} : memref<64x144xf32, #tpu.memory_space<vmem>>, vector<64x16xf32>,
    %c1_77 = arith.constant 1 : index
    %c2_78 = arith.constant 2 : index
    %c0_79 = arith.constant 0 : index
    %111 = vector.load %arg17[%c1_77, %c2_78, %c0_79] : memref<10x10x16xf32, #tpu.memory_space<vmem>>, vector<8x8x16xf32>
    %112 = vector.shape_cast %111 : vector<8x8x16xf32> to vector<64x16xf32>
    %c0_80 = arith.constant 0 : index
    %c80 = arith.constant 80 : index
    %113 = vector.load %arg20[%c0_80, %c80] : memref<64x144xf32, #tpu.memory_space<vmem>>, vector<64x16xf32>
    tpu.vector_store %arg20[%c0_80, %c80], %112 {strides = array<i32>} : memref<64x144xf32, #tpu.memory_space<vmem>>, vector<64x16xf32>,
    %c2_81 = arith.constant 2 : index
    %c0_82 = arith.constant 0 : index
    %c0_83 = arith.constant 0 : index
    %114 = vector.load %arg17[%c2_81, %c0_82, %c0_83] : memref<10x10x16xf32, #tpu.memory_space<vmem>>, vector<8x8x16xf32>
    %115 = vector.shape_cast %114 : vector<8x8x16xf32> to vector<64x16xf32>
    %c0_84 = arith.constant 0 : index
    %c96 = arith.constant 96 : index
    %116 = vector.load %arg20[%c0_84, %c96] : memref<64x144xf32, #tpu.memory_space<vmem>>, vector<64x16xf32>
    tpu.vector_store %arg20[%c0_84, %c96], %115 {strides = array<i32>} : memref<64x144xf32, #tpu.memory_space<vmem>>, vector<64x16xf32>,
    %c2_85 = arith.constant 2 : index
    %c1_86 = arith.constant 1 : index
    %c0_87 = arith.constant 0 : index
    %117 = vector.load %arg17[%c2_85, %c1_86, %c0_87] : memref<10x10x16xf32, #tpu.memory_space<vmem>>, vector<8x8x16xf32>
    %118 = vector.shape_cast %117 : vector<8x8x16xf32> to vector<64x16xf32>
    %c0_88 = arith.constant 0 : index
    %c112 = arith.constant 112 : index
    %119 = vector.load %arg20[%c0_88, %c112] : memref<64x144xf32, #tpu.memory_space<vmem>>, vector<64x16xf32>
    tpu.vector_store %arg20[%c0_88, %c112], %118 {strides = array<i32>} : memref<64x144xf32, #tpu.memory_space<vmem>>, vector<64x16xf32>,
    %c2_89 = arith.constant 2 : index
    %c2_90 = arith.constant 2 : index
    %c0_91 = arith.constant 0 : index
    %120 = vector.load %arg17[%c2_89, %c2_90, %c0_91] : memref<10x10x16xf32, #tpu.memory_space<vmem>>, vector<8x8x16xf32>
    %121 = vector.shape_cast %120 : vector<8x8x16xf32> to vector<64x16xf32>
    %c0_92 = arith.constant 0 : index
    %c128 = arith.constant 128 : index
    %122 = vector.load %arg20[%c0_92, %c128] : memref<64x144xf32, #tpu.memory_space<vmem>>, vector<64x16xf32>
    tpu.vector_store %arg20[%c0_92, %c128], %121 {strides = array<i32>} : memref<64x144xf32, #tpu.memory_space<vmem>>, vector<64x16xf32>,
    %c0_93 = arith.constant 0 : index
    %c0_94 = arith.constant 0 : index
    %123 = vector.load %arg20[%c0_93, %c0_94] : memref<64x144xf32, #tpu.memory_space<vmem>>, vector<64x144xf32>
    %cst_95 = arith.constant dense<0.000000e+00> : vector<64x16xf32>
    %124 = tpu.matmul %123, %9, %cst_95 {dimension_numbers = #tpu.dot_dimension_numbers<[1], [0], [0], [1], [0, 0, 1, 1], [], []>} : vector<64x144xf32>, vector<144x16xf32>, vector<64x16xf32> -> vector<64x16xf32>
    %125 = vector.broadcast %6 : f32 to vector<64x16xf32>
    %126 = arith.mulf %124, %125 : vector<64x16xf32>
    %127 = vector.broadcast %5 : f32 to vector<64x16xf32>
    %128 = arith.addf %126, %127 : vector<64x16xf32>
    %129 = arith.addf %128, %89 : vector<64x16xf32>
    %cst_96 = arith.constant 0.000000e+00 : f32
    %130 = vector.broadcast %cst_96 : f32 to vector<64x16xf32>
    %131 = arith.maximumf %129, %130 : vector<64x16xf32>
    %132 = vector.shape_cast %131 : vector<64x16xf32> to vector<8x8x16xf32>
    %c5 = arith.constant 5 : index
    %133 = memref.load %arg2[%c5] : memref<15xf32, #tpu.memory_space<smem>>
    %c6 = arith.constant 6 : index
    %134 = memref.load %arg2[%c6] : memref<15xf32, #tpu.memory_space<smem>>
    %c7 = arith.constant 7 : index
    %135 = memref.load %arg2[%c7] : memref<15xf32, #tpu.memory_space<smem>>
    %c8 = arith.constant 8 : index
    %136 = memref.load %arg2[%c8] : memref<15xf32, #tpu.memory_space<smem>>
    %c9 = arith.constant 9 : index
    %137 = memref.load %arg2[%c9] : memref<15xf32, #tpu.memory_space<smem>>
    %c0_97 = arith.constant 0 : index
    %c0_98 = arith.constant 0 : index
    %138 = vector.load %arg7[%c0_97, %c0_98] : memref<16x64xf32, #tpu.memory_space<vmem>>, vector<16x64xf32>
    %c0_99 = arith.constant 0 : index
    %c0_100 = arith.constant 0 : index
    %139 = vector.load %arg8[%c0_99, %c0_100] : memref<144x32xf32, #tpu.memory_space<vmem>>, vector<144x32xf32>
    %c0_101 = arith.constant 0 : index
    %c0_102 = arith.constant 0 : index
    %140 = vector.load %arg9[%c0_101, %c0_102] : memref<288x32xf32, #tpu.memory_space<vmem>>, vector<288x32xf32>
    %c0_103 = arith.constant 0 : index
    %c0_104 = arith.constant 0 : index
    %141 = vector.load %arg10[%c0_103, %c0_104] : memref<16x32xf32, #tpu.memory_space<vmem>>, vector<16x32xf32>
    %142 = vector.broadcast %133 : f32 to vector<8x8x16xf32>
    %143 = arith.addf %132, %142 : vector<8x8x16xf32>
    %cst_105 = arith.constant 0.000000e+00 : f32
    %144 = vector.broadcast %cst_105 : f32 to vector<10x10x16xf32>
    %c0_106 = arith.constant 0 : index
    %c0_107 = arith.constant 0 : index
    %c0_108 = arith.constant 0 : index
    %145 = vector.load %arg17[%c0_106, %c0_107, %c0_108] : memref<10x10x16xf32, #tpu.memory_space<vmem>>, vector<10x10x16xf32>
    tpu.vector_store %arg17[%c0_106, %c0_107, %c0_108], %144 {strides = array<i32>} : memref<10x10x16xf32, #tpu.memory_space<vmem>>, vector<10x10x16xf32>,
    %c1_109 = arith.constant 1 : index
    %c1_110 = arith.constant 1 : index
    %c0_111 = arith.constant 0 : index
    %146 = vector.load %arg17[%c1_109, %c1_110, %c0_111] : memref<10x10x16xf32, #tpu.memory_space<vmem>>, vector<8x8x16xf32>
    tpu.vector_store %arg17[%c1_109, %c1_110, %c0_111], %143 {strides = array<i32>} : memref<10x10x16xf32, #tpu.memory_space<vmem>>, vector<8x8x16xf32>,
    %c0_112 = arith.constant 0 : index
    %c0_113 = arith.constant 0 : index
    %c0_114 = arith.constant 0 : index
    %147 = vector.load %arg17[%c0_112, %c0_113, %c0_114] : memref<10x10x16xf32, #tpu.memory_space<vmem>>, vector<8x8x16xf32>
    %148 = vector.shape_cast %147 : vector<8x8x16xf32> to vector<64x16xf32>
    %c0_115 = arith.constant 0 : index
    %c0_116 = arith.constant 0 : index
    %149 = vector.load %arg20[%c0_115, %c0_116] : memref<64x144xf32, #tpu.memory_space<vmem>>, vector<64x16xf32>
    tpu.vector_store %arg20[%c0_115, %c0_116], %148 {strides = array<i32>} : memref<64x144xf32, #tpu.memory_space<vmem>>, vector<64x16xf32>,
    %c0_117 = arith.constant 0 : index
    %c1_118 = arith.constant 1 : index
    %c0_119 = arith.constant 0 : index
    %150 = vector.load %arg17[%c0_117, %c1_118, %c0_119] : memref<10x10x16xf32, #tpu.memory_space<vmem>>, vector<8x8x16xf32>
    %151 = vector.shape_cast %150 : vector<8x8x16xf32> to vector<64x16xf32>
    %c0_120 = arith.constant 0 : index
    %c16_121 = arith.constant 16 : index
    %152 = vector.load %arg20[%c0_120, %c16_121] : memref<64x144xf32, #tpu.memory_space<vmem>>, vector<64x16xf32>
    tpu.vector_store %arg20[%c0_120, %c16_121], %151 {strides = array<i32>} : memref<64x144xf32, #tpu.memory_space<vmem>>, vector<64x16xf32>,
    %c0_122 = arith.constant 0 : index
    %c2_123 = arith.constant 2 : index
    %c0_124 = arith.constant 0 : index
    %153 = vector.load %arg17[%c0_122, %c2_123, %c0_124] : memref<10x10x16xf32, #tpu.memory_space<vmem>>, vector<8x8x16xf32>
    %154 = vector.shape_cast %153 : vector<8x8x16xf32> to vector<64x16xf32>
    %c0_125 = arith.constant 0 : index
    %c32_126 = arith.constant 32 : index
    %155 = vector.load %arg20[%c0_125, %c32_126] : memref<64x144xf32, #tpu.memory_space<vmem>>, vector<64x16xf32>
    tpu.vector_store %arg20[%c0_125, %c32_126], %154 {strides = array<i32>} : memref<64x144xf32, #tpu.memory_space<vmem>>, vector<64x16xf32>,
    %c1_127 = arith.constant 1 : index
    %c0_128 = arith.constant 0 : index
    %c0_129 = arith.constant 0 : index
    %156 = vector.load %arg17[%c1_127, %c0_128, %c0_129] : memref<10x10x16xf32, #tpu.memory_space<vmem>>, vector<8x8x16xf32>
    %157 = vector.shape_cast %156 : vector<8x8x16xf32> to vector<64x16xf32>
    %c0_130 = arith.constant 0 : index
    %c48_131 = arith.constant 48 : index
    %158 = vector.load %arg20[%c0_130, %c48_131] : memref<64x144xf32, #tpu.memory_space<vmem>>, vector<64x16xf32>
    tpu.vector_store %arg20[%c0_130, %c48_131], %157 {strides = array<i32>} : memref<64x144xf32, #tpu.memory_space<vmem>>, vector<64x16xf32>,
    %c1_132 = arith.constant 1 : index
    %c1_133 = arith.constant 1 : index
    %c0_134 = arith.constant 0 : index
    %159 = vector.load %arg17[%c1_132, %c1_133, %c0_134] : memref<10x10x16xf32, #tpu.memory_space<vmem>>, vector<8x8x16xf32>
    %160 = vector.shape_cast %159 : vector<8x8x16xf32> to vector<64x16xf32>
    %c0_135 = arith.constant 0 : index
    %c64_136 = arith.constant 64 : index
    %161 = vector.load %arg20[%c0_135, %c64_136] : memref<64x144xf32, #tpu.memory_space<vmem>>, vector<64x16xf32>
    tpu.vector_store %arg20[%c0_135, %c64_136], %160 {strides = array<i32>} : memref<64x144xf32, #tpu.memory_space<vmem>>, vector<64x16xf32>,
    %c1_137 = arith.constant 1 : index
    %c2_138 = arith.constant 2 : index
    %c0_139 = arith.constant 0 : index
    %162 = vector.load %arg17[%c1_137, %c2_138, %c0_139] : memref<10x10x16xf32, #tpu.memory_space<vmem>>, vector<8x8x16xf32>
    %163 = vector.shape_cast %162 : vector<8x8x16xf32> to vector<64x16xf32>
    %c0_140 = arith.constant 0 : index
    %c80_141 = arith.constant 80 : index
    %164 = vector.load %arg20[%c0_140, %c80_141] : memref<64x144xf32, #tpu.memory_space<vmem>>, vector<64x16xf32>
    tpu.vector_store %arg20[%c0_140, %c80_141], %163 {strides = array<i32>} : memref<64x144xf32, #tpu.memory_space<vmem>>, vector<64x16xf32>,
    %c2_142 = arith.constant 2 : index
    %c0_143 = arith.constant 0 : index
    %c0_144 = arith.constant 0 : index
    %165 = vector.load %arg17[%c2_142, %c0_143, %c0_144] : memref<10x10x16xf32, #tpu.memory_space<vmem>>, vector<8x8x16xf32>
    %166 = vector.shape_cast %165 : vector<8x8x16xf32> to vector<64x16xf32>
    %c0_145 = arith.constant 0 : index
    %c96_146 = arith.constant 96 : index
    %167 = vector.load %arg20[%c0_145, %c96_146] : memref<64x144xf32, #tpu.memory_space<vmem>>, vector<64x16xf32>
    tpu.vector_store %arg20[%c0_145, %c96_146], %166 {strides = array<i32>} : memref<64x144xf32, #tpu.memory_space<vmem>>, vector<64x16xf32>,
    %c2_147 = arith.constant 2 : index
    %c1_148 = arith.constant 1 : index
    %c0_149 = arith.constant 0 : index
    %168 = vector.load %arg17[%c2_147, %c1_148, %c0_149] : memref<10x10x16xf32, #tpu.memory_space<vmem>>, vector<8x8x16xf32>
    %169 = vector.shape_cast %168 : vector<8x8x16xf32> to vector<64x16xf32>
    %c0_150 = arith.constant 0 : index
    %c112_151 = arith.constant 112 : index
    %170 = vector.load %arg20[%c0_150, %c112_151] : memref<64x144xf32, #tpu.memory_space<vmem>>, vector<64x16xf32>
    tpu.vector_store %arg20[%c0_150, %c112_151], %169 {strides = array<i32>} : memref<64x144xf32, #tpu.memory_space<vmem>>, vector<64x16xf32>,
    %c2_152 = arith.constant 2 : index
    %c2_153 = arith.constant 2 : index
    %c0_154 = arith.constant 0 : index
    %171 = vector.load %arg17[%c2_152, %c2_153, %c0_154] : memref<10x10x16xf32, #tpu.memory_space<vmem>>, vector<8x8x16xf32>
    %172 = vector.shape_cast %171 : vector<8x8x16xf32> to vector<64x16xf32>
    %c0_155 = arith.constant 0 : index
    %c128_156 = arith.constant 128 : index
    %173 = vector.load %arg20[%c0_155, %c128_156] : memref<64x144xf32, #tpu.memory_space<vmem>>, vector<64x16xf32>
    tpu.vector_store %arg20[%c0_155, %c128_156], %172 {strides = array<i32>} : memref<64x144xf32, #tpu.memory_space<vmem>>, vector<64x16xf32>,
    %c0_157 = arith.constant 0 : index
    %c0_158 = arith.constant 0 : index
    %174 = vector.load %arg20[%c0_157, %c0_158] : memref<64x144xf32, #tpu.memory_space<vmem>>, vector<64x144xf32>
    %cst_159 = arith.constant dense<0.000000e+00> : vector<64x32xf32>
    %175 = tpu.matmul %174, %139, %cst_159 {dimension_numbers = #tpu.dot_dimension_numbers<[1], [0], [0], [1], [0, 0, 1, 1], [], []>} : vector<64x144xf32>, vector<144x32xf32>, vector<64x32xf32> -> vector<64x32xf32>
    %cst_160 = arith.constant dense<0.000000e+00> : vector<16x32xf32>
    %176 = tpu.matmul %138, %175, %cst_160 {dimension_numbers = #tpu.dot_dimension_numbers<[1], [0], [0], [1], [0, 0, 1, 1], [], []>} : vector<16x64xf32>, vector<64x32xf32>, vector<16x32xf32> -> vector<16x32xf32>
    %177 = vector.broadcast %134 : f32 to vector<16x32xf32>
    %178 = arith.addf %176, %177 : vector<16x32xf32>
    %cst_161 = arith.constant 0.000000e+00 : f32
    %179 = vector.broadcast %cst_161 : f32 to vector<16x32xf32>
    %180 = arith.maximumf %178, %179 : vector<16x32xf32>
    %181 = vector.shape_cast %143 : vector<8x8x16xf32> to vector<64x16xf32>
    %cst_162 = arith.constant dense<0.000000e+00> : vector<16x16xf32>
    %182 = tpu.matmul %138, %181, %cst_162 {dimension_numbers = #tpu.dot_dimension_numbers<[1], [0], [0], [1], [0, 0, 1, 1], [], []>} : vector<16x64xf32>, vector<64x16xf32>, vector<16x16xf32> -> vector<16x16xf32>
    %cst_163 = arith.constant dense<0.000000e+00> : vector<16x32xf32>
    %183 = tpu.matmul %182, %141, %cst_163 {dimension_numbers = #tpu.dot_dimension_numbers<[1], [0], [0], [1], [0, 0, 1, 1], [], []>} : vector<16x16xf32>, vector<16x32xf32>, vector<16x32xf32> -> vector<16x32xf32>
    %184 = vector.shape_cast %180 : vector<16x32xf32> to vector<4x4x32xf32>
    %185 = vector.broadcast %135 : f32 to vector<4x4x32xf32>
    %186 = arith.addf %184, %185 : vector<4x4x32xf32>
    %cst_164 = arith.constant 0.000000e+00 : f32
    %187 = vector.broadcast %cst_164 : f32 to vector<6x6x32xf32>
    %c0_165 = arith.constant 0 : index
    %c0_166 = arith.constant 0 : index
    %c0_167 = arith.constant 0 : index
    %188 = vector.load %arg18[%c0_165, %c0_166, %c0_167] : memref<6x6x32xf32, #tpu.memory_space<vmem>>, vector<6x6x32xf32>
    tpu.vector_store %arg18[%c0_165, %c0_166, %c0_167], %187 {strides = array<i32>} : memref<6x6x32xf32, #tpu.memory_space<vmem>>, vector<6x6x32xf32>,
    %c1_168 = arith.constant 1 : index
    %c1_169 = arith.constant 1 : index
    %c0_170 = arith.constant 0 : index
    %189 = vector.load %arg18[%c1_168, %c1_169, %c0_170] : memref<6x6x32xf32, #tpu.memory_space<vmem>>, vector<4x4x32xf32>
    tpu.vector_store %arg18[%c1_168, %c1_169, %c0_170], %186 {strides = array<i32>} : memref<6x6x32xf32, #tpu.memory_space<vmem>>, vector<4x4x32xf32>,
    %c0_171 = arith.constant 0 : index
    %c0_172 = arith.constant 0 : index
    %c0_173 = arith.constant 0 : index
    %190 = vector.load %arg18[%c0_171, %c0_172, %c0_173] : memref<6x6x32xf32, #tpu.memory_space<vmem>>, vector<4x4x32xf32>
    %191 = vector.shape_cast %190 : vector<4x4x32xf32> to vector<16x32xf32>
    %c0_174 = arith.constant 0 : index
    %c0_175 = arith.constant 0 : index
    %192 = vector.load %arg21[%c0_174, %c0_175] : memref<16x288xf32, #tpu.memory_space<vmem>>, vector<16x32xf32>
    tpu.vector_store %arg21[%c0_174, %c0_175], %191 {strides = array<i32>} : memref<16x288xf32, #tpu.memory_space<vmem>>, vector<16x32xf32>,
    %c0_176 = arith.constant 0 : index
    %c1_177 = arith.constant 1 : index
    %c0_178 = arith.constant 0 : index
    %193 = vector.load %arg18[%c0_176, %c1_177, %c0_178] : memref<6x6x32xf32, #tpu.memory_space<vmem>>, vector<4x4x32xf32>
    %194 = vector.shape_cast %193 : vector<4x4x32xf32> to vector<16x32xf32>
    %c0_179 = arith.constant 0 : index
    %c32_180 = arith.constant 32 : index
    %195 = vector.load %arg21[%c0_179, %c32_180] : memref<16x288xf32, #tpu.memory_space<vmem>>, vector<16x32xf32>
    tpu.vector_store %arg21[%c0_179, %c32_180], %194 {strides = array<i32>} : memref<16x288xf32, #tpu.memory_space<vmem>>, vector<16x32xf32>,
    %c0_181 = arith.constant 0 : index
    %c2_182 = arith.constant 2 : index
    %c0_183 = arith.constant 0 : index
    %196 = vector.load %arg18[%c0_181, %c2_182, %c0_183] : memref<6x6x32xf32, #tpu.memory_space<vmem>>, vector<4x4x32xf32>
    %197 = vector.shape_cast %196 : vector<4x4x32xf32> to vector<16x32xf32>
    %c0_184 = arith.constant 0 : index
    %c64_185 = arith.constant 64 : index
    %198 = vector.load %arg21[%c0_184, %c64_185] : memref<16x288xf32, #tpu.memory_space<vmem>>, vector<16x32xf32>
    tpu.vector_store %arg21[%c0_184, %c64_185], %197 {strides = array<i32>} : memref<16x288xf32, #tpu.memory_space<vmem>>, vector<16x32xf32>,
    %c1_186 = arith.constant 1 : index
    %c0_187 = arith.constant 0 : index
    %c0_188 = arith.constant 0 : index
    %199 = vector.load %arg18[%c1_186, %c0_187, %c0_188] : memref<6x6x32xf32, #tpu.memory_space<vmem>>, vector<4x4x32xf32>
    %200 = vector.shape_cast %199 : vector<4x4x32xf32> to vector<16x32xf32>
    %c0_189 = arith.constant 0 : index
    %c96_190 = arith.constant 96 : index
    %201 = vector.load %arg21[%c0_189, %c96_190] : memref<16x288xf32, #tpu.memory_space<vmem>>, vector<16x32xf32>
    tpu.vector_store %arg21[%c0_189, %c96_190], %200 {strides = array<i32>} : memref<16x288xf32, #tpu.memory_space<vmem>>, vector<16x32xf32>,
    %c1_191 = arith.constant 1 : index
    %c1_192 = arith.constant 1 : index
    %c0_193 = arith.constant 0 : index
    %202 = vector.load %arg18[%c1_191, %c1_192, %c0_193] : memref<6x6x32xf32, #tpu.memory_space<vmem>>, vector<4x4x32xf32>
    %203 = vector.shape_cast %202 : vector<4x4x32xf32> to vector<16x32xf32>
    %c0_194 = arith.constant 0 : index
    %c128_195 = arith.constant 128 : index
    %204 = vector.load %arg21[%c0_194, %c128_195] : memref<16x288xf32, #tpu.memory_space<vmem>>, vector<16x32xf32>
    tpu.vector_store %arg21[%c0_194, %c128_195], %203 {strides = array<i32>} : memref<16x288xf32, #tpu.memory_space<vmem>>, vector<16x32xf32>,
    %c1_196 = arith.constant 1 : index
    %c2_197 = arith.constant 2 : index
    %c0_198 = arith.constant 0 : index
    %205 = vector.load %arg18[%c1_196, %c2_197, %c0_198] : memref<6x6x32xf32, #tpu.memory_space<vmem>>, vector<4x4x32xf32>
    %206 = vector.shape_cast %205 : vector<4x4x32xf32> to vector<16x32xf32>
    %c0_199 = arith.constant 0 : index
    %c160 = arith.constant 160 : index
    %207 = vector.load %arg21[%c0_199, %c160] : memref<16x288xf32, #tpu.memory_space<vmem>>, vector<16x32xf32>
    tpu.vector_store %arg21[%c0_199, %c160], %206 {strides = array<i32>} : memref<16x288xf32, #tpu.memory_space<vmem>>, vector<16x32xf32>,
    %c2_200 = arith.constant 2 : index
    %c0_201 = arith.constant 0 : index
    %c0_202 = arith.constant 0 : index
    %208 = vector.load %arg18[%c2_200, %c0_201, %c0_202] : memref<6x6x32xf32, #tpu.memory_space<vmem>>, vector<4x4x32xf32>
    %209 = vector.shape_cast %208 : vector<4x4x32xf32> to vector<16x32xf32>
    %c0_203 = arith.constant 0 : index
    %c192 = arith.constant 192 : index
    %210 = vector.load %arg21[%c0_203, %c192] : memref<16x288xf32, #tpu.memory_space<vmem>>, vector<16x32xf32>
    tpu.vector_store %arg21[%c0_203, %c192], %209 {strides = array<i32>} : memref<16x288xf32, #tpu.memory_space<vmem>>, vector<16x32xf32>,
    %c2_204 = arith.constant 2 : index
    %c1_205 = arith.constant 1 : index
    %c0_206 = arith.constant 0 : index
    %211 = vector.load %arg18[%c2_204, %c1_205, %c0_206] : memref<6x6x32xf32, #tpu.memory_space<vmem>>, vector<4x4x32xf32>
    %212 = vector.shape_cast %211 : vector<4x4x32xf32> to vector<16x32xf32>
    %c0_207 = arith.constant 0 : index
    %c224 = arith.constant 224 : index
    %213 = vector.load %arg21[%c0_207, %c224] : memref<16x288xf32, #tpu.memory_space<vmem>>, vector<16x32xf32>
    tpu.vector_store %arg21[%c0_207, %c224], %212 {strides = array<i32>} : memref<16x288xf32, #tpu.memory_space<vmem>>, vector<16x32xf32>,
    %c2_208 = arith.constant 2 : index
    %c2_209 = arith.constant 2 : index
    %c0_210 = arith.constant 0 : index
    %214 = vector.load %arg18[%c2_208, %c2_209, %c0_210] : memref<6x6x32xf32, #tpu.memory_space<vmem>>, vector<4x4x32xf32>
    %215 = vector.shape_cast %214 : vector<4x4x32xf32> to vector<16x32xf32>
    %c0_211 = arith.constant 0 : index
    %c256 = arith.constant 256 : index
    %216 = vector.load %arg21[%c0_211, %c256] : memref<16x288xf32, #tpu.memory_space<vmem>>, vector<16x32xf32>
    tpu.vector_store %arg21[%c0_211, %c256], %215 {strides = array<i32>} : memref<16x288xf32, #tpu.memory_space<vmem>>, vector<16x32xf32>,
    %c0_212 = arith.constant 0 : index
    %c0_213 = arith.constant 0 : index
    %217 = vector.load %arg21[%c0_212, %c0_213] : memref<16x288xf32, #tpu.memory_space<vmem>>, vector<16x288xf32>
    %cst_214 = arith.constant dense<0.000000e+00> : vector<16x32xf32>
    %218 = tpu.matmul %217, %140, %cst_214 {dimension_numbers = #tpu.dot_dimension_numbers<[1], [0], [0], [1], [0, 0, 1, 1], [], []>} : vector<16x288xf32>, vector<288x32xf32>, vector<16x32xf32> -> vector<16x32xf32>
    %219 = vector.broadcast %137 : f32 to vector<16x32xf32>
    %220 = arith.mulf %218, %219 : vector<16x32xf32>
    %221 = vector.broadcast %136 : f32 to vector<16x32xf32>
    %222 = arith.addf %220, %221 : vector<16x32xf32>
    %223 = arith.addf %222, %183 : vector<16x32xf32>
    %cst_215 = arith.constant 0.000000e+00 : f32
    %224 = vector.broadcast %cst_215 : f32 to vector<16x32xf32>
    %225 = arith.maximumf %223, %224 : vector<16x32xf32>
    %226 = vector.shape_cast %225 : vector<16x32xf32> to vector<4x4x32xf32>
    %c10 = arith.constant 10 : index
    %227 = memref.load %arg2[%c10] : memref<15xf32, #tpu.memory_space<smem>>
    %c11 = arith.constant 11 : index
    %228 = memref.load %arg2[%c11] : memref<15xf32, #tpu.memory_space<smem>>
    %c12 = arith.constant 12 : index
    %229 = memref.load %arg2[%c12] : memref<15xf32, #tpu.memory_space<smem>>
    %c13 = arith.constant 13 : index
    %230 = memref.load %arg2[%c13] : memref<15xf32, #tpu.memory_space<smem>>
    %c14 = arith.constant 14 : index
    %231 = memref.load %arg2[%c14] : memref<15xf32, #tpu.memory_space<smem>>
    %c0_216 = arith.constant 0 : index
    %c0_217 = arith.constant 0 : index
    %232 = vector.load %arg11[%c0_216, %c0_217] : memref<4x16xf32, #tpu.memory_space<vmem>>, vector<4x16xf32>
    %c0_218 = arith.constant 0 : index
    %c0_219 = arith.constant 0 : index
    %233 = vector.load %arg12[%c0_218, %c0_219] : memref<288x32xf32, #tpu.memory_space<vmem>>, vector<288x32xf32>
    %c0_220 = arith.constant 0 : index
    %c0_221 = arith.constant 0 : index
    %234 = vector.load %arg13[%c0_220, %c0_221] : memref<288x32xf32, #tpu.memory_space<vmem>>, vector<288x32xf32>
    %c0_222 = arith.constant 0 : index
    %c0_223 = arith.constant 0 : index
    %235 = vector.load %arg14[%c0_222, %c0_223] : memref<32x32xf32, #tpu.memory_space<vmem>>, vector<32x32xf32>
    %236 = vector.broadcast %227 : f32 to vector<4x4x32xf32>
    %237 = arith.addf %226, %236 : vector<4x4x32xf32>
    %cst_224 = arith.constant 0.000000e+00 : f32
    %238 = vector.broadcast %cst_224 : f32 to vector<6x6x32xf32>
    %c0_225 = arith.constant 0 : index
    %c0_226 = arith.constant 0 : index
    %c0_227 = arith.constant 0 : index
    %239 = vector.load %arg18[%c0_225, %c0_226, %c0_227] : memref<6x6x32xf32, #tpu.memory_space<vmem>>, vector<6x6x32xf32>
    tpu.vector_store %arg18[%c0_225, %c0_226, %c0_227], %238 {strides = array<i32>} : memref<6x6x32xf32, #tpu.memory_space<vmem>>, vector<6x6x32xf32>,
    %c1_228 = arith.constant 1 : index
    %c1_229 = arith.constant 1 : index
    %c0_230 = arith.constant 0 : index
    %240 = vector.load %arg18[%c1_228, %c1_229, %c0_230] : memref<6x6x32xf32, #tpu.memory_space<vmem>>, vector<4x4x32xf32>
    tpu.vector_store %arg18[%c1_228, %c1_229, %c0_230], %237 {strides = array<i32>} : memref<6x6x32xf32, #tpu.memory_space<vmem>>, vector<4x4x32xf32>,
    %c0_231 = arith.constant 0 : index
    %c0_232 = arith.constant 0 : index
    %c0_233 = arith.constant 0 : index
    %241 = vector.load %arg18[%c0_231, %c0_232, %c0_233] : memref<6x6x32xf32, #tpu.memory_space<vmem>>, vector<4x4x32xf32>
    %242 = vector.shape_cast %241 : vector<4x4x32xf32> to vector<16x32xf32>
    %c0_234 = arith.constant 0 : index
    %c0_235 = arith.constant 0 : index
    %243 = vector.load %arg21[%c0_234, %c0_235] : memref<16x288xf32, #tpu.memory_space<vmem>>, vector<16x32xf32>
    tpu.vector_store %arg21[%c0_234, %c0_235], %242 {strides = array<i32>} : memref<16x288xf32, #tpu.memory_space<vmem>>, vector<16x32xf32>,
    %c0_236 = arith.constant 0 : index
    %c1_237 = arith.constant 1 : index
    %c0_238 = arith.constant 0 : index
    %244 = vector.load %arg18[%c0_236, %c1_237, %c0_238] : memref<6x6x32xf32, #tpu.memory_space<vmem>>, vector<4x4x32xf32>
    %245 = vector.shape_cast %244 : vector<4x4x32xf32> to vector<16x32xf32>
    %c0_239 = arith.constant 0 : index
    %c32_240 = arith.constant 32 : index
    %246 = vector.load %arg21[%c0_239, %c32_240] : memref<16x288xf32, #tpu.memory_space<vmem>>, vector<16x32xf32>
    tpu.vector_store %arg21[%c0_239, %c32_240], %245 {strides = array<i32>} : memref<16x288xf32, #tpu.memory_space<vmem>>, vector<16x32xf32>,
    %c0_241 = arith.constant 0 : index
    %c2_242 = arith.constant 2 : index
    %c0_243 = arith.constant 0 : index
    %247 = vector.load %arg18[%c0_241, %c2_242, %c0_243] : memref<6x6x32xf32, #tpu.memory_space<vmem>>, vector<4x4x32xf32>
    %248 = vector.shape_cast %247 : vector<4x4x32xf32> to vector<16x32xf32>
    %c0_244 = arith.constant 0 : index
    %c64_245 = arith.constant 64 : index
    %249 = vector.load %arg21[%c0_244, %c64_245] : memref<16x288xf32, #tpu.memory_space<vmem>>, vector<16x32xf32>
    tpu.vector_store %arg21[%c0_244, %c64_245], %248 {strides = array<i32>} : memref<16x288xf32, #tpu.memory_space<vmem>>, vector<16x32xf32>,
    %c1_246 = arith.constant 1 : index
    %c0_247 = arith.constant 0 : index
    %c0_248 = arith.constant 0 : index
    %250 = vector.load %arg18[%c1_246, %c0_247, %c0_248] : memref<6x6x32xf32, #tpu.memory_space<vmem>>, vector<4x4x32xf32>
    %251 = vector.shape_cast %250 : vector<4x4x32xf32> to vector<16x32xf32>
    %c0_249 = arith.constant 0 : index
    %c96_250 = arith.constant 96 : index
    %252 = vector.load %arg21[%c0_249, %c96_250] : memref<16x288xf32, #tpu.memory_space<vmem>>, vector<16x32xf32>
    tpu.vector_store %arg21[%c0_249, %c96_250], %251 {strides = array<i32>} : memref<16x288xf32, #tpu.memory_space<vmem>>, vector<16x32xf32>,
    %c1_251 = arith.constant 1 : index
    %c1_252 = arith.constant 1 : index
    %c0_253 = arith.constant 0 : index
    %253 = vector.load %arg18[%c1_251, %c1_252, %c0_253] : memref<6x6x32xf32, #tpu.memory_space<vmem>>, vector<4x4x32xf32>
    %254 = vector.shape_cast %253 : vector<4x4x32xf32> to vector<16x32xf32>
    %c0_254 = arith.constant 0 : index
    %c128_255 = arith.constant 128 : index
    %255 = vector.load %arg21[%c0_254, %c128_255] : memref<16x288xf32, #tpu.memory_space<vmem>>, vector<16x32xf32>
    tpu.vector_store %arg21[%c0_254, %c128_255], %254 {strides = array<i32>} : memref<16x288xf32, #tpu.memory_space<vmem>>, vector<16x32xf32>,
    %c1_256 = arith.constant 1 : index
    %c2_257 = arith.constant 2 : index
    %c0_258 = arith.constant 0 : index
    %256 = vector.load %arg18[%c1_256, %c2_257, %c0_258] : memref<6x6x32xf32, #tpu.memory_space<vmem>>, vector<4x4x32xf32>
    %257 = vector.shape_cast %256 : vector<4x4x32xf32> to vector<16x32xf32>
    %c0_259 = arith.constant 0 : index
    %c160_260 = arith.constant 160 : index
    %258 = vector.load %arg21[%c0_259, %c160_260] : memref<16x288xf32, #tpu.memory_space<vmem>>, vector<16x32xf32>
    tpu.vector_store %arg21[%c0_259, %c160_260], %257 {strides = array<i32>} : memref<16x288xf32, #tpu.memory_space<vmem>>, vector<16x32xf32>,
    %c2_261 = arith.constant 2 : index
    %c0_262 = arith.constant 0 : index
    %c0_263 = arith.constant 0 : index
    %259 = vector.load %arg18[%c2_261, %c0_262, %c0_263] : memref<6x6x32xf32, #tpu.memory_space<vmem>>, vector<4x4x32xf32>
    %260 = vector.shape_cast %259 : vector<4x4x32xf32> to vector<16x32xf32>
    %c0_264 = arith.constant 0 : index
    %c192_265 = arith.constant 192 : index
    %261 = vector.load %arg21[%c0_264, %c192_265] : memref<16x288xf32, #tpu.memory_space<vmem>>, vector<16x32xf32>
    tpu.vector_store %arg21[%c0_264, %c192_265], %260 {strides = array<i32>} : memref<16x288xf32, #tpu.memory_space<vmem>>, vector<16x32xf32>,
    %c2_266 = arith.constant 2 : index
    %c1_267 = arith.constant 1 : index
    %c0_268 = arith.constant 0 : index
    %262 = vector.load %arg18[%c2_266, %c1_267, %c0_268] : memref<6x6x32xf32, #tpu.memory_space<vmem>>, vector<4x4x32xf32>
    %263 = vector.shape_cast %262 : vector<4x4x32xf32> to vector<16x32xf32>
    %c0_269 = arith.constant 0 : index
    %c224_270 = arith.constant 224 : index
    %264 = vector.load %arg21[%c0_269, %c224_270] : memref<16x288xf32, #tpu.memory_space<vmem>>, vector<16x32xf32>
    tpu.vector_store %arg21[%c0_269, %c224_270], %263 {strides = array<i32>} : memref<16x288xf32, #tpu.memory_space<vmem>>, vector<16x32xf32>,
    %c2_271 = arith.constant 2 : index
    %c2_272 = arith.constant 2 : index
    %c0_273 = arith.constant 0 : index
    %265 = vector.load %arg18[%c2_271, %c2_272, %c0_273] : memref<6x6x32xf32, #tpu.memory_space<vmem>>, vector<4x4x32xf32>
    %266 = vector.shape_cast %265 : vector<4x4x32xf32> to vector<16x32xf32>
    %c0_274 = arith.constant 0 : index
    %c256_275 = arith.constant 256 : index
    %267 = vector.load %arg21[%c0_274, %c256_275] : memref<16x288xf32, #tpu.memory_space<vmem>>, vector<16x32xf32>
    tpu.vector_store %arg21[%c0_274, %c256_275], %266 {strides = array<i32>} : memref<16x288xf32, #tpu.memory_space<vmem>>, vector<16x32xf32>,
    %c0_276 = arith.constant 0 : index
    %c0_277 = arith.constant 0 : index
    %268 = vector.load %arg21[%c0_276, %c0_277] : memref<16x288xf32, #tpu.memory_space<vmem>>, vector<16x288xf32>
    %cst_278 = arith.constant dense<0.000000e+00> : vector<16x32xf32>
    %269 = tpu.matmul %268, %233, %cst_278 {dimension_numbers = #tpu.dot_dimension_numbers<[1], [0], [0], [1], [0, 0, 1, 1], [], []>} : vector<16x288xf32>, vector<288x32xf32>, vector<16x32xf32> -> vector<16x32xf32>
    %cst_279 = arith.constant dense<0.000000e+00> : vector<4x32xf32>
    %270 = tpu.matmul %232, %269, %cst_279 {dimension_numbers = #tpu.dot_dimension_numbers<[1], [0], [0], [1], [0, 0, 1, 1], [], []>} : vector<4x16xf32>, vector<16x32xf32>, vector<4x32xf32> -> vector<4x32xf32>
    %271 = vector.broadcast %228 : f32 to vector<4x32xf32>
    %272 = arith.addf %270, %271 : vector<4x32xf32>
    %cst_280 = arith.constant 0.000000e+00 : f32
    %273 = vector.broadcast %cst_280 : f32 to vector<4x32xf32>
    %274 = arith.maximumf %272, %273 : vector<4x32xf32>
    %275 = vector.shape_cast %237 : vector<4x4x32xf32> to vector<16x32xf32>
    %cst_281 = arith.constant dense<0.000000e+00> : vector<4x32xf32>
    %276 = tpu.matmul %232, %275, %cst_281 {dimension_numbers = #tpu.dot_dimension_numbers<[1], [0], [0], [1], [0, 0, 1, 1], [], []>} : vector<4x16xf32>, vector<16x32xf32>, vector<4x32xf32> -> vector<4x32xf32>
    %cst_282 = arith.constant dense<0.000000e+00> : vector<4x32xf32>
    %277 = tpu.matmul %276, %235, %cst_282 {dimension_numbers = #tpu.dot_dimension_numbers<[1], [0], [0], [1], [0, 0, 1, 1], [], []>} : vector<4x32xf32>, vector<32x32xf32>, vector<4x32xf32> -> vector<4x32xf32>
    %278 = vector.shape_cast %274 : vector<4x32xf32> to vector<2x2x32xf32>
    %279 = vector.broadcast %229 : f32 to vector<2x2x32xf32>
    %280 = arith.addf %278, %279 : vector<2x2x32xf32>
    %cst_283 = arith.constant 0.000000e+00 : f32
    %281 = vector.broadcast %cst_283 : f32 to vector<4x4x32xf32>
    %c0_284 = arith.constant 0 : index
    %c0_285 = arith.constant 0 : index
    %c0_286 = arith.constant 0 : index
    %282 = vector.load %arg19[%c0_284, %c0_285, %c0_286] : memref<4x4x32xf32, #tpu.memory_space<vmem>>, vector<4x4x32xf32>
    tpu.vector_store %arg19[%c0_284, %c0_285, %c0_286], %281 {strides = array<i32>} : memref<4x4x32xf32, #tpu.memory_space<vmem>>, vector<4x4x32xf32>,
    %c1_287 = arith.constant 1 : index
    %c1_288 = arith.constant 1 : index
    %c0_289 = arith.constant 0 : index
    %283 = vector.load %arg19[%c1_287, %c1_288, %c0_289] : memref<4x4x32xf32, #tpu.memory_space<vmem>>, vector<2x2x32xf32>
    tpu.vector_store %arg19[%c1_287, %c1_288, %c0_289], %280 {strides = array<i32>} : memref<4x4x32xf32, #tpu.memory_space<vmem>>, vector<2x2x32xf32>,
    %c0_290 = arith.constant 0 : index
    %c0_291 = arith.constant 0 : index
    %c0_292 = arith.constant 0 : index
    %284 = vector.load %arg19[%c0_290, %c0_291, %c0_292] : memref<4x4x32xf32, #tpu.memory_space<vmem>>, vector<2x2x32xf32>
    %285 = vector.shape_cast %284 : vector<2x2x32xf32> to vector<4x32xf32>
    %c0_293 = arith.constant 0 : index
    %c0_294 = arith.constant 0 : index
    %286 = vector.load %arg22[%c0_293, %c0_294] : memref<4x288xf32, #tpu.memory_space<vmem>>, vector<4x32xf32>
    tpu.vector_store %arg22[%c0_293, %c0_294], %285 {strides = array<i32>} : memref<4x288xf32, #tpu.memory_space<vmem>>, vector<4x32xf32>,
    %c0_295 = arith.constant 0 : index
    %c1_296 = arith.constant 1 : index
    %c0_297 = arith.constant 0 : index
    %287 = vector.load %arg19[%c0_295, %c1_296, %c0_297] : memref<4x4x32xf32, #tpu.memory_space<vmem>>, vector<2x2x32xf32>
    %288 = vector.shape_cast %287 : vector<2x2x32xf32> to vector<4x32xf32>
    %c0_298 = arith.constant 0 : index
    %c32_299 = arith.constant 32 : index
    %289 = vector.load %arg22[%c0_298, %c32_299] : memref<4x288xf32, #tpu.memory_space<vmem>>, vector<4x32xf32>
    tpu.vector_store %arg22[%c0_298, %c32_299], %288 {strides = array<i32>} : memref<4x288xf32, #tpu.memory_space<vmem>>, vector<4x32xf32>,
    %c0_300 = arith.constant 0 : index
    %c2_301 = arith.constant 2 : index
    %c0_302 = arith.constant 0 : index
    %290 = vector.load %arg19[%c0_300, %c2_301, %c0_302] : memref<4x4x32xf32, #tpu.memory_space<vmem>>, vector<2x2x32xf32>
    %291 = vector.shape_cast %290 : vector<2x2x32xf32> to vector<4x32xf32>
    %c0_303 = arith.constant 0 : index
    %c64_304 = arith.constant 64 : index
    %292 = vector.load %arg22[%c0_303, %c64_304] : memref<4x288xf32, #tpu.memory_space<vmem>>, vector<4x32xf32>
    tpu.vector_store %arg22[%c0_303, %c64_304], %291 {strides = array<i32>} : memref<4x288xf32, #tpu.memory_space<vmem>>, vector<4x32xf32>,
    %c1_305 = arith.constant 1 : index
    %c0_306 = arith.constant 0 : index
    %c0_307 = arith.constant 0 : index
    %293 = vector.load %arg19[%c1_305, %c0_306, %c0_307] : memref<4x4x32xf32, #tpu.memory_space<vmem>>, vector<2x2x32xf32>
    %294 = vector.shape_cast %293 : vector<2x2x32xf32> to vector<4x32xf32>
    %c0_308 = arith.constant 0 : index
    %c96_309 = arith.constant 96 : index
    %295 = vector.load %arg22[%c0_308, %c96_309] : memref<4x288xf32, #tpu.memory_space<vmem>>, vector<4x32xf32>
    tpu.vector_store %arg22[%c0_308, %c96_309], %294 {strides = array<i32>} : memref<4x288xf32, #tpu.memory_space<vmem>>, vector<4x32xf32>,
    %c1_310 = arith.constant 1 : index
    %c1_311 = arith.constant 1 : index
    %c0_312 = arith.constant 0 : index
    %296 = vector.load %arg19[%c1_310, %c1_311, %c0_312] : memref<4x4x32xf32, #tpu.memory_space<vmem>>, vector<2x2x32xf32>
    %297 = vector.shape_cast %296 : vector<2x2x32xf32> to vector<4x32xf32>
    %c0_313 = arith.constant 0 : index
    %c128_314 = arith.constant 128 : index
    %298 = vector.load %arg22[%c0_313, %c128_314] : memref<4x288xf32, #tpu.memory_space<vmem>>, vector<4x32xf32>
    tpu.vector_store %arg22[%c0_313, %c128_314], %297 {strides = array<i32>} : memref<4x288xf32, #tpu.memory_space<vmem>>, vector<4x32xf32>,
    %c1_315 = arith.constant 1 : index
    %c2_316 = arith.constant 2 : index
    %c0_317 = arith.constant 0 : index
    %299 = vector.load %arg19[%c1_315, %c2_316, %c0_317] : memref<4x4x32xf32, #tpu.memory_space<vmem>>, vector<2x2x32xf32>
    %300 = vector.shape_cast %299 : vector<2x2x32xf32> to vector<4x32xf32>
    %c0_318 = arith.constant 0 : index
    %c160_319 = arith.constant 160 : index
    %301 = vector.load %arg22[%c0_318, %c160_319] : memref<4x288xf32, #tpu.memory_space<vmem>>, vector<4x32xf32>
    tpu.vector_store %arg22[%c0_318, %c160_319], %300 {strides = array<i32>} : memref<4x288xf32, #tpu.memory_space<vmem>>, vector<4x32xf32>,
    %c2_320 = arith.constant 2 : index
    %c0_321 = arith.constant 0 : index
    %c0_322 = arith.constant 0 : index
    %302 = vector.load %arg19[%c2_320, %c0_321, %c0_322] : memref<4x4x32xf32, #tpu.memory_space<vmem>>, vector<2x2x32xf32>
    %303 = vector.shape_cast %302 : vector<2x2x32xf32> to vector<4x32xf32>
    %c0_323 = arith.constant 0 : index
    %c192_324 = arith.constant 192 : index
    %304 = vector.load %arg22[%c0_323, %c192_324] : memref<4x288xf32, #tpu.memory_space<vmem>>, vector<4x32xf32>
    tpu.vector_store %arg22[%c0_323, %c192_324], %303 {strides = array<i32>} : memref<4x288xf32, #tpu.memory_space<vmem>>, vector<4x32xf32>,
    %c2_325 = arith.constant 2 : index
    %c1_326 = arith.constant 1 : index
    %c0_327 = arith.constant 0 : index
    %305 = vector.load %arg19[%c2_325, %c1_326, %c0_327] : memref<4x4x32xf32, #tpu.memory_space<vmem>>, vector<2x2x32xf32>
    %306 = vector.shape_cast %305 : vector<2x2x32xf32> to vector<4x32xf32>
    %c0_328 = arith.constant 0 : index
    %c224_329 = arith.constant 224 : index
    %307 = vector.load %arg22[%c0_328, %c224_329] : memref<4x288xf32, #tpu.memory_space<vmem>>, vector<4x32xf32>
    tpu.vector_store %arg22[%c0_328, %c224_329], %306 {strides = array<i32>} : memref<4x288xf32, #tpu.memory_space<vmem>>, vector<4x32xf32>,
    %c2_330 = arith.constant 2 : index
    %c2_331 = arith.constant 2 : index
    %c0_332 = arith.constant 0 : index
    %308 = vector.load %arg19[%c2_330, %c2_331, %c0_332] : memref<4x4x32xf32, #tpu.memory_space<vmem>>, vector<2x2x32xf32>
    %309 = vector.shape_cast %308 : vector<2x2x32xf32> to vector<4x32xf32>
    %c0_333 = arith.constant 0 : index
    %c256_334 = arith.constant 256 : index
    %310 = vector.load %arg22[%c0_333, %c256_334] : memref<4x288xf32, #tpu.memory_space<vmem>>, vector<4x32xf32>
    tpu.vector_store %arg22[%c0_333, %c256_334], %309 {strides = array<i32>} : memref<4x288xf32, #tpu.memory_space<vmem>>, vector<4x32xf32>,
    %c0_335 = arith.constant 0 : index
    %c0_336 = arith.constant 0 : index
    %311 = vector.load %arg22[%c0_335, %c0_336] : memref<4x288xf32, #tpu.memory_space<vmem>>, vector<4x288xf32>
    %cst_337 = arith.constant dense<0.000000e+00> : vector<4x32xf32>
    %312 = tpu.matmul %311, %234, %cst_337 {dimension_numbers = #tpu.dot_dimension_numbers<[1], [0], [0], [1], [0, 0, 1, 1], [], []>} : vector<4x288xf32>, vector<288x32xf32>, vector<4x32xf32> -> vector<4x32xf32>
    %313 = vector.broadcast %231 : f32 to vector<4x32xf32>
    %314 = arith.mulf %312, %313 : vector<4x32xf32>
    %315 = vector.broadcast %230 : f32 to vector<4x32xf32>
    %316 = arith.addf %314, %315 : vector<4x32xf32>
    %317 = arith.addf %316, %277 : vector<4x32xf32>
    %cst_338 = arith.constant 0.000000e+00 : f32
    %318 = vector.broadcast %cst_338 : f32 to vector<4x32xf32>
    %319 = arith.maximumf %317, %318 : vector<4x32xf32>
    %320 = vector.shape_cast %319 : vector<4x32xf32> to vector<2x2x32xf32>
    %321 = vector.shape_cast %320 : vector<2x2x32xf32> to vector<4x32xf32>
    %cst_339 = arith.constant dense<0.000000e+00> : vector<32xf32>
    %322 = vector.multi_reduction <add>, %321, %cst_339 [0] : vector<4x32xf32> to vector<32xf32>
    %323 = vector.shape_cast %322 : vector<32xf32> to vector<1x32xf32>
    %cst_340 = arith.constant 2.500000e-01 : f32
    %324 = vector.broadcast %cst_340 : f32 to vector<1x32xf32>
    %325 = arith.mulf %323, %324 : vector<1x32xf32>
    %326 = vector.shape_cast %325 : vector<1x32xf32> to vector<1x1x32xf32>
    %c0_341 = arith.constant 0 : index
    %c0_342 = arith.constant 0 : index
    %c0_343 = arith.constant 0 : index
    %327 = vector.load %arg15[%c0_341, %c0_342, %c0_343] : memref<1x1x32xf32, #tpu.memory_space<vmem>>, vector<1x1x32xf32>
    tpu.vector_store %arg15[%c0_341, %c0_342, %c0_343], %326 {strides = array<i32>} : memref<1x1x32xf32, #tpu.memory_space<vmem>>, vector<1x1x32xf32>,
    return
  }
  func.func @transform_0(%arg0: i32) -> (i32, i32, i32, i32) {
    %c0_i32 = arith.constant 0 : i32
    %c0_i32_0 = arith.constant 0 : i32
    %c0_i32_1 = arith.constant 0 : i32
    %c0_i32_2 = arith.constant 0 : i32
    return %arg0, %c0_i32, %c0_i32_0, %c0_i32_1 : i32, i32, i32, i32
  }
  func.func @transform_1(%arg0: i32) -> i32 {
    %c0_i32 = arith.constant 0 : i32
    %c0_i32_0 = arith.constant 0 : i32
    return %c0_i32 : i32
  }
  func.func @transform_2(%arg0: i32) -> (i32, i32) {
    %c0_i32 = arith.constant 0 : i32
    %c0_i32_0 = arith.constant 0 : i32
    %c0_i32_1 = arith.constant 0 : i32
    return %c0_i32, %c0_i32_0 : i32, i32
  }
  func.func @transform_3(%arg0: i32) -> (i32, i32) {
    %c0_i32 = arith.constant 0 : i32
    %c0_i32_0 = arith.constant 0 : i32
    %c0_i32_1 = arith.constant 0 : i32
    return %c0_i32, %c0_i32_0 : i32, i32
  }
  func.func @transform_4(%arg0: i32) -> (i32, i32) {
    %c0_i32 = arith.constant 0 : i32
    %c0_i32_0 = arith.constant 0 : i32
    %c0_i32_1 = arith.constant 0 : i32
    return %c0_i32, %c0_i32_0 : i32, i32
  }
  func.func @transform_5(%arg0: i32) -> (i32, i32) {
    %c0_i32 = arith.constant 0 : i32
    %c0_i32_0 = arith.constant 0 : i32
    %c0_i32_1 = arith.constant 0 : i32
    return %c0_i32, %c0_i32_0 : i32, i32
  }
  func.func @transform_6(%arg0: i32) -> (i32, i32) {
    %c0_i32 = arith.constant 0 : i32
    %c0_i32_0 = arith.constant 0 : i32
    %c0_i32_1 = arith.constant 0 : i32
    return %c0_i32, %c0_i32_0 : i32, i32
  }
  func.func @transform_7(%arg0: i32) -> (i32, i32) {
    %c0_i32 = arith.constant 0 : i32
    %c0_i32_0 = arith.constant 0 : i32
    %c0_i32_1 = arith.constant 0 : i32
    return %c0_i32, %c0_i32_0 : i32, i32
  }
  func.func @transform_8(%arg0: i32) -> (i32, i32) {
    %c0_i32 = arith.constant 0 : i32
    %c0_i32_0 = arith.constant 0 : i32
    %c0_i32_1 = arith.constant 0 : i32
    return %c0_i32, %c0_i32_0 : i32, i32
  }
  func.func @transform_9(%arg0: i32) -> (i32, i32) {
    %c0_i32 = arith.constant 0 : i32
    %c0_i32_0 = arith.constant 0 : i32
    %c0_i32_1 = arith.constant 0 : i32
    return %c0_i32, %c0_i32_0 : i32, i32
  }
  func.func @transform_10(%arg0: i32) -> (i32, i32) {
    %c0_i32 = arith.constant 0 : i32
    %c0_i32_0 = arith.constant 0 : i32
    %c0_i32_1 = arith.constant 0 : i32
    return %c0_i32, %c0_i32_0 : i32, i32
  }
  func.func @transform_11(%arg0: i32) -> (i32, i32) {
    %c0_i32 = arith.constant 0 : i32
    %c0_i32_0 = arith.constant 0 : i32
    %c0_i32_1 = arith.constant 0 : i32
    return %c0_i32, %c0_i32_0 : i32, i32
  }
  func.func @transform_12(%arg0: i32) -> (i32, i32) {
    %c0_i32 = arith.constant 0 : i32
    %c0_i32_0 = arith.constant 0 : i32
    %c0_i32_1 = arith.constant 0 : i32
    return %c0_i32, %c0_i32_0 : i32, i32
  }
  func.func @transform_13(%arg0: i32) -> (i32, i32) {
    %c0_i32 = arith.constant 0 : i32
    %c0_i32_0 = arith.constant 0 : i32
    %c0_i32_1 = arith.constant 0 : i32
    return %c0_i32, %c0_i32_0 : i32, i32
  }
  func.func @transform_14(%arg0: i32) -> (i32, i32, i32) {
    %c0_i32 = arith.constant 0 : i32
    %c0_i32_0 = arith.constant 0 : i32
    %c0_i32_1 = arith.constant 0 : i32
    return %arg0, %c0_i32, %c0_i32_0 : i32, i32, i32
  }
}

</mosaic_0001>

<llo_original>
// kernel: classify_pair.3
$region0: #{classify_pair.3}
  #allocation0 [shape = 'u32[]', space=smem, size = 0x4, offset = 0x4, fixed_abs, tag = 'smem constant byte address 0x4 - core index']
  #allocation1 [shape = 'u32[72,128]{1,0:T(1,128)}', space=vmem, size = 0x9000, scoped, tag = 'internal scratch']
  #allocation2 [shape = 'f32[1,1]{1,0:T(1,128)S(1)}', space=vmem, size = 0x200, scoped, tag = 'scoped memory for classify_pair.3']
  %s0 = inlined_call_operand.vmem [shape: f32[4,32], index: 0, kind: input, shape index: {}]
  %s1 = inlined_call_operand.vmem [shape: f32[32,1], index: 1, kind: input, shape index: {}]
  %s2 = inlined_call_operand.<no memory space> [shape: f32[1,1], index: 2, kind: input, shape index: {}]
  %s3 = inlined_call_operand.vmem [shape: f32[2,1], index: 3, kind: output, shape index: {}]
  %s4 = sld [smem:[#allocation0]]
  $region22: #{classify_pair.3} parent=0
    _
  %s6 = ssub.s32 1, %s4
  %s7 = scalar_select 0, %s6, %s4
  %v8 = vstv %s2
  %9 = vst [vmem:[#allocation2] sm:$0x1] %v8
  // Predicated region
  $region2: #{classify_pair.3} parent=0 // pred_check
    _
  $region3: #{classify_pair.3} parent=0 // pred_check_branch
    %11 = sbr.rel (0) target = $region5
  $region4: #{classify_pair.3} parent=0 // pred_region
    _
  $region5: #{classify_pair.3} parent=0 // pred_fallthru
    _
  // Predicated region
  $region6: #{classify_pair.3} parent=0 // pred_check
    _
  $region7: #{classify_pair.3} parent=0 // pred_check_branch
    %13 = sbr.rel (0) target = $region9
  $region8: #{classify_pair.3} parent=0 // pred_region
    _
  $region9: #{classify_pair.3} parent=0 // pred_fallthru
    _
  // Predicated region
  $region10: #{classify_pair.3} parent=0 // pred_check
    _
  $region11: #{classify_pair.3} parent=0 // pred_check_branch
    %15 = sbr.rel (0) target = $region13
  $region12: #{classify_pair.3} parent=0 // pred_region
    _
  $region13: #{classify_pair.3} parent=0 // pred_fallthru
    _
  %v16 = vld [vmem:[%s0] sm:$0xf]
  %v18 = vrot.slane %v16, 2
  %v20 = vsub.f32 %v16, %v18
  %v21 = vmul.f32 %v20, %v20
  %v22 = vld [vmem:[%s1] sm:$0xff]
  %v23 = vld [vmem:[%s1 + $0x8] sm:$0xff]
  %v24 = vld [vmem:[%s1 + $0x10] sm:$0xff]
  %v25 = vld [vmem:[%s1 + $0x18] sm:$0xff]
  %v26 = vld [vmem:[#allocation2] sm:$0x1]
  %v28 = vperm.slane %v26, 0
  %vm30 = vcmask 261120
  %v32 = vsel %vm30, %v21, 0
  %34 = vmatpush.msra.mxu0 0.0
  %35 = vmatpush.msra.mxu0 0.0
  %36 = vmatpush.msra.mxu0 0.0
  %37 = vmatpush.msra.mxu0 0.0
  %38 = vmatpush.msra.mxu0 0.0
  %39 = vmatpush.msra.mxu0 0.0
  %40 = vmatpush.msra.mxu0 0.0
  %41 = vmatpush.msra.mxu0 0.0
  %42 = vmatpush.msra.mxu0 0.0
  %43 = vmatpush.msra.mxu0 0.0
  %44 = vmatpush.msra.mxu0 0.0
  %45 = vmatpush.msra.mxu0 0.0
  %46 = vmatpush.msra.mxu0 %v25
  %47 = vmatpush.msra.mxu0 %v24
  %48 = vmatpush.msra.mxu0 %v23
  %49 = vmatpush.msra.mxu0 %v22
  %50 = vmatmul.f32.gmra.mxu0 %v32
  %v51 = vpop.f32.mrf.mxu0
  %v52 = vadd.f32 %v28, %v51
  %53 = vdwg.mxu0
  %vm54 = vcmask 1024
  %55 = vst.msk [vmem:[%s3] sm:$0x3] %vm54, %v52
  // Predicated region
  $region14: #{classify_pair.3} parent=0 // pred_check
    _
  $region15: #{classify_pair.3} parent=0 // pred_check_branch
    %57 = sbr.rel (0) target = $region17
  $region16: #{classify_pair.3} parent=0 // pred_region
    _
  $region17: #{classify_pair.3} parent=0 // pred_fallthru
    _
  // Predicated region
  $region18: #{classify_pair.3} parent=0 // pred_check
    _
  $region19: #{classify_pair.3} parent=0 // pred_check_branch
    %59 = sbr.rel (0) target = $region21
  $region20: #{classify_pair.3} parent=0 // pred_region
    _
  $region21: #{classify_pair.3} parent=0 // pred_fallthru
    _

// kernel: classify_pair.2
$region0: #{classify_pair.2}
  #allocation0 [shape = 'u32[]', space=smem, size = 0x4, offset = 0x4, fixed_abs, tag = 'smem constant byte address 0x4 - core index']
  #allocation1 [shape = 'u32[72,128]{1,0:T(1,128)}', space=vmem, size = 0x9000, scoped, tag = 'internal scratch']
  #allocation2 [shape = 'f32[18,18,1]{2,1,0:T(8,128)}', space=vmem, size = 0x36000, scoped, tag = 'scratch operand']
  #allocation3 [shape = 'f32[10,10,16]{2,1,0:T(8,128)}', space=vmem, size = 0x14000, scoped, tag = 'scratch operand']
  #allocation4 [shape = 'f32[6,6,32]{2,1,0:T(8,128)}', space=vmem, size = 0x6000, scoped, tag = 'scratch operand']
  #allocation5 [shape = 'f32[4,4,32]{2,1,0:T(4,128)}', space=vmem, size = 0x2000, scoped, tag = 'scratch operand']
  #allocation6 [shape = 'f32[64,144]{1,0:T(8,128)}', space=vmem, size = 0x10000, scoped, tag = 'scratch operand']
  #allocation7 [shape = 'f32[16,288]{1,0:T(8,128)}', space=vmem, size = 0x6000, scoped, tag = 'scratch operand']
  #allocation8 [shape = 'f32[4,288]{1,0:T(4,128)}', space=vmem, size = 0x1800, scoped, tag = 'scratch operand']
  %s0 = inlined_call_operand.vmem [shape: f32[4,16,16,1], index: 0, kind: input, shape index: {}]
  %s1 = inlined_call_operand.vmem [shape: f32[15], index: 1, kind: input, shape index: {}]
  %s2 = inlined_call_operand.vmem [shape: f32[64,256], index: 2, kind: input, shape index: {}]
  %s3 = inlined_call_operand.vmem [shape: f32[9,16], index: 3, kind: input, shape index: {}]
  %s4 = inlined_call_operand.vmem [shape: f32[144,16], index: 4, kind: input, shape index: {}]
  %s5 = inlined_call_operand.vmem [shape: f32[1,16], index: 5, kind: input, shape index: {}]
  %s6 = inlined_call_operand.vmem [shape: f32[16,64], index: 6, kind: input, shape index: {}]
  %s7 = inlined_call_operand.vmem [shape: f32[144,32], index: 7, kind: input, shape index: {}]
  %s8 = inlined_call_operand.vmem [shape: f32[288,32], index: 8, kind: input, shape index: {}]
  %s9 = inlined_call_operand.vmem [shape: f32[16,32], index: 9, kind: input, shape index: {}]
  %s10 = inlined_call_operand.vmem [shape: f32[4,16], index: 10, kind: input, shape index: {}]
  %s11 = inlined_call_operand.vmem [shape: f32[288,32], index: 11, kind: input, shape index: {}]
  %s12 = inlined_call_operand.vmem [shape: f32[288,32], index: 12, kind: input, shape index: {}]
  %s13 = inlined_call_operand.vmem [shape: f32[32,32], index: 13, kind: input, shape index: {}]
  %s14 = inlined_call_operand.vmem [shape: f32[4,1,32], index: 14, kind: output, shape index: {}]
  %s15 = sld [smem:[#allocation0]]
  $region93: #{classify_pair.2} parent=0
    _
  %s17 = ssub.s32 1, %s15
  %s18 = scalar_select 0, %s17, %s15
  $region1: #{classify_pair.2} parent=0
    #allocation9 [shape = 'u8[512]{0}', space=smem, size = 0x200, scoped, tag = 'input window, operand 1, single buffered']
    #allocation10 [shape = 's32[2]{0}', space=sflag, size = 0x8, scoped, tag = 'scoped memory for classify_pair.2']
    %19 = vsyncpa [#allocation10], 0
    loop: start=0, step=1, limit=6
    $region2: #{classify_pair.2} parent=1 // loop_pre_header
      _
    $region3: #{classify_pair.2} parent=1 // loop_header
      %s21 = sphi 0, %s25
      %p22 = scmp.ge.s32.totalorder %s21, 6
      %s31 = sphi 0, %s33
      %s34 = sphi 0, %s31
      %s35 = sphi 0, %s34
      %s51 = sphi 0, %s35
      %s55 = sphi 0, %s55
      %s57 = sphi 0, %s55
      %s58 = sphi 0, %s57
      %s72 = sphi 0, %s58
      %s76 = sphi 0, %s76
      %s78 = sphi 0, %s76
      %s79 = sphi 0, %s78
      %s93 = sphi 0, %s79
      %s97 = sphi 0, %s97
      %s99 = sphi 0, %s97
      %s100 = sphi 0, %s99
      %s114 = sphi 0, %s100
      %s118 = sphi 0, %s118
      %s120 = sphi 0, %s118
      %s121 = sphi 0, %s120
      %s135 = sphi 0, %s121
      %s139 = sphi 0, %s139
      %s141 = sphi 0, %s139
      %s142 = sphi 0, %s141
      %s156 = sphi 0, %s142
      %s160 = sphi 0, %s160
      %s162 = sphi 0, %s160
      %s163 = sphi 0, %s162
      %s177 = sphi 0, %s163
      %s181 = sphi 0, %s181
      %s183 = sphi 0, %s181
      %s184 = sphi 0, %s183
      %s198 = sphi 0, %s184
      %s202 = sphi 0, %s202
      %s204 = sphi 0, %s202
      %s205 = sphi 0, %s204
      %s219 = sphi 0, %s205
      %s223 = sphi 0, %s223
      %s225 = sphi 0, %s223
      %s226 = sphi 0, %s225
      %s240 = sphi 0, %s226
      %s244 = sphi 0, %s244
      %s246 = sphi 0, %s244
      %s247 = sphi 0, %s246
      %s261 = sphi 0, %s247
      %s265 = sphi 0, %s265
      %s267 = sphi 0, %s265
      %s268 = sphi 0, %s267
      %s282 = sphi 0, %s268
      %s286 = sphi 0, %s286
      %s288 = sphi 0, %s286
      %s289 = sphi 0, %s288
      %s303 = sphi 0, %s289
      %s307 = sphi 0, %s307
      %s309 = sphi 0, %s307
      %s310 = sphi 0, %s309
      %s324 = sphi 0, %s310
      %s330 = sphi 0, %s332
      %s333 = sphi 0, %s330
      %s334 = sphi 0, %s333
      %s350 = sphi 0, %s334
    $region4: #{classify_pair.2} parent=1 // loop_header_branch
      %24 = sbr.rel (%p22) target = $region8
    $region5: #{classify_pair.2} parent=1 // loop_body
      %s26 = ssub.s32 %s21, 1
      %s27 = ssub.s32 %s21, 2
      %s28 = sadd.s32 %s21, 1
      %s29 = ssub.s32 %s21, %s28
      %p30 = scmp.eq.s32.totalorder %s29, 0
      %s32 = sadd.s32 %s31, 1
      %s33 = scalar_select %p30, %s31, %s32
      %p36 = pneg %p30
      %p37 = scmp.eq.s32.totalorder %s21, 3
      %p38 = por %p36, %p37
      %p39 = scmp.ne.s32.totalorder %s31, %s34
      %p40 = scmp.eq.s32.totalorder %s21, 0
      %p41 = por %p39, %p40
      %p42 = scmp.ne.s32.totalorder %s31, %s34
      %p43 = scmp.eq.s32.totalorder %s26, 3
      %p44 = por %p42, %p43
      %p45 = scmp.ne.s32.totalorder %s34, %s35
      %p46 = scmp.eq.s32.totalorder %s26, 0
      %p47 = por %p45, %p46
      %p48 = scmp.ne.s32.totalorder %s34, %s35
      %p49 = scmp.eq.s32.totalorder %s27, 3
      %p50 = por %p48, %p49
      %p52 = scmp.ne.s32.totalorder %s35, %s51
      %p53 = scmp.eq.s32.totalorder %s27, 0
      %p54 = por %p52, %p53
      %s56 = sadd.s32 %s55, 1
      %p59 = scmp.eq.s32.totalorder %s21, 3
      %p60 = scmp.ne.s32.totalorder %s55, %s57
      %p61 = scmp.eq.s32.totalorder %s21, 0
      %p62 = por %p60, %p61
      %p63 = scmp.ne.s32.totalorder %s55, %s57
      %p64 = scmp.eq.s32.totalorder %s26, 3
      %p65 = por %p63, %p64
      %p66 = scmp.ne.s32.totalorder %s57, %s58
      %p67 = scmp.eq.s32.totalorder %s26, 0
      %p68 = por %p66, %p67
      %p69 = scmp.ne.s32.totalorder %s57, %s58
      %p70 = scmp.eq.s32.totalorder %s27, 3
      %p71 = por %p69, %p70
      %p73 = scmp.ne.s32.totalorder %s58, %s72
      %p74 = scmp.eq.s32.totalorder %s27, 0
      %p75 = por %p73, %p74
      %s77 = sadd.s32 %s76, 1
      %p80 = scmp.eq.s32.totalorder %s21, 3
      %p81 = scmp.ne.s32.totalorder %s76, %s78
      %p82 = scmp.eq.s32.totalorder %s21, 0
      %p83 = por %p81, %p82
      %p84 = scmp.ne.s32.totalorder %s76, %s78
      %p85 = scmp.eq.s32.totalorder %s26, 3
      %p86 = por %p84, %p85
      %p87 = scmp.ne.s32.totalorder %s78, %s79
      %p88 = scmp.eq.s32.totalorder %s26, 0
      %p89 = por %p87, %p88
      %p90 = scmp.ne.s32.totalorder %s78, %s79
      %p91 = scmp.eq.s32.totalorder %s27, 3
      %p92 = por %p90, %p91
      %p94 = scmp.ne.s32.totalorder %s79, %s93
      %p95 = scmp.eq.s32.totalorder %s27, 0
      %p96 = por %p94, %p95
      %s98 = sadd.s32 %s97, 1
      %p101 = scmp.eq.s32.totalorder %s21, 3
      %p102 = scmp.ne.s32.totalorder %s97, %s99
      %p103 = scmp.eq.s32.totalorder %s21, 0
      %p104 = por %p102, %p103
      %p105 = scmp.ne.s32.totalorder %s97, %s99
      %p106 = scmp.eq.s32.totalorder %s26, 3
      %p107 = por %p105, %p106
      %p108 = scmp.ne.s32.totalorder %s99, %s100
      %p109 = scmp.eq.s32.totalorder %s26, 0
      %p110 = por %p108, %p109
      %p111 = scmp.ne.s32.totalorder %s99, %s100
      %p112 = scmp.eq.s32.totalorder %s27, 3
      %p113 = por %p111, %p112
      %p115 = scmp.ne.s32.totalorder %s100, %s114
      %p116 = scmp.eq.s32.totalorder %s27, 0
      %p117 = por %p115, %p116
      %s119 = sadd.s32 %s118, 1
      %p122 = scmp.eq.s32.totalorder %s21, 3
      %p123 = scmp.ne.s32.totalorder %s118, %s120
      %p124 = scmp.eq.s32.totalorder %s21, 0
      %p125 = por %p123, %p124
      %p126 = scmp.ne.s32.totalorder %s118, %s120
      %p127 = scmp.eq.s32.totalorder %s26, 3
      %p128 = por %p126, %p127
      %p129 = scmp.ne.s32.totalorder %s120, %s121
      %p130 = scmp.eq.s32.totalorder %s26, 0
      %p131 = por %p129, %p130
      %p132 = scmp.ne.s32.totalorder %s120, %s121
      %p133 = scmp.eq.s32.totalorder %s27, 3
      %p134 = por %p132, %p133
      %p136 = scmp.ne.s32.totalorder %s121, %s135
      %p137 = scmp.eq.s32.totalorder %s27, 0
      %p138 = por %p136, %p137
      %s140 = sadd.s32 %s139, 1
      %p143 = scmp.eq.s32.totalorder %s21, 3
      %p144 = scmp.ne.s32.totalorder %s139, %s141
      %p145 = scmp.eq.s32.totalorder %s21, 0
      %p146 = por %p144, %p145
      %p147 = scmp.ne.s32.totalorder %s139, %s141
      %p148 = scmp.eq.s32.totalorder %s26, 3
      %p149 = por %p147, %p148
      %p150 = scmp.ne.s32.totalorder %s141, %s142
      %p151 = scmp.eq.s32.totalorder %s26, 0
      %p152 = por %p150, %p151
      %p153 = scmp.ne.s32.totalorder %s141, %s142
      %p154 = scmp.eq.s32.totalorder %s27, 3
      %p155 = por %p153, %p154
      %p157 = scmp.ne.s32.totalorder %s142, %s156
      %p158 = scmp.eq.s32.totalorder %s27, 0
      %p159 = por %p157, %p158
      %s161 = sadd.s32 %s160, 1
      %p164 = scmp.eq.s32.totalorder %s21, 3
      %p165 = scmp.ne.s32.totalorder %s160, %s162
      %p166 = scmp.eq.s32.totalorder %s21, 0
      %p167 = por %p165, %p166
      %p168 = scmp.ne.s32.totalorder %s160, %s162
      %p169 = scmp.eq.s32.totalorder %s26, 3
      %p170 = por %p168, %p169
      %p171 = scmp.ne.s32.totalorder %s162, %s163
      %p172 = scmp.eq.s32.totalorder %s26, 0
      %p173 = por %p171, %p172
      %p174 = scmp.ne.s32.totalorder %s162, %s163
      %p175 = scmp.eq.s32.totalorder %s27, 3
      %p176 = por %p174, %p175
      %p178 = scmp.ne.s32.totalorder %s163, %s177
      %p179 = scmp.eq.s32.totalorder %s27, 0
      %p180 = por %p178, %p179
      %s182 = sadd.s32 %s181, 1
      %p185 = scmp.eq.s32.totalorder %s21, 3
      %p186 = scmp.ne.s32.totalorder %s181, %s183
      %p187 = scmp.eq.s32.totalorder %s21, 0
      %p188 = por %p186, %p187
      %p189 = scmp.ne.s32.totalorder %s181, %s183
      %p190 = scmp.eq.s32.totalorder %s26, 3
      %p191 = por %p189, %p190
      %p192 = scmp.ne.s32.totalorder %s183, %s184
      %p193 = scmp.eq.s32.totalorder %s26, 0
      %p194 = por %p192, %p193
      %p195 = scmp.ne.s32.totalorder %s183, %s184
      %p196 = scmp.eq.s32.totalorder %s27, 3
      %p197 = por %p195, %p196
      %p199 = scmp.ne.s32.totalorder %s184, %s198
      %p200 = scmp.eq.s32.totalorder %s27, 0
      %p201 = por %p199, %p200
      %s203 = sadd.s32 %s202, 1
      %p206 = scmp.eq.s32.totalorder %s21, 3
      %p207 = scmp.ne.s32.totalorder %s202, %s204
      %p208 = scmp.eq.s32.totalorder %s21, 0
      %p209 = por %p207, %p208
      %p210 = scmp.ne.s32.totalorder %s202, %s204
      %p211 = scmp.eq.s32.totalorder %s26, 3
      %p212 = por %p210, %p211
      %p213 = scmp.ne.s32.totalorder %s204, %s205
      %p214 = scmp.eq.s32.totalorder %s26, 0
      %p215 = por %p213, %p214
      %p216 = scmp.ne.s32.totalorder %s204, %s205
      %p217 = scmp.eq.s32.totalorder %s27, 3
      %p218 = por %p216, %p217
      %p220 = scmp.ne.s32.totalorder %s205, %s219
      %p221 = scmp.eq.s32.totalorder %s27, 0
      %p222 = por %p220, %p221
      %s224 = sadd.s32 %s223, 1
      %p227 = scmp.eq.s32.totalorder %s21, 3
      %p228 = scmp.ne.s32.totalorder %s223, %s225
      %p229 = scmp.eq.s32.totalorder %s21, 0
      %p230 = por %p228, %p229
      %p231 = scmp.ne.s32.totalorder %s223, %s225
      %p232 = scmp.eq.s32.totalorder %s26, 3
      %p233 = por %p231, %p232
      %p234 = scmp.ne.s32.totalorder %s225, %s226
      %p235 = scmp.eq.s32.totalorder %s26, 0
      %p236 = por %p234, %p235
      %p237 = scmp.ne.s32.totalorder %s225, %s226
      %p238 = scmp.eq.s32.totalorder %s27, 3
      %p239 = por %p237, %p238
      %p241 = scmp.ne.s32.totalorder %s226, %s240
      %p242 = scmp.eq.s32.totalorder %s27, 0
      %p243 = por %p241, %p242
      %s245 = sadd.s32 %s244, 1
      %p248 = scmp.eq.s32.totalorder %s21, 3
      %p249 = scmp.ne.s32.totalorder %s244, %s246
      %p250 = scmp.eq.s32.totalorder %s21, 0
      %p251 = por %p249, %p250
      %p252 = scmp.ne.s32.totalorder %s244, %s246
      %p253 = scmp.eq.s32.totalorder %s26, 3
      %p254 = por %p252, %p253
      %p255 = scmp.ne.s32.totalorder %s246, %s247
      %p256 = scmp.eq.s32.totalorder %s26, 0
      %p257 = por %p255, %p256
      %p258 = scmp.ne.s32.totalorder %s246, %s247
      %p259 = scmp.eq.s32.totalorder %s27, 3
      %p260 = por %p258, %p259
      %p262 = scmp.ne.s32.totalorder %s247, %s261
      %p263 = scmp.eq.s32.totalorder %s27, 0
      %p264 = por %p262, %p263
      %s266 = sadd.s32 %s265, 1
      %p269 = scmp.eq.s32.totalorder %s21, 3
      %p270 = scmp.ne.s32.totalorder %s265, %s267
      %p271 = scmp.eq.s32.totalorder %s21, 0
      %p272 = por %p270, %p271
      %p273 = scmp.ne.s32.totalorder %s265, %s267
      %p274 = scmp.eq.s32.totalorder %s26, 3
      %p275 = por %p273, %p274
      %p276 = scmp.ne.s32.totalorder %s267, %s268
      %p277 = scmp.eq.s32.totalorder %s26, 0
      %p278 = por %p276, %p277
      %p279 = scmp.ne.s32.totalorder %s267, %s268
      %p280 = scmp.eq.s32.totalorder %s27, 3
      %p281 = por %p279, %p280
      %p283 = scmp.ne.s32.totalorder %s268, %s282
      %p284 = scmp.eq.s32.totalorder %s27, 0
      %p285 = por %p283, %p284
      %s287 = sadd.s32 %s286, 1
      %p290 = scmp.eq.s32.totalorder %s21, 3
      %p291 = scmp.ne.s32.totalorder %s286, %s288
      %p292 = scmp.eq.s32.totalorder %s21, 0
      %p293 = por %p291, %p292
      %p294 = scmp.ne.s32.totalorder %s286, %s288
      %p295 = scmp.eq.s32.totalorder %s26, 3
      %p296 = por %p294, %p295
      %p297 = scmp.ne.s32.totalorder %s288, %s289
      %p298 = scmp.eq.s32.totalorder %s26, 0
      %p299 = por %p297, %p298
      %p300 = scmp.ne.s32.totalorder %s288, %s289
      %p301 = scmp.eq.s32.totalorder %s27, 3
      %p302 = por %p300, %p301
      %p304 = scmp.ne.s32.totalorder %s289, %s303
      %p305 = scmp.eq.s32.totalorder %s27, 0
      %p306 = por %p304, %p305
      %s308 = sadd.s32 %s307, 1
      %p311 = scmp.eq.s32.totalorder %s21, 3
      %p312 = scmp.ne.s32.totalorder %s307, %s309
      %p313 = scmp.eq.s32.totalorder %s21, 0
      %p314 = por %p312, %p313
      %p315 = scmp.ne.s32.totalorder %s307, %s309
      %p316 = scmp.eq.s32.totalorder %s26, 3
      %p317 = por %p315, %p316
      %p318 = scmp.ne.s32.totalorder %s309, %s310
      %p319 = scmp.eq.s32.totalorder %s26, 0
      %p320 = por %p318, %p319
      %p321 = scmp.ne.s32.totalorder %s309, %s310
      %p322 = scmp.eq.s32.totalorder %s27, 3
      %p323 = por %p321, %p322
      %p325 = scmp.ne.s32.totalorder %s310, %s324
      %p326 = scmp.eq.s32.totalorder %s27, 0
      %p327 = por %p325, %p326
      %s328 = ssub.s32 %s21, %s28
      %p329 = scmp.eq.s32.totalorder %s328, 0
      %s331 = sadd.s32 %s330, 1
      %s332 = scalar_select %p329, %s330, %s331
      %p335 = pneg %p329
      %p336 = scmp.eq.s32.totalorder %s21, 3
      %p337 = por %p335, %p336
      %p338 = scmp.ne.s32.totalorder %s330, %s333
      %p339 = scmp.eq.s32.totalorder %s21, 0
      %p340 = por %p338, %p339
      %p341 = scmp.ne.s32.totalorder %s330, %s333
      %p342 = scmp.eq.s32.totalorder %s26, 3
      %p343 = por %p341, %p342
      %p344 = scmp.ne.s32.totalorder %s333, %s334
      %p345 = scmp.eq.s32.totalorder %s26, 0
      %p346 = por %p344, %p345
      %p347 = scmp.ne.s32.totalorder %s333, %s334
      %p348 = scmp.eq.s32.totalorder %s27, 3
      %p349 = por %p347, %p348
      %p351 = scmp.ne.s32.totalorder %s334, %s350
      %p352 = scmp.eq.s32.totalorder %s27, 0
      %p353 = por %p351, %p352
      %p354 = scmp.le.s32.totalorder 1, %s21
      %p355 = scmp.lt.s32.totalorder %s21, 5
      %p356 = pnand %p354, %p355
      %p357 = pneg %p356
      // Predicated region
      $region9: #{classify_pair.2} parent=5 // pred_check
        _
      $region10: #{classify_pair.2} parent=5 // pred_check_branch
        %359 = sbr.rel (%p356) target = $region12
      $region11: #{classify_pair.2} parent=5 // pred_region
        %s360 = ssub.s32 %s21, 1
        // Predicated region
        $region13: #{classify_pair.2} parent=11 // pred_check
          %p361 = pneg %p68
        $region14: #{classify_pair.2} parent=11 // pred_check_branch
          %363 = sbr.rel (%p361) target = $region16
        $region15: #{classify_pair.2} parent=11 // pred_region
          %365 = vsyncadd [#allocation10], 0
          %s367 = sshll.u32 %s1, 4
          %s368 = int_to_ptr.vmem [resolvable:$true] %s367
          %370 = dma.vmem_to_smem %s368, 16, [#allocation9], [#allocation10]
        $region16: #{classify_pair.2} parent=11 // pred_fallthru
          _
        // Predicated region
        $region17: #{classify_pair.2} parent=11 // pred_check
          %p371 = pneg %p89
        $region18: #{classify_pair.2} parent=11 // pred_check_branch
          %373 = sbr.rel (%p371) target = $region20
        $region19: #{classify_pair.2} parent=11 // pred_region
          _
        $region20: #{classify_pair.2} parent=11 // pred_fallthru
          _
        // Predicated region
        $region21: #{classify_pair.2} parent=11 // pred_check
          %p374 = pneg %p110
        $region22: #{classify_pair.2} parent=11 // pred_check_branch
          %376 = sbr.rel (%p374) target = $region24
        $region23: #{classify_pair.2} parent=11 // pred_region
          _
        $region24: #{classify_pair.2} parent=11 // pred_fallthru
          _
        // Predicated region
        $region25: #{classify_pair.2} parent=11 // pred_check
          %p377 = pneg %p131
        $region26: #{classify_pair.2} parent=11 // pred_check_branch
          %379 = sbr.rel (%p377) target = $region28
        $region27: #{classify_pair.2} parent=11 // pred_region
          _
        $region28: #{classify_pair.2} parent=11 // pred_fallthru
          _
        // Predicated region
        $region29: #{classify_pair.2} parent=11 // pred_check
          %p380 = pneg %p152
        $region30: #{classify_pair.2} parent=11 // pred_check_branch
          %382 = sbr.rel (%p380) target = $region32
        $region31: #{classify_pair.2} parent=11 // pred_region
          _
        $region32: #{classify_pair.2} parent=11 // pred_fallthru
          _
        // Predicated region
        $region33: #{classify_pair.2} parent=11 // pred_check
          %p383 = pneg %p173
        $region34: #{classify_pair.2} parent=11 // pred_check_branch
          %385 = sbr.rel (%p383) target = $region36
        $region35: #{classify_pair.2} parent=11 // pred_region
          _
        $region36: #{classify_pair.2} parent=11 // pred_fallthru
          _
        // Predicated region
        $region37: #{classify_pair.2} parent=11 // pred_check
          %p386 = pneg %p194
        $region38: #{classify_pair.2} parent=11 // pred_check_branch
          %388 = sbr.rel (%p386) target = $region40
        $region39: #{classify_pair.2} parent=11 // pred_region
          _
        $region40: #{classify_pair.2} parent=11 // pred_fallthru
          _
        // Predicated region
        $region41: #{classify_pair.2} parent=11 // pred_check
          %p389 = pneg %p215
        $region42: #{classify_pair.2} parent=11 // pred_check_branch
          %391 = sbr.rel (%p389) target = $region44
        $region43: #{classify_pair.2} parent=11 // pred_region
          _
        $region44: #{classify_pair.2} parent=11 // pred_fallthru
          _
        // Predicated region
        $region45: #{classify_pair.2} parent=11 // pred_check
          %p392 = pneg %p236
        $region46: #{classify_pair.2} parent=11 // pred_check_branch
          %394 = sbr.rel (%p392) target = $region48
        $region47: #{classify_pair.2} parent=11 // pred_region
          _
        $region48: #{classify_pair.2} parent=11 // pred_fallthru
          _
        // Predicated region
        $region49: #{classify_pair.2} parent=11 // pred_check
          %p395 = pneg %p257
        $region50: #{classify_pair.2} parent=11 // pred_check_branch
          %397 = sbr.rel (%p395) target = $region52
        $region51: #{classify_pair.2} parent=11 // pred_region
          _
        $region52: #{classify_pair.2} parent=11 // pred_fallthru
          _
        // Predicated region
        $region53: #{classify_pair.2} parent=11 // pred_check
          %p398 = pneg %p278
        $region54: #{classify_pair.2} parent=11 // pred_check_branch
          %400 = sbr.rel (%p398) target = $region56
        $region55: #{classify_pair.2} parent=11 // pred_region
          _
        $region56: #{classify_pair.2} parent=11 // pred_fallthru
          _
        // Predicated region
        $region57: #{classify_pair.2} parent=11 // pred_check
          %p401 = pneg %p299
        $region58: #{classify_pair.2} parent=11 // pred_check_branch
          %403 = sbr.rel (%p401) target = $region60
        $region59: #{classify_pair.2} parent=11 // pred_region
          _
        $region60: #{classify_pair.2} parent=11 // pred_fallthru
          _
        // Predicated region
        $region61: #{classify_pair.2} parent=11 // pred_check
          %p404 = pneg %p320
        $region62: #{classify_pair.2} parent=11 // pred_check_branch
          %406 = sbr.rel (%p404) target = $region64
        $region63: #{classify_pair.2} parent=11 // pred_region
          _
        $region64: #{classify_pair.2} parent=11 // pred_fallthru
          _
      $region12: #{classify_pair.2} parent=5 // pred_fallthru
        _
      %p407 = scmp.lt.s32.totalorder %s21, 4
      // Predicated region
      $region65: #{classify_pair.2} parent=5 // pred_check
        %p408 = pneg %p407
      $region66: #{classify_pair.2} parent=5 // pred_check_branch
        %410 = sbr.rel (%p408) target = $region68
      $region67: #{classify_pair.2} parent=5 // pred_region
        // Predicated region
        $region69: #{classify_pair.2} parent=67 // pred_check
          %p411 = pneg %p41
        $region70: #{classify_pair.2} parent=67 // pred_check_branch
          %413 = sbr.rel (%p411) target = $region72
        $region71: #{classify_pair.2} parent=67 // pred_region
          %p414 = scmp.lt.s32.totalorder %s21, 3
          %s415 = scalar_select %p414, %s21, 3
          %s416 = smul.addr %s415, 32
          %s417 = smul.addr %s416, 8
          %s418 = scalar_lea.vmem %s0, %s417
        $region72: #{classify_pair.2} parent=67 // pred_fallthru
          _
      $region68: #{classify_pair.2} parent=5 // pred_fallthru
        _
      %p419 = scmp.le.s32.totalorder 1, %s21
      %p420 = scmp.lt.s32.totalorder %s21, 5
      %p421 = pnand %p419, %p420
      %p422 = pneg %p421
      // Predicated region
      $region73: #{classify_pair.2} parent=5 // pred_check
        _
      $region74: #{classify_pair.2} parent=5 // pred_check_branch
        %424 = sbr.rel (%p421) target = $region76
      $region75: #{classify_pair.2} parent=5 // pred_region
        %s425 = ssub.s32 %s21, 1
        // Predicated region
        $region77: #{classify_pair.2} parent=75 // pred_check
          %p426 = pneg %p68
        $region78: #{classify_pair.2} parent=75 // pred_check_branch
          %428 = sbr.rel (%p426) target = $region80
        $region79: #{classify_pair.2} parent=75 // pred_region
          %430 = dma.done [#allocation10], 16
        $region80: #{classify_pair.2} parent=75 // pred_fallthru
          _
        %431 = sfence
        %p432 = scmp.lt.s32.totalorder %s26, 3
        %s433 = scalar_select %p432, %s26, 3
        %s434 = smul.addr %s433, 32
        %s435 = smul.addr %s434, 8
        %s436 = scalar_lea.vmem %s0, %s435
        %p437 = pneg %p47
        %p438 = pneg %p44
        %p439 = pneg %p68
        %p440 = pneg %p65
        %p441 = pneg %p89
        %p442 = pneg %p86
        %p443 = pneg %p110
        %p444 = pneg %p107
        %p445 = pneg %p131
        %p446 = pneg %p128
        %p447 = pneg %p152
        %p448 = pneg %p149
        %p449 = pneg %p173
        %p450 = pneg %p170
        %p451 = pneg %p194
        %p452 = pneg %p191
        %p453 = pneg %p215
        %p454 = pneg %p212
        %p455 = pneg %p236
        %p456 = pneg %p233
        %p457 = pneg %p257
        %p458 = pneg %p254
        %p459 = pneg %p278
        %p460 = pneg %p275
        %p461 = pneg %p299
        %p462 = pneg %p296
        %p463 = pneg %p320
        %p464 = pneg %p317
        %p465 = pneg %p346
        %p466 = pneg %p343
        %p467 = scmp.lt.s32.totalorder %s26, 3
        %s468 = scalar_select %p467, %s26, 3
        %s469 = scalar_lea.vmem %s14, %s468
        %p470 = scmp.lt.s32.totalorder %s26, 3
        %s471 = scalar_select %p470, %s26, 3
        %s472 = smul.addr %s471, 32
        %s473 = smul.addr %s472, 8
        %s474 = scalar_lea.vmem %s0, %s473
        %p475 = scmp.lt.s32.totalorder %s26, 3
        %s476 = scalar_select %p475, %s26, 3
        %s477 = scalar_lea.vmem %s14, %s476
        %v478 = vld [vmem:[%s474] sm:$0xff]
        %v479 = vld [vmem:[%s474 + $0x8] sm:$0xff]
        %v480 = vld [vmem:[%s474 + $0x10] sm:$0xff]
        %v481 = vld [vmem:[%s474 + $0x18] sm:$0xff]
        %v482 = vld [vmem:[%s474 + $0x20] sm:$0xff]
        %v483 = vld [vmem:[%s474 + $0x28] sm:$0xff]
        %v484 = vld [vmem:[%s474 + $0x30] sm:$0xff]
        %v485 = vld [vmem:[%s474 + $0x38] sm:$0xff]
        %v486 = vld [vmem:[%s474 + $0x40] sm:$0xff]
        %v487 = vld [vmem:[%s474 + $0x48] sm:$0xff]
        %v488 = vld [vmem:[%s474 + $0x50] sm:$0xff]
        %v489 = vld [vmem:[%s474 + $0x58] sm:$0xff]
        %v490 = vld [vmem:[%s474 + $0x60] sm:$0xff]
        %v491 = vld [vmem:[%s474 + $0x68] sm:$0xff]
        %v492 = vld [vmem:[%s474 + $0x70] sm:$0xff]
        %v493 = vld [vmem:[%s474 + $0x78] sm:$0xff]
        %v494 = vld [vmem:[%s474 + $0x80] sm:$0xff]
        %v495 = vld [vmem:[%s474 + $0x88] sm:$0xff]
        %v496 = vld [vmem:[%s474 + $0x90] sm:$0xff]
        %v497 = vld [vmem:[%s474 + $0x98] sm:$0xff]
        %v498 = vld [vmem:[%s474 + $0xa0] sm:$0xff]
        %v499 = vld [vmem:[%s474 + $0xa8] sm:$0xff]
        %v500 = vld [vmem:[%s474 + $0xb0] sm:$0xff]
        %v501 = vld [vmem:[%s474 + $0xb8] sm:$0xff]
        %v502 = vld [vmem:[%s474 + $0xc0] sm:$0xff]
        %v503 = vld [vmem:[%s474 + $0xc8] sm:$0xff]
        %v504 = vld [vmem:[%s474 + $0xd0] sm:$0xff]
        %v505 = vld [vmem:[%s474 + $0xd8] sm:$0xff]
        %v506 = vld [vmem:[%s474 + $0xe0] sm:$0xff]
        %v507 = vld [vmem:[%s474 + $0xe8] sm:$0xff]
        %v508 = vld [vmem:[%s474 + $0xf0] sm:$0xff]
        %v509 = vld [vmem:[%s474 + $0xf8] sm:$0xff]
        %s510 = sld [smem:[#allocation9]]
        %s511 = sld [smem:[#allocation9 + $0x1]]
        %s512 = sld [smem:[#allocation9 + $0x2]]
        %s513 = sld [smem:[#allocation9 + $0x3]]
        %s514 = sld [smem:[#allocation9 + $0x4]]
        %v515 = vld [vmem:[%s2] sm:$0xff]
        %v516 = vld [vmem:[%s2 + $0x8] sm:$0xff]
        %v517 = vld [vmem:[%s2 + $0x10] sm:$0xff]
        %v518 = vld [vmem:[%s2 + $0x18] sm:$0xff]
        %v519 = vld [vmem:[%s2 + $0x20] sm:$0xff]
        %v520 = vld [vmem:[%s2 + $0x28] sm:$0xff]
        %v521 = vld [vmem:[%s2 + $0x30] sm:$0xff]
        %v522 = vld [vmem:[%s2 + $0x38] sm:$0xff]
        %v523 = vld [vmem:[%s2 + $0x40] sm:$0xff]
        %v524 = vld [vmem:[%s2 + $0x48] sm:$0xff]
        %v525 = vld [vmem:[%s2 + $0x50] sm:$0xff]
        %v526 = vld [vmem:[%s2 + $0x58] sm:$0xff]
        %v527 = vld [vmem:[%s2 + $0x60] sm:$0xff]
        %v528 = vld [vmem:[%s2 + $0x68] sm:$0xff]
        %v529 = vld [vmem:[%s2 + $0x70] sm:$0xff]
        %v530 = vld [vmem:[%s2 + $0x78] sm:$0xff]
        %v531 = vld [vmem:[%s3] sm:$0xff]
        %v532 = vld [vmem:[%s3 + $0x8] sm:$0x1]
        %v533 = vld [vmem:[%s4] sm:$0xff]
        %v534 = vld [vmem:[%s4 + $0x8] sm:$0xff]
        %v535 = vld [vmem:[%s4 + $0x10] sm:$0xff]
        %v536 = vld [vmem:[%s4 + $0x18] sm:$0xff]
        %v537 = vld [vmem:[%s4 + $0x20] sm:$0xff]
        %v538 = vld [vmem:[%s4 + $0x28] sm:$0xff]
        %v539 = vld [vmem:[%s4 + $0x30] sm:$0xff]
        %v540 = vld [vmem:[%s4 + $0x38] sm:$0xff]
        %v541 = vld [vmem:[%s4 + $0x40] sm:$0xff]
        %v542 = vld [vmem:[%s4 + $0x48] sm:$0xff]
        %v543 = vld [vmem:[%s4 + $0x50] sm:$0xff]
        %v544 = vld [vmem:[%s4 + $0x58] sm:$0xff]
        %v545 = vld [vmem:[%s4 + $0x60] sm:$0xff]
        %v546 = vld [vmem:[%s4 + $0x68] sm:$0xff]
        %v547 = vld [vmem:[%s4 + $0x70] sm:$0xff]
        %v548 = vld [vmem:[%s4 + $0x78] sm:$0xff]
        %v549 = vld [vmem:[%s4 + $0x80] sm:$0xff]
        %v550 = vld [vmem:[%s4 + $0x88] sm:$0xff]
        %v551 = vld [vmem:[%s5] sm:$0x1]
        %v552 = vstv %s510
        %v553 = vadd.f32 %v478, %v552
        %v554 = vadd.f32 %v479, %v552
        %v555 = vadd.f32 %v480, %v552
        %v556 = vadd.f32 %v481, %v552
        %v557 = vadd.f32 %v482, %v552
        %v558 = vadd.f32 %v483, %v552
        %v559 = vadd.f32 %v484, %v552
        %v560 = vadd.f32 %v485, %v552
        %v561 = vadd.f32 %v486, %v552
        %v562 = vadd.f32 %v487, %v552
        %v563 = vadd.f32 %v488, %v552
        %v564 = vadd.f32 %v489, %v552
        %v565 = vadd.f32 %v490, %v552
        %v566 = vadd.f32 %v491, %v552
        %v567 = vadd.f32 %v492, %v552
        %v568 = vadd.f32 %v493, %v552
        %v569 = vadd.f32 %v494, %v552
        %v570 = vadd.f32 %v495, %v552
        %v571 = vadd.f32 %v496, %v552
        %v572 = vadd.f32 %v497, %v552
        %v573 = vadd.f32 %v498, %v552
        %v574 = vadd.f32 %v499, %v552
        %v575 = vadd.f32 %v500, %v552
        %v576 = vadd.f32 %v501, %v552
        %v577 = vadd.f32 %v502, %v552
        %v578 = vadd.f32 %v503, %v552
        %v579 = vadd.f32 %v504, %v552
        %v580 = vadd.f32 %v505, %v552
        %v581 = vadd.f32 %v506, %v552
        %v582 = vadd.f32 %v507, %v552
        %v583 = vadd.f32 %v508, %v552
        %v584 = vadd.f32 %v509, %v552
        %vm585 = vcmask 7168
        %586 = vst.msk [vmem:[#allocation2] sm:$0xff] %vm585, 0.0
        %587 = vst.msk [vmem:[#allocation2 + $0x8] sm:$0xff] %vm585, 0.0
        %vm588 = vcmask 1024
        %589 = vst.msk [vmem:[#allocation2 + $0x10] sm:$0x3] %vm588, 0.0
        %590 = vst.msk [vmem:[#allocation2 + $0x18] sm:$0xff] %vm585, 0.0
        %591 = vst.msk [vmem:[#allocation2 + $0x20] sm:$0xff] %vm585, 0.0
        %592 = vst.msk [vmem:[#allocation2 + $0x28] sm:$0x3] %vm588, 0.0
        %593 = vst.msk [vmem:[#allocation2 + $0x30] sm:$0xff] %vm585, 0.0
        %594 = vst.msk [vmem:[#allocation2 + $0x38] sm:$0xff] %vm585, 0.0
        %595 = vst.msk [vmem:[#allocation2 + $0x40] sm:$0x3] %vm588, 0.0
        %596 = vst.msk [vmem:[#allocation2 + $0x48] sm:$0xff] %vm585, 0.0
        %597 = vst.msk [vmem:[#allocation2 + $0x50] sm:$0xff] %vm585, 0.0
        %598 = vst.msk [vmem:[#allocation2 + $0x58] sm:$0x3] %vm588, 0.0
        %599 = vst.msk [vmem:[#allocation2 + $0x60] sm:$0xff] %vm585, 0.0
        %600 = vst.msk [vmem:[#allocation2 + $0x68] sm:$0xff] %vm585, 0.0
        %601 = vst.msk [vmem:[#allocation2 + $0x70] sm:$0x3] %vm588, 0.0
        %602 = vst.msk [vmem:[#allocation2 + $0x78] sm:$0xff] %vm585, 0.0
        %603 = vst.msk [vmem:[#allocation2 + $0x80] sm:$0xff] %vm585, 0.0
        %604 = vst.msk [vmem:[#allocation2 + $0x88] sm:$0x3] %vm588, 0.0
        %605 = vst.msk [vmem:[#allocation2 + $0x90] sm:$0xff] %vm585, 0.0
        %606 = vst.msk [vmem:[#allocation2 + $0x98] sm:$0xff] %vm585, 0.0
        %607 = vst.msk [vmem:[#allocation2 + $0xa0] sm:$0x3] %vm588, 0.0
        %608 = vst.msk [vmem:[#allocation2 + $0xa8] sm:$0xff] %vm585, 0.0
        %609 = vst.msk [vmem:[#allocation2 + $0xb0] sm:$0xff] %vm585, 0.0
        %610 = vst.msk [vmem:[#allocation2 + $0xb8] sm:$0x3] %vm588, 0.0
        %611 = vst.msk [vmem:[#allocation2 + $0xc0] sm:$0xff] %vm585, 0.0
        %612 = vst.msk [vmem:[#allocation2 + $0xc8] sm:$0xff] %vm585, 0.0
        %613 = vst.msk [vmem:[#allocation2 + $0xd0] sm:$0x3] %vm588, 0.0
        %614 = vst.msk [vmem:[#allocation2 + $0xd8] sm:$0xff] %vm585, 0.0
        %615 = vst.msk [vmem:[#allocation2 + $0xe0] sm:$0xff] %vm585, 0.0
        %616 = vst.msk [vmem:[#allocation2 + $0xe8] sm:$0x3] %vm588, 0.0
        %617 = vst.msk [vmem:[#allocation2 + $0xf0] sm:$0xff] %vm585, 0.0
        %618 = vst.msk [vmem:[#allocation2 + $0xf8] sm:$0xff] %vm585, 0.0
        %619 = vst.msk [vmem:[#allocation2 + $0x100] sm:$0x3] %vm588, 0.0
        %620 = vst.msk [vmem:[#allocation2 + $0x108] sm:$0xff] %vm585, 0.0
        %621 = vst.msk [vmem:[#allocation2 + $0x110] sm:$0xff] %vm585, 0.0
        %622 = vst.msk [vmem:[#allocation2 + $0x118] sm:$0x3] %vm588, 0.0
        %623 = vst.msk [vmem:[#allocation2 + $0x120] sm:$0xff] %vm585, 0.0
        %624 = vst.msk [vmem:[#allocation2 + $0x128] sm:$0xff] %vm585, 0.0
        %625 = vst.msk [vmem:[#allocation2 + $0x130] sm:$0x3] %vm588, 0.0
        %626 = vst.msk [vmem:[#allocation2 + $0x138] sm:$0xff] %vm585, 0.0
        %627 = vst.msk [vmem:[#allocation2 + $0x140] sm:$0xff] %vm585, 0.0
        %628 = vst.msk [vmem:[#allocation2 + $0x148] sm:$0x3] %vm588, 0.0
        %629 = vst.msk [vmem:[#allocation2 + $0x150] sm:$0xff] %vm585, 0.0
        %630 = vst.msk [vmem:[#allocation2 + $0x158] sm:$0xff] %vm585, 0.0
        %631 = vst.msk [vmem:[#allocation2 + $0x160] sm:$0x3] %vm588, 0.0
        %632 = vst.msk [vmem:[#allocation2 + $0x168] sm:$0xff] %vm585, 0.0
        %633 = vst.msk [vmem:[#allocation2 + $0x170] sm:$0xff] %vm585, 0.0
        %634 = vst.msk [vmem:[#allocation2 + $0x178] sm:$0x3] %vm588, 0.0
        %635 = vst.msk [vmem:[#allocation2 + $0x180] sm:$0xff] %vm585, 0.0
        %636 = vst.msk [vmem:[#allocation2 + $0x188] sm:$0xff] %vm585, 0.0
        %637 = vst.msk [vmem:[#allocation2 + $0x190] sm:$0x3] %vm588, 0.0
        %638 = vst.msk [vmem:[#allocation2 + $0x198] sm:$0xff] %vm585, 0.0
        %639 = vst.msk [vmem:[#allocation2 + $0x1a0] sm:$0xff] %vm585, 0.0
        %640 = vst.msk [vmem:[#allocation2 + $0x1a8] sm:$0x3] %vm588, 0.0
        %s641 = scalar_lea.vmem [#allocation2], 24
        %642 = vst.msk [vmem:[%s641 + $0x1] sm:$0xff] %vm585, %v553
        %643 = vst.msk [vmem:[%s641 + $0x9] sm:$0xff] %vm585, %v554
        %644 = vst.msk [vmem:[%s641 + $0x19] sm:$0xff] %vm585, %v555
        %645 = vst.msk [vmem:[%s641 + $0x21] sm:$0xff] %vm585, %v556
        %646 = vst.msk [vmem:[%s641 + $0x31] sm:$0xff] %vm585, %v557
        %647 = vst.msk [vmem:[%s641 + $0x39] sm:$0xff] %vm585, %v558
        %648 = vst.msk [vmem:[%s641 + $0x49] sm:$0xff] %vm585, %v559
        %649 = vst.msk [vmem:[%s641 + $0x51] sm:$0xff] %vm585, %v560
        %650 = vst.msk [vmem:[%s641 + $0x61] sm:$0xff] %vm585, %v561
        %651 = vst.msk [vmem:[%s641 + $0x69] sm:$0xff] %vm585, %v562
        %652 = vst.msk [vmem:[%s641 + $0x79] sm:$0xff] %vm585, %v563
        %653 = vst.msk [vmem:[%s641 + $0x81] sm:$0xff] %vm585, %v564
        %654 = vst.msk [vmem:[%s641 + $0x91] sm:$0xff] %vm585, %v565
        %655 = vst.msk [vmem:[%s641 + $0x99] sm:$0xff] %vm585, %v566
        %656 = vst.msk [vmem:[%s641 + $0xa9] sm:$0xff] %vm585, %v567
        %657 = vst.msk [vmem:[%s641 + $0xb1] sm:$0xff] %vm585, %v568
        %658 = vst.msk [vmem:[%s641 + $0xc1] sm:$0xff] %vm585, %v569
        %659 = vst.msk [vmem:[%s641 + $0xc9] sm:$0xff] %vm585, %v570
        %660 = vst.msk [vmem:[%s641 + $0xd9] sm:$0xff] %vm585, %v571
        %661 = vst.msk [vmem:[%s641 + $0xe1] sm:$0xff] %vm585, %v572
        %662 = vst.msk [vmem:[%s641 + $0xf1] sm:$0xff] %vm585, %v573
        %663 = vst.msk [vmem:[%s641 + $0xf9] sm:$0xff] %vm585, %v574
        %664 = vst.msk [vmem:[%s641 + $0x109] sm:$0xff] %vm585, %v575
        %665 = vst.msk [vmem:[%s641 + $0x111] sm:$0xff] %vm585, %v576
        %666 = vst.msk [vmem:[%s641 + $0x121] sm:$0xff] %vm585, %v577
        %667 = vst.msk [vmem:[%s641 + $0x129] sm:$0xff] %vm585, %v578
        %668 = vst.msk [vmem:[%s641 + $0x139] sm:$0xff] %vm585, %v579
        %669 = vst.msk [vmem:[%s641 + $0x141] sm:$0xff] %vm585, %v580
        %670 = vst.msk [vmem:[%s641 + $0x151] sm:$0xff] %vm585, %v581
        %671 = vst.msk [vmem:[%s641 + $0x159] sm:$0xff] %vm585, %v582
        %672 = vst.msk [vmem:[%s641 + $0x169] sm:$0xff] %vm585, %v583
        %673 = vst.msk [vmem:[%s641 + $0x171] sm:$0xff] %vm585, %v584
        %v674 = vld [vmem:[#allocation2] sm:$0xff]
        %v675 = vld [vmem:[#allocation2 + $0x8] sm:$0xff]
        %v676 = vld [vmem:[#allocation2 + $0x18] sm:$0xff]
        %v677 = vld [vmem:[#allocation2 + $0x20] sm:$0xff]
        %v678 = vld [vmem:[#allocation2 + $0x30] sm:$0xff]
        %v679 = vld [vmem:[#allocation2 + $0x38] sm:$0xff]
        %v680 = vld [vmem:[#allocation2 + $0x48] sm:$0xff]
        %v681 = vld [vmem:[#allocation2 + $0x50] sm:$0xff]
        %v682 = vld [vmem:[#allocation2 + $0x60] sm:$0xff]
        %v683 = vld [vmem:[#allocation2 + $0x68] sm:$0xff]
        %v684 = vld [vmem:[#allocation2 + $0x78] sm:$0xff]
        %v685 = vld [vmem:[#allocation2 + $0x80] sm:$0xff]
        %v686 = vld [vmem:[#allocation2 + $0x90] sm:$0xff]
        %v687 = vld [vmem:[#allocation2 + $0x98] sm:$0xff]
        %v688 = vld [vmem:[#allocation2 + $0xa8] sm:$0xff]
        %v689 = vld [vmem:[#allocation2 + $0xb0] sm:$0xff]
        %v690 = vld [vmem:[#allocation2 + $0xc0] sm:$0xff]
        %v691 = vld [vmem:[#allocation2 + $0xc8] sm:$0xff]
        %v692 = vld [vmem:[#allocation2 + $0xd8] sm:$0xff]
        %v693 = vld [vmem:[#allocation2 + $0xe0] sm:$0xff]
        %v694 = vld [vmem:[#allocation2 + $0xf0] sm:$0xff]
        %v695 = vld [vmem:[#allocation2 + $0xf8] sm:$0xff]
        %v696 = vld [vmem:[#allocation2 + $0x108] sm:$0xff]
        %v697 = vld [vmem:[#allocation2 + $0x110] sm:$0xff]
        %v698 = vld [vmem:[#allocation2 + $0x120] sm:$0xff]
        %v699 = vld [vmem:[#allocation2 + $0x128] sm:$0xff]
        %v700 = vld [vmem:[#allocation2 + $0x138] sm:$0xff]
        %v701 = vld [vmem:[#allocation2 + $0x140] sm:$0xff]
        %v702 = vld [vmem:[#allocation2 + $0x150] sm:$0xff]
        %v703 = vld [vmem:[#allocation2 + $0x158] sm:$0xff]
        %v704 = vld [vmem:[#allocation2 + $0x168] sm:$0xff]
        %v705 = vld [vmem:[#allocation2 + $0x170] sm:$0xff]
        %707 = vset.pattern.permute.xlu0 0
        %708 = vperm.xlu0 %707, %v674
        %v709 = vpop.permute.xlu0 %708
        %712 = vset.pattern.permute.xlu0 0
        %713 = vperm.xlu0 %712, %v675
        %v714 = vpop.permute.xlu0 %713
        %717 = vset.pattern.permute.xlu0 0
        %718 = vperm.xlu0 %717, %v676
        %v719 = vpop.permute.xlu0 %718
        %722 = vset.pattern.permute.xlu0 0
        %723 = vperm.xlu0 %722, %v677
        %v724 = vpop.permute.xlu0 %723
        %727 = vset.pattern.permute.xlu0 0
        %728 = vperm.xlu0 %727, %v678
        %v729 = vpop.permute.xlu0 %728
        %732 = vset.pattern.permute.xlu0 0
        %733 = vperm.xlu0 %732, %v679
        %v734 = vpop.permute.xlu0 %733
        %737 = vset.pattern.permute.xlu0 0
        %738 = vperm.xlu0 %737, %v680
        %v739 = vpop.permute.xlu0 %738
        %742 = vset.pattern.permute.xlu0 0
        %743 = vperm.xlu0 %742, %v681
        %v744 = vpop.permute.xlu0 %743
        %747 = vset.pattern.permute.xlu0 0
        %748 = vperm.xlu0 %747, %v682
        %v749 = vpop.permute.xlu0 %748
        %752 = vset.pattern.permute.xlu0 0
        %753 = vperm.xlu0 %752, %v683
        %v754 = vpop.permute.xlu0 %753
        %757 = vset.pattern.permute.xlu0 0
        %758 = vperm.xlu0 %757, %v684
        %v759 = vpop.permute.xlu0 %758
        %762 = vset.pattern.permute.xlu0 0
        %763 = vperm.xlu0 %762, %v685
        %v764 = vpop.permute.xlu0 %763
        %767 = vset.pattern.permute.xlu0 0
        %768 = vperm.xlu0 %767, %v686
        %v769 = vpop.permute.xlu0 %768
        %772 = vset.pattern.permute.xlu0 0
        %773 = vperm.xlu0 %772, %v687
        %v774 = vpop.permute.xlu0 %773
        %777 = vset.pattern.permute.xlu0 0
        %778 = vperm.xlu0 %777, %v688
        %v779 = vpop.permute.xlu0 %778
        %782 = vset.pattern.permute.xlu0 0
        %783 = vperm.xlu0 %782, %v689
        %v784 = vpop.permute.xlu0 %783
        %787 = vset.pattern.permute.xlu0 0
        %788 = vperm.xlu0 %787, %v690
        %v789 = vpop.permute.xlu0 %788
        %792 = vset.pattern.permute.xlu0 0
        %793 = vperm.xlu0 %792, %v691
        %v794 = vpop.permute.xlu0 %793
        %797 = vset.pattern.permute.xlu0 0
        %798 = vperm.xlu0 %797, %v692
        %v799 = vpop.permute.xlu0 %798
        %802 = vset.pattern.permute.xlu0 0
        %803 = vperm.xlu0 %802, %v693
        %v804 = vpop.permute.xlu0 %803
        %807 = vset.pattern.permute.xlu0 0
        %808 = vperm.xlu0 %807, %v694
        %v809 = vpop.permute.xlu0 %808
        %812 = vset.pattern.permute.xlu0 0
        %813 = vperm.xlu0 %812, %v695
        %v814 = vpop.permute.xlu0 %813
        %817 = vset.pattern.permute.xlu0 0
        %818 = vperm.xlu0 %817, %v696
        %v819 = vpop.permute.xlu0 %818
        %822 = vset.pattern.permute.xlu0 0
        %823 = vperm.xlu0 %822, %v697
        %v824 = vpop.permute.xlu0 %823
        %827 = vset.pattern.permute.xlu0 0
        %828 = vperm.xlu0 %827, %v698
        %v829 = vpop.permute.xlu0 %828
        %832 = vset.pattern.permute.xlu0 0
        %833 = vperm.xlu0 %832, %v699
        %v834 = vpop.permute.xlu0 %833
        %837 = vset.pattern.permute.xlu0 0
        %838 = vperm.xlu0 %837, %v700
        %v839 = vpop.permute.xlu0 %838
        %842 = vset.pattern.permute.xlu0 0
        %843 = vperm.xlu0 %842, %v701
        %v844 = vpop.permute.xlu0 %843
        %847 = vset.pattern.permute.xlu0 0
        %848 = vperm.xlu0 %847, %v702
        %v849 = vpop.permute.xlu0 %848
        %852 = vset.pattern.permute.xlu0 0
        %853 = vperm.xlu0 %852, %v703
        %v854 = vpop.permute.xlu0 %853
        %857 = vset.pattern.permute.xlu0 0
        %858 = vperm.xlu0 %857, %v704
        %v859 = vpop.permute.xlu0 %858
        %862 = vset.pattern.permute.xlu0 0
        %863 = vperm.xlu0 %862, %v705
        %v864 = vpop.permute.xlu0 %863
        %v866 = vperm.slane %v531, 0
        %v867 = vmul.f32 %v709, %v866
        %v868 = vmul.f32 %v714, %v866
        %v869 = vmul.f32 %v719, %v866
        %v870 = vmul.f32 %v724, %v866
        %v871 = vmul.f32 %v729, %v866
        %v872 = vmul.f32 %v734, %v866
        %v873 = vmul.f32 %v739, %v866
        %v874 = vmul.f32 %v744, %v866
        %v875 = vmul.f32 %v749, %v866
        %v876 = vmul.f32 %v754, %v866
        %v877 = vmul.f32 %v759, %v866
        %v878 = vmul.f32 %v764, %v866
        %v879 = vmul.f32 %v769, %v866
        %v880 = vmul.f32 %v774, %v866
        %v881 = vmul.f32 %v779, %v866
        %v882 = vmul.f32 %v784, %v866
        %v883 = vmul.f32 %v789, %v866
        %v884 = vmul.f32 %v794, %v866
        %v885 = vmul.f32 %v799, %v866
        %v886 = vmul.f32 %v804, %v866
        %v887 = vmul.f32 %v809, %v866
        %v888 = vmul.f32 %v814, %v866
        %v889 = vmul.f32 %v819, %v866
        %v890 = vmul.f32 %v824, %v866
        %v891 = vmul.f32 %v829, %v866
        %v892 = vmul.f32 %v834, %v866
        %v893 = vmul.f32 %v839, %v866
        %v894 = vmul.f32 %v844, %v866
        %v895 = vmul.f32 %v849, %v866
        %v896 = vmul.f32 %v854, %v866
        %v897 = vmul.f32 %v859, %v866
        %v898 = vmul.f32 %v864, %v866
        %v899 = vadd.f32 %v867, 0.0
        %v900 = vadd.f32 %v868, 0.0
        %v901 = vadd.f32 %v869, 0.0
        %v902 = vadd.f32 %v870, 0.0
        %v903 = vadd.f32 %v871, 0.0
        %v904 = vadd.f32 %v872, 0.0
        %v905 = vadd.f32 %v873, 0.0
        %v906 = vadd.f32 %v874, 0.0
        %v907 = vadd.f32 %v875, 0.0
        %v908 = vadd.f32 %v876, 0.0
        %v909 = vadd.f32 %v877, 0.0
        %v910 = vadd.f32 %v878, 0.0
        %v911 = vadd.f32 %v879, 0.0
        %v912 = vadd.f32 %v880, 0.0
        %v913 = vadd.f32 %v881, 0.0
        %v914 = vadd.f32 %v882, 0.0
        %v915 = vadd.f32 %v883, 0.0
        %v916 = vadd.f32 %v884, 0.0
        %v917 = vadd.f32 %v885, 0.0
        %v918 = vadd.f32 %v886, 0.0
        %v919 = vadd.f32 %v887, 0.0
        %v920 = vadd.f32 %v888, 0.0
        %v921 = vadd.f32 %v889, 0.0
        %v922 = vadd.f32 %v890, 0.0
        %v923 = vadd.f32 %v891, 0.0
        %v924 = vadd.f32 %v892, 0.0
        %v925 = vadd.f32 %v893, 0.0
        %v926 = vadd.f32 %v894, 0.0
        %v927 = vadd.f32 %v895, 0.0
        %v928 = vadd.f32 %v896, 0.0
        %v929 = vadd.f32 %v897, 0.0
        %v930 = vadd.f32 %v898, 0.0
        %v931 = vld [vmem:[#allocation2 + $0x1] sm:$0xff]
        %v932 = vld [vmem:[#allocation2 + $0x9] sm:$0xff]
        %v933 = vld [vmem:[#allocation2 + $0x19] sm:$0xff]
        %v934 = vld [vmem:[#allocation2 + $0x21] sm:$0xff]
        %v935 = vld [vmem:[#allocation2 + $0x31] sm:$0xff]
        %v936 = vld [vmem:[#allocation2 + $0x39] sm:$0xff]
        %v937 = vld [vmem:[#allocation2 + $0x49] sm:$0xff]
        %v938 = vld [vmem:[#allocation2 + $0x51] sm:$0xff]
        %v939 = vld [vmem:[#allocation2 + $0x61] sm:$0xff]
        %v940 = vld [vmem:[#allocation2 + $0x69] sm:$0xff]
        %v941 = vld [vmem:[#allocation2 + $0x79] sm:$0xff]
        %v942 = vld [vmem:[#allocation2 + $0x81] sm:$0xff]
        %v943 = vld [vmem:[#allocation2 + $0x91] sm:$0xff]
        %v944 = vld [vmem:[#allocation2 + $0x99] sm:$0xff]
        %v945 = vld [vmem:[#allocation2 + $0xa9] sm:$0xff]
        %v946 = vld [vmem:[#allocation2 + $0xb1] sm:$0xff]
        %v947 = vld [vmem:[#allocation2 + $0xc1] sm:$0xff]
        %v948 = vld [vmem:[#allocation2 + $0xc9] sm:$0xff]
        %v949 = vld [vmem:[#allocation2 + $0xd9] sm:$0xff]
        %v950 = vld [vmem:[#allocation2 + $0xe1] sm:$0xff]
        %v951 = vld [vmem:[#allocation2 + $0xf1] sm:$0xff]
        %v952 = vld [vmem:[#allocation2 + $0xf9] sm:$0xff]
        %v953 = vld [vmem:[#allocation2 + $0x109] sm:$0xff]
        %v954 = vld [vmem:[#allocation2 + $0x111] sm:$0xff]
        %v955 = vld [vmem:[#allocation2 + $0x121] sm:$0xff]
        %v956 = vld [vmem:[#allocation2 + $0x129] sm:$0xff]
        %v957 = vld [vmem:[#allocation2 + $0x139] sm:$0xff]
        %v958 = vld [vmem:[#allocation2 + $0x141] sm:$0xff]
        %v959 = vld [vmem:[#allocation2 + $0x151] sm:$0xff]
        %v960 = vld [vmem:[#allocation2 + $0x159] sm:$0xff]
        %v961 = vld [vmem:[#allocation2 + $0x169] sm:$0xff]
        %v962 = vld [vmem:[#allocation2 + $0x171] sm:$0xff]
        %964 = vset.pattern.permute.xlu0 0
        %965 = vperm.xlu0 %964, %v931
        %v966 = vpop.permute.xlu0 %965
        %969 = vset.pattern.permute.xlu0 0
        %970 = vperm.xlu0 %969, %v932
        %v971 = vpop.permute.xlu0 %970
        %974 = vset.pattern.permute.xlu0 0
        %975 = vperm.xlu0 %974, %v933
        %v976 = vpop.permute.xlu0 %975
        %979 = vset.pattern.permute.xlu0 0
        %980 = vperm.xlu0 %979, %v934
        %v981 = vpop.permute.xlu0 %980
        %984 = vset.pattern.permute.xlu0 0
        %985 = vperm.xlu0 %984, %v935
        %v986 = vpop.permute.xlu0 %985
        %989 = vset.pattern.permute.xlu0 0
        %990 = vperm.xlu0 %989, %v936
        %v991 = vpop.permute.xlu0 %990
        %994 = vset.pattern.permute.xlu0 0
        %995 = vperm.xlu0 %994, %v937
        %v996 = vpop.permute.xlu0 %995
        %999 = vset.pattern.permute.xlu0 0
        %1000 = vperm.xlu0 %999, %v938
        %v1001 = vpop.permute.xlu0 %1000
        %1004 = vset.pattern.permute.xlu0 0
        %1005 = vperm.xlu0 %1004, %v939
        %v1006 = vpop.permute.xlu0 %1005
        %1009 = vset.pattern.permute.xlu0 0
        %1010 = vperm.xlu0 %1009, %v940
        %v1011 = vpop.permute.xlu0 %1010
        %1014 = vset.pattern.permute.xlu0 0
        %1015 = vperm.xlu0 %1014, %v941
        %v1016 = vpop.permute.xlu0 %1015
        %1019 = vset.pattern.permute.xlu0 0
        %1020 = vperm.xlu0 %1019, %v942
        %v1021 = vpop.permute.xlu0 %1020
        %1024 = vset.pattern.permute.xlu0 0
        %1025 = vperm.xlu0 %1024, %v943
        %v1026 = vpop.permute.xlu0 %1025
        %1029 = vset.pattern.permute.xlu0 0
        %1030 = vperm.xlu0 %1029, %v944
        %v1031 = vpop.permute.xlu0 %1030
        %1034 = vset.pattern.permute.xlu0 0
        %1035 = vperm.xlu0 %1034, %v945
        %v1036 = vpop.permute.xlu0 %1035
        %1039 = vset.pattern.permute.xlu0 0
        %1040 = vperm.xlu0 %1039, %v946
        %v1041 = vpop.permute.xlu0 %1040
        %1044 = vset.pattern.permute.xlu0 0
        %1045 = vperm.xlu0 %1044, %v947
        %v1046 = vpop.permute.xlu0 %1045
        %1049 = vset.pattern.permute.xlu0 0
        %1050 = vperm.xlu0 %1049, %v948
        %v1051 = vpop.permute.xlu0 %1050
        %1054 = vset.pattern.permute.xlu0 0
        %1055 = vperm.xlu0 %1054, %v949
        %v1056 = vpop.permute.xlu0 %1055
        %1059 = vset.pattern.permute.xlu0 0
        %1060 = vperm.xlu0 %1059, %v950
        %v1061 = vpop.permute.xlu0 %1060
        %1064 = vset.pattern.permute.xlu0 0
        %1065 = vperm.xlu0 %1064, %v951
        %v1066 = vpop.permute.xlu0 %1065
        %1069 = vset.pattern.permute.xlu0 0
        %1070 = vperm.xlu0 %1069, %v952
        %v1071 = vpop.permute.xlu0 %1070
        %1074 = vset.pattern.permute.xlu0 0
        %1075 = vperm.xlu0 %1074, %v953
        %v1076 = vpop.permute.xlu0 %1075
        %1079 = vset.pattern.permute.xlu0 0
        %1080 = vperm.xlu0 %1079, %v954
        %v1081 = vpop.permute.xlu0 %1080
        %1084 = vset.pattern.permute.xlu0 0
        %1085 = vperm.xlu0 %1084, %v955
        %v1086 = vpop.permute.xlu0 %1085
        %1089 = vset.pattern.permute.xlu0 0
        %1090 = vperm.xlu0 %1089, %v956
        %v1091 = vpop.permute.xlu0 %1090
        %1094 = vset.pattern.permute.xlu0 0
        %1095 = vperm.xlu0 %1094, %v957
        %v1096 = vpop.permute.xlu0 %1095
        %1099 = vset.pattern.permute.xlu0 0
        %1100 = vperm.xlu0 %1099, %v958
        %v1101 = vpop.permute.xlu0 %1100
        %1104 = vset.pattern.permute.xlu0 0
        %1105 = vperm.xlu0 %1104, %v959
        %v1106 = vpop.permute.xlu0 %1105
        %1109 = vset.pattern.permute.xlu0 0
        %1110 = vperm.xlu0 %1109, %v960
        %v1111 = vpop.permute.xlu0 %1110
        %1114 = vset.pattern.permute.xlu0 0
        %1115 = vperm.xlu0 %1114, %v961
        %v1116 = vpop.permute.xlu0 %1115
        %1119 = vset.pattern.permute.xlu0 0
        %1120 = vperm.xlu0 %1119, %v962
        %v1121 = vpop.permute.xlu0 %1120
        %v1123 = vperm.slane %v531, 1
        %v1124 = vmul.f32 %v966, %v1123
        %v1125 = vmul.f32 %v971, %v1123
        %v1126 = vmul.f32 %v976, %v1123
        %v1127 = vmul.f32 %v981, %v1123
        %v1128 = vmul.f32 %v986, %v1123
        %v1129 = vmul.f32 %v991, %v1123
        %v1130 = vmul.f32 %v996, %v1123
        %v1131 = vmul.f32 %v1001, %v1123
        %v1132 = vmul.f32 %v1006, %v1123
        %v1133 = vmul.f32 %v1011, %v1123
        %v1134 = vmul.f32 %v1016, %v1123
        %v1135 = vmul.f32 %v1021, %v1123
        %v1136 = vmul.f32 %v1026, %v1123
        %v1137 = vmul.f32 %v1031, %v1123
        %v1138 = vmul.f32 %v1036, %v1123
        %v1139 = vmul.f32 %v1041, %v1123
        %v1140 = vmul.f32 %v1046, %v1123
        %v1141 = vmul.f32 %v1051, %v1123
        %v1142 = vmul.f32 %v1056, %v1123
        %v1143 = vmul.f32 %v1061, %v1123
        %v1144 = vmul.f32 %v1066, %v1123
        %v1145 = vmul.f32 %v1071, %v1123
        %v1146 = vmul.f32 %v1076, %v1123
        %v1147 = vmul.f32 %v1081, %v1123
        %v1148 = vmul.f32 %v1086, %v1123
        %v1149 = vmul.f32 %v1091, %v1123
        %v1150 = vmul.f32 %v1096, %v1123
        %v1151 = vmul.f32 %v1101, %v1123
        %v1152 = vmul.f32 %v1106, %v1123
        %v1153 = vmul.f32 %v1111, %v1123
        %v1154 = vmul.f32 %v1116, %v1123
        %v1155 = vmul.f32 %v1121, %v1123
        %v1156 = vadd.f32 %v899, %v1124
        %v1157 = vadd.f32 %v900, %v1125
        %v1158 = vadd.f32 %v901, %v1126
        %v1159 = vadd.f32 %v902, %v1127
        %v1160 = vadd.f32 %v903, %v1128
        %v1161 = vadd.f32 %v904, %v1129
        %v1162 = vadd.f32 %v905, %v1130
        %v1163 = vadd.f32 %v906, %v1131
        %v1164 = vadd.f32 %v907, %v1132
        %v1165 = vadd.f32 %v908, %v1133
        %v1166 = vadd.f32 %v909, %v1134
        %v1167 = vadd.f32 %v910, %v1135
        %v1168 = vadd.f32 %v911, %v1136
        %v1169 = vadd.f32 %v912, %v1137
        %v1170 = vadd.f32 %v913, %v1138
        %v1171 = vadd.f32 %v914, %v1139
        %v1172 = vadd.f32 %v915, %v1140
        %v1173 = vadd.f32 %v916, %v1141
        %v1174 = vadd.f32 %v917, %v1142
        %v1175 = vadd.f32 %v918, %v1143
        %v1176 = vadd.f32 %v919, %v1144
        %v1177 = vadd.f32 %v920, %v1145
        %v1178 = vadd.f32 %v921, %v1146
        %v1179 = vadd.f32 %v922, %v1147
        %v1180 = vadd.f32 %v923, %v1148
        %v1181 = vadd.f32 %v924, %v1149
        %v1182 = vadd.f32 %v925, %v1150
        %v1183 = vadd.f32 %v926, %v1151
        %v1184 = vadd.f32 %v927, %v1152
        %v1185 = vadd.f32 %v928, %v1153
        %v1186 = vadd.f32 %v929, %v1154
        %v1187 = vadd.f32 %v930, %v1155
        %v1188 = vld [vmem:[#allocation2 + $0x2] sm:$0xff]
        %v1189 = vld [vmem:[#allocation2 + $0xa] sm:$0xff]
        %v1190 = vld [vmem:[#allocation2 + $0x1a] sm:$0xff]
        %v1191 = vld [vmem:[#allocation2 + $0x22] sm:$0xff]
        %v1192 = vld [vmem:[#allocation2 + $0x32] sm:$0xff]
        %v1193 = vld [vmem:[#allocation2 + $0x3a] sm:$0xff]
        %v1194 = vld [vmem:[#allocation2 + $0x4a] sm:$0xff]
        %v1195 = vld [vmem:[#allocation2 + $0x52] sm:$0xff]
        %v1196 = vld [vmem:[#allocation2 + $0x62] sm:$0xff]
        %v1197 = vld [vmem:[#allocation2 + $0x6a] sm:$0xff]
        %v1198 = vld [vmem:[#allocation2 + $0x7a] sm:$0xff]
        %v1199 = vld [vmem:[#allocation2 + $0x82] sm:$0xff]
        %v1200 = vld [vmem:[#allocation2 + $0x92] sm:$0xff]
        %v1201 = vld [vmem:[#allocation2 + $0x9a] sm:$0xff]
        %v1202 = vld [vmem:[#allocation2 + $0xaa] sm:$0xff]
        %v1203 = vld [vmem:[#allocation2 + $0xb2] sm:$0xff]
        %v1204 = vld [vmem:[#allocation2 + $0xc2] sm:$0xff]
        %v1205 = vld [vmem:[#allocation2 + $0xca] sm:$0xff]
        %v1206 = vld [vmem:[#allocation2 + $0xda] sm:$0xff]
        %v1207 = vld [vmem:[#allocation2 + $0xe2] sm:$0xff]
        %v1208 = vld [vmem:[#allocation2 + $0xf2] sm:$0xff]
        %v1209 = vld [vmem:[#allocation2 + $0xfa] sm:$0xff]
        %v1210 = vld [vmem:[#allocation2 + $0x10a] sm:$0xff]
        %v1211 = vld [vmem:[#allocation2 + $0x112] sm:$0xff]
        %v1212 = vld [vmem:[#allocation2 + $0x122] sm:$0xff]
        %v1213 = vld [vmem:[#allocation2 + $0x12a] sm:$0xff]
        %v1214 = vld [vmem:[#allocation2 + $0x13a] sm:$0xff]
        %v1215 = vld [vmem:[#allocation2 + $0x142] sm:$0xff]
        %v1216 = vld [vmem:[#allocation2 + $0x152] sm:$0xff]
        %v1217 = vld [vmem:[#allocation2 + $0x15a] sm:$0xff]
        %v1218 = vld [vmem:[#allocation2 + $0x16a] sm:$0xff]
        %v1219 = vld [vmem:[#allocation2 + $0x172] sm:$0xff]
        %1221 = vset.pattern.permute.xlu0 0
        %1222 = vperm.xlu0 %1221, %v1188
        %v1223 = vpop.permute.xlu0 %1222
        %1226 = vset.pattern.permute.xlu0 0
        %1227 = vperm.xlu0 %1226, %v1189
        %v1228 = vpop.permute.xlu0 %1227
        %1231 = vset.pattern.permute.xlu0 0
        %1232 = vperm.xlu0 %1231, %v1190
        %v1233 = vpop.permute.xlu0 %1232
        %1236 = vset.pattern.permute.xlu0 0
        %1237 = vperm.xlu0 %1236, %v1191
        %v1238 = vpop.permute.xlu0 %1237
        %1241 = vset.pattern.permute.xlu0 0
        %1242 = vperm.xlu0 %1241, %v1192
        %v1243 = vpop.permute.xlu0 %1242
        %1246 = vset.pattern.permute.xlu0 0
        %1247 = vperm.xlu0 %1246, %v1193
        %v1248 = vpop.permute.xlu0 %1247
        %1251 = vset.pattern.permute.xlu0 0
        %1252 = vperm.xlu0 %1251, %v1194
        %v1253 = vpop.permute.xlu0 %1252
        %1256 = vset.pattern.permute.xlu0 0
        %1257 = vperm.xlu0 %1256, %v1195
        %v1258 = vpop.permute.xlu0 %1257
        %1261 = vset.pattern.permute.xlu0 0
        %1262 = vperm.xlu0 %1261, %v1196
        %v1263 = vpop.permute.xlu0 %1262
        %1266 = vset.pattern.permute.xlu0 0
        %1267 = vperm.xlu0 %1266, %v1197
        %v1268 = vpop.permute.xlu0 %1267
        %1271 = vset.pattern.permute.xlu0 0
        %1272 = vperm.xlu0 %1271, %v1198
        %v1273 = vpop.permute.xlu0 %1272
        %1276 = vset.pattern.permute.xlu0 0
        %1277 = vperm.xlu0 %1276, %v1199
        %v1278 = vpop.permute.xlu0 %1277
        %1281 = vset.pattern.permute.xlu0 0
        %1282 = vperm.xlu0 %1281, %v1200
        %v1283 = vpop.permute.xlu0 %1282
        %1286 = vset.pattern.permute.xlu0 0
        %1287 = vperm.xlu0 %1286, %v1201
        %v1288 = vpop.permute.xlu0 %1287
        %1291 = vset.pattern.permute.xlu0 0
        %1292 = vperm.xlu0 %1291, %v1202
        %v1293 = vpop.permute.xlu0 %1292
        %1296 = vset.pattern.permute.xlu0 0
        %1297 = vperm.xlu0 %1296, %v1203
        %v1298 = vpop.permute.xlu0 %1297
        %1301 = vset.pattern.permute.xlu0 0
        %1302 = vperm.xlu0 %1301, %v1204
        %v1303 = vpop.permute.xlu0 %1302
        %1306 = vset.pattern.permute.xlu0 0
        %1307 = vperm.xlu0 %1306, %v1205
        %v1308 = vpop.permute.xlu0 %1307
        %1311 = vset.pattern.permute.xlu0 0
        %1312 = vperm.xlu0 %1311, %v1206
        %v1313 = vpop.permute.xlu0 %1312
        %1316 = vset.pattern.permute.xlu0 0
        %1317 = vperm.xlu0 %1316, %v1207
        %v1318 = vpop.permute.xlu0 %1317
        %1321 = vset.pattern.permute.xlu0 0
        %1322 = vperm.xlu0 %1321, %v1208
        %v1323 = vpop.permute.xlu0 %1322
        %1326 = vset.pattern.permute.xlu0 0
        %1327 = vperm.xlu0 %1326, %v1209
        %v1328 = vpop.permute.xlu0 %1327
        %1331 = vset.pattern.permute.xlu0 0
        %1332 = vperm.xlu0 %1331, %v1210
        %v1333 = vpop.permute.xlu0 %1332
        %1336 = vset.pattern.permute.xlu0 0
        %1337 = vperm.xlu0 %1336, %v1211
        %v1338 = vpop.permute.xlu0 %1337
        %1341 = vset.pattern.permute.xlu0 0
        %1342 = vperm.xlu0 %1341, %v1212
        %v1343 = vpop.permute.xlu0 %1342
        %1346 = vset.pattern.permute.xlu0 0
        %1347 = vperm.xlu0 %1346, %v1213
        %v1348 = vpop.permute.xlu0 %1347
        %1351 = vset.pattern.permute.xlu0 0
        %1352 = vperm.xlu0 %1351, %v1214
        %v1353 = vpop.permute.xlu0 %1352
        %1356 = vset.pattern.permute.xlu0 0
        %1357 = vperm.xlu0 %1356, %v1215
        %v1358 = vpop.permute.xlu0 %1357
        %1361 = vset.pattern.permute.xlu0 0
        %1362 = vperm.xlu0 %1361, %v1216
        %v1363 = vpop.permute.xlu0 %1362
        %1366 = vset.pattern.permute.xlu0 0
        %1367 = vperm.xlu0 %1366, %v1217
        %v1368 = vpop.permute.xlu0 %1367
        %1371 = vset.pattern.permute.xlu0 0
        %1372 = vperm.xlu0 %1371, %v1218
        %v1373 = vpop.permute.xlu0 %1372
        %1376 = vset.pattern.permute.xlu0 0
        %1377 = vperm.xlu0 %1376, %v1219
        %v1378 = vpop.permute.xlu0 %1377
        %v1380 = vperm.slane %v531, 2
        %v1381 = vmul.f32 %v1223, %v1380
        %v1382 = vmul.f32 %v1228, %v1380
        %v1383 = vmul.f32 %v1233, %v1380
        %v1384 = vmul.f32 %v1238, %v1380
        %v1385 = vmul.f32 %v1243, %v1380
        %v1386 = vmul.f32 %v1248, %v1380
        %v1387 = vmul.f32 %v1253, %v1380
        %v1388 = vmul.f32 %v1258, %v1380
        %v1389 = vmul.f32 %v1263, %v1380
        %v1390 = vmul.f32 %v1268, %v1380
        %v1391 = vmul.f32 %v1273, %v1380
        %v1392 = vmul.f32 %v1278, %v1380
        %v1393 = vmul.f32 %v1283, %v1380
        %v1394 = vmul.f32 %v1288, %v1380
        %v1395 = vmul.f32 %v1293, %v1380
        %v1396 = vmul.f32 %v1298, %v1380
        %v1397 = vmul.f32 %v1303, %v1380
        %v1398 = vmul.f32 %v1308, %v1380
        %v1399 = vmul.f32 %v1313, %v1380
        %v1400 = vmul.f32 %v1318, %v1380
        %v1401 = vmul.f32 %v1323, %v1380
        %v1402 = vmul.f32 %v1328, %v1380
        %v1403 = vmul.f32 %v1333, %v1380
        %v1404 = vmul.f32 %v1338, %v1380
        %v1405 = vmul.f32 %v1343, %v1380
        %v1406 = vmul.f32 %v1348, %v1380
        %v1407 = vmul.f32 %v1353, %v1380
        %v1408 = vmul.f32 %v1358, %v1380
        %v1409 = vmul.f32 %v1363, %v1380
        %v1410 = vmul.f32 %v1368, %v1380
        %v1411 = vmul.f32 %v1373, %v1380
        %v1412 = vmul.f32 %v1378, %v1380
        %v1413 = vadd.f32 %v1156, %v1381
        %v1414 = vadd.f32 %v1157, %v1382
        %v1415 = vadd.f32 %v1158, %v1383
        %v1416 = vadd.f32 %v1159, %v1384
        %v1417 = vadd.f32 %v1160, %v1385
        %v1418 = vadd.f32 %v1161, %v1386
        %v1419 = vadd.f32 %v1162, %v1387
        %v1420 = vadd.f32 %v1163, %v1388
        %v1421 = vadd.f32 %v1164, %v1389
        %v1422 = vadd.f32 %v1165, %v1390
        %v1423 = vadd.f32 %v1166, %v1391
        %v1424 = vadd.f32 %v1167, %v1392
        %v1425 = vadd.f32 %v1168, %v1393
        %v1426 = vadd.f32 %v1169, %v1394
        %v1427 = vadd.f32 %v1170, %v1395
        %v1428 = vadd.f32 %v1171, %v1396
        %v1429 = vadd.f32 %v1172, %v1397
        %v1430 = vadd.f32 %v1173, %v1398
        %v1431 = vadd.f32 %v1174, %v1399
        %v1432 = vadd.f32 %v1175, %v1400
        %v1433 = vadd.f32 %v1176, %v1401
        %v1434 = vadd.f32 %v1177, %v1402
        %v1435 = vadd.f32 %v1178, %v1403
        %v1436 = vadd.f32 %v1179, %v1404
        %v1437 = vadd.f32 %v1180, %v1405
        %v1438 = vadd.f32 %v1181, %v1406
        %v1439 = vadd.f32 %v1182, %v1407
        %v1440 = vadd.f32 %v1183, %v1408
        %v1441 = vadd.f32 %v1184, %v1409
        %v1442 = vadd.f32 %v1185, %v1410
        %v1443 = vadd.f32 %v1186, %v1411
        %v1444 = vadd.f32 %v1187, %v1412
        %v1445 = vld [vmem:[%s641] sm:$0xff]
        %v1446 = vld [vmem:[%s641 + $0x8] sm:$0xff]
        %v1447 = vld [vmem:[%s641 + $0x18] sm:$0xff]
        %v1448 = vld [vmem:[%s641 + $0x20] sm:$0xff]
        %v1449 = vld [vmem:[%s641 + $0x30] sm:$0xff]
        %v1450 = vld [vmem:[%s641 + $0x38] sm:$0xff]
        %v1451 = vld [vmem:[%s641 + $0x48] sm:$0xff]
        %v1452 = vld [vmem:[%s641 + $0x50] sm:$0xff]
        %v1453 = vld [vmem:[%s641 + $0x60] sm:$0xff]
        %v1454 = vld [vmem:[%s641 + $0x68] sm:$0xff]
        %v1455 = vld [vmem:[%s641 + $0x78] sm:$0xff]
        %v1456 = vld [vmem:[%s641 + $0x80] sm:$0xff]
        %v1457 = vld [vmem:[%s641 + $0x90] sm:$0xff]
        %v1458 = vld [vmem:[%s641 + $0x98] sm:$0xff]
        %v1459 = vld [vmem:[%s641 + $0xa8] sm:$0xff]
        %v1460 = vld [vmem:[%s641 + $0xb0] sm:$0xff]
        %v1461 = vld [vmem:[%s641 + $0xc0] sm:$0xff]
        %v1462 = vld [vmem:[%s641 + $0xc8] sm:$0xff]
        %v1463 = vld [vmem:[%s641 + $0xd8] sm:$0xff]
        %v1464 = vld [vmem:[%s641 + $0xe0] sm:$0xff]
        %v1465 = vld [vmem:[%s641 + $0xf0] sm:$0xff]
        %v1466 = vld [vmem:[%s641 + $0xf8] sm:$0xff]
        %v1467 = vld [vmem:[%s641 + $0x108] sm:$0xff]
        %v1468 = vld [vmem:[%s641 + $0x110] sm:$0xff]
        %v1469 = vld [vmem:[%s641 + $0x120] sm:$0xff]
        %v1470 = vld [vmem:[%s641 + $0x128] sm:$0xff]
        %v1471 = vld [vmem:[%s641 + $0x138] sm:$0xff]
        %v1472 = vld [vmem:[%s641 + $0x140] sm:$0xff]
        %v1473 = vld [vmem:[%s641 + $0x150] sm:$0xff]
        %v1474 = vld [vmem:[%s641 + $0x158] sm:$0xff]
        %v1475 = vld [vmem:[%s641 + $0x168] sm:$0xff]
        %v1476 = vld [vmem:[%s641 + $0x170] sm:$0xff]
        %1478 = vset.pattern.permute.xlu0 0
        %1479 = vperm.xlu0 %1478, %v1445
        %v1480 = vpop.permute.xlu0 %1479
        %1483 = vset.pattern.permute.xlu0 0
        %1484 = vperm.xlu0 %1483, %v1446
        %v1485 = vpop.permute.xlu0 %1484
        %1488 = vset.pattern.permute.xlu0 0
        %1489 = vperm.xlu0 %1488, %v1447
        %v1490 = vpop.permute.xlu0 %1489
        %1493 = vset.pattern.permute.xlu0 0
        %1494 = vperm.xlu0 %1493, %v1448
        %v1495 = vpop.permute.xlu0 %1494
        %1498 = vset.pattern.permute.xlu0 0
        %1499 = vperm.xlu0 %1498, %v1449
        %v1500 = vpop.permute.xlu0 %1499
        %1503 = vset.pattern.permute.xlu0 0
        %1504 = vperm.xlu0 %1503, %v1450
        %v1505 = vpop.permute.xlu0 %1504
        %1508 = vset.pattern.permute.xlu0 0
        %1509 = vperm.xlu0 %1508, %v1451
        %v1510 = vpop.permute.xlu0 %1509
        %1513 = vset.pattern.permute.xlu0 0
        %1514 = vperm.xlu0 %1513, %v1452
        %v1515 = vpop.permute.xlu0 %1514
        %1518 = vset.pattern.permute.xlu0 0
        %1519 = vperm.xlu0 %1518, %v1453
        %v1520 = vpop.permute.xlu0 %1519
        %1523 = vset.pattern.permute.xlu0 0
        %1524 = vperm.xlu0 %1523, %v1454
        %v1525 = vpop.permute.xlu0 %1524
        %1528 = vset.pattern.permute.xlu0 0
        %1529 = vperm.xlu0 %1528, %v1455
        %v1530 = vpop.permute.xlu0 %1529
        %1533 = vset.pattern.permute.xlu0 0
        %1534 = vperm.xlu0 %1533, %v1456
        %v1535 = vpop.permute.xlu0 %1534
        %1538 = vset.pattern.permute.xlu0 0
        %1539 = vperm.xlu0 %1538, %v1457
        %v1540 = vpop.permute.xlu0 %1539
        %1543 = vset.pattern.permute.xlu0 0
        %1544 = vperm.xlu0 %1543, %v1458
        %v1545 = vpop.permute.xlu0 %1544
        %1548 = vset.pattern.permute.xlu0 0
        %1549 = vperm.xlu0 %1548, %v1459
        %v1550 = vpop.permute.xlu0 %1549
        %1553 = vset.pattern.permute.xlu0 0
        %1554 = vperm.xlu0 %1553, %v1460
        %v1555 = vpop.permute.xlu0 %1554
        %1558 = vset.pattern.permute.xlu0 0
        %1559 = vperm.xlu0 %1558, %v1461
        %v1560 = vpop.permute.xlu0 %1559
        %1563 = vset.pattern.permute.xlu0 0
        %1564 = vperm.xlu0 %1563, %v1462
        %v1565 = vpop.permute.xlu0 %1564
        %1568 = vset.pattern.permute.xlu0 0
        %1569 = vperm.xlu0 %1568, %v1463
        %v1570 = vpop.permute.xlu0 %1569
        %1573 = vset.pattern.permute.xlu0 0
        %1574 = vperm.xlu0 %1573, %v1464
        %v1575 = vpop.permute.xlu0 %1574
        %1578 = vset.pattern.permute.xlu0 0
        %1579 = vperm.xlu0 %1578, %v1465
        %v1580 = vpop.permute.xlu0 %1579
        %1583 = vset.pattern.permute.xlu0 0
        %1584 = vperm.xlu0 %1583, %v1466
        %v1585 = vpop.permute.xlu0 %1584
        %1588 = vset.pattern.permute.xlu0 0
        %1589 = vperm.xlu0 %1588, %v1467
        %v1590 = vpop.permute.xlu0 %1589
        %1593 = vset.pattern.permute.xlu0 0
        %1594 = vperm.xlu0 %1593, %v1468
        %v1595 = vpop.permute.xlu0 %1594
        %1598 = vset.pattern.permute.xlu0 0
        %1599 = vperm.xlu0 %1598, %v1469
        %v1600 = vpop.permute.xlu0 %1599
        %1603 = vset.pattern.permute.xlu0 0
        %1604 = vperm.xlu0 %1603, %v1470
        %v1605 = vpop.permute.xlu0 %1604
        %1608 = vset.pattern.permute.xlu0 0
        %1609 = vperm.xlu0 %1608, %v1471
        %v1610 = vpop.permute.xlu0 %1609
        %1613 = vset.pattern.permute.xlu0 0
        %1614 = vperm.xlu0 %1613, %v1472
        %v1615 = vpop.permute.xlu0 %1614
        %1618 = vset.pattern.permute.xlu0 0
        %1619 = vperm.xlu0 %1618, %v1473
        %v1620 = vpop.permute.xlu0 %1619
        %1623 = vset.pattern.permute.xlu0 0
        %1624 = vperm.xlu0 %1623, %v1474
        %v1625 = vpop.permute.xlu0 %1624
        %1628 = vset.pattern.permute.xlu0 0
        %1629 = vperm.xlu0 %1628, %v1475
        %v1630 = vpop.permute.xlu0 %1629
        %1633 = vset.pattern.permute.xlu0 0
        %1634 = vperm.xlu0 %1633, %v1476
        %v1635 = vpop.permute.xlu0 %1634
        %v1637 = vperm.slane %v531, 3
        %v1638 = vmul.f32 %v1480, %v1637
        %v1639 = vmul.f32 %v1485, %v1637
        %v1640 = vmul.f32 %v1490, %v1637
        %v1641 = vmul.f32 %v1495, %v1637
        %v1642 = vmul.f32 %v1500, %v1637
        %v1643 = vmul.f32 %v1505, %v1637
        %v1644 = vmul.f32 %v1510, %v1637
        %v1645 = vmul.f32 %v1515, %v1637
        %v1646 = vmul.f32 %v1520, %v1637
        %v1647 = vmul.f32 %v1525, %v1637
        %v1648 = vmul.f32 %v1530, %v1637
        %v1649 = vmul.f32 %v1535, %v1637
        %v1650 = vmul.f32 %v1540, %v1637
        %v1651 = vmul.f32 %v1545, %v1637
        %v1652 = vmul.f32 %v1550, %v1637
        %v1653 = vmul.f32 %v1555, %v1637
        %v1654 = vmul.f32 %v1560, %v1637
        %v1655 = vmul.f32 %v1565, %v1637
        %v1656 = vmul.f32 %v1570, %v1637
        %v1657 = vmul.f32 %v1575, %v1637
        %v1658 = vmul.f32 %v1580, %v1637
        %v1659 = vmul.f32 %v1585, %v1637
        %v1660 = vmul.f32 %v1590, %v1637
        %v1661 = vmul.f32 %v1595, %v1637
        %v1662 = vmul.f32 %v1600, %v1637
        %v1663 = vmul.f32 %v1605, %v1637
        %v1664 = vmul.f32 %v1610, %v1637
        %v1665 = vmul.f32 %v1615, %v1637
        %v1666 = vmul.f32 %v1620, %v1637
        %v1667 = vmul.f32 %v1625, %v1637
        %v1668 = vmul.f32 %v1630, %v1637
        %v1669 = vmul.f32 %v1635, %v1637
        %v1670 = vadd.f32 %v1413, %v1638
        %v1671 = vadd.f32 %v1414, %v1639
        %v1672 = vadd.f32 %v1415, %v1640
        %v1673 = vadd.f32 %v1416, %v1641
        %v1674 = vadd.f32 %v1417, %v1642
        %v1675 = vadd.f32 %v1418, %v1643
        %v1676 = vadd.f32 %v1419, %v1644
        %v1677 = vadd.f32 %v1420, %v1645
        %v1678 = vadd.f32 %v1421, %v1646
        %v1679 = vadd.f32 %v1422, %v1647
        %v1680 = vadd.f32 %v1423, %v1648
        %v1681 = vadd.f32 %v1424, %v1649
        %v1682 = vadd.f32 %v1425, %v1650
        %v1683 = vadd.f32 %v1426, %v1651
        %v1684 = vadd.f32 %v1427, %v1652
        %v1685 = vadd.f32 %v1428, %v1653
        %v1686 = vadd.f32 %v1429, %v1654
        %v1687 = vadd.f32 %v1430, %v1655
        %v1688 = vadd.f32 %v1431, %v1656
        %v1689 = vadd.f32 %v1432, %v1657
        %v1690 = vadd.f32 %v1433, %v1658
        %v1691 = vadd.f32 %v1434, %v1659
        %v1692 = vadd.f32 %v1435, %v1660
        %v1693 = vadd.f32 %v1436, %v1661
        %v1694 = vadd.f32 %v1437, %v1662
        %v1695 = vadd.f32 %v1438, %v1663
        %v1696 = vadd.f32 %v1439, %v1664
        %v1697 = vadd.f32 %v1440, %v1665
        %v1698 = vadd.f32 %v1441, %v1666
        %v1699 = vadd.f32 %v1442, %v1667
        %v1700 = vadd.f32 %v1443, %v1668
        %v1701 = vadd.f32 %v1444, %v1669
        %v1702 = vld [vmem:[%s641 + $0x1] sm:$0xff]
        %v1703 = vld [vmem:[%s641 + $0x9] sm:$0xff]
        %v1704 = vld [vmem:[%s641 + $0x19] sm:$0xff]
        %v1705 = vld [vmem:[%s641 + $0x21] sm:$0xff]
        %v1706 = vld [vmem:[%s641 + $0x31] sm:$0xff]
        %v1707 = vld [vmem:[%s641 + $0x39] sm:$0xff]
        %v1708 = vld [vmem:[%s641 + $0x49] sm:$0xff]
        %v1709 = vld [vmem:[%s641 + $0x51] sm:$0xff]
        %v1710 = vld [vmem:[%s641 + $0x61] sm:$0xff]
        %v1711 = vld [vmem:[%s641 + $0x69] sm:$0xff]
        %v1712 = vld [vmem:[%s641 + $0x79] sm:$0xff]
        %v1713 = vld [vmem:[%s641 + $0x81] sm:$0xff]
        %v1714 = vld [vmem:[%s641 + $0x91] sm:$0xff]
        %v1715 = vld [vmem:[%s641 + $0x99] sm:$0xff]
        %v1716 = vld [vmem:[%s641 + $0xa9] sm:$0xff]
        %v1717 = vld [vmem:[%s641 + $0xb1] sm:$0xff]
        %v1718 = vld [vmem:[%s641 + $0xc1] sm:$0xff]
        %v1719 = vld [vmem:[%s641 + $0xc9] sm:$0xff]
        %v1720 = vld [vmem:[%s641 + $0xd9] sm:$0xff]
        %v1721 = vld [vmem:[%s641 + $0xe1] sm:$0xff]
        %v1722 = vld [vmem:[%s641 + $0xf1] sm:$0xff]
        %v1723 = vld [vmem:[%s641 + $0xf9] sm:$0xff]
        %v1724 = vld [vmem:[%s641 + $0x109] sm:$0xff]
        %v1725 = vld [vmem:[%s641 + $0x111] sm:$0xff]
        %v1726 = vld [vmem:[%s641 + $0x121] sm:$0xff]
        %v1727 = vld [vmem:[%s641 + $0x129] sm:$0xff]
        %v1728 = vld [vmem:[%s641 + $0x139] sm:$0xff]
        %v1729 = vld [vmem:[%s641 + $0x141] sm:$0xff]
        %v1730 = vld [vmem:[%s641 + $0x151] sm:$0xff]
        %v1731 = vld [vmem:[%s641 + $0x159] sm:$0xff]
        %v1732 = vld [vmem:[%s641 + $0x169] sm:$0xff]
        %v1733 = vld [vmem:[%s641 + $0x171] sm:$0xff]
        %1735 = vset.pattern.permute.xlu0 0
        %1736 = vperm.xlu0 %1735, %v1702
        %v1737 = vpop.permute.xlu0 %1736
        %1740 = vset.pattern.permute.xlu0 0
        %1741 = vperm.xlu0 %1740, %v1703
        %v1742 = vpop.permute.xlu0 %1741
        %1745 = vset.pattern.permute.xlu0 0
        %1746 = vperm.xlu0 %1745, %v1704
        %v1747 = vpop.permute.xlu0 %1746
        %1750 = vset.pattern.permute.xlu0 0
        %1751 = vperm.xlu0 %1750, %v1705
        %v1752 = vpop.permute.xlu0 %1751
        %1755 = vset.pattern.permute.xlu0 0
        %1756 = vperm.xlu0 %1755, %v1706
        %v1757 = vpop.permute.xlu0 %1756
        %1760 = vset.pattern.permute.xlu0 0
        %1761 = vperm.xlu0 %1760, %v1707
        %v1762 = vpop.permute.xlu0 %1761
        %1765 = vset.pattern.permute.xlu0 0
        %1766 = vperm.xlu0 %1765, %v1708
        %v1767 = vpop.permute.xlu0 %1766
        %1770 = vset.pattern.permute.xlu0 0
        %1771 = vperm.xlu0 %1770, %v1709
        %v1772 = vpop.permute.xlu0 %1771
        %1775 = vset.pattern.permute.xlu0 0
        %1776 = vperm.xlu0 %1775, %v1710
        %v1777 = vpop.permute.xlu0 %1776
        %1780 = vset.pattern.permute.xlu0 0
        %1781 = vperm.xlu0 %1780, %v1711
        %v1782 = vpop.permute.xlu0 %1781
        %1785 = vset.pattern.permute.xlu0 0
        %1786 = vperm.xlu0 %1785, %v1712
        %v1787 = vpop.permute.xlu0 %1786
        %1790 = vset.pattern.permute.xlu0 0
        %1791 = vperm.xlu0 %1790, %v1713
        %v1792 = vpop.permute.xlu0 %1791
        %1795 = vset.pattern.permute.xlu0 0
        %1796 = vperm.xlu0 %1795, %v1714
        %v1797 = vpop.permute.xlu0 %1796
        %1800 = vset.pattern.permute.xlu0 0
        %1801 = vperm.xlu0 %1800, %v1715
        %v1802 = vpop.permute.xlu0 %1801
        %1805 = vset.pattern.permute.xlu0 0
        %1806 = vperm.xlu0 %1805, %v1716
        %v1807 = vpop.permute.xlu0 %1806
        %1810 = vset.pattern.permute.xlu0 0
        %1811 = vperm.xlu0 %1810, %v1717
        %v1812 = vpop.permute.xlu0 %1811
        %1815 = vset.pattern.permute.xlu0 0
        %1816 = vperm.xlu0 %1815, %v1718
        %v1817 = vpop.permute.xlu0 %1816
        %1820 = vset.pattern.permute.xlu0 0
        %1821 = vperm.xlu0 %1820, %v1719
        %v1822 = vpop.permute.xlu0 %1821
        %1825 = vset.pattern.permute.xlu0 0
        %1826 = vperm.xlu0 %1825, %v1720
        %v1827 = vpop.permute.xlu0 %1826
        %1830 = vset.pattern.permute.xlu0 0
        %1831 = vperm.xlu0 %1830, %v1721
        %v1832 = vpop.permute.xlu0 %1831
        %1835 = vset.pattern.permute.xlu0 0
        %1836 = vperm.xlu0 %1835, %v1722
        %v1837 = vpop.permute.xlu0 %1836
        %1840 = vset.pattern.permute.xlu0 0
        %1841 = vperm.xlu0 %1840, %v1723
        %v1842 = vpop.permute.xlu0 %1841
        %1845 = vset.pattern.permute.xlu0 0
        %1846 = vperm.xlu0 %1845, %v1724
        %v1847 = vpop.permute.xlu0 %1846
        %1850 = vset.pattern.permute.xlu0 0
        %1851 = vperm.xlu0 %1850, %v1725
        %v1852 = vpop.permute.xlu0 %1851
        %1855 = vset.pattern.permute.xlu0 0
        %1856 = vperm.xlu0 %1855, %v1726
        %v1857 = vpop.permute.xlu0 %1856
        %1860 = vset.pattern.permute.xlu0 0
        %1861 = vperm.xlu0 %1860, %v1727
        %v1862 = vpop.permute.xlu0 %1861
        %1865 = vset.pattern.permute.xlu0 0
        %1866 = vperm.xlu0 %1865, %v1728
        %v1867 = vpop.permute.xlu0 %1866
        %1870 = vset.pattern.permute.xlu0 0
        %1871 = vperm.xlu0 %1870, %v1729
        %v1872 = vpop.permute.xlu0 %1871
        %1875 = vset.pattern.permute.xlu0 0
        %1876 = vperm.xlu0 %1875, %v1730
        %v1877 = vpop.permute.xlu0 %1876
        %1880 = vset.pattern.permute.xlu0 0
        %1881 = vperm.xlu0 %1880, %v1731
        %v1882 = vpop.permute.xlu0 %1881
        %1885 = vset.pattern.permute.xlu0 0
        %1886 = vperm.xlu0 %1885, %v1732
        %v1887 = vpop.permute.xlu0 %1886
        %1890 = vset.pattern.permute.xlu0 0
        %1891 = vperm.xlu0 %1890, %v1733
        %v1892 = vpop.permute.xlu0 %1891
        %v1894 = vperm.slane %v531, 4
        %v1895 = vmul.f32 %v1737, %v1894
        %v1896 = vmul.f32 %v1742, %v1894
        %v1897 = vmul.f32 %v1747, %v1894
        %v1898 = vmul.f32 %v1752, %v1894
        %v1899 = vmul.f32 %v1757, %v1894
        %v1900 = vmul.f32 %v1762, %v1894
        %v1901 = vmul.f32 %v1767, %v1894
        %v1902 = vmul.f32 %v1772, %v1894
        %v1903 = vmul.f32 %v1777, %v1894
        %v1904 = vmul.f32 %v1782, %v1894
        %v1905 = vmul.f32 %v1787, %v1894
        %v1906 = vmul.f32 %v1792, %v1894
        %v1907 = vmul.f32 %v1797, %v1894
        %v1908 = vmul.f32 %v1802, %v1894
        %v1909 = vmul.f32 %v1807, %v1894
        %v1910 = vmul.f32 %v1812, %v1894
        %v1911 = vmul.f32 %v1817, %v1894
        %v1912 = vmul.f32 %v1822, %v1894
        %v1913 = vmul.f32 %v1827, %v1894
        %v1914 = vmul.f32 %v1832, %v1894
        %v1915 = vmul.f32 %v1837, %v1894
        %v1916 = vmul.f32 %v1842, %v1894
        %v1917 = vmul.f32 %v1847, %v1894
        %v1918 = vmul.f32 %v1852, %v1894
        %v1919 = vmul.f32 %v1857, %v1894
        %v1920 = vmul.f32 %v1862, %v1894
        %v1921 = vmul.f32 %v1867, %v1894
        %v1922 = vmul.f32 %v1872, %v1894
        %v1923 = vmul.f32 %v1877, %v1894
        %v1924 = vmul.f32 %v1882, %v1894
        %v1925 = vmul.f32 %v1887, %v1894
        %v1926 = vmul.f32 %v1892, %v1894
        %v1927 = vadd.f32 %v1670, %v1895
        %v1928 = vadd.f32 %v1671, %v1896
        %v1929 = vadd.f32 %v1672, %v1897
        %v1930 = vadd.f32 %v1673, %v1898
        %v1931 = vadd.f32 %v1674, %v1899
        %v1932 = vadd.f32 %v1675, %v1900
        %v1933 = vadd.f32 %v1676, %v1901
        %v1934 = vadd.f32 %v1677, %v1902
        %v1935 = vadd.f32 %v1678, %v1903
        %v1936 = vadd.f32 %v1679, %v1904
        %v1937 = vadd.f32 %v1680, %v1905
        %v1938 = vadd.f32 %v1681, %v1906
        %v1939 = vadd.f32 %v1682, %v1907
        %v1940 = vadd.f32 %v1683, %v1908
        %v1941 = vadd.f32 %v1684, %v1909
        %v1942 = vadd.f32 %v1685, %v1910
        %v1943 = vadd.f32 %v1686, %v1911
        %v1944 = vadd.f32 %v1687, %v1912
        %v1945 = vadd.f32 %v1688, %v1913
        %v1946 = vadd.f32 %v1689, %v1914
        %v1947 = vadd.f32 %v1690, %v1915
        %v1948 = vadd.f32 %v1691, %v1916
        %v1949 = vadd.f32 %v1692, %v1917
        %v1950 = vadd.f32 %v1693, %v1918
        %v1951 = vadd.f32 %v1694, %v1919
        %v1952 = vadd.f32 %v1695, %v1920
        %v1953 = vadd.f32 %v1696, %v1921
        %v1954 = vadd.f32 %v1697, %v1922
        %v1955 = vadd.f32 %v1698, %v1923
        %v1956 = vadd.f32 %v1699, %v1924
        %v1957 = vadd.f32 %v1700, %v1925
        %v1958 = vadd.f32 %v1701, %v1926
        %v1959 = vld [vmem:[%s641 + $0x2] sm:$0xff]
        %v1960 = vld [vmem:[%s641 + $0xa] sm:$0xff]
        %v1961 = vld [vmem:[%s641 + $0x1a] sm:$0xff]
        %v1962 = vld [vmem:[%s641 + $0x22] sm:$0xff]
        %v1963 = vld [vmem:[%s641 + $0x32] sm:$0xff]
        %v1964 = vld [vmem:[%s641 + $0x3a] sm:$0xff]
        %v1965 = vld [vmem:[%s641 + $0x4a] sm:$0xff]
        %v1966 = vld [vmem:[%s641 + $0x52] sm:$0xff]
        %v1967 = vld [vmem:[%s641 + $0x62] sm:$0xff]
        %v1968 = vld [vmem:[%s641 + $0x6a] sm:$0xff]
        %v1969 = vld [vmem:[%s641 + $0x7a] sm:$0xff]
        %v1970 = vld [vmem:[%s641 + $0x82] sm:$0xff]
        %v1971 = vld [vmem:[%s641 + $0x92] sm:$0xff]
        %v1972 = vld [vmem:[%s641 + $0x9a] sm:$0xff]
        %v1973 = vld [vmem:[%s641 + $0xaa] sm:$0xff]
        %v1974 = vld [vmem:[%s641 + $0xb2] sm:$0xff]
        %v1975 = vld [vmem:[%s641 + $0xc2] sm:$0xff]
        %v1976 = vld [vmem:[%s641 + $0xca] sm:$0xff]
        %v1977 = vld [vmem:[%s641 + $0xda] sm:$0xff]
        %v1978 = vld [vmem:[%s641 + $0xe2] sm:$0xff]
        %v1979 = vld [vmem:[%s641 + $0xf2] sm:$0xff]
        %v1980 = vld [vmem:[%s641 + $0xfa] sm:$0xff]
        %v1981 = vld [vmem:[%s641 + $0x10a] sm:$0xff]
        %v1982 = vld [vmem:[%s641 + $0x112] sm:$0xff]
        %v1983 = vld [vmem:[%s641 + $0x122] sm:$0xff]
        %v1984 = vld [vmem:[%s641 + $0x12a] sm:$0xff]
        %v1985 = vld [vmem:[%s641 + $0x13a] sm:$0xff]
        %v1986 = vld [vmem:[%s641 + $0x142] sm:$0xff]
        %v1987 = vld [vmem:[%s641 + $0x152] sm:$0xff]
        %v1988 = vld [vmem:[%s641 + $0x15a] sm:$0xff]
        %v1989 = vld [vmem:[%s641 + $0x16a] sm:$0xff]
        %v1990 = vld [vmem:[%s641 + $0x172] sm:$0xff]
        %1992 = vset.pattern.permute.xlu0 0
        %1993 = vperm.xlu0 %1992, %v1959
        %v1994 = vpop.permute.xlu0 %1993
        %1997 = vset.pattern.permute.xlu0 0
        %1998 = vperm.xlu0 %1997, %v1960
        %v1999 = vpop.permute.xlu0 %1998
        %2002 = vset.pattern.permute.xlu0 0
        %2003 = vperm.xlu0 %2002, %v1961
        %v2004 = vpop.permute.xlu0 %2003
        %2007 = vset.pattern.permute.xlu0 0
        %2008 = vperm.xlu0 %2007, %v1962
        %v2009 = vpop.permute.xlu0 %2008
        %2012 = vset.pattern.permute.xlu0 0
        %2013 = vperm.xlu0 %2012, %v1963
        %v2014 = vpop.permute.xlu0 %2013
        %2017 = vset.pattern.permute.xlu0 0
        %2018 = vperm.xlu0 %2017, %v1964
        %v2019 = vpop.permute.xlu0 %2018
        %2022 = vset.pattern.permute.xlu0 0
        %2023 = vperm.xlu0 %2022, %v1965
        %v2024 = vpop.permute.xlu0 %2023
        %2027 = vset.pattern.permute.xlu0 0
        %2028 = vperm.xlu0 %2027, %v1966
        %v2029 = vpop.permute.xlu0 %2028
        %2032 = vset.pattern.permute.xlu0 0
        %2033 = vperm.xlu0 %2032, %v1967
        %v2034 = vpop.permute.xlu0 %2033
        %2037 = vset.pattern.permute.xlu0 0
        %2038 = vperm.xlu0 %2037, %v1968
        %v2039 = vpop.permute.xlu0 %2038
        %2042 = vset.pattern.permute.xlu0 0
        %2043 = vperm.xlu0 %2042, %v1969
        %v2044 = vpop.permute.xlu0 %2043
        %2047 = vset.pattern.permute.xlu0 0
        %2048 = vperm.xlu0 %2047, %v1970
        %v2049 = vpop.permute.xlu0 %2048
        %2052 = vset.pattern.permute.xlu0 0
        %2053 = vperm.xlu0 %2052, %v1971
        %v2054 = vpop.permute.xlu0 %2053
        %2057 = vset.pattern.permute.xlu0 0
        %2058 = vperm.xlu0 %2057, %v1972
        %v2059 = vpop.permute.xlu0 %2058
        %2062 = vset.pattern.permute.xlu0 0
        %2063 = vperm.xlu0 %2062, %v1973
        %v2064 = vpop.permute.xlu0 %2063
        %2067 = vset.pattern.permute.xlu0 0
        %2068 = vperm.xlu0 %2067, %v1974
        %v2069 = vpop.permute.xlu0 %2068
        %2072 = vset.pattern.permute.xlu0 0
        %2073 = vperm.xlu0 %2072, %v1975
        %v2074 = vpop.permute.xlu0 %2073
        %2077 = vset.pattern.permute.xlu0 0
        %2078 = vperm.xlu0 %2077, %v1976
        %v2079 = vpop.permute.xlu0 %2078
        %2082 = vset.pattern.permute.xlu0 0
        %2083 = vperm.xlu0 %2082, %v1977
        %v2084 = vpop.permute.xlu0 %2083
        %2087 = vset.pattern.permute.xlu0 0
        %2088 = vperm.xlu0 %2087, %v1978
        %v2089 = vpop.permute.xlu0 %2088
        %2092 = vset.pattern.permute.xlu0 0
        %2093 = vperm.xlu0 %2092, %v1979
        %v2094 = vpop.permute.xlu0 %2093
        %2097 = vset.pattern.permute.xlu0 0
        %2098 = vperm.xlu0 %2097, %v1980
        %v2099 = vpop.permute.xlu0 %2098
        %2102 = vset.pattern.permute.xlu0 0
        %2103 = vperm.xlu0 %2102, %v1981
        %v2104 = vpop.permute.xlu0 %2103
        %2107 = vset.pattern.permute.xlu0 0
        %2108 = vperm.xlu0 %2107, %v1982
        %v2109 = vpop.permute.xlu0 %2108
        %2112 = vset.pattern.permute.xlu0 0
        %2113 = vperm.xlu0 %2112, %v1983
        %v2114 = vpop.permute.xlu0 %2113
        %2117 = vset.pattern.permute.xlu0 0
        %2118 = vperm.xlu0 %2117, %v1984
        %v2119 = vpop.permute.xlu0 %2118
        %2122 = vset.pattern.permute.xlu0 0
        %2123 = vperm.xlu0 %2122, %v1985
        %v2124 = vpop.permute.xlu0 %2123
        %2127 = vset.pattern.permute.xlu0 0
        %2128 = vperm.xlu0 %2127, %v1986
        %v2129 = vpop.permute.xlu0 %2128
        %2132 = vset.pattern.permute.xlu0 0
        %2133 = vperm.xlu0 %2132, %v1987
        %v2134 = vpop.permute.xlu0 %2133
        %2137 = vset.pattern.permute.xlu0 0
        %2138 = vperm.xlu0 %2137, %v1988
        %v2139 = vpop.permute.xlu0 %2138
        %2142 = vset.pattern.permute.xlu0 0
        %2143 = vperm.xlu0 %2142, %v1989
        %v2144 = vpop.permute.xlu0 %2143
        %2147 = vset.pattern.permute.xlu0 0
        %2148 = vperm.xlu0 %2147, %v1990
        %v2149 = vpop.permute.xlu0 %2148
        %v2151 = vperm.slane %v531, 5
        %v2152 = vmul.f32 %v1994, %v2151
        %v2153 = vmul.f32 %v1999, %v2151
        %v2154 = vmul.f32 %v2004, %v2151
        %v2155 = vmul.f32 %v2009, %v2151
        %v2156 = vmul.f32 %v2014, %v2151
        %v2157 = vmul.f32 %v2019, %v2151
        %v2158 = vmul.f32 %v2024, %v2151
        %v2159 = vmul.f32 %v2029, %v2151
        %v2160 = vmul.f32 %v2034, %v2151
        %v2161 = vmul.f32 %v2039, %v2151
        %v2162 = vmul.f32 %v2044, %v2151
        %v2163 = vmul.f32 %v2049, %v2151
        %v2164 = vmul.f32 %v2054, %v2151
        %v2165 = vmul.f32 %v2059, %v2151
        %v2166 = vmul.f32 %v2064, %v2151
        %v2167 = vmul.f32 %v2069, %v2151
        %v2168 = vmul.f32 %v2074, %v2151
        %v2169 = vmul.f32 %v2079, %v2151
        %v2170 = vmul.f32 %v2084, %v2151
        %v2171 = vmul.f32 %v2089, %v2151
        %v2172 = vmul.f32 %v2094, %v2151
        %v2173 = vmul.f32 %v2099, %v2151
        %v2174 = vmul.f32 %v2104, %v2151
        %v2175 = vmul.f32 %v2109, %v2151
        %v2176 = vmul.f32 %v2114, %v2151
        %v2177 = vmul.f32 %v2119, %v2151
        %v2178 = vmul.f32 %v2124, %v2151
        %v2179 = vmul.f32 %v2129, %v2151
        %v2180 = vmul.f32 %v2134, %v2151
        %v2181 = vmul.f32 %v2139, %v2151
        %v2182 = vmul.f32 %v2144, %v2151
        %v2183 = vmul.f32 %v2149, %v2151
        %v2184 = vadd.f32 %v1927, %v2152
        %v2185 = vadd.f32 %v1928, %v2153
        %v2186 = vadd.f32 %v1929, %v2154
        %v2187 = vadd.f32 %v1930, %v2155
        %v2188 = vadd.f32 %v1931, %v2156
        %v2189 = vadd.f32 %v1932, %v2157
        %v2190 = vadd.f32 %v1933, %v2158
        %v2191 = vadd.f32 %v1934, %v2159
        %v2192 = vadd.f32 %v1935, %v2160
        %v2193 = vadd.f32 %v1936, %v2161
        %v2194 = vadd.f32 %v1937, %v2162
        %v2195 = vadd.f32 %v1938, %v2163
        %v2196 = vadd.f32 %v1939, %v2164
        %v2197 = vadd.f32 %v1940, %v2165
        %v2198 = vadd.f32 %v1941, %v2166
        %v2199 = vadd.f32 %v1942, %v2167
        %v2200 = vadd.f32 %v1943, %v2168
        %v2201 = vadd.f32 %v1944, %v2169
        %v2202 = vadd.f32 %v1945, %v2170
        %v2203 = vadd.f32 %v1946, %v2171
        %v2204 = vadd.f32 %v1947, %v2172
        %v2205 = vadd.f32 %v1948, %v2173
        %v2206 = vadd.f32 %v1949, %v2174
        %v2207 = vadd.f32 %v1950, %v2175
        %v2208 = vadd.f32 %v1951, %v2176
        %v2209 = vadd.f32 %v1952, %v2177
        %v2210 = vadd.f32 %v1953, %v2178
        %v2211 = vadd.f32 %v1954, %v2179
        %v2212 = vadd.f32 %v1955, %v2180
        %v2213 = vadd.f32 %v1956, %v2181
        %v2214 = vadd.f32 %v1957, %v2182
        %v2215 = vadd.f32 %v1958, %v2183
        %s2216 = scalar_lea.vmem [#allocation2], 48
        %v2217 = vld [vmem:[%s2216] sm:$0xff]
        %v2218 = vld [vmem:[%s2216 + $0x8] sm:$0xff]
        %v2219 = vld [vmem:[%s2216 + $0x18] sm:$0xff]
        %v2220 = vld [vmem:[%s2216 + $0x20] sm:$0xff]
        %v2221 = vld [vmem:[%s2216 + $0x30] sm:$0xff]
        %v2222 = vld [vmem:[%s2216 + $0x38] sm:$0xff]
        %v2223 = vld [vmem:[%s2216 + $0x48] sm:$0xff]
        %v2224 = vld [vmem:[%s2216 + $0x50] sm:$0xff]
        %v2225 = vld [vmem:[%s2216 + $0x60] sm:$0xff]
        %v2226 = vld [vmem:[%s2216 + $0x68] sm:$0xff]
        %v2227 = vld [vmem:[%s2216 + $0x78] sm:$0xff]
        %v2228 = vld [vmem:[%s2216 + $0x80] sm:$0xff]
        %v2229 = vld [vmem:[%s2216 + $0x90] sm:$0xff]
        %v2230 = vld [vmem:[%s2216 + $0x98] sm:$0xff]
        %v2231 = vld [vmem:[%s2216 + $0xa8] sm:$0xff]
        %v2232 = vld [vmem:[%s2216 + $0xb0] sm:$0xff]
        %v2233 = vld [vmem:[%s2216 + $0xc0] sm:$0xff]
        %v2234 = vld [vmem:[%s2216 + $0xc8] sm:$0xff]
        %v2235 = vld [vmem:[%s2216 + $0xd8] sm:$0xff]
        %v2236 = vld [vmem:[%s2216 + $0xe0] sm:$0xff]
        %v2237 = vld [vmem:[%s2216 + $0xf0] sm:$0xff]
        %v2238 = vld [vmem:[%s2216 + $0xf8] sm:$0xff]
        %v2239 = vld [vmem:[%s2216 + $0x108] sm:$0xff]
        %v2240 = vld [vmem:[%s2216 + $0x110] sm:$0xff]
        %v2241 = vld [vmem:[%s2216 + $0x120] sm:$0xff]
        %v2242 = vld [vmem:[%s2216 + $0x128] sm:$0xff]
        %v2243 = vld [vmem:[%s2216 + $0x138] sm:$0xff]
        %v2244 = vld [vmem:[%s2216 + $0x140] sm:$0xff]
        %v2245 = vld [vmem:[%s2216 + $0x150] sm:$0xff]
        %v2246 = vld [vmem:[%s2216 + $0x158] sm:$0xff]
        %v2247 = vld [vmem:[%s2216 + $0x168] sm:$0xff]
        %v2248 = vld [vmem:[%s2216 + $0x170] sm:$0xff]
        %2250 = vset.pattern.permute.xlu0 0
        %2251 = vperm.xlu0 %2250, %v2217
        %v2252 = vpop.permute.xlu0 %2251
        %2255 = vset.pattern.permute.xlu0 0
        %2256 = vperm.xlu0 %2255, %v2218
        %v2257 = vpop.permute.xlu0 %2256
        %2260 = vset.pattern.permute.xlu0 0
        %2261 = vperm.xlu0 %2260, %v2219
        %v2262 = vpop.permute.xlu0 %2261
        %2265 = vset.pattern.permute.xlu0 0
        %2266 = vperm.xlu0 %2265, %v2220
        %v2267 = vpop.permute.xlu0 %2266
        %2270 = vset.pattern.permute.xlu0 0
        %2271 = vperm.xlu0 %2270, %v2221
        %v2272 = vpop.permute.xlu0 %2271
        %2275 = vset.pattern.permute.xlu0 0
        %2276 = vperm.xlu0 %2275, %v2222
        %v2277 = vpop.permute.xlu0 %2276
        %2280 = vset.pattern.permute.xlu0 0
        %2281 = vperm.xlu0 %2280, %v2223
        %v2282 = vpop.permute.xlu0 %2281
        %2285 = vset.pattern.permute.xlu0 0
        %2286 = vperm.xlu0 %2285, %v2224
        %v2287 = vpop.permute.xlu0 %2286
        %2290 = vset.pattern.permute.xlu0 0
        %2291 = vperm.xlu0 %2290, %v2225
        %v2292 = vpop.permute.xlu0 %2291
        %2295 = vset.pattern.permute.xlu0 0
        %2296 = vperm.xlu0 %2295, %v2226
        %v2297 = vpop.permute.xlu0 %2296
        %2300 = vset.pattern.permute.xlu0 0
        %2301 = vperm.xlu0 %2300, %v2227
        %v2302 = vpop.permute.xlu0 %2301
        %2305 = vset.pattern.permute.xlu0 0
        %2306 = vperm.xlu0 %2305, %v2228
        %v2307 = vpop.permute.xlu0 %2306
        %2310 = vset.pattern.permute.xlu0 0
        %2311 = vperm.xlu0 %2310, %v2229
        %v2312 = vpop.permute.xlu0 %2311
        %2315 = vset.pattern.permute.xlu0 0
        %2316 = vperm.xlu0 %2315, %v2230
        %v2317 = vpop.permute.xlu0 %2316
        %2320 = vset.pattern.permute.xlu0 0
        %2321 = vperm.xlu0 %2320, %v2231
        %v2322 = vpop.permute.xlu0 %2321
        %2325 = vset.pattern.permute.xlu0 0
        %2326 = vperm.xlu0 %2325, %v2232
        %v2327 = vpop.permute.xlu0 %2326
        %2330 = vset.pattern.permute.xlu0 0
        %2331 = vperm.xlu0 %2330, %v2233
        %v2332 = vpop.permute.xlu0 %2331
        %2335 = vset.pattern.permute.xlu0 0
        %2336 = vperm.xlu0 %2335, %v2234
        %v2337 = vpop.permute.xlu0 %2336
        %2340 = vset.pattern.permute.xlu0 0
        %2341 = vperm.xlu0 %2340, %v2235
        %v2342 = vpop.permute.xlu0 %2341
        %2345 = vset.pattern.permute.xlu0 0
        %2346 = vperm.xlu0 %2345, %v2236
        %v2347 = vpop.permute.xlu0 %2346
        %2350 = vset.pattern.permute.xlu0 0
        %2351 = vperm.xlu0 %2350, %v2237
        %v2352 = vpop.permute.xlu0 %2351
        %2355 = vset.pattern.permute.xlu0 0
        %2356 = vperm.xlu0 %2355, %v2238
        %v2357 = vpop.permute.xlu0 %2356
        %2360 = vset.pattern.permute.xlu0 0
        %2361 = vperm.xlu0 %2360, %v2239
        %v2362 = vpop.permute.xlu0 %2361
        %2365 = vset.pattern.permute.xlu0 0
        %2366 = vperm.xlu0 %2365, %v2240
        %v2367 = vpop.permute.xlu0 %2366
        %2370 = vset.pattern.permute.xlu0 0
        %2371 = vperm.xlu0 %2370, %v2241
        %v2372 = vpop.permute.xlu0 %2371
        %2375 = vset.pattern.permute.xlu0 0
        %2376 = vperm.xlu0 %2375, %v2242
        %v2377 = vpop.permute.xlu0 %2376
        %2380 = vset.pattern.permute.xlu0 0
        %2381 = vperm.xlu0 %2380, %v2243
        %v2382 = vpop.permute.xlu0 %2381
        %2385 = vset.pattern.permute.xlu0 0
        %2386 = vperm.xlu0 %2385, %v2244
        %v2387 = vpop.permute.xlu0 %2386
        %2390 = vset.pattern.permute.xlu0 0
        %2391 = vperm.xlu0 %2390, %v2245
        %v2392 = vpop.permute.xlu0 %2391
        %2395 = vset.pattern.permute.xlu0 0
        %2396 = vperm.xlu0 %2395, %v2246
        %v2397 = vpop.permute.xlu0 %2396
        %2400 = vset.pattern.permute.xlu0 0
        %2401 = vperm.xlu0 %2400, %v2247
        %v2402 = vpop.permute.xlu0 %2401
        %2405 = vset.pattern.permute.xlu0 0
        %2406 = vperm.xlu0 %2405, %v2248
        %v2407 = vpop.permute.xlu0 %2406
        %v2409 = vperm.slane %v531, 6
        %v2410 = vmul.f32 %v2252, %v2409
        %v2411 = vmul.f32 %v2257, %v2409
        %v2412 = vmul.f32 %v2262, %v2409
        %v2413 = vmul.f32 %v2267, %v2409
        %v2414 = vmul.f32 %v2272, %v2409
        %v2415 = vmul.f32 %v2277, %v2409
        %v2416 = vmul.f32 %v2282, %v2409
        %v2417 = vmul.f32 %v2287, %v2409
        %v2418 = vmul.f32 %v2292, %v2409
        %v2419 = vmul.f32 %v2297, %v2409
        %v2420 = vmul.f32 %v2302, %v2409
        %v2421 = vmul.f32 %v2307, %v2409
        %v2422 = vmul.f32 %v2312, %v2409
        %v2423 = vmul.f32 %v2317, %v2409
        %v2424 = vmul.f32 %v2322, %v2409
        %v2425 = vmul.f32 %v2327, %v2409
        %v2426 = vmul.f32 %v2332, %v2409
        %v2427 = vmul.f32 %v2337, %v2409
        %v2428 = vmul.f32 %v2342, %v2409
        %v2429 = vmul.f32 %v2347, %v2409
        %v2430 = vmul.f32 %v2352, %v2409
        %v2431 = vmul.f32 %v2357, %v2409
        %v2432 = vmul.f32 %v2362, %v2409
        %v2433 = vmul.f32 %v2367, %v2409
        %v2434 = vmul.f32 %v2372, %v2409
        %v2435 = vmul.f32 %v2377, %v2409
        %v2436 = vmul.f32 %v2382, %v2409
        %v2437 = vmul.f32 %v2387, %v2409
        %v2438 = vmul.f32 %v2392, %v2409
        %v2439 = vmul.f32 %v2397, %v2409
        %v2440 = vmul.f32 %v2402, %v2409
        %v2441 = vmul.f32 %v2407, %v2409
        %v2442 = vadd.f32 %v2184, %v2410
        %v2443 = vadd.f32 %v2185, %v2411
        %v2444 = vadd.f32 %v2186, %v2412
        %v2445 = vadd.f32 %v2187, %v2413
        %v2446 = vadd.f32 %v2188, %v2414
        %v2447 = vadd.f32 %v2189, %v2415
        %v2448 = vadd.f32 %v2190, %v2416
        %v2449 = vadd.f32 %v2191, %v2417
        %v2450 = vadd.f32 %v2192, %v2418
        %v2451 = vadd.f32 %v2193, %v2419
        %v2452 = vadd.f32 %v2194, %v2420
        %v2453 = vadd.f32 %v2195, %v2421
        %v2454 = vadd.f32 %v2196, %v2422
        %v2455 = vadd.f32 %v2197, %v2423
        %v2456 = vadd.f32 %v2198, %v2424
        %v2457 = vadd.f32 %v2199, %v2425
        %v2458 = vadd.f32 %v2200, %v2426
        %v2459 = vadd.f32 %v2201, %v2427
        %v2460 = vadd.f32 %v2202, %v2428
        %v2461 = vadd.f32 %v2203, %v2429
        %v2462 = vadd.f32 %v2204, %v2430
        %v2463 = vadd.f32 %v2205, %v2431
        %v2464 = vadd.f32 %v2206, %v2432
        %v2465 = vadd.f32 %v2207, %v2433
        %v2466 = vadd.f32 %v2208, %v2434
        %v2467 = vadd.f32 %v2209, %v2435
        %v2468 = vadd.f32 %v2210, %v2436
        %v2469 = vadd.f32 %v2211, %v2437
        %v2470 = vadd.f32 %v2212, %v2438
        %v2471 = vadd.f32 %v2213, %v2439
        %v2472 = vadd.f32 %v2214, %v2440
        %v2473 = vadd.f32 %v2215, %v2441
        %v2474 = vld [vmem:[%s2216 + $0x1] sm:$0xff]
        %v2475 = vld [vmem:[%s2216 + $0x9] sm:$0xff]
        %v2476 = vld [vmem:[%s2216 + $0x19] sm:$0xff]
        %v2477 = vld [vmem:[%s2216 + $0x21] sm:$0xff]
        %v2478 = vld [vmem:[%s2216 + $0x31] sm:$0xff]
        %v2479 = vld [vmem:[%s2216 + $0x39] sm:$0xff]
        %v2480 = vld [vmem:[%s2216 + $0x49] sm:$0xff]
        %v2481 = vld [vmem:[%s2216 + $0x51] sm:$0xff]
        %v2482 = vld [vmem:[%s2216 + $0x61] sm:$0xff]
        %v2483 = vld [vmem:[%s2216 + $0x69] sm:$0xff]
        %v2484 = vld [vmem:[%s2216 + $0x79] sm:$0xff]
        %v2485 = vld [vmem:[%s2216 + $0x81] sm:$0xff]
        %v2486 = vld [vmem:[%s2216 + $0x91] sm:$0xff]
        %v2487 = vld [vmem:[%s2216 + $0x99] sm:$0xff]
        %v2488 = vld [vmem:[%s2216 + $0xa9] sm:$0xff]
        %v2489 = vld [vmem:[%s2216 + $0xb1] sm:$0xff]
        %v2490 = vld [vmem:[%s2216 + $0xc1] sm:$0xff]
        %v2491 = vld [vmem:[%s2216 + $0xc9] sm:$0xff]
        %v2492 = vld [vmem:[%s2216 + $0xd9] sm:$0xff]
        %v2493 = vld [vmem:[%s2216 + $0xe1] sm:$0xff]
        %v2494 = vld [vmem:[%s2216 + $0xf1] sm:$0xff]
        %v2495 = vld [vmem:[%s2216 + $0xf9] sm:$0xff]
        %v2496 = vld [vmem:[%s2216 + $0x109] sm:$0xff]
        %v2497 = vld [vmem:[%s2216 + $0x111] sm:$0xff]
        %v2498 = vld [vmem:[%s2216 + $0x121] sm:$0xff]
        %v2499 = vld [vmem:[%s2216 + $0x129] sm:$0xff]
        %v2500 = vld [vmem:[%s2216 + $0x139] sm:$0xff]
        %v2501 = vld [vmem:[%s2216 + $0x141] sm:$0xff]
        %v2502 = vld [vmem:[%s2216 + $0x151] sm:$0xff]
        %v2503 = vld [vmem:[%s2216 + $0x159] sm:$0xff]
        %v2504 = vld [vmem:[%s2216 + $0x169] sm:$0xff]
        %v2505 = vld [vmem:[%s2216 + $0x171] sm:$0xff]
        %2507 = vset.pattern.permute.xlu0 0
        %2508 = vperm.xlu0 %2507, %v2474
        %v2509 = vpop.permute.xlu0 %2508
        %2512 = vset.pattern.permute.xlu0 0
        %2513 = vperm.xlu0 %2512, %v2475
        %v2514 = vpop.permute.xlu0 %2513
        %2517 = vset.pattern.permute.xlu0 0
        %2518 = vperm.xlu0 %2517, %v2476
        %v2519 = vpop.permute.xlu0 %2518
        %2522 = vset.pattern.permute.xlu0 0
        %2523 = vperm.xlu0 %2522, %v2477
        %v2524 = vpop.permute.xlu0 %2523
        %2527 = vset.pattern.permute.xlu0 0
        %2528 = vperm.xlu0 %2527, %v2478
        %v2529 = vpop.permute.xlu0 %2528
        %2532 = vset.pattern.permute.xlu0 0
        %2533 = vperm.xlu0 %2532, %v2479
        %v2534 = vpop.permute.xlu0 %2533
        %2537 = vset.pattern.permute.xlu0 0
        %2538 = vperm.xlu0 %2537, %v2480
        %v2539 = vpop.permute.xlu0 %2538
        %2542 = vset.pattern.permute.xlu0 0
        %2543 = vperm.xlu0 %2542, %v2481
        %v2544 = vpop.permute.xlu0 %2543
        %2547 = vset.pattern.permute.xlu0 0
        %2548 = vperm.xlu0 %2547, %v2482
        %v2549 = vpop.permute.xlu0 %2548
        %2552 = vset.pattern.permute.xlu0 0
        %2553 = vperm.xlu0 %2552, %v2483
        %v2554 = vpop.permute.xlu0 %2553
        %2557 = vset.pattern.permute.xlu0 0
        %2558 = vperm.xlu0 %2557, %v2484
        %v2559 = vpop.permute.xlu0 %2558
        %2562 = vset.pattern.permute.xlu0 0
        %2563 = vperm.xlu0 %2562, %v2485
        %v2564 = vpop.permute.xlu0 %2563
        %2567 = vset.pattern.permute.xlu0 0
        %2568 = vperm.xlu0 %2567, %v2486
        %v2569 = vpop.permute.xlu0 %2568
        %2572 = vset.pattern.permute.xlu0 0
        %2573 = vperm.xlu0 %2572, %v2487
        %v2574 = vpop.permute.xlu0 %2573
        %2577 = vset.pattern.permute.xlu0 0
        %2578 = vperm.xlu0 %2577, %v2488
        %v2579 = vpop.permute.xlu0 %2578
        %2582 = vset.pattern.permute.xlu0 0
        %2583 = vperm.xlu0 %2582, %v2489
        %v2584 = vpop.permute.xlu0 %2583
        %2587 = vset.pattern.permute.xlu0 0
        %2588 = vperm.xlu0 %2587, %v2490
        %v2589 = vpop.permute.xlu0 %2588
        %2592 = vset.pattern.permute.xlu0 0
        %2593 = vperm.xlu0 %2592, %v2491
        %v2594 = vpop.permute.xlu0 %2593
        %2597 = vset.pattern.permute.xlu0 0
        %2598 = vperm.xlu0 %2597, %v2492
        %v2599 = vpop.permute.xlu0 %2598
        %2602 = vset.pattern.permute.xlu0 0
        %2603 = vperm.xlu0 %2602, %v2493
        %v2604 = vpop.permute.xlu0 %2603
        %2607 = vset.pattern.permute.xlu0 0
        %2608 = vperm.xlu0 %2607, %v2494
        %v2609 = vpop.permute.xlu0 %2608
        %2612 = vset.pattern.permute.xlu0 0
        %2613 = vperm.xlu0 %2612, %v2495
        %v2614 = vpop.permute.xlu0 %2613
        %2617 = vset.pattern.permute.xlu0 0
        %2618 = vperm.xlu0 %2617, %v2496
        %v2619 = vpop.permute.xlu0 %2618
        %2622 = vset.pattern.permute.xlu0 0
        %2623 = vperm.xlu0 %2622, %v2497
        %v2624 = vpop.permute.xlu0 %2623
        %2627 = vset.pattern.permute.xlu0 0
        %2628 = vperm.xlu0 %2627, %v2498
        %v2629 = vpop.permute.xlu0 %2628
        %2632 = vset.pattern.permute.xlu0 0
        %2633 = vperm.xlu0 %2632, %v2499
        %v2634 = vpop.permute.xlu0 %2633
        %2637 = vset.pattern.permute.xlu0 0
        %2638 = vperm.xlu0 %2637, %v2500
        %v2639 = vpop.permute.xlu0 %2638
        %2642 = vset.pattern.permute.xlu0 0
        %2643 = vperm.xlu0 %2642, %v2501
        %v2644 = vpop.permute.xlu0 %2643
        %2647 = vset.pattern.permute.xlu0 0
        %2648 = vperm.xlu0 %2647, %v2502
        %v2649 = vpop.permute.xlu0 %2648
        %2652 = vset.pattern.permute.xlu0 0
        %2653 = vperm.xlu0 %2652, %v2503
        %v2654 = vpop.permute.xlu0 %2653
        %2657 = vset.pattern.permute.xlu0 0
        %2658 = vperm.xlu0 %2657, %v2504
        %v2659 = vpop.permute.xlu0 %2658
        %2662 = vset.pattern.permute.xlu0 0
        %2663 = vperm.xlu0 %2662, %v2505
        %v2664 = vpop.permute.xlu0 %2663
        %v2666 = vperm.slane %v531, 7
        %v2667 = vmul.f32 %v2509, %v2666
        %v2668 = vmul.f32 %v2514, %v2666
        %v2669 = vmul.f32 %v2519, %v2666
        %v2670 = vmul.f32 %v2524, %v2666
        %v2671 = vmul.f32 %v2529, %v2666
        %v2672 = vmul.f32 %v2534, %v2666
        %v2673 = vmul.f32 %v2539, %v2666
        %v2674 = vmul.f32 %v2544, %v2666
        %v2675 = vmul.f32 %v2549, %v2666
        %v2676 = vmul.f32 %v2554, %v2666
        %v2677 = vmul.f32 %v2559, %v2666
        %v2678 = vmul.f32 %v2564, %v2666
        %v2679 = vmul.f32 %v2569, %v2666
        %v2680 = vmul.f32 %v2574, %v2666
        %v2681 = vmul.f32 %v2579, %v2666
        %v2682 = vmul.f32 %v2584, %v2666
        %v2683 = vmul.f32 %v2589, %v2666
        %v2684 = vmul.f32 %v2594, %v2666
        %v2685 = vmul.f32 %v2599, %v2666
        %v2686 = vmul.f32 %v2604, %v2666
        %v2687 = vmul.f32 %v2609, %v2666
        %v2688 = vmul.f32 %v2614, %v2666
        %v2689 = vmul.f32 %v2619, %v2666
        %v2690 = vmul.f32 %v2624, %v2666
        %v2691 = vmul.f32 %v2629, %v2666
        %v2692 = vmul.f32 %v2634, %v2666
        %v2693 = vmul.f32 %v2639, %v2666
        %v2694 = vmul.f32 %v2644, %v2666
        %v2695 = vmul.f32 %v2649, %v2666
        %v2696 = vmul.f32 %v2654, %v2666
        %v2697 = vmul.f32 %v2659, %v2666
        %v2698 = vmul.f32 %v2664, %v2666
        %v2699 = vadd.f32 %v2442, %v2667
        %v2700 = vadd.f32 %v2443, %v2668
        %v2701 = vadd.f32 %v2444, %v2669
        %v2702 = vadd.f32 %v2445, %v2670
        %v2703 = vadd.f32 %v2446, %v2671
        %v2704 = vadd.f32 %v2447, %v2672
        %v2705 = vadd.f32 %v2448, %v2673
        %v2706 = vadd.f32 %v2449, %v2674
        %v2707 = vadd.f32 %v2450, %v2675
        %v2708 = vadd.f32 %v2451, %v2676
        %v2709 = vadd.f32 %v2452, %v2677
        %v2710 = vadd.f32 %v2453, %v2678
        %v2711 = vadd.f32 %v2454, %v2679
        %v2712 = vadd.f32 %v2455, %v2680
        %v2713 = vadd.f32 %v2456, %v2681
        %v2714 = vadd.f32 %v2457, %v2682
        %v2715 = vadd.f32 %v2458, %v2683
        %v2716 = vadd.f32 %v2459, %v2684
        %v2717 = vadd.f32 %v2460, %v2685
        %v2718 = vadd.f32 %v2461, %v2686
        %v2719 = vadd.f32 %v2462, %v2687
        %v2720 = vadd.f32 %v2463, %v2688
        %v2721 = vadd.f32 %v2464, %v2689
        %v2722 = vadd.f32 %v2465, %v2690
        %v2723 = vadd.f32 %v2466, %v2691
        %v2724 = vadd.f32 %v2467, %v2692
        %v2725 = vadd.f32 %v2468, %v2693
        %v2726 = vadd.f32 %v2469, %v2694
        %v2727 = vadd.f32 %v2470, %v2695
        %v2728 = vadd.f32 %v2471, %v2696
        %v2729 = vadd.f32 %v2472, %v2697
        %v2730 = vadd.f32 %v2473, %v2698
        %v2731 = vld [vmem:[%s2216 + $0x2] sm:$0xff]
        %v2732 = vld [vmem:[%s2216 + $0xa] sm:$0xff]
        %v2733 = vld [vmem:[%s2216 + $0x1a] sm:$0xff]
        %v2734 = vld [vmem:[%s2216 + $0x22] sm:$0xff]
        %v2735 = vld [vmem:[%s2216 + $0x32] sm:$0xff]
        %v2736 = vld [vmem:[%s2216 + $0x3a] sm:$0xff]
        %v2737 = vld [vmem:[%s2216 + $0x4a] sm:$0xff]
        %v2738 = vld [vmem:[%s2216 + $0x52] sm:$0xff]
        %v2739 = vld [vmem:[%s2216 + $0x62] sm:$0xff]
        %v2740 = vld [vmem:[%s2216 + $0x6a] sm:$0xff]
        %v2741 = vld [vmem:[%s2216 + $0x7a] sm:$0xff]
        %v2742 = vld [vmem:[%s2216 + $0x82] sm:$0xff]
        %v2743 = vld [vmem:[%s2216 + $0x92] sm:$0xff]
        %v2744 = vld [vmem:[%s2216 + $0x9a] sm:$0xff]
        %v2745 = vld [vmem:[%s2216 + $0xaa] sm:$0xff]
        %v2746 = vld [vmem:[%s2216 + $0xb2] sm:$0xff]
        %v2747 = vld [vmem:[%s2216 + $0xc2] sm:$0xff]
        %v2748 = vld [vmem:[%s2216 + $0xca] sm:$0xff]
        %v2749 = vld [vmem:[%s2216 + $0xda] sm:$0xff]
        %v2750 = vld [vmem:[%s2216 + $0xe2] sm:$0xff]
        %v2751 = vld [vmem:[%s2216 + $0xf2] sm:$0xff]
        %v2752 = vld [vmem:[%s2216 + $0xfa] sm:$0xff]
        %v2753 = vld [vmem:[%s2216 + $0x10a] sm:$0xff]
        %v2754 = vld [vmem:[%s2216 + $0x112] sm:$0xff]
        %v2755 = vld [vmem:[%s2216 + $0x122] sm:$0xff]
        %v2756 = vld [vmem:[%s2216 + $0x12a] sm:$0xff]
        %v2757 = vld [vmem:[%s2216 + $0x13a] sm:$0xff]
        %v2758 = vld [vmem:[%s2216 + $0x142] sm:$0xff]
        %v2759 = vld [vmem:[%s2216 + $0x152] sm:$0xff]
        %v2760 = vld [vmem:[%s2216 + $0x15a] sm:$0xff]
        %v2761 = vld [vmem:[%s2216 + $0x16a] sm:$0xff]
        %v2762 = vld [vmem:[%s2216 + $0x172] sm:$0xff]
        %2764 = vset.pattern.permute.xlu0 0
        %2765 = vperm.xlu0 %2764, %v2731
        %v2766 = vpop.permute.xlu0 %2765
        %2769 = vset.pattern.permute.xlu0 0
        %2770 = vperm.xlu0 %2769, %v2732
        %v2771 = vpop.permute.xlu0 %2770
        %2774 = vset.pattern.permute.xlu0 0
        %2775 = vperm.xlu0 %2774, %v2733
        %v2776 = vpop.permute.xlu0 %2775
        %2779 = vset.pattern.permute.xlu0 0
        %2780 = vperm.xlu0 %2779, %v2734
        %v2781 = vpop.permute.xlu0 %2780
        %2784 = vset.pattern.permute.xlu0 0
        %2785 = vperm.xlu0 %2784, %v2735
        %v2786 = vpop.permute.xlu0 %2785
        %2789 = vset.pattern.permute.xlu0 0
        %2790 = vperm.xlu0 %2789, %v2736
        %v2791 = vpop.permute.xlu0 %2790
        %2794 = vset.pattern.permute.xlu0 0
        %2795 = vperm.xlu0 %2794, %v2737
        %v2796 = vpop.permute.xlu0 %2795
        %2799 = vset.pattern.permute.xlu0 0
        %2800 = vperm.xlu0 %2799, %v2738
        %v2801 = vpop.permute.xlu0 %2800
        %2804 = vset.pattern.permute.xlu0 0
        %2805 = vperm.xlu0 %2804, %v2739
        %v2806 = vpop.permute.xlu0 %2805
        %2809 = vset.pattern.permute.xlu0 0
        %2810 = vperm.xlu0 %2809, %v2740
        %v2811 = vpop.permute.xlu0 %2810
        %2814 = vset.pattern.permute.xlu0 0
        %2815 = vperm.xlu0 %2814, %v2741
        %v2816 = vpop.permute.xlu0 %2815
        %2819 = vset.pattern.permute.xlu0 0
        %2820 = vperm.xlu0 %2819, %v2742
        %v2821 = vpop.permute.xlu0 %2820
        %2824 = vset.pattern.permute.xlu0 0
        %2825 = vperm.xlu0 %2824, %v2743
        %v2826 = vpop.permute.xlu0 %2825
        %2829 = vset.pattern.permute.xlu0 0
        %2830 = vperm.xlu0 %2829, %v2744
        %v2831 = vpop.permute.xlu0 %2830
        %2834 = vset.pattern.permute.xlu0 0
        %2835 = vperm.xlu0 %2834, %v2745
        %v2836 = vpop.permute.xlu0 %2835
        %2839 = vset.pattern.permute.xlu0 0
        %2840 = vperm.xlu0 %2839, %v2746
        %v2841 = vpop.permute.xlu0 %2840
        %2844 = vset.pattern.permute.xlu0 0
        %2845 = vperm.xlu0 %2844, %v2747
        %v2846 = vpop.permute.xlu0 %2845
        %2849 = vset.pattern.permute.xlu0 0
        %2850 = vperm.xlu0 %2849, %v2748
        %v2851 = vpop.permute.xlu0 %2850
        %2854 = vset.pattern.permute.xlu0 0
        %2855 = vperm.xlu0 %2854, %v2749
        %v2856 = vpop.permute.xlu0 %2855
        %2859 = vset.pattern.permute.xlu0 0
        %2860 = vperm.xlu0 %2859, %v2750
        %v2861 = vpop.permute.xlu0 %2860
        %2864 = vset.pattern.permute.xlu0 0
        %2865 = vperm.xlu0 %2864, %v2751
        %v2866 = vpop.permute.xlu0 %2865
        %2869 = vset.pattern.permute.xlu0 0
        %2870 = vperm.xlu0 %2869, %v2752
        %v2871 = vpop.permute.xlu0 %2870
        %2874 = vset.pattern.permute.xlu0 0
        %2875 = vperm.xlu0 %2874, %v2753
        %v2876 = vpop.permute.xlu0 %2875
        %2879 = vset.pattern.permute.xlu0 0
        %2880 = vperm.xlu0 %2879, %v2754
        %v2881 = vpop.permute.xlu0 %2880
        %2884 = vset.pattern.permute.xlu0 0
        %2885 = vperm.xlu0 %2884, %v2755
        %v2886 = vpop.permute.xlu0 %2885
        %2889 = vset.pattern.permute.xlu0 0
        %2890 = vperm.xlu0 %2889, %v2756
        %v2891 = vpop.permute.xlu0 %2890
        %2894 = vset.pattern.permute.xlu0 0
        %2895 = vperm.xlu0 %2894, %v2757
        %v2896 = vpop.permute.xlu0 %2895
        %2899 = vset.pattern.permute.xlu0 0
        %2900 = vperm.xlu0 %2899, %v2758
        %v2901 = vpop.permute.xlu0 %2900
        %2904 = vset.pattern.permute.xlu0 0
        %2905 = vperm.xlu0 %2904, %v2759
        %v2906 = vpop.permute.xlu0 %2905
        %2909 = vset.pattern.permute.xlu0 0
        %2910 = vperm.xlu0 %2909, %v2760
        %v2911 = vpop.permute.xlu0 %2910
        %2914 = vset.pattern.permute.xlu0 0
        %2915 = vperm.xlu0 %2914, %v2761
        %v2916 = vpop.permute.xlu0 %2915
        %2919 = vset.pattern.permute.xlu0 0
        %2920 = vperm.xlu0 %2919, %v2762
        %v2921 = vpop.permute.xlu0 %2920
        %v2923 = vperm.slane %v532, 0
        %v2924 = vmul.f32 %v2766, %v2923
        %v2925 = vmul.f32 %v2771, %v2923
        %v2926 = vmul.f32 %v2776, %v2923
        %v2927 = vmul.f32 %v2781, %v2923
        %v2928 = vmul.f32 %v2786, %v2923
        %v2929 = vmul.f32 %v2791, %v2923
        %v2930 = vmul.f32 %v2796, %v2923
        %v2931 = vmul.f32 %v2801, %v2923
        %v2932 = vmul.f32 %v2806, %v2923
        %v2933 = vmul.f32 %v2811, %v2923
        %v2934 = vmul.f32 %v2816, %v2923
        %v2935 = vmul.f32 %v2821, %v2923
        %v2936 = vmul.f32 %v2826, %v2923
        %v2937 = vmul.f32 %v2831, %v2923
        %v2938 = vmul.f32 %v2836, %v2923
        %v2939 = vmul.f32 %v2841, %v2923
        %v2940 = vmul.f32 %v2846, %v2923
        %v2941 = vmul.f32 %v2851, %v2923
        %v2942 = vmul.f32 %v2856, %v2923
        %v2943 = vmul.f32 %v2861, %v2923
        %v2944 = vmul.f32 %v2866, %v2923
        %v2945 = vmul.f32 %v2871, %v2923
        %v2946 = vmul.f32 %v2876, %v2923
        %v2947 = vmul.f32 %v2881, %v2923
        %v2948 = vmul.f32 %v2886, %v2923
        %v2949 = vmul.f32 %v2891, %v2923
        %v2950 = vmul.f32 %v2896, %v2923
        %v2951 = vmul.f32 %v2901, %v2923
        %v2952 = vmul.f32 %v2906, %v2923
        %v2953 = vmul.f32 %v2911, %v2923
        %v2954 = vmul.f32 %v2916, %v2923
        %v2955 = vmul.f32 %v2921, %v2923
        %v2956 = vadd.f32 %v2699, %v2924
        %v2957 = vadd.f32 %v2700, %v2925
        %v2958 = vadd.f32 %v2701, %v2926
        %v2959 = vadd.f32 %v2702, %v2927
        %v2960 = vadd.f32 %v2703, %v2928
        %v2961 = vadd.f32 %v2704, %v2929
        %v2962 = vadd.f32 %v2705, %v2930
        %v2963 = vadd.f32 %v2706, %v2931
        %v2964 = vadd.f32 %v2707, %v2932
        %v2965 = vadd.f32 %v2708, %v2933
        %v2966 = vadd.f32 %v2709, %v2934
        %v2967 = vadd.f32 %v2710, %v2935
        %v2968 = vadd.f32 %v2711, %v2936
        %v2969 = vadd.f32 %v2712, %v2937
        %v2970 = vadd.f32 %v2713, %v2938
        %v2971 = vadd.f32 %v2714, %v2939
        %v2972 = vadd.f32 %v2715, %v2940
        %v2973 = vadd.f32 %v2716, %v2941
        %v2974 = vadd.f32 %v2717, %v2942
        %v2975 = vadd.f32 %v2718, %v2943
        %v2976 = vadd.f32 %v2719, %v2944
        %v2977 = vadd.f32 %v2720, %v2945
        %v2978 = vadd.f32 %v2721, %v2946
        %v2979 = vadd.f32 %v2722, %v2947
        %v2980 = vadd.f32 %v2723, %v2948
        %v2981 = vadd.f32 %v2724, %v2949
        %v2982 = vadd.f32 %v2725, %v2950
        %v2983 = vadd.f32 %v2726, %v2951
        %v2984 = vadd.f32 %v2727, %v2952
        %v2985 = vadd.f32 %v2728, %v2953
        %v2986 = vadd.f32 %v2729, %v2954
        %v2987 = vadd.f32 %v2730, %v2955
        %v2988 = vstv %s511
        %2989 = vmatpush.msra.mxu0 %v2971
        %2990 = vmatpush.msra.mxu0 %v2970
        %2991 = vmatpush.msra.mxu0 %v2969
        %2992 = vmatpush.msra.mxu0 %v2968
        %2993 = vmatpush.msra.mxu0 %v2967
        %2994 = vmatpush.msra.mxu0 %v2966
        %2995 = vmatpush.msra.mxu0 %v2965
        %2996 = vmatpush.msra.mxu0 %v2964
        %2997 = vmatpush.msra.mxu0 %v2963
        %2998 = vmatpush.msra.mxu0 %v2962
        %2999 = vmatpush.msra.mxu0 %v2961
        %3000 = vmatpush.msra.mxu0 %v2960
        %3001 = vmatpush.msra.mxu0 %v2959
        %3002 = vmatpush.msra.mxu0 %v2958
        %3003 = vmatpush.msra.mxu0 %v2957
        %3004 = vmatpush.msra.mxu0 %v2956
        %3005 = vmatmul.f32.gmra.mxu0 %v515
        %v3006 = vpop.f32.mrf.mxu0
        %v3007 = vadd.f32 %v2988, %v3006
        %3008 = vmatmul.f32.gmra.mxu0 %v517
        %v3009 = vpop.f32.mrf.mxu0
        %v3010 = vadd.f32 %v2988, %v3009
        %3011 = vmatmul.f32.gmra.mxu0 %v519
        %v3012 = vpop.f32.mrf.mxu0
        %v3013 = vadd.f32 %v2988, %v3012
        %3014 = vmatmul.f32.gmra.mxu0 %v521
        %v3015 = vpop.f32.mrf.mxu0
        %v3016 = vadd.f32 %v2988, %v3015
        %3017 = vmatmul.f32.gmra.mxu0 %v523
        %v3018 = vpop.f32.mrf.mxu0
        %v3019 = vadd.f32 %v2988, %v3018
        %3020 = vmatmul.f32.gmra.mxu0 %v525
        %v3021 = vpop.f32.mrf.mxu0
        %v3022 = vadd.f32 %v2988, %v3021
        %3023 = vmatmul.f32.gmra.mxu0 %v527
        %v3024 = vpop.f32.mrf.mxu0
        %v3025 = vadd.f32 %v2988, %v3024
        %3026 = vmatmul.f32.gmra.mxu0 %v529
        %v3027 = vpop.f32.mrf.mxu0
        %v3028 = vadd.f32 %v2988, %v3027
        %3029 = vdwg.mxu0
        %3030 = vmatpush.msra.mxu0 %v2987
        %3031 = vmatpush.msra.mxu0 %v2986
        %3032 = vmatpush.msra.mxu0 %v2985
        %3033 = vmatpush.msra.mxu0 %v2984
        %3034 = vmatpush.msra.mxu0 %v2983
        %3035 = vmatpush.msra.mxu0 %v2982
        %3036 = vmatpush.msra.mxu0 %v2981
        %3037 = vmatpush.msra.mxu0 %v2980
        %3038 = vmatpush.msra.mxu0 %v2979
        %3039 = vmatpush.msra.mxu0 %v2978
        %3040 = vmatpush.msra.mxu0 %v2977
        %3041 = vmatpush.msra.mxu0 %v2976
        %3042 = vmatpush.msra.mxu0 %v2975
        %3043 = vmatpush.msra.mxu0 %v2974
        %3044 = vmatpush.msra.mxu0 %v2973
        %3045 = vmatpush.msra.mxu0 %v2972
        %3046 = vmatmul.f32.gmra.mxu0 %v516
        %v3047 = vpop.f32.mrf.mxu0
        %v3048 = vadd.f32 %v3007, %v3047
        %3049 = vmatmul.f32.gmra.mxu0 %v518
        %v3050 = vpop.f32.mrf.mxu0
        %v3051 = vadd.f32 %v3010, %v3050
        %3052 = vmatmul.f32.gmra.mxu0 %v520
        %v3053 = vpop.f32.mrf.mxu0
        %v3054 = vadd.f32 %v3013, %v3053
        %3055 = vmatmul.f32.gmra.mxu0 %v522
        %v3056 = vpop.f32.mrf.mxu0
        %v3057 = vadd.f32 %v3016, %v3056
        %3058 = vmatmul.f32.gmra.mxu0 %v524
        %v3059 = vpop.f32.mrf.mxu0
        %v3060 = vadd.f32 %v3019, %v3059
        %3061 = vmatmul.f32.gmra.mxu0 %v526
        %v3062 = vpop.f32.mrf.mxu0
        %v3063 = vadd.f32 %v3022, %v3062
        %3064 = vmatmul.f32.gmra.mxu0 %v528
        %v3065 = vpop.f32.mrf.mxu0
        %v3066 = vadd.f32 %v3025, %v3065
        %3067 = vmatmul.f32.gmra.mxu0 %v530
        %v3068 = vpop.f32.mrf.mxu0
        %v3069 = vadd.f32 %v3028, %v3068
        %3070 = vdwg.mxu0
        %v3071 = vmax.f32 %v3048, 0.0
        %v3072 = vmax.f32 %v3051, 0.0
        %v3073 = vmax.f32 %v3054, 0.0
        %v3074 = vmax.f32 %v3057, 0.0
        %v3075 = vmax.f32 %v3060, 0.0
        %v3076 = vmax.f32 %v3063, 0.0
        %v3077 = vmax.f32 %v3066, 0.0
        %v3078 = vmax.f32 %v3069, 0.0
        %3079 = vmatpush.msra.mxu0 %v568
        %3080 = vmatpush.msra.mxu0 %v567
        %3081 = vmatpush.msra.mxu0 %v566
        %3082 = vmatpush.msra.mxu0 %v565
        %3083 = vmatpush.msra.mxu0 %v564
        %3084 = vmatpush.msra.mxu0 %v563
        %3085 = vmatpush.msra.mxu0 %v562
        %3086 = vmatpush.msra.mxu0 %v561
        %3087 = vmatpush.msra.mxu0 %v560
        %3088 = vmatpush.msra.mxu0 %v559
        %3089 = vmatpush.msra.mxu0 %v558
        %3090 = vmatpush.msra.mxu0 %v557
        %3091 = vmatpush.msra.mxu0 %v556
        %3092 = vmatpush.msra.mxu0 %v555
        %3093 = vmatpush.msra.mxu0 %v554
        %3094 = vmatpush.msra.mxu0 %v553
        %3095 = vmatmul.f32.gmra.mxu0 %v515
        %v3096 = vpop.f32.mrf.mxu0
        %v3097 = vadd.f32 0.0, %v3096
        %3098 = vmatmul.f32.gmra.mxu0 %v517
        %v3099 = vpop.f32.mrf.mxu0
        %v3100 = vadd.f32 0.0, %v3099
        %3101 = vmatmul.f32.gmra.mxu0 %v519
        %v3102 = vpop.f32.mrf.mxu0
        %v3103 = vadd.f32 0.0, %v3102
        %3104 = vmatmul.f32.gmra.mxu0 %v521
        %v3105 = vpop.f32.mrf.mxu0
        %v3106 = vadd.f32 0.0, %v3105
        %3107 = vmatmul.f32.gmra.mxu0 %v523
        %v3108 = vpop.f32.mrf.mxu0
        %v3109 = vadd.f32 0.0, %v3108
        %3110 = vmatmul.f32.gmra.mxu0 %v525
        %v3111 = vpop.f32.mrf.mxu0
        %v3112 = vadd.f32 0.0, %v3111
        %3113 = vmatmul.f32.gmra.mxu0 %v527
        %v3114 = vpop.f32.mrf.mxu0
        %v3115 = vadd.f32 0.0, %v3114
        %3116 = vmatmul.f32.gmra.mxu0 %v529
        %v3117 = vpop.f32.mrf.mxu0
        %v3118 = vadd.f32 0.0, %v3117
        %3119 = vdwg.mxu0
        %3120 = vmatpush.msra.mxu0 %v584
        %3121 = vmatpush.msra.mxu0 %v583
        %3122 = vmatpush.msra.mxu0 %v582
        %3123 = vmatpush.msra.mxu0 %v581
        %3124 = vmatpush.msra.mxu0 %v580
        %3125 = vmatpush.msra.mxu0 %v579
        %3126 = vmatpush.msra.mxu0 %v578
        %3127 = vmatpush.msra.mxu0 %v577
        %3128 = vmatpush.msra.mxu0 %v576
        %3129 = vmatpush.msra.mxu0 %v575
        %3130 = vmatpush.msra.mxu0 %v574
        %3131 = vmatpush.msra.mxu0 %v573
        %3132 = vmatpush.msra.mxu0 %v572
        %3133 = vmatpush.msra.mxu0 %v571
        %3134 = vmatpush.msra.mxu0 %v570
        %3135 = vmatpush.msra.mxu0 %v569
        %3136 = vmatmul.f32.gmra.mxu0 %v516
        %v3137 = vpop.f32.mrf.mxu0
        %v3138 = vadd.f32 %v3097, %v3137
        %3139 = vmatmul.f32.gmra.mxu0 %v518
        %v3140 = vpop.f32.mrf.mxu0
        %v3141 = vadd.f32 %v3100, %v3140
        %3142 = vmatmul.f32.gmra.mxu0 %v520
        %v3143 = vpop.f32.mrf.mxu0
        %v3144 = vadd.f32 %v3103, %v3143
        %3145 = vmatmul.f32.gmra.mxu0 %v522
        %v3146 = vpop.f32.mrf.mxu0
        %v3147 = vadd.f32 %v3106, %v3146
        %3148 = vmatmul.f32.gmra.mxu0 %v524
        %v3149 = vpop.f32.mrf.mxu0
        %v3150 = vadd.f32 %v3109, %v3149
        %3151 = vmatmul.f32.gmra.mxu0 %v526
        %v3152 = vpop.f32.mrf.mxu0
        %v3153 = vadd.f32 %v3112, %v3152
        %3154 = vmatmul.f32.gmra.mxu0 %v528
        %v3155 = vpop.f32.mrf.mxu0
        %v3156 = vadd.f32 %v3115, %v3155
        %3157 = vmatmul.f32.gmra.mxu0 %v530
        %v3158 = vpop.f32.mrf.mxu0
        %v3159 = vadd.f32 %v3118, %v3158
        %3160 = vdwg.mxu0
        %3162 = vset.pattern.permute.xlu0 0
        %3163 = vperm.xlu0 %3162, %v3138
        %v3164 = vpop.permute.xlu0 %3163
        %3167 = vset.pattern.permute.xlu0 0
        %3168 = vperm.xlu0 %3167, %v3141
        %v3169 = vpop.permute.xlu0 %3168
        %3172 = vset.pattern.permute.xlu0 0
        %3173 = vperm.xlu0 %3172, %v3144
        %v3174 = vpop.permute.xlu0 %3173
        %3177 = vset.pattern.permute.xlu0 0
        %3178 = vperm.xlu0 %3177, %v3147
        %v3179 = vpop.permute.xlu0 %3178
        %3182 = vset.pattern.permute.xlu0 0
        %3183 = vperm.xlu0 %3182, %v3150
        %v3184 = vpop.permute.xlu0 %3183
        %3187 = vset.pattern.permute.xlu0 0
        %3188 = vperm.xlu0 %3187, %v3153
        %v3189 = vpop.permute.xlu0 %3188
        %3192 = vset.pattern.permute.xlu0 0
        %3193 = vperm.xlu0 %3192, %v3156
        %v3194 = vpop.permute.xlu0 %3193
        %3197 = vset.pattern.permute.xlu0 0
        %3198 = vperm.xlu0 %3197, %v3159
        %v3199 = vpop.permute.xlu0 %3198
        %v3202 = vperm.slane %v551, 0
        %v3204 = vmul.f32 %v3164, %v3202
        %v3205 = vmul.f32 %v3169, %v3202
        %v3206 = vmul.f32 %v3174, %v3202
        %v3207 = vmul.f32 %v3179, %v3202
        %v3208 = vmul.f32 %v3184, %v3202
        %v3209 = vmul.f32 %v3189, %v3202
        %v3210 = vmul.f32 %v3194, %v3202
        %v3211 = vmul.f32 %v3199, %v3202
        %v3212 = vstv %s512
        %v3213 = vadd.f32 %v3071, %v3212
        %v3214 = vadd.f32 %v3072, %v3212
        %v3215 = vadd.f32 %v3073, %v3212
        %v3216 = vadd.f32 %v3074, %v3212
        %v3217 = vadd.f32 %v3075, %v3212
        %v3218 = vadd.f32 %v3076, %v3212
        %v3219 = vadd.f32 %v3077, %v3212
        %v3220 = vadd.f32 %v3078, %v3212
        %vm3221 = vcmask 130048
        %3222 = vst.msk [vmem:[#allocation3] sm:$0xff] %vm3221, 0.0
        %vm3223 = vcmask 123904
        %3224 = vst.msk [vmem:[#allocation3 + $0x8] sm:$0x3] %vm3223, 0.0
        %3225 = vst.msk [vmem:[#allocation3 + $0x10] sm:$0xff] %vm3221, 0.0
        %3226 = vst.msk [vmem:[#allocation3 + $0x18] sm:$0x3] %vm3223, 0.0
        %3227 = vst.msk [vmem:[#allocation3 + $0x20] sm:$0xff] %vm3221, 0.0
        %3228 = vst.msk [vmem:[#allocation3 + $0x28] sm:$0x3] %vm3223, 0.0
        %3229 = vst.msk [vmem:[#allocation3 + $0x30] sm:$0xff] %vm3221, 0.0
        %3230 = vst.msk [vmem:[#allocation3 + $0x38] sm:$0x3] %vm3223, 0.0
        %3231 = vst.msk [vmem:[#allocation3 + $0x40] sm:$0xff] %vm3221, 0.0
        %3232 = vst.msk [vmem:[#allocation3 + $0x48] sm:$0x3] %vm3223, 0.0
        %3233 = vst.msk [vmem:[#allocation3 + $0x50] sm:$0xff] %vm3221, 0.0
        %3234 = vst.msk [vmem:[#allocation3 + $0x58] sm:$0x3] %vm3223, 0.0
        %3235 = vst.msk [vmem:[#allocation3 + $0x60] sm:$0xff] %vm3221, 0.0
        %3236 = vst.msk [vmem:[#allocation3 + $0x68] sm:$0x3] %vm3223, 0.0
        %3237 = vst.msk [vmem:[#allocation3 + $0x70] sm:$0xff] %vm3221, 0.0
        %3238 = vst.msk [vmem:[#allocation3 + $0x78] sm:$0x3] %vm3223, 0.0
        %3239 = vst.msk [vmem:[#allocation3 + $0x80] sm:$0xff] %vm3221, 0.0
        %3240 = vst.msk [vmem:[#allocation3 + $0x88] sm:$0x3] %vm3223, 0.0
        %3241 = vst.msk [vmem:[#allocation3 + $0x90] sm:$0xff] %vm3221, 0.0
        %3242 = vst.msk [vmem:[#allocation3 + $0x98] sm:$0x3] %vm3223, 0.0
        %s3243 = scalar_lea.vmem [#allocation3], 16
        %3244 = vst.msk [vmem:[%s3243 + $0x1] sm:$0xff] %vm3221, %v3213
        %3245 = vst.msk [vmem:[%s3243 + $0x11] sm:$0xff] %vm3221, %v3214
        %3246 = vst.msk [vmem:[%s3243 + $0x21] sm:$0xff] %vm3221, %v3215
        %3247 = vst.msk [vmem:[%s3243 + $0x31] sm:$0xff] %vm3221, %v3216
        %3248 = vst.msk [vmem:[%s3243 + $0x41] sm:$0xff] %vm3221, %v3217
        %3249 = vst.msk [vmem:[%s3243 + $0x51] sm:$0xff] %vm3221, %v3218
        %3250 = vst.msk [vmem:[%s3243 + $0x61] sm:$0xff] %vm3221, %v3219
        %3251 = vst.msk [vmem:[%s3243 + $0x71] sm:$0xff] %vm3221, %v3220
        %v3252 = vld [vmem:[#allocation3] sm:$0xff]
        %v3253 = vld [vmem:[#allocation3 + $0x10] sm:$0xff]
        %v3254 = vld [vmem:[#allocation3 + $0x20] sm:$0xff]
        %v3255 = vld [vmem:[#allocation3 + $0x30] sm:$0xff]
        %v3256 = vld [vmem:[#allocation3 + $0x40] sm:$0xff]
        %v3257 = vld [vmem:[#allocation3 + $0x50] sm:$0xff]
        %v3258 = vld [vmem:[#allocation3 + $0x60] sm:$0xff]
        %v3259 = vld [vmem:[#allocation3 + $0x70] sm:$0xff]
        %3260 = vst.msk [vmem:[#allocation6] sm:$0xff] %vm3221, %v3252
        %3261 = vst.msk [vmem:[#allocation6 + $0x10] sm:$0xff] %vm3221, %v3253
        %3262 = vst.msk [vmem:[#allocation6 + $0x20] sm:$0xff] %vm3221, %v3254
        %3263 = vst.msk [vmem:[#allocation6 + $0x30] sm:$0xff] %vm3221, %v3255
        %3264 = vst.msk [vmem:[#allocation6 + $0x40] sm:$0xff] %vm3221, %v3256
        %3265 = vst.msk [vmem:[#allocation6 + $0x50] sm:$0xff] %vm3221, %v3257
        %3266 = vst.msk [vmem:[#allocation6 + $0x60] sm:$0xff] %vm3221, %v3258
        %3267 = vst.msk [vmem:[#allocation6 + $0x70] sm:$0xff] %vm3221, %v3259
        %v3268 = vld [vmem:[#allocation3 + $0x1] sm:$0xff]
        %v3269 = vld [vmem:[#allocation3 + $0x11] sm:$0xff]
        %v3270 = vld [vmem:[#allocation3 + $0x21] sm:$0xff]
        %v3271 = vld [vmem:[#allocation3 + $0x31] sm:$0xff]
        %v3272 = vld [vmem:[#allocation3 + $0x41] sm:$0xff]
        %v3273 = vld [vmem:[#allocation3 + $0x51] sm:$0xff]
        %v3274 = vld [vmem:[#allocation3 + $0x61] sm:$0xff]
        %v3275 = vld [vmem:[#allocation3 + $0x71] sm:$0xff]
        %3284 = vrot.lane.b32.xlu0 %v3268, 16
        %v3285 = vpop.permute.xlu0 %3284
        %3286 = vrot.lane.b32.xlu0 %v3269, 16
        %v3287 = vpop.permute.xlu0 %3286
        %3288 = vrot.lane.b32.xlu0 %v3270, 16
        %v3289 = vpop.permute.xlu0 %3288
        %3290 = vrot.lane.b32.xlu0 %v3271, 16
        %v3291 = vpop.permute.xlu0 %3290
        %3292 = vrot.lane.b32.xlu0 %v3272, 16
        %v3293 = vpop.permute.xlu0 %3292
        %3294 = vrot.lane.b32.xlu0 %v3273, 16
        %v3295 = vpop.permute.xlu0 %3294
        %3296 = vrot.lane.b32.xlu0 %v3274, 16
        %v3297 = vpop.permute.xlu0 %3296
        %3298 = vrot.lane.b32.xlu0 %v3275, 16
        %v3299 = vpop.permute.xlu0 %3298
        %vm3308 = vcmask 261248
        %3309 = vst.msk [vmem:[#allocation6] sm:$0xff] %vm3308, %v3285
        %3310 = vst.msk [vmem:[#allocation6 + $0x10] sm:$0xff] %vm3308, %v3287
        %3311 = vst.msk [vmem:[#allocation6 + $0x20] sm:$0xff] %vm3308, %v3289
        %3312 = vst.msk [vmem:[#allocation6 + $0x30] sm:$0xff] %vm3308, %v3291
        %3313 = vst.msk [vmem:[#allocation6 + $0x40] sm:$0xff] %vm3308, %v3293
        %3314 = vst.msk [vmem:[#allocation6 + $0x50] sm:$0xff] %vm3308, %v3295
        %3315 = vst.msk [vmem:[#allocation6 + $0x60] sm:$0xff] %vm3308, %v3297
        %3316 = vst.msk [vmem:[#allocation6 + $0x70] sm:$0xff] %vm3308, %v3299
        %v3317 = vld [vmem:[#allocation3 + $0x2] sm:$0xff]
        %v3318 = vld [vmem:[#allocation3 + $0x12] sm:$0xff]
        %v3319 = vld [vmem:[#allocation3 + $0x22] sm:$0xff]
        %v3320 = vld [vmem:[#allocation3 + $0x32] sm:$0xff]
        %v3321 = vld [vmem:[#allocation3 + $0x42] sm:$0xff]
        %v3322 = vld [vmem:[#allocation3 + $0x52] sm:$0xff]
        %v3323 = vld [vmem:[#allocation3 + $0x62] sm:$0xff]
        %v3324 = vld [vmem:[#allocation3 + $0x72] sm:$0xff]
        %3333 = vrot.lane.b32.xlu0 %v3317, 32
        %v3334 = vpop.permute.xlu0 %3333
        %3335 = vrot.lane.b32.xlu0 %v3318, 32
        %v3336 = vpop.permute.xlu0 %3335
        %3337 = vrot.lane.b32.xlu0 %v3319, 32
        %v3338 = vpop.permute.xlu0 %3337
        %3339 = vrot.lane.b32.xlu0 %v3320, 32
        %v3340 = vpop.permute.xlu0 %3339
        %3341 = vrot.lane.b32.xlu0 %v3321, 32
        %v3342 = vpop.permute.xlu0 %3341
        %3343 = vrot.lane.b32.xlu0 %v3322, 32
        %v3344 = vpop.permute.xlu0 %3343
        %3345 = vrot.lane.b32.xlu0 %v3323, 32
        %v3346 = vpop.permute.xlu0 %3345
        %3347 = vrot.lane.b32.xlu0 %v3324, 32
        %v3348 = vpop.permute.xlu0 %3347
        %vm3357 = vcmask 392448
        %3358 = vst.msk [vmem:[#allocation6] sm:$0xff] %vm3357, %v3334
        %3359 = vst.msk [vmem:[#allocation6 + $0x10] sm:$0xff] %vm3357, %v3336
        %3360 = vst.msk [vmem:[#allocation6 + $0x20] sm:$0xff] %vm3357, %v3338
        %3361 = vst.msk [vmem:[#allocation6 + $0x30] sm:$0xff] %vm3357, %v3340
        %3362 = vst.msk [vmem:[#allocation6 + $0x40] sm:$0xff] %vm3357, %v3342
        %3363 = vst.msk [vmem:[#allocation6 + $0x50] sm:$0xff] %vm3357, %v3344
        %3364 = vst.msk [vmem:[#allocation6 + $0x60] sm:$0xff] %vm3357, %v3346
        %3365 = vst.msk [vmem:[#allocation6 + $0x70] sm:$0xff] %vm3357, %v3348
        %v3366 = vld [vmem:[%s3243] sm:$0xff]
        %v3367 = vld [vmem:[%s3243 + $0x10] sm:$0xff]
        %v3368 = vld [vmem:[%s3243 + $0x20] sm:$0xff]
        %v3369 = vld [vmem:[%s3243 + $0x30] sm:$0xff]
        %v3370 = vld [vmem:[%s3243 + $0x40] sm:$0xff]
        %v3371 = vld [vmem:[%s3243 + $0x50] sm:$0xff]
        %v3372 = vld [vmem:[%s3243 + $0x60] sm:$0xff]
        %v3373 = vld [vmem:[%s3243 + $0x70] sm:$0xff]
        %3382 = vrot.lane.b32.xlu0 %v3366, 48
        %v3383 = vpop.permute.xlu0 %3382
        %3384 = vrot.lane.b32.xlu0 %v3367, 48
        %v3385 = vpop.permute.xlu0 %3384
        %3386 = vrot.lane.b32.xlu0 %v3368, 48
        %v3387 = vpop.permute.xlu0 %3386
        %3388 = vrot.lane.b32.xlu0 %v3369, 48
        %v3389 = vpop.permute.xlu0 %3388
        %3390 = vrot.lane.b32.xlu0 %v3370, 48
        %v3391 = vpop.permute.xlu0 %3390
        %3392 = vrot.lane.b32.xlu0 %v3371, 48
        %v3393 = vpop.permute.xlu0 %3392
        %3394 = vrot.lane.b32.xlu0 %v3372, 48
        %v3395 = vpop.permute.xlu0 %3394
        %3396 = vrot.lane.b32.xlu0 %v3373, 48
        %v3397 = vpop.permute.xlu0 %3396
        %vm3406 = vcmask 523648
        %3407 = vst.msk [vmem:[#allocation6] sm:$0xff] %vm3406, %v3383
        %3408 = vst.msk [vmem:[#allocation6 + $0x10] sm:$0xff] %vm3406, %v3385
        %3409 = vst.msk [vmem:[#allocation6 + $0x20] sm:$0xff] %vm3406, %v3387
        %3410 = vst.msk [vmem:[#allocation6 + $0x30] sm:$0xff] %vm3406, %v3389
        %3411 = vst.msk [vmem:[#allocation6 + $0x40] sm:$0xff] %vm3406, %v3391
        %3412 = vst.msk [vmem:[#allocation6 + $0x50] sm:$0xff] %vm3406, %v3393
        %3413 = vst.msk [vmem:[#allocation6 + $0x60] sm:$0xff] %vm3406, %v3395
        %3414 = vst.msk [vmem:[#allocation6 + $0x70] sm:$0xff] %vm3406, %v3397
        %v3415 = vld [vmem:[%s3243 + $0x1] sm:$0xff]
        %v3416 = vld [vmem:[%s3243 + $0x11] sm:$0xff]
        %v3417 = vld [vmem:[%s3243 + $0x21] sm:$0xff]
        %v3418 = vld [vmem:[%s3243 + $0x31] sm:$0xff]
        %v3419 = vld [vmem:[%s3243 + $0x41] sm:$0xff]
        %v3420 = vld [vmem:[%s3243 + $0x51] sm:$0xff]
        %v3421 = vld [vmem:[%s3243 + $0x61] sm:$0xff]
        %v3422 = vld [vmem:[%s3243 + $0x71] sm:$0xff]
        %3431 = vrot.lane.b32.xlu0 %v3415, 64
        %v3432 = vpop.permute.xlu0 %3431
        %3433 = vrot.lane.b32.xlu0 %v3416, 64
        %v3434 = vpop.permute.xlu0 %3433
        %3435 = vrot.lane.b32.xlu0 %v3417, 64
        %v3436 = vpop.permute.xlu0 %3435
        %3437 = vrot.lane.b32.xlu0 %v3418, 64
        %v3438 = vpop.permute.xlu0 %3437
        %3439 = vrot.lane.b32.xlu0 %v3419, 64
        %v3440 = vpop.permute.xlu0 %3439
        %3441 = vrot.lane.b32.xlu0 %v3420, 64
        %v3442 = vpop.permute.xlu0 %3441
        %3443 = vrot.lane.b32.xlu0 %v3421, 64
        %v3444 = vpop.permute.xlu0 %3443
        %3445 = vrot.lane.b32.xlu0 %v3422, 64
        %v3446 = vpop.permute.xlu0 %3445
        %vm3455 = vcmask 654848
        %3456 = vst.msk [vmem:[#allocation6] sm:$0xff] %vm3455, %v3432
        %3457 = vst.msk [vmem:[#allocation6 + $0x10] sm:$0xff] %vm3455, %v3434
        %3458 = vst.msk [vmem:[#allocation6 + $0x20] sm:$0xff] %vm3455, %v3436
        %3459 = vst.msk [vmem:[#allocation6 + $0x30] sm:$0xff] %vm3455, %v3438
        %3460 = vst.msk [vmem:[#allocation6 + $0x40] sm:$0xff] %vm3455, %v3440
        %3461 = vst.msk [vmem:[#allocation6 + $0x50] sm:$0xff] %vm3455, %v3442
        %3462 = vst.msk [vmem:[#allocation6 + $0x60] sm:$0xff] %vm3455, %v3444
        %3463 = vst.msk [vmem:[#allocation6 + $0x70] sm:$0xff] %vm3455, %v3446
        %v3464 = vld [vmem:[%s3243 + $0x2] sm:$0xff]
        %v3465 = vld [vmem:[%s3243 + $0x12] sm:$0xff]
        %v3466 = vld [vmem:[%s3243 + $0x22] sm:$0xff]
        %v3467 = vld [vmem:[%s3243 + $0x32] sm:$0xff]
        %v3468 = vld [vmem:[%s3243 + $0x42] sm:$0xff]
        %v3469 = vld [vmem:[%s3243 + $0x52] sm:$0xff]
        %v3470 = vld [vmem:[%s3243 + $0x62] sm:$0xff]
        %v3471 = vld [vmem:[%s3243 + $0x72] sm:$0xff]
        %3480 = vrot.lane.b32.xlu0 %v3464, 80
        %v3481 = vpop.permute.xlu0 %3480
        %3482 = vrot.lane.b32.xlu0 %v3465, 80
        %v3483 = vpop.permute.xlu0 %3482
        %3484 = vrot.lane.b32.xlu0 %v3466, 80
        %v3485 = vpop.permute.xlu0 %3484
        %3486 = vrot.lane.b32.xlu0 %v3467, 80
        %v3487 = vpop.permute.xlu0 %3486
        %3488 = vrot.lane.b32.xlu0 %v3468, 80
        %v3489 = vpop.permute.xlu0 %3488
        %3490 = vrot.lane.b32.xlu0 %v3469, 80
        %v3491 = vpop.permute.xlu0 %3490
        %3492 = vrot.lane.b32.xlu0 %v3470, 80
        %v3493 = vpop.permute.xlu0 %3492
        %3494 = vrot.lane.b32.xlu0 %v3471, 80
        %v3495 = vpop.permute.xlu0 %3494
        %vm3504 = vcmask 786048
        %3505 = vst.msk [vmem:[#allocation6] sm:$0xff] %vm3504, %v3481
        %3506 = vst.msk [vmem:[#allocation6 + $0x10] sm:$0xff] %vm3504, %v3483
        %3507 = vst.msk [vmem:[#allocation6 + $0x20] sm:$0xff] %vm3504, %v3485
        %3508 = vst.msk [vmem:[#allocation6 + $0x30] sm:$0xff] %vm3504, %v3487
        %3509 = vst.msk [vmem:[#allocation6 + $0x40] sm:$0xff] %vm3504, %v3489
        %3510 = vst.msk [vmem:[#allocation6 + $0x50] sm:$0xff] %vm3504, %v3491
        %3511 = vst.msk [vmem:[#allocation6 + $0x60] sm:$0xff] %vm3504, %v3493
        %3512 = vst.msk [vmem:[#allocation6 + $0x70] sm:$0xff] %vm3504, %v3495
        %s3513 = scalar_lea.vmem [#allocation3], 32
        %v3514 = vld [vmem:[%s3513] sm:$0xff]
        %v3515 = vld [vmem:[%s3513 + $0x10] sm:$0xff]
        %v3516 = vld [vmem:[%s3513 + $0x20] sm:$0xff]
        %v3517 = vld [vmem:[%s3513 + $0x30] sm:$0xff]
        %v3518 = vld [vmem:[%s3513 + $0x40] sm:$0xff]
        %v3519 = vld [vmem:[%s3513 + $0x50] sm:$0xff]
        %v3520 = vld [vmem:[%s3513 + $0x60] sm:$0xff]
        %v3521 = vld [vmem:[%s3513 + $0x70] sm:$0xff]
        %3530 = vrot.lane.b32.xlu0 %v3514, 96
        %v3531 = vpop.permute.xlu0 %3530
        %3532 = vrot.lane.b32.xlu0 %v3515, 96
        %v3533 = vpop.permute.xlu0 %3532
        %3534 = vrot.lane.b32.xlu0 %v3516, 96
        %v3535 = vpop.permute.xlu0 %3534
        %3536 = vrot.lane.b32.xlu0 %v3517, 96
        %v3537 = vpop.permute.xlu0 %3536
        %3538 = vrot.lane.b32.xlu0 %v3518, 96
        %v3539 = vpop.permute.xlu0 %3538
        %3540 = vrot.lane.b32.xlu0 %v3519, 96
        %v3541 = vpop.permute.xlu0 %3540
        %3542 = vrot.lane.b32.xlu0 %v3520, 96
        %v3543 = vpop.permute.xlu0 %3542
        %3544 = vrot.lane.b32.xlu0 %v3521, 96
        %v3545 = vpop.permute.xlu0 %3544
        %vm3554 = vcmask 917248
        %3555 = vst.msk [vmem:[#allocation6] sm:$0xff] %vm3554, %v3531
        %3556 = vst.msk [vmem:[#allocation6 + $0x10] sm:$0xff] %vm3554, %v3533
        %3557 = vst.msk [vmem:[#allocation6 + $0x20] sm:$0xff] %vm3554, %v3535
        %3558 = vst.msk [vmem:[#allocation6 + $0x30] sm:$0xff] %vm3554, %v3537
        %3559 = vst.msk [vmem:[#allocation6 + $0x40] sm:$0xff] %vm3554, %v3539
        %3560 = vst.msk [vmem:[#allocation6 + $0x50] sm:$0xff] %vm3554, %v3541
        %3561 = vst.msk [vmem:[#allocation6 + $0x60] sm:$0xff] %vm3554, %v3543
        %3562 = vst.msk [vmem:[#allocation6 + $0x70] sm:$0xff] %vm3554, %v3545
        %v3563 = vld [vmem:[%s3513 + $0x1] sm:$0xff]
        %v3564 = vld [vmem:[%s3513 + $0x11] sm:$0xff]
        %v3565 = vld [vmem:[%s3513 + $0x21] sm:$0xff]
        %v3566 = vld [vmem:[%s3513 + $0x31] sm:$0xff]
        %v3567 = vld [vmem:[%s3513 + $0x41] sm:$0xff]
        %v3568 = vld [vmem:[%s3513 + $0x51] sm:$0xff]
        %v3569 = vld [vmem:[%s3513 + $0x61] sm:$0xff]
        %v3570 = vld [vmem:[%s3513 + $0x71] sm:$0xff]
        %3579 = vrot.lane.b32.xlu0 %v3563, 112
        %v3580 = vpop.permute.xlu0 %3579
        %3581 = vrot.lane.b32.xlu0 %v3564, 112
        %v3582 = vpop.permute.xlu0 %3581
        %3583 = vrot.lane.b32.xlu0 %v3565, 112
        %v3584 = vpop.permute.xlu0 %3583
        %3585 = vrot.lane.b32.xlu0 %v3566, 112
        %v3586 = vpop.permute.xlu0 %3585
        %3587 = vrot.lane.b32.xlu0 %v3567, 112
        %v3588 = vpop.permute.xlu0 %3587
        %3589 = vrot.lane.b32.xlu0 %v3568, 112
        %v3590 = vpop.permute.xlu0 %3589
        %3591 = vrot.lane.b32.xlu0 %v3569, 112
        %v3592 = vpop.permute.xlu0 %3591
        %3593 = vrot.lane.b32.xlu0 %v3570, 112
        %v3594 = vpop.permute.xlu0 %3593
        %vm3603 = vcmask 1048448
        %3604 = vst.msk [vmem:[#allocation6] sm:$0xff] %vm3603, %v3580
        %3605 = vst.msk [vmem:[#allocation6 + $0x10] sm:$0xff] %vm3603, %v3582
        %3606 = vst.msk [vmem:[#allocation6 + $0x20] sm:$0xff] %vm3603, %v3584
        %3607 = vst.msk [vmem:[#allocation6 + $0x30] sm:$0xff] %vm3603, %v3586
        %3608 = vst.msk [vmem:[#allocation6 + $0x40] sm:$0xff] %vm3603, %v3588
        %3609 = vst.msk [vmem:[#allocation6 + $0x50] sm:$0xff] %vm3603, %v3590
        %3610 = vst.msk [vmem:[#allocation6 + $0x60] sm:$0xff] %vm3603, %v3592
        %3611 = vst.msk [vmem:[#allocation6 + $0x70] sm:$0xff] %vm3603, %v3594
        %v3612 = vld [vmem:[%s3513 + $0x2] sm:$0xff]
        %v3613 = vld [vmem:[%s3513 + $0x12] sm:$0xff]
        %v3614 = vld [vmem:[%s3513 + $0x22] sm:$0xff]
        %v3615 = vld [vmem:[%s3513 + $0x32] sm:$0xff]
        %v3616 = vld [vmem:[%s3513 + $0x42] sm:$0xff]
        %v3617 = vld [vmem:[%s3513 + $0x52] sm:$0xff]
        %v3618 = vld [vmem:[%s3513 + $0x62] sm:$0xff]
        %v3619 = vld [vmem:[%s3513 + $0x72] sm:$0xff]
        %3620 = vst.msk [vmem:[#allocation6 + $0x8] sm:$0xff] %vm3221, %v3612
        %3621 = vst.msk [vmem:[#allocation6 + $0x18] sm:$0xff] %vm3221, %v3613
        %3622 = vst.msk [vmem:[#allocation6 + $0x28] sm:$0xff] %vm3221, %v3614
        %3623 = vst.msk [vmem:[#allocation6 + $0x38] sm:$0xff] %vm3221, %v3615
        %3624 = vst.msk [vmem:[#allocation6 + $0x48] sm:$0xff] %vm3221, %v3616
        %3625 = vst.msk [vmem:[#allocation6 + $0x58] sm:$0xff] %vm3221, %v3617
        %3626 = vst.msk [vmem:[#allocation6 + $0x68] sm:$0xff] %vm3221, %v3618
        %3627 = vst.msk [vmem:[#allocation6 + $0x78] sm:$0xff] %vm3221, %v3619
        %v3628 = vld [vmem:[#allocation6] sm:$0xff]
        %v3629 = vld [vmem:[#allocation6 + $0x8] sm:$0xff]
        %v3630 = vld [vmem:[#allocation6 + $0x10] sm:$0xff]
        %v3631 = vld [vmem:[#allocation6 + $0x18] sm:$0xff]
        %v3632 = vld [vmem:[#allocation6 + $0x20] sm:$0xff]
        %v3633 = vld [vmem:[#allocation6 + $0x28] sm:$0xff]
        %v3634 = vld [vmem:[#allocation6 + $0x30] sm:$0xff]
        %v3635 = vld [vmem:[#allocation6 + $0x38] sm:$0xff]
        %v3636 = vld [vmem:[#allocation6 + $0x40] sm:$0xff]
        %v3637 = vld [vmem:[#allocation6 + $0x48] sm:$0xff]
        %v3638 = vld [vmem:[#allocation6 + $0x50] sm:$0xff]
        %v3639 = vld [vmem:[#allocation6 + $0x58] sm:$0xff]
        %v3640 = vld [vmem:[#allocation6 + $0x60] sm:$0xff]
        %v3641 = vld [vmem:[#allocation6 + $0x68] sm:$0xff]
        %v3642 = vld [vmem:[#allocation6 + $0x70] sm:$0xff]
        %v3643 = vld [vmem:[#allocation6 + $0x78] sm:$0xff]
        %v3645 = vsel %vm3221, %v3629, 0
        %v3648 = vsel %vm3221, %v3631, 0
        %v3651 = vsel %vm3221, %v3633, 0
        %v3654 = vsel %vm3221, %v3635, 0
        %v3657 = vsel %vm3221, %v3637, 0
        %v3660 = vsel %vm3221, %v3639, 0
        %v3663 = vsel %vm3221, %v3641, 0
        %v3666 = vsel %vm3221, %v3643, 0
        %3668 = vmatpush.msra.mxu0 %v548
        %3669 = vmatpush.msra.mxu0 %v547
        %3670 = vmatpush.msra.mxu0 %v546
        %3671 = vmatpush.msra.mxu0 %v545
        %3672 = vmatpush.msra.mxu0 %v544
        %3673 = vmatpush.msra.mxu0 %v543
        %3674 = vmatpush.msra.mxu0 %v542
        %3675 = vmatpush.msra.mxu0 %v541
        %3676 = vmatpush.msra.mxu0 %v540
        %3677 = vmatpush.msra.mxu0 %v539
        %3678 = vmatpush.msra.mxu0 %v538
        %3679 = vmatpush.msra.mxu0 %v537
        %3680 = vmatpush.msra.mxu0 %v536
        %3681 = vmatpush.msra.mxu0 %v535
        %3682 = vmatpush.msra.mxu0 %v534
        %3683 = vmatpush.msra.mxu0 %v533
        %3684 = vmatmul.f32.gmra.mxu0 %v3628
        %v3685 = vpop.f32.mrf.mxu0
        %v3686 = vadd.f32 0.0, %v3685
        %3687 = vmatmul.f32.gmra.mxu0 %v3630
        %v3688 = vpop.f32.mrf.mxu0
        %v3689 = vadd.f32 0.0, %v3688
        %3690 = vmatmul.f32.gmra.mxu0 %v3632
        %v3691 = vpop.f32.mrf.mxu0
        %v3692 = vadd.f32 0.0, %v3691
        %3693 = vmatmul.f32.gmra.mxu0 %v3634
        %v3694 = vpop.f32.mrf.mxu0
        %v3695 = vadd.f32 0.0, %v3694
        %3696 = vmatmul.f32.gmra.mxu0 %v3636
        %v3697 = vpop.f32.mrf.mxu0
        %v3698 = vadd.f32 0.0, %v3697
        %3699 = vmatmul.f32.gmra.mxu0 %v3638
        %v3700 = vpop.f32.mrf.mxu0
        %v3701 = vadd.f32 0.0, %v3700
        %3702 = vmatmul.f32.gmra.mxu0 %v3640
        %v3703 = vpop.f32.mrf.mxu0
        %v3704 = vadd.f32 0.0, %v3703
        %3705 = vmatmul.f32.gmra.mxu0 %v3642
        %v3706 = vpop.f32.mrf.mxu0
        %v3707 = vadd.f32 0.0, %v3706
        %3708 = vdwg.mxu0
        %3709 = vmatpush.msra.mxu0 0.0
        %3710 = vmatpush.msra.mxu0 0.0
        %3711 = vmatpush.msra.mxu0 0.0
        %3712 = vmatpush.msra.mxu0 0.0
        %3713 = vmatpush.msra.mxu0 0.0
        %3714 = vmatpush.msra.mxu0 0.0
        %3715 = vmatpush.msra.mxu0 0.0
        %3716 = vmatpush.msra.mxu0 0.0
        %3717 = vmatpush.msra.mxu0 0.0
        %3718 = vmatpush.msra.mxu0 0.0
        %3719 = vmatpush.msra.mxu0 0.0
        %3720 = vmatpush.msra.mxu0 0.0
        %3721 = vmatpush.msra.mxu0 0.0
        %3722 = vmatpush.msra.mxu0 0.0
        %3723 = vmatpush.msra.mxu0 %v550
        %3724 = vmatpush.msra.mxu0 %v549
        %3725 = vmatmul.f32.gmra.mxu0 %v3645
        %v3726 = vpop.f32.mrf.mxu0
        %v3727 = vadd.f32 %v3686, %v3726
        %3728 = vmatmul.f32.gmra.mxu0 %v3648
        %v3729 = vpop.f32.mrf.mxu0
        %v3730 = vadd.f32 %v3689, %v3729
        %3731 = vmatmul.f32.gmra.mxu0 %v3651
        %v3732 = vpop.f32.mrf.mxu0
        %v3733 = vadd.f32 %v3692, %v3732
        %3734 = vmatmul.f32.gmra.mxu0 %v3654
        %v3735 = vpop.f32.mrf.mxu0
        %v3736 = vadd.f32 %v3695, %v3735
        %3737 = vmatmul.f32.gmra.mxu0 %v3657
        %v3738 = vpop.f32.mrf.mxu0
        %v3739 = vadd.f32 %v3698, %v3738
        %3740 = vmatmul.f32.gmra.mxu0 %v3660
        %v3741 = vpop.f32.mrf.mxu0
        %v3742 = vadd.f32 %v3701, %v3741
        %3743 = vmatmul.f32.gmra.mxu0 %v3663
        %v3744 = vpop.f32.mrf.mxu0
        %v3745 = vadd.f32 %v3704, %v3744
        %3746 = vmatmul.f32.gmra.mxu0 %v3666
        %v3747 = vpop.f32.mrf.mxu0
        %v3748 = vadd.f32 %v3707, %v3747
        %3749 = vdwg.mxu0
        %v3750 = vstv %s514
        %v3751 = vmul.f32 %v3727, %v3750
        %v3752 = vmul.f32 %v3730, %v3750
        %v3753 = vmul.f32 %v3733, %v3750
        %v3754 = vmul.f32 %v3736, %v3750
        %v3755 = vmul.f32 %v3739, %v3750
        %v3756 = vmul.f32 %v3742, %v3750
        %v3757 = vmul.f32 %v3745, %v3750
        %v3758 = vmul.f32 %v3748, %v3750
        %v3759 = vstv %s513
        %v3760 = vadd.f32 %v3751, %v3759
        %v3761 = vadd.f32 %v3752, %v3759
        %v3762 = vadd.f32 %v3753, %v3759
        %v3763 = vadd.f32 %v3754, %v3759
        %v3764 = vadd.f32 %v3755, %v3759
        %v3765 = vadd.f32 %v3756, %v3759
        %v3766 = vadd.f32 %v3757, %v3759
        %v3767 = vadd.f32 %v3758, %v3759
        %v3768 = vadd.f32 %v3760, %v3204
        %v3769 = vadd.f32 %v3761, %v3205
        %v3770 = vadd.f32 %v3762, %v3206
        %v3771 = vadd.f32 %v3763, %v3207
        %v3772 = vadd.f32 %v3764, %v3208
        %v3773 = vadd.f32 %v3765, %v3209
        %v3774 = vadd.f32 %v3766, %v3210
        %v3775 = vadd.f32 %v3767, %v3211
        %v3776 = vmax.f32 %v3768, 0.0
        %v3777 = vmax.f32 %v3769, 0.0
        %v3778 = vmax.f32 %v3770, 0.0
        %v3779 = vmax.f32 %v3771, 0.0
        %v3780 = vmax.f32 %v3772, 0.0
        %v3781 = vmax.f32 %v3773, 0.0
        %v3782 = vmax.f32 %v3774, 0.0
        %v3783 = vmax.f32 %v3775, 0.0
        %s3784 = sld [smem:[#allocation9 + $0x5]]
        %s3785 = sld [smem:[#allocation9 + $0x6]]
        %s3786 = sld [smem:[#allocation9 + $0x7]]
        %s3787 = sld [smem:[#allocation9 + $0x8]]
        %s3788 = sld [smem:[#allocation9 + $0x9]]
        %v3789 = vld [vmem:[%s6] sm:$0xff]
        %v3790 = vld [vmem:[%s6 + $0x8] sm:$0xff]
        %v3791 = vld [vmem:[%s7] sm:$0xff]
        %v3792 = vld [vmem:[%s7 + $0x8] sm:$0xff]
        %v3793 = vld [vmem:[%s7 + $0x10] sm:$0xff]
        %v3794 = vld [vmem:[%s7 + $0x18] sm:$0xff]
        %v3795 = vld [vmem:[%s7 + $0x20] sm:$0xff]
        %v3796 = vld [vmem:[%s7 + $0x28] sm:$0xff]
        %v3797 = vld [vmem:[%s7 + $0x30] sm:$0xff]
        %v3798 = vld [vmem:[%s7 + $0x38] sm:$0xff]
        %v3799 = vld [vmem:[%s7 + $0x40] sm:$0xff]
        %v3800 = vld [vmem:[%s7 + $0x48] sm:$0xff]
        %v3801 = vld [vmem:[%s7 + $0x50] sm:$0xff]
        %v3802 = vld [vmem:[%s7 + $0x58] sm:$0xff]
        %v3803 = vld [vmem:[%s7 + $0x60] sm:$0xff]
        %v3804 = vld [vmem:[%s7 + $0x68] sm:$0xff]
        %v3805 = vld [vmem:[%s7 + $0x70] sm:$0xff]
        %v3806 = vld [vmem:[%s7 + $0x78] sm:$0xff]
        %v3807 = vld [vmem:[%s7 + $0x80] sm:$0xff]
        %v3808 = vld [vmem:[%s7 + $0x88] sm:$0xff]
        %v3809 = vld [vmem:[%s8] sm:$0xff]
        %v3810 = vld [vmem:[%s8 + $0x8] sm:$0xff]
        %v3811 = vld [vmem:[%s8 + $0x10] sm:$0xff]
        %v3812 = vld [vmem:[%s8 + $0x18] sm:$0xff]
        %v3813 = vld [vmem:[%s8 + $0x20] sm:$0xff]
        %v3814 = vld [vmem:[%s8 + $0x28] sm:$0xff]
        %v3815 = vld [vmem:[%s8 + $0x30] sm:$0xff]
        %v3816 = vld [vmem:[%s8 + $0x38] sm:$0xff]
        %v3817 = vld [vmem:[%s8 + $0x40] sm:$0xff]
        %v3818 = vld [vmem:[%s8 + $0x48] sm:$0xff]
        %v3819 = vld [vmem:[%s8 + $0x50] sm:$0xff]
        %v3820 = vld [vmem:[%s8 + $0x58] sm:$0xff]
        %v3821 = vld [vmem:[%s8 + $0x60] sm:$0xff]
        %v3822 = vld [vmem:[%s8 + $0x68] sm:$0xff]
        %v3823 = vld [vmem:[%s8 + $0x70] sm:$0xff]
        %v3824 = vld [vmem:[%s8 + $0x78] sm:$0xff]
        %v3825 = vld [vmem:[%s8 + $0x80] sm:$0xff]
        %v3826 = vld [vmem:[%s8 + $0x88] sm:$0xff]
        %v3827 = vld [vmem:[%s8 + $0x90] sm:$0xff]
        %v3828 = vld [vmem:[%s8 + $0x98] sm:$0xff]
        %v3829 = vld [vmem:[%s8 + $0xa0] sm:$0xff]
        %v3830 = vld [vmem:[%s8 + $0xa8] sm:$0xff]
        %v3831 = vld [vmem:[%s8 + $0xb0] sm:$0xff]
        %v3832 = vld [vmem:[%s8 + $0xb8] sm:$0xff]
        %v3833 = vld [vmem:[%s8 + $0xc0] sm:$0xff]
        %v3834 = vld [vmem:[%s8 + $0xc8] sm:$0xff]
        %v3835 = vld [vmem:[%s8 + $0xd0] sm:$0xff]
        %v3836 = vld [vmem:[%s8 + $0xd8] sm:$0xff]
        %v3837 = vld [vmem:[%s8 + $0xe0] sm:$0xff]
        %v3838 = vld [vmem:[%s8 + $0xe8] sm:$0xff]
        %v3839 = vld [vmem:[%s8 + $0xf0] sm:$0xff]
        %v3840 = vld [vmem:[%s8 + $0xf8] sm:$0xff]
        %v3841 = vld [vmem:[%s8 + $0x100] sm:$0xff]
        %v3842 = vld [vmem:[%s8 + $0x108] sm:$0xff]
        %v3843 = vld [vmem:[%s8 + $0x110] sm:$0xff]
        %v3844 = vld [vmem:[%s8 + $0x118] sm:$0xff]
        %v3845 = vld [vmem:[%s9] sm:$0xff]
        %v3846 = vld [vmem:[%s9 + $0x8] sm:$0xff]
        %v3847 = vstv %s3784
        %v3848 = vadd.f32 %v3776, %v3847
        %v3849 = vadd.f32 %v3777, %v3847
        %v3850 = vadd.f32 %v3778, %v3847
        %v3851 = vadd.f32 %v3779, %v3847
        %v3852 = vadd.f32 %v3780, %v3847
        %v3853 = vadd.f32 %v3781, %v3847
        %v3854 = vadd.f32 %v3782, %v3847
        %v3855 = vadd.f32 %v3783, %v3847
        %3856 = vst.msk [vmem:[#allocation3] sm:$0xff] %vm3221, 0.0
        %3857 = vst.msk [vmem:[#allocation3 + $0x8] sm:$0x3] %vm3223, 0.0
        %3858 = vst.msk [vmem:[#allocation3 + $0x10] sm:$0xff] %vm3221, 0.0
        %3859 = vst.msk [vmem:[#allocation3 + $0x18] sm:$0x3] %vm3223, 0.0
        %3860 = vst.msk [vmem:[#allocation3 + $0x20] sm:$0xff] %vm3221, 0.0
        %3861 = vst.msk [vmem:[#allocation3 + $0x28] sm:$0x3] %vm3223, 0.0
        %3862 = vst.msk [vmem:[#allocation3 + $0x30] sm:$0xff] %vm3221, 0.0
        %3863 = vst.msk [vmem:[#allocation3 + $0x38] sm:$0x3] %vm3223, 0.0
        %3864 = vst.msk [vmem:[#allocation3 + $0x40] sm:$0xff] %vm3221, 0.0
        %3865 = vst.msk [vmem:[#allocation3 + $0x48] sm:$0x3] %vm3223, 0.0
        %3866 = vst.msk [vmem:[#allocation3 + $0x50] sm:$0xff] %vm3221, 0.0
        %3867 = vst.msk [vmem:[#allocation3 + $0x58] sm:$0x3] %vm3223, 0.0
        %3868 = vst.msk [vmem:[#allocation3 + $0x60] sm:$0xff] %vm3221, 0.0
        %3869 = vst.msk [vmem:[#allocation3 + $0x68] sm:$0x3] %vm3223, 0.0
        %3870 = vst.msk [vmem:[#allocation3 + $0x70] sm:$0xff] %vm3221, 0.0
        %3871 = vst.msk [vmem:[#allocation3 + $0x78] sm:$0x3] %vm3223, 0.0
        %3872 = vst.msk [vmem:[#allocation3 + $0x80] sm:$0xff] %vm3221, 0.0
        %3873 = vst.msk [vmem:[#allocation3 + $0x88] sm:$0x3] %vm3223, 0.0
        %3874 = vst.msk [vmem:[#allocation3 + $0x90] sm:$0xff] %vm3221, 0.0
        %3875 = vst.msk [vmem:[#allocation3 + $0x98] sm:$0x3] %vm3223, 0.0
        %3876 = vst.msk [vmem:[%s3243 + $0x1] sm:$0xff] %vm3221, %v3848
        %3877 = vst.msk [vmem:[%s3243 + $0x11] sm:$0xff] %vm3221, %v3849
        %3878 = vst.msk [vmem:[%s3243 + $0x21] sm:$0xff] %vm3221, %v3850
        %3879 = vst.msk [vmem:[%s3243 + $0x31] sm:$0xff] %vm3221, %v3851
        %3880 = vst.msk [vmem:[%s3243 + $0x41] sm:$0xff] %vm3221, %v3852
        %3881 = vst.msk [vmem:[%s3243 + $0x51] sm:$0xff] %vm3221, %v3853
        %3882 = vst.msk [vmem:[%s3243 + $0x61] sm:$0xff] %vm3221, %v3854
        %3883 = vst.msk [vmem:[%s3243 + $0x71] sm:$0xff] %vm3221, %v3855
        %v3884 = vld [vmem:[#allocation3] sm:$0xff]
        %v3885 = vld [vmem:[#allocation3 + $0x10] sm:$0xff]
        %v3886 = vld [vmem:[#allocation3 + $0x20] sm:$0xff]
        %v3887 = vld [vmem:[#allocation3 + $0x30] sm:$0xff]
        %v3888 = vld [vmem:[#allocation3 + $0x40] sm:$0xff]
        %v3889 = vld [vmem:[#allocation3 + $0x50] sm:$0xff]
        %v3890 = vld [vmem:[#allocation3 + $0x60] sm:$0xff]
        %v3891 = vld [vmem:[#allocation3 + $0x70] sm:$0xff]
        %3892 = vst.msk [vmem:[#allocation6] sm:$0xff] %vm3221, %v3884
        %3893 = vst.msk [vmem:[#allocation6 + $0x10] sm:$0xff] %vm3221, %v3885
        %3894 = vst.msk [vmem:[#allocation6 + $0x20] sm:$0xff] %vm3221, %v3886
        %3895 = vst.msk [vmem:[#allocation6 + $0x30] sm:$0xff] %vm3221, %v3887
        %3896 = vst.msk [vmem:[#allocation6 + $0x40] sm:$0xff] %vm3221, %v3888
        %3897 = vst.msk [vmem:[#allocation6 + $0x50] sm:$0xff] %vm3221, %v3889
        %3898 = vst.msk [vmem:[#allocation6 + $0x60] sm:$0xff] %vm3221, %v3890
        %3899 = vst.msk [vmem:[#allocation6 + $0x70] sm:$0xff] %vm3221, %v3891
        %v3900 = vld [vmem:[#allocation3 + $0x1] sm:$0xff]
        %v3901 = vld [vmem:[#allocation3 + $0x11] sm:$0xff]
        %v3902 = vld [vmem:[#allocation3 + $0x21] sm:$0xff]
        %v3903 = vld [vmem:[#allocation3 + $0x31] sm:$0xff]
        %v3904 = vld [vmem:[#allocation3 + $0x41] sm:$0xff]
        %v3905 = vld [vmem:[#allocation3 + $0x51] sm:$0xff]
        %v3906 = vld [vmem:[#allocation3 + $0x61] sm:$0xff]
        %v3907 = vld [vmem:[#allocation3 + $0x71] sm:$0xff]
        %3916 = vrot.lane.b32.xlu0 %v3900, 16
        %v3917 = vpop.permute.xlu0 %3916
        %3918 = vrot.lane.b32.xlu0 %v3901, 16
        %v3919 = vpop.permute.xlu0 %3918
        %3920 = vrot.lane.b32.xlu0 %v3902, 16
        %v3921 = vpop.permute.xlu0 %3920
        %3922 = vrot.lane.b32.xlu0 %v3903, 16
        %v3923 = vpop.permute.xlu0 %3922
        %3924 = vrot.lane.b32.xlu0 %v3904, 16
        %v3925 = vpop.permute.xlu0 %3924
        %3926 = vrot.lane.b32.xlu0 %v3905, 16
        %v3927 = vpop.permute.xlu0 %3926
        %3928 = vrot.lane.b32.xlu0 %v3906, 16
        %v3929 = vpop.permute.xlu0 %3928
        %3930 = vrot.lane.b32.xlu0 %v3907, 16
        %v3931 = vpop.permute.xlu0 %3930
        %3940 = vst.msk [vmem:[#allocation6] sm:$0xff] %vm3308, %v3917
        %3941 = vst.msk [vmem:[#allocation6 + $0x10] sm:$0xff] %vm3308, %v3919
        %3942 = vst.msk [vmem:[#allocation6 + $0x20] sm:$0xff] %vm3308, %v3921
        %3943 = vst.msk [vmem:[#allocation6 + $0x30] sm:$0xff] %vm3308, %v3923
        %3944 = vst.msk [vmem:[#allocation6 + $0x40] sm:$0xff] %vm3308, %v3925
        %3945 = vst.msk [vmem:[#allocation6 + $0x50] sm:$0xff] %vm3308, %v3927
        %3946 = vst.msk [vmem:[#allocation6 + $0x60] sm:$0xff] %vm3308, %v3929
        %3947 = vst.msk [vmem:[#allocation6 + $0x70] sm:$0xff] %vm3308, %v3931
        %v3948 = vld [vmem:[#allocation3 + $0x2] sm:$0xff]
        %v3949 = vld [vmem:[#allocation3 + $0x12] sm:$0xff]
        %v3950 = vld [vmem:[#allocation3 + $0x22] sm:$0xff]
        %v3951 = vld [vmem:[#allocation3 + $0x32] sm:$0xff]
        %v3952 = vld [vmem:[#allocation3 + $0x42] sm:$0xff]
        %v3953 = vld [vmem:[#allocation3 + $0x52] sm:$0xff]
        %v3954 = vld [vmem:[#allocation3 + $0x62] sm:$0xff]
        %v3955 = vld [vmem:[#allocation3 + $0x72] sm:$0xff]
        %3964 = vrot.lane.b32.xlu0 %v3948, 32
        %v3965 = vpop.permute.xlu0 %3964
        %3966 = vrot.lane.b32.xlu0 %v3949, 32
        %v3967 = vpop.permute.xlu0 %3966
        %3968 = vrot.lane.b32.xlu0 %v3950, 32
        %v3969 = vpop.permute.xlu0 %3968
        %3970 = vrot.lane.b32.xlu0 %v3951, 32
        %v3971 = vpop.permute.xlu0 %3970
        %3972 = vrot.lane.b32.xlu0 %v3952, 32
        %v3973 = vpop.permute.xlu0 %3972
        %3974 = vrot.lane.b32.xlu0 %v3953, 32
        %v3975 = vpop.permute.xlu0 %3974
        %3976 = vrot.lane.b32.xlu0 %v3954, 32
        %v3977 = vpop.permute.xlu0 %3976
        %3978 = vrot.lane.b32.xlu0 %v3955, 32
        %v3979 = vpop.permute.xlu0 %3978
        %3988 = vst.msk [vmem:[#allocation6] sm:$0xff] %vm3357, %v3965
        %3989 = vst.msk [vmem:[#allocation6 + $0x10] sm:$0xff] %vm3357, %v3967
        %3990 = vst.msk [vmem:[#allocation6 + $0x20] sm:$0xff] %vm3357, %v3969
        %3991 = vst.msk [vmem:[#allocation6 + $0x30] sm:$0xff] %vm3357, %v3971
        %3992 = vst.msk [vmem:[#allocation6 + $0x40] sm:$0xff] %vm3357, %v3973
        %3993 = vst.msk [vmem:[#allocation6 + $0x50] sm:$0xff] %vm3357, %v3975
        %3994 = vst.msk [vmem:[#allocation6 + $0x60] sm:$0xff] %vm3357, %v3977
        %3995 = vst.msk [vmem:[#allocation6 + $0x70] sm:$0xff] %vm3357, %v3979
        %v3996 = vld [vmem:[%s3243] sm:$0xff]
        %v3997 = vld [vmem:[%s3243 + $0x10] sm:$0xff]
        %v3998 = vld [vmem:[%s3243 + $0x20] sm:$0xff]
        %v3999 = vld [vmem:[%s3243 + $0x30] sm:$0xff]
        %v4000 = vld [vmem:[%s3243 + $0x40] sm:$0xff]
        %v4001 = vld [vmem:[%s3243 + $0x50] sm:$0xff]
        %v4002 = vld [vmem:[%s3243 + $0x60] sm:$0xff]
        %v4003 = vld [vmem:[%s3243 + $0x70] sm:$0xff]
        %4012 = vrot.lane.b32.xlu0 %v3996, 48
        %v4013 = vpop.permute.xlu0 %4012
        %4014 = vrot.lane.b32.xlu0 %v3997, 48
        %v4015 = vpop.permute.xlu0 %4014
        %4016 = vrot.lane.b32.xlu0 %v3998, 48
        %v4017 = vpop.permute.xlu0 %4016
        %4018 = vrot.lane.b32.xlu0 %v3999, 48
        %v4019 = vpop.permute.xlu0 %4018
        %4020 = vrot.lane.b32.xlu0 %v4000, 48
        %v4021 = vpop.permute.xlu0 %4020
        %4022 = vrot.lane.b32.xlu0 %v4001, 48
        %v4023 = vpop.permute.xlu0 %4022
        %4024 = vrot.lane.b32.xlu0 %v4002, 48
        %v4025 = vpop.permute.xlu0 %4024
        %4026 = vrot.lane.b32.xlu0 %v4003, 48
        %v4027 = vpop.permute.xlu0 %4026
        %4036 = vst.msk [vmem:[#allocation6] sm:$0xff] %vm3406, %v4013
        %4037 = vst.msk [vmem:[#allocation6 + $0x10] sm:$0xff] %vm3406, %v4015
        %4038 = vst.msk [vmem:[#allocation6 + $0x20] sm:$0xff] %vm3406, %v4017
        %4039 = vst.msk [vmem:[#allocation6 + $0x30] sm:$0xff] %vm3406, %v4019
        %4040 = vst.msk [vmem:[#allocation6 + $0x40] sm:$0xff] %vm3406, %v4021
        %4041 = vst.msk [vmem:[#allocation6 + $0x50] sm:$0xff] %vm3406, %v4023
        %4042 = vst.msk [vmem:[#allocation6 + $0x60] sm:$0xff] %vm3406, %v4025
        %4043 = vst.msk [vmem:[#allocation6 + $0x70] sm:$0xff] %vm3406, %v4027
        %v4044 = vld [vmem:[%s3243 + $0x1] sm:$0xff]
        %v4045 = vld [vmem:[%s3243 + $0x11] sm:$0xff]
        %v4046 = vld [vmem:[%s3243 + $0x21] sm:$0xff]
        %v4047 = vld [vmem:[%s3243 + $0x31] sm:$0xff]
        %v4048 = vld [vmem:[%s3243 + $0x41] sm:$0xff]
        %v4049 = vld [vmem:[%s3243 + $0x51] sm:$0xff]
        %v4050 = vld [vmem:[%s3243 + $0x61] sm:$0xff]
        %v4051 = vld [vmem:[%s3243 + $0x71] sm:$0xff]
        %4060 = vrot.lane.b32.xlu0 %v4044, 64
        %v4061 = vpop.permute.xlu0 %4060
        %4062 = vrot.lane.b32.xlu0 %v4045, 64
        %v4063 = vpop.permute.xlu0 %4062
        %4064 = vrot.lane.b32.xlu0 %v4046, 64
        %v4065 = vpop.permute.xlu0 %4064
        %4066 = vrot.lane.b32.xlu0 %v4047, 64
        %v4067 = vpop.permute.xlu0 %4066
        %4068 = vrot.lane.b32.xlu0 %v4048, 64
        %v4069 = vpop.permute.xlu0 %4068
        %4070 = vrot.lane.b32.xlu0 %v4049, 64
        %v4071 = vpop.permute.xlu0 %4070
        %4072 = vrot.lane.b32.xlu0 %v4050, 64
        %v4073 = vpop.permute.xlu0 %4072
        %4074 = vrot.lane.b32.xlu0 %v4051, 64
        %v4075 = vpop.permute.xlu0 %4074
        %4084 = vst.msk [vmem:[#allocation6] sm:$0xff] %vm3455, %v4061
        %4085 = vst.msk [vmem:[#allocation6 + $0x10] sm:$0xff] %vm3455, %v4063
        %4086 = vst.msk [vmem:[#allocation6 + $0x20] sm:$0xff] %vm3455, %v4065
        %4087 = vst.msk [vmem:[#allocation6 + $0x30] sm:$0xff] %vm3455, %v4067
        %4088 = vst.msk [vmem:[#allocation6 + $0x40] sm:$0xff] %vm3455, %v4069
        %4089 = vst.msk [vmem:[#allocation6 + $0x50] sm:$0xff] %vm3455, %v4071
        %4090 = vst.msk [vmem:[#allocation6 + $0x60] sm:$0xff] %vm3455, %v4073
        %4091 = vst.msk [vmem:[#allocation6 + $0x70] sm:$0xff] %vm3455, %v4075
        %v4092 = vld [vmem:[%s3243 + $0x2] sm:$0xff]
        %v4093 = vld [vmem:[%s3243 + $0x12] sm:$0xff]
        %v4094 = vld [vmem:[%s3243 + $0x22] sm:$0xff]
        %v4095 = vld [vmem:[%s3243 + $0x32] sm:$0xff]
        %v4096 = vld [vmem:[%s3243 + $0x42] sm:$0xff]
        %v4097 = vld [vmem:[%s3243 + $0x52] sm:$0xff]
        %v4098 = vld [vmem:[%s3243 + $0x62] sm:$0xff]
        %v4099 = vld [vmem:[%s3243 + $0x72] sm:$0xff]
        %4108 = vrot.lane.b32.xlu0 %v4092, 80
        %v4109 = vpop.permute.xlu0 %4108
        %4110 = vrot.lane.b32.xlu0 %v4093, 80
        %v4111 = vpop.permute.xlu0 %4110
        %4112 = vrot.lane.b32.xlu0 %v4094, 80
        %v4113 = vpop.permute.xlu0 %4112
        %4114 = vrot.lane.b32.xlu0 %v4095, 80
        %v4115 = vpop.permute.xlu0 %4114
        %4116 = vrot.lane.b32.xlu0 %v4096, 80
        %v4117 = vpop.permute.xlu0 %4116
        %4118 = vrot.lane.b32.xlu0 %v4097, 80
        %v4119 = vpop.permute.xlu0 %4118
        %4120 = vrot.lane.b32.xlu0 %v4098, 80
        %v4121 = vpop.permute.xlu0 %4120
        %4122 = vrot.lane.b32.xlu0 %v4099, 80
        %v4123 = vpop.permute.xlu0 %4122
        %4132 = vst.msk [vmem:[#allocation6] sm:$0xff] %vm3504, %v4109
        %4133 = vst.msk [vmem:[#allocation6 + $0x10] sm:$0xff] %vm3504, %v4111
        %4134 = vst.msk [vmem:[#allocation6 + $0x20] sm:$0xff] %vm3504, %v4113
        %4135 = vst.msk [vmem:[#allocation6 + $0x30] sm:$0xff] %vm3504, %v4115
        %4136 = vst.msk [vmem:[#allocation6 + $0x40] sm:$0xff] %vm3504, %v4117
        %4137 = vst.msk [vmem:[#allocation6 + $0x50] sm:$0xff] %vm3504, %v4119
        %4138 = vst.msk [vmem:[#allocation6 + $0x60] sm:$0xff] %vm3504, %v4121
        %4139 = vst.msk [vmem:[#allocation6 + $0x70] sm:$0xff] %vm3504, %v4123
        %v4140 = vld [vmem:[%s3513] sm:$0xff]
        %v4141 = vld [vmem:[%s3513 + $0x10] sm:$0xff]
        %v4142 = vld [vmem:[%s3513 + $0x20] sm:$0xff]
        %v4143 = vld [vmem:[%s3513 + $0x30] sm:$0xff]
        %v4144 = vld [vmem:[%s3513 + $0x40] sm:$0xff]
        %v4145 = vld [vmem:[%s3513 + $0x50] sm:$0xff]
        %v4146 = vld [vmem:[%s3513 + $0x60] sm:$0xff]
        %v4147 = vld [vmem:[%s3513 + $0x70] sm:$0xff]
        %4156 = vrot.lane.b32.xlu0 %v4140, 96
        %v4157 = vpop.permute.xlu0 %4156
        %4158 = vrot.lane.b32.xlu0 %v4141, 96
        %v4159 = vpop.permute.xlu0 %4158
        %4160 = vrot.lane.b32.xlu0 %v4142, 96
        %v4161 = vpop.permute.xlu0 %4160
        %4162 = vrot.lane.b32.xlu0 %v4143, 96
        %v4163 = vpop.permute.xlu0 %4162
        %4164 = vrot.lane.b32.xlu0 %v4144, 96
        %v4165 = vpop.permute.xlu0 %4164
        %4166 = vrot.lane.b32.xlu0 %v4145, 96
        %v4167 = vpop.permute.xlu0 %4166
        %4168 = vrot.lane.b32.xlu0 %v4146, 96
        %v4169 = vpop.permute.xlu0 %4168
        %4170 = vrot.lane.b32.xlu0 %v4147, 96
        %v4171 = vpop.permute.xlu0 %4170
        %4180 = vst.msk [vmem:[#allocation6] sm:$0xff] %vm3554, %v4157
        %4181 = vst.msk [vmem:[#allocation6 + $0x10] sm:$0xff] %vm3554, %v4159
        %4182 = vst.msk [vmem:[#allocation6 + $0x20] sm:$0xff] %vm3554, %v4161
        %4183 = vst.msk [vmem:[#allocation6 + $0x30] sm:$0xff] %vm3554, %v4163
        %4184 = vst.msk [vmem:[#allocation6 + $0x40] sm:$0xff] %vm3554, %v4165
        %4185 = vst.msk [vmem:[#allocation6 + $0x50] sm:$0xff] %vm3554, %v4167
        %4186 = vst.msk [vmem:[#allocation6 + $0x60] sm:$0xff] %vm3554, %v4169
        %4187 = vst.msk [vmem:[#allocation6 + $0x70] sm:$0xff] %vm3554, %v4171
        %v4188 = vld [vmem:[%s3513 + $0x1] sm:$0xff]
        %v4189 = vld [vmem:[%s3513 + $0x11] sm:$0xff]
        %v4190 = vld [vmem:[%s3513 + $0x21] sm:$0xff]
        %v4191 = vld [vmem:[%s3513 + $0x31] sm:$0xff]
        %v4192 = vld [vmem:[%s3513 + $0x41] sm:$0xff]
        %v4193 = vld [vmem:[%s3513 + $0x51] sm:$0xff]
        %v4194 = vld [vmem:[%s3513 + $0x61] sm:$0xff]
        %v4195 = vld [vmem:[%s3513 + $0x71] sm:$0xff]
        %4204 = vrot.lane.b32.xlu0 %v4188, 112
        %v4205 = vpop.permute.xlu0 %4204
        %4206 = vrot.lane.b32.xlu0 %v4189, 112
        %v4207 = vpop.permute.xlu0 %4206
        %4208 = vrot.lane.b32.xlu0 %v4190, 112
        %v4209 = vpop.permute.xlu0 %4208
        %4210 = vrot.lane.b32.xlu0 %v4191, 112
        %v4211 = vpop.permute.xlu0 %4210
        %4212 = vrot.lane.b32.xlu0 %v4192, 112
        %v4213 = vpop.permute.xlu0 %4212
        %4214 = vrot.lane.b32.xlu0 %v4193, 112
        %v4215 = vpop.permute.xlu0 %4214
        %4216 = vrot.lane.b32.xlu0 %v4194, 112
        %v4217 = vpop.permute.xlu0 %4216
        %4218 = vrot.lane.b32.xlu0 %v4195, 112
        %v4219 = vpop.permute.xlu0 %4218
        %4228 = vst.msk [vmem:[#allocation6] sm:$0xff] %vm3603, %v4205
        %4229 = vst.msk [vmem:[#allocation6 + $0x10] sm:$0xff] %vm3603, %v4207
        %4230 = vst.msk [vmem:[#allocation6 + $0x20] sm:$0xff] %vm3603, %v4209
        %4231 = vst.msk [vmem:[#allocation6 + $0x30] sm:$0xff] %vm3603, %v4211
        %4232 = vst.msk [vmem:[#allocation6 + $0x40] sm:$0xff] %vm3603, %v4213
        %4233 = vst.msk [vmem:[#allocation6 + $0x50] sm:$0xff] %vm3603, %v4215
        %4234 = vst.msk [vmem:[#allocation6 + $0x60] sm:$0xff] %vm3603, %v4217
        %4235 = vst.msk [vmem:[#allocation6 + $0x70] sm:$0xff] %vm3603, %v4219
        %v4236 = vld [vmem:[%s3513 + $0x2] sm:$0xff]
        %v4237 = vld [vmem:[%s3513 + $0x12] sm:$0xff]
        %v4238 = vld [vmem:[%s3513 + $0x22] sm:$0xff]
        %v4239 = vld [vmem:[%s3513 + $0x32] sm:$0xff]
        %v4240 = vld [vmem:[%s3513 + $0x42] sm:$0xff]
        %v4241 = vld [vmem:[%s3513 + $0x52] sm:$0xff]
        %v4242 = vld [vmem:[%s3513 + $0x62] sm:$0xff]
        %v4243 = vld [vmem:[%s3513 + $0x72] sm:$0xff]
        %4244 = vst.msk [vmem:[#allocation6 + $0x8] sm:$0xff] %vm3221, %v4236
        %4245 = vst.msk [vmem:[#allocation6 + $0x18] sm:$0xff] %vm3221, %v4237
        %4246 = vst.msk [vmem:[#allocation6 + $0x28] sm:$0xff] %vm3221, %v4238
        %4247 = vst.msk [vmem:[#allocation6 + $0x38] sm:$0xff] %vm3221, %v4239
        %4248 = vst.msk [vmem:[#allocation6 + $0x48] sm:$0xff] %vm3221, %v4240
        %4249 = vst.msk [vmem:[#allocation6 + $0x58] sm:$0xff] %vm3221, %v4241
        %4250 = vst.msk [vmem:[#allocation6 + $0x68] sm:$0xff] %vm3221, %v4242
        %4251 = vst.msk [vmem:[#allocation6 + $0x78] sm:$0xff] %vm3221, %v4243
        %v4252 = vld [vmem:[#allocation6] sm:$0xff]
        %v4253 = vld [vmem:[#allocation6 + $0x8] sm:$0xff]
        %v4254 = vld [vmem:[#allocation6 + $0x10] sm:$0xff]
        %v4255 = vld [vmem:[#allocation6 + $0x18] sm:$0xff]
        %v4256 = vld [vmem:[#allocation6 + $0x20] sm:$0xff]
        %v4257 = vld [vmem:[#allocation6 + $0x28] sm:$0xff]
        %v4258 = vld [vmem:[#allocation6 + $0x30] sm:$0xff]
        %v4259 = vld [vmem:[#allocation6 + $0x38] sm:$0xff]
        %v4260 = vld [vmem:[#allocation6 + $0x40] sm:$0xff]
        %v4261 = vld [vmem:[#allocation6 + $0x48] sm:$0xff]
        %v4262 = vld [vmem:[#allocation6 + $0x50] sm:$0xff]
        %v4263 = vld [vmem:[#allocation6 + $0x58] sm:$0xff]
        %v4264 = vld [vmem:[#allocation6 + $0x60] sm:$0xff]
        %v4265 = vld [vmem:[#allocation6 + $0x68] sm:$0xff]
        %v4266 = vld [vmem:[#allocation6 + $0x70] sm:$0xff]
        %v4267 = vld [vmem:[#allocation6 + $0x78] sm:$0xff]
        %v4269 = vsel %vm3221, %v4253, 0
        %v4272 = vsel %vm3221, %v4255, 0
        %v4275 = vsel %vm3221, %v4257, 0
        %v4278 = vsel %vm3221, %v4259, 0
        %v4281 = vsel %vm3221, %v4261, 0
        %v4284 = vsel %vm3221, %v4263, 0
        %v4287 = vsel %vm3221, %v4265, 0
        %v4290 = vsel %vm3221, %v4267, 0
        %4292 = vmatpush.msra.mxu0 %v3806
        %4293 = vmatpush.msra.mxu0 %v3805
        %4294 = vmatpush.msra.mxu0 %v3804
        %4295 = vmatpush.msra.mxu0 %v3803
        %4296 = vmatpush.msra.mxu0 %v3802
        %4297 = vmatpush.msra.mxu0 %v3801
        %4298 = vmatpush.msra.mxu0 %v3800
        %4299 = vmatpush.msra.mxu0 %v3799
        %4300 = vmatpush.msra.mxu0 %v3798
        %4301 = vmatpush.msra.mxu0 %v3797
        %4302 = vmatpush.msra.mxu0 %v3796
        %4303 = vmatpush.msra.mxu0 %v3795
        %4304 = vmatpush.msra.mxu0 %v3794
        %4305 = vmatpush.msra.mxu0 %v3793
        %4306 = vmatpush.msra.mxu0 %v3792
        %4307 = vmatpush.msra.mxu0 %v3791
        %4308 = vmatmul.f32.gmra.mxu0 %v4252
        %v4309 = vpop.f32.mrf.mxu0
        %v4310 = vadd.f32 0.0, %v4309
        %4311 = vmatmul.f32.gmra.mxu0 %v4254
        %v4312 = vpop.f32.mrf.mxu0
        %v4313 = vadd.f32 0.0, %v4312
        %4314 = vmatmul.f32.gmra.mxu0 %v4256
        %v4315 = vpop.f32.mrf.mxu0
        %v4316 = vadd.f32 0.0, %v4315
        %4317 = vmatmul.f32.gmra.mxu0 %v4258
        %v4318 = vpop.f32.mrf.mxu0
        %v4319 = vadd.f32 0.0, %v4318
        %4320 = vmatmul.f32.gmra.mxu0 %v4260
        %v4321 = vpop.f32.mrf.mxu0
        %v4322 = vadd.f32 0.0, %v4321
        %4323 = vmatmul.f32.gmra.mxu0 %v4262
        %v4324 = vpop.f32.mrf.mxu0
        %v4325 = vadd.f32 0.0, %v4324
        %4326 = vmatmul.f32.gmra.mxu0 %v4264
        %v4327 = vpop.f32.mrf.mxu0
        %v4328 = vadd.f32 0.0, %v4327
        %4329 = vmatmul.f32.gmra.mxu0 %v4266
        %v4330 = vpop.f32.mrf.mxu0
        %v4331 = vadd.f32 0.0, %v4330
        %4332 = vdwg.mxu0
        %4333 = vmatpush.msra.mxu0 0.0
        %4334 = vmatpush.msra.mxu0 0.0
        %4335 = vmatpush.msra.mxu0 0.0
        %4336 = vmatpush.msra.mxu0 0.0
        %4337 = vmatpush.msra.mxu0 0.0
        %4338 = vmatpush.msra.mxu0 0.0
        %4339 = vmatpush.msra.mxu0 0.0
        %4340 = vmatpush.msra.mxu0 0.0
        %4341 = vmatpush.msra.mxu0 0.0
        %4342 = vmatpush.msra.mxu0 0.0
        %4343 = vmatpush.msra.mxu0 0.0
        %4344 = vmatpush.msra.mxu0 0.0
        %4345 = vmatpush.msra.mxu0 0.0
        %4346 = vmatpush.msra.mxu0 0.0
        %4347 = vmatpush.msra.mxu0 %v3808
        %4348 = vmatpush.msra.mxu0 %v3807
        %4349 = vmatmul.f32.gmra.mxu0 %v4269
        %v4350 = vpop.f32.mrf.mxu0
        %v4351 = vadd.f32 %v4310, %v4350
        %4352 = vmatmul.f32.gmra.mxu0 %v4272
        %v4353 = vpop.f32.mrf.mxu0
        %v4354 = vadd.f32 %v4313, %v4353
        %4355 = vmatmul.f32.gmra.mxu0 %v4275
        %v4356 = vpop.f32.mrf.mxu0
        %v4357 = vadd.f32 %v4316, %v4356
        %4358 = vmatmul.f32.gmra.mxu0 %v4278
        %v4359 = vpop.f32.mrf.mxu0
        %v4360 = vadd.f32 %v4319, %v4359
        %4361 = vmatmul.f32.gmra.mxu0 %v4281
        %v4362 = vpop.f32.mrf.mxu0
        %v4363 = vadd.f32 %v4322, %v4362
        %4364 = vmatmul.f32.gmra.mxu0 %v4284
        %v4365 = vpop.f32.mrf.mxu0
        %v4366 = vadd.f32 %v4325, %v4365
        %4367 = vmatmul.f32.gmra.mxu0 %v4287
        %v4368 = vpop.f32.mrf.mxu0
        %v4369 = vadd.f32 %v4328, %v4368
        %4370 = vmatmul.f32.gmra.mxu0 %v4290
        %v4371 = vpop.f32.mrf.mxu0
        %v4372 = vadd.f32 %v4331, %v4371
        %4373 = vdwg.mxu0
        %v4374 = vstv %s3785
        %vm4375 = vcmask 523264
        %v4377 = vsel %vm4375, %v3789, 0
        %v4380 = vsel %vm4375, %v3790, 0
        %4382 = vmatpush.msra.mxu0 0.0
        %4383 = vmatpush.msra.mxu0 0.0
        %4384 = vmatpush.msra.mxu0 0.0
        %4385 = vmatpush.msra.mxu0 0.0
        %4386 = vmatpush.msra.mxu0 0.0
        %4387 = vmatpush.msra.mxu0 0.0
        %4388 = vmatpush.msra.mxu0 0.0
        %4389 = vmatpush.msra.mxu0 0.0
        %4390 = vmatpush.msra.mxu0 %v4372
        %4391 = vmatpush.msra.mxu0 %v4369
        %4392 = vmatpush.msra.mxu0 %v4366
        %4393 = vmatpush.msra.mxu0 %v4363
        %4394 = vmatpush.msra.mxu0 %v4360
        %4395 = vmatpush.msra.mxu0 %v4357
        %4396 = vmatpush.msra.mxu0 %v4354
        %4397 = vmatpush.msra.mxu0 %v4351
        %4398 = vmatmul.f32.gmra.mxu0 %v4377
        %v4399 = vpop.f32.mrf.mxu0
        %v4400 = vadd.f32 %v4374, %v4399
        %4401 = vmatmul.f32.gmra.mxu0 %v4380
        %v4402 = vpop.f32.mrf.mxu0
        %v4403 = vadd.f32 %v4374, %v4402
        %4404 = vdwg.mxu0
        %v4405 = vmax.f32 %v4400, 0.0
        %v4406 = vmax.f32 %v4403, 0.0
        %4407 = vmatpush.msra.mxu0 0.0
        %4408 = vmatpush.msra.mxu0 0.0
        %4409 = vmatpush.msra.mxu0 0.0
        %4410 = vmatpush.msra.mxu0 0.0
        %4411 = vmatpush.msra.mxu0 0.0
        %4412 = vmatpush.msra.mxu0 0.0
        %4413 = vmatpush.msra.mxu0 0.0
        %4414 = vmatpush.msra.mxu0 0.0
        %4415 = vmatpush.msra.mxu0 %v3855
        %4416 = vmatpush.msra.mxu0 %v3854
        %4417 = vmatpush.msra.mxu0 %v3853
        %4418 = vmatpush.msra.mxu0 %v3852
        %4419 = vmatpush.msra.mxu0 %v3851
        %4420 = vmatpush.msra.mxu0 %v3850
        %4421 = vmatpush.msra.mxu0 %v3849
        %4422 = vmatpush.msra.mxu0 %v3848
        %4423 = vmatmul.f32.gmra.mxu0 %v4377
        %v4424 = vpop.f32.mrf.mxu0
        %v4425 = vadd.f32 0.0, %v4424
        %4426 = vmatmul.f32.gmra.mxu0 %v4380
        %v4427 = vpop.f32.mrf.mxu0
        %v4428 = vadd.f32 0.0, %v4427
        %4429 = vdwg.mxu0
        %v4431 = vsel %vm3221, %v4425, 0
        %v4434 = vsel %vm3221, %v4428, 0
        %4436 = vmatpush.msra.mxu0 0.0
        %4437 = vmatpush.msra.mxu0 0.0
        %4438 = vmatpush.msra.mxu0 0.0
        %4439 = vmatpush.msra.mxu0 0.0
        %4440 = vmatpush.msra.mxu0 0.0
        %4441 = vmatpush.msra.mxu0 0.0
        %4442 = vmatpush.msra.mxu0 0.0
        %4443 = vmatpush.msra.mxu0 0.0
        %4444 = vmatpush.msra.mxu0 0.0
        %4445 = vmatpush.msra.mxu0 0.0
        %4446 = vmatpush.msra.mxu0 0.0
        %4447 = vmatpush.msra.mxu0 0.0
        %4448 = vmatpush.msra.mxu0 0.0
        %4449 = vmatpush.msra.mxu0 0.0
        %4450 = vmatpush.msra.mxu0 %v3846
        %4451 = vmatpush.msra.mxu0 %v3845
        %4452 = vmatmul.f32.gmra.mxu0 %v4431
        %v4453 = vpop.f32.mrf.mxu0
        %v4454 = vadd.f32 0.0, %v4453
        %4455 = vmatmul.f32.gmra.mxu0 %v4434
        %v4456 = vpop.f32.mrf.mxu0
        %v4457 = vadd.f32 0.0, %v4456
        %4458 = vdwg.mxu0
        %v4461 = vrot.slane %v4405, 4
        %v4462 = vrot.slane %v4406, 4
        %v4465 = vstv %s3786
        %v4466 = vadd.f32 %v4405, %v4465
        %v4467 = vadd.f32 %v4461, %v4465
        %v4468 = vadd.f32 %v4406, %v4465
        %v4469 = vadd.f32 %v4462, %v4465
        %vm4470 = vcmask 259072
        %4471 = vst.msk [vmem:[#allocation4] sm:$0x3f] %vm4470, 0.0
        %4472 = vst.msk [vmem:[#allocation4 + $0x8] sm:$0x3f] %vm4470, 0.0
        %4473 = vst.msk [vmem:[#allocation4 + $0x10] sm:$0x3f] %vm4470, 0.0
        %4474 = vst.msk [vmem:[#allocation4 + $0x18] sm:$0x3f] %vm4470, 0.0
        %4475 = vst.msk [vmem:[#allocation4 + $0x20] sm:$0x3f] %vm4470, 0.0
        %4476 = vst.msk [vmem:[#allocation4 + $0x28] sm:$0x3f] %vm4470, 0.0
        %s4477 = scalar_lea.vmem [#allocation4], 8
        %vm4478 = vcmask 257024
        %4479 = vst.msk [vmem:[%s4477 + $0x1] sm:$0xf] %vm4478, %v4466
        %4480 = vst.msk [vmem:[%s4477 + $0x9] sm:$0xf] %vm4478, %v4467
        %4481 = vst.msk [vmem:[%s4477 + $0x11] sm:$0xf] %vm4478, %v4468
        %4482 = vst.msk [vmem:[%s4477 + $0x19] sm:$0xf] %vm4478, %v4469
        %v4483 = vld [vmem:[#allocation4] sm:$0xf]
        %v4484 = vld [vmem:[#allocation4 + $0x8] sm:$0xf]
        %v4485 = vld [vmem:[#allocation4 + $0x10] sm:$0xf]
        %v4486 = vld [vmem:[#allocation4 + $0x18] sm:$0xf]
        %4491 = vst [vmem:[#allocation1] ss:$2 sm:$0xff] %v4483
        %s4492 = scalar_lea.vmem [#allocation1], 1
        %4493 = vst [vmem:[%s4492] ss:$2 sm:$0xff] %v4484
        %s4494 = scalar_lea.vmem [#allocation1], 16
        %4495 = vst [vmem:[%s4494] ss:$2 sm:$0xff] %v4485
        %s4496 = scalar_lea.vmem [#allocation1], 17
        %4497 = vst [vmem:[%s4496] ss:$2 sm:$0xff] %v4486
        %v4498 = vld.sshfl [vmem:[#allocation1] sm:$0xff pattern:$0x75316420]
        %v4499 = vld.sshfl [vmem:[#allocation1 + $0x10] sm:$0xff pattern:$0x75316420]
        %vm4502 = vcmask 261120
        %4503 = vst.msk [vmem:[#allocation7] sm:$0xff] %vm4502, %v4498
        %4504 = vst.msk [vmem:[#allocation7 + $0x18] sm:$0xff] %vm4502, %v4499
        %v4505 = vld [vmem:[#allocation4 + $0x1] sm:$0xf]
        %v4506 = vld [vmem:[#allocation4 + $0x9] sm:$0xf]
        %v4507 = vld [vmem:[#allocation4 + $0x11] sm:$0xf]
        %v4508 = vld [vmem:[#allocation4 + $0x19] sm:$0xf]
        %4513 = vst [vmem:[#allocation1] ss:$2 sm:$0xff] %v4505
        %s4514 = scalar_lea.vmem [#allocation1], 1
        %4515 = vst [vmem:[%s4514] ss:$2 sm:$0xff] %v4506
        %s4516 = scalar_lea.vmem [#allocation1], 16
        %4517 = vst [vmem:[%s4516] ss:$2 sm:$0xff] %v4507
        %s4518 = scalar_lea.vmem [#allocation1], 17
        %4519 = vst [vmem:[%s4518] ss:$2 sm:$0xff] %v4508
        %v4520 = vld.sshfl [vmem:[#allocation1] sm:$0xff pattern:$0x75316420]
        %v4521 = vld.sshfl [vmem:[#allocation1 + $0x10] sm:$0xff pattern:$0x75316420]
        %4522 = vrot.lane.b32.xlu0 %v4520, 32
        %v4523 = vpop.permute.xlu0 %4522
        %4524 = vrot.lane.b32.xlu0 %v4521, 32
        %v4525 = vpop.permute.xlu0 %4524
        %vm4528 = vcmask 523520
        %4529 = vst.msk [vmem:[#allocation7] sm:$0xff] %vm4528, %v4523
        %4530 = vst.msk [vmem:[#allocation7 + $0x18] sm:$0xff] %vm4528, %v4525
        %v4531 = vld [vmem:[#allocation4 + $0x2] sm:$0xf]
        %v4532 = vld [vmem:[#allocation4 + $0xa] sm:$0xf]
        %v4533 = vld [vmem:[#allocation4 + $0x12] sm:$0xf]
        %v4534 = vld [vmem:[#allocation4 + $0x1a] sm:$0xf]
        %4539 = vst [vmem:[#allocation1] ss:$2 sm:$0xff] %v4531
        %s4540 = scalar_lea.vmem [#allocation1], 1
        %4541 = vst [vmem:[%s4540] ss:$2 sm:$0xff] %v4532
        %s4542 = scalar_lea.vmem [#allocation1], 16
        %4543 = vst [vmem:[%s4542] ss:$2 sm:$0xff] %v4533
        %s4544 = scalar_lea.vmem [#allocation1], 17
        %4545 = vst [vmem:[%s4544] ss:$2 sm:$0xff] %v4534
        %v4546 = vld.sshfl [vmem:[#allocation1] sm:$0xff pattern:$0x75316420]
        %v4547 = vld.sshfl [vmem:[#allocation1 + $0x10] sm:$0xff pattern:$0x75316420]
        %4548 = vrot.lane.b32.xlu0 %v4546, 64
        %v4549 = vpop.permute.xlu0 %4548
        %4550 = vrot.lane.b32.xlu0 %v4547, 64
        %v4551 = vpop.permute.xlu0 %4550
        %vm4554 = vcmask 785920
        %4555 = vst.msk [vmem:[#allocation7] sm:$0xff] %vm4554, %v4549
        %4556 = vst.msk [vmem:[#allocation7 + $0x18] sm:$0xff] %vm4554, %v4551
        %v4557 = vld [vmem:[%s4477] sm:$0xf]
        %v4558 = vld [vmem:[%s4477 + $0x8] sm:$0xf]
        %v4559 = vld [vmem:[%s4477 + $0x10] sm:$0xf]
        %v4560 = vld [vmem:[%s4477 + $0x18] sm:$0xf]
        %4565 = vst [vmem:[#allocation1] ss:$2 sm:$0xff] %v4557
        %s4566 = scalar_lea.vmem [#allocation1], 1
        %4567 = vst [vmem:[%s4566] ss:$2 sm:$0xff] %v4558
        %s4568 = scalar_lea.vmem [#allocation1], 16
        %4569 = vst [vmem:[%s4568] ss:$2 sm:$0xff] %v4559
        %s4570 = scalar_lea.vmem [#allocation1], 17
        %4571 = vst [vmem:[%s4570] ss:$2 sm:$0xff] %v4560
        %v4572 = vld.sshfl [vmem:[#allocation1] sm:$0xff pattern:$0x75316420]
        %v4573 = vld.sshfl [vmem:[#allocation1 + $0x10] sm:$0xff pattern:$0x75316420]
        %4574 = vrot.lane.b32.xlu0 %v4572, 96
        %v4575 = vpop.permute.xlu0 %4574
        %4576 = vrot.lane.b32.xlu0 %v4573, 96
        %v4577 = vpop.permute.xlu0 %4576
        %vm4580 = vcmask 1048320
        %4581 = vst.msk [vmem:[#allocation7] sm:$0xff] %vm4580, %v4575
        %4582 = vst.msk [vmem:[#allocation7 + $0x18] sm:$0xff] %vm4580, %v4577
        %v4583 = vld [vmem:[%s4477 + $0x1] sm:$0xf]
        %v4584 = vld [vmem:[%s4477 + $0x9] sm:$0xf]
        %v4585 = vld [vmem:[%s4477 + $0x11] sm:$0xf]
        %v4586 = vld [vmem:[%s4477 + $0x19] sm:$0xf]
        %4591 = vst [vmem:[#allocation1] ss:$2 sm:$0xff] %v4583
        %s4592 = scalar_lea.vmem [#allocation1], 1
        %4593 = vst [vmem:[%s4592] ss:$2 sm:$0xff] %v4584
        %s4594 = scalar_lea.vmem [#allocation1], 16
        %4595 = vst [vmem:[%s4594] ss:$2 sm:$0xff] %v4585
        %s4596 = scalar_lea.vmem [#allocation1], 17
        %4597 = vst [vmem:[%s4596] ss:$2 sm:$0xff] %v4586
        %v4598 = vld.sshfl [vmem:[#allocation1] sm:$0xff pattern:$0x75316420]
        %v4599 = vld.sshfl [vmem:[#allocation1 + $0x10] sm:$0xff pattern:$0x75316420]
        %4602 = vst.msk [vmem:[#allocation7 + $0x8] sm:$0xff] %vm4502, %v4598
        %4603 = vst.msk [vmem:[#allocation7 + $0x20] sm:$0xff] %vm4502, %v4599
        %v4604 = vld [vmem:[%s4477 + $0x2] sm:$0xf]
        %v4605 = vld [vmem:[%s4477 + $0xa] sm:$0xf]
        %v4606 = vld [vmem:[%s4477 + $0x12] sm:$0xf]
        %v4607 = vld [vmem:[%s4477 + $0x1a] sm:$0xf]
        %4612 = vst [vmem:[#allocation1] ss:$2 sm:$0xff] %v4604
        %s4613 = scalar_lea.vmem [#allocation1], 1
        %4614 = vst [vmem:[%s4613] ss:$2 sm:$0xff] %v4605
        %s4615 = scalar_lea.vmem [#allocation1], 16
        %4616 = vst [vmem:[%s4615] ss:$2 sm:$0xff] %v4606
        %s4617 = scalar_lea.vmem [#allocation1], 17
        %4618 = vst [vmem:[%s4617] ss:$2 sm:$0xff] %v4607
        %v4619 = vld.sshfl [vmem:[#allocation1] sm:$0xff pattern:$0x75316420]
        %v4620 = vld.sshfl [vmem:[#allocation1 + $0x10] sm:$0xff pattern:$0x75316420]
        %4621 = vrot.lane.b32.xlu0 %v4619, 32
        %v4622 = vpop.permute.xlu0 %4621
        %4623 = vrot.lane.b32.xlu0 %v4620, 32
        %v4624 = vpop.permute.xlu0 %4623
        %4627 = vst.msk [vmem:[#allocation7 + $0x8] sm:$0xff] %vm4528, %v4622
        %4628 = vst.msk [vmem:[#allocation7 + $0x20] sm:$0xff] %vm4528, %v4624
        %s4629 = scalar_lea.vmem [#allocation4], 16
        %v4630 = vld [vmem:[%s4629] sm:$0xf]
        %v4631 = vld [vmem:[%s4629 + $0x8] sm:$0xf]
        %v4632 = vld [vmem:[%s4629 + $0x10] sm:$0xf]
        %v4633 = vld [vmem:[%s4629 + $0x18] sm:$0xf]
        %4638 = vst [vmem:[#allocation1] ss:$2 sm:$0xff] %v4630
        %s4639 = scalar_lea.vmem [#allocation1], 1
        %4640 = vst [vmem:[%s4639] ss:$2 sm:$0xff] %v4631
        %s4641 = scalar_lea.vmem [#allocation1], 16
        %4642 = vst [vmem:[%s4641] ss:$2 sm:$0xff] %v4632
        %s4643 = scalar_lea.vmem [#allocation1], 17
        %4644 = vst [vmem:[%s4643] ss:$2 sm:$0xff] %v4633
        %v4645 = vld.sshfl [vmem:[#allocation1] sm:$0xff pattern:$0x75316420]
        %v4646 = vld.sshfl [vmem:[#allocation1 + $0x10] sm:$0xff pattern:$0x75316420]
        %4647 = vrot.lane.b32.xlu0 %v4645, 64
        %v4648 = vpop.permute.xlu0 %4647
        %4649 = vrot.lane.b32.xlu0 %v4646, 64
        %v4650 = vpop.permute.xlu0 %4649
        %4653 = vst.msk [vmem:[#allocation7 + $0x8] sm:$0xff] %vm4554, %v4648
        %4654 = vst.msk [vmem:[#allocation7 + $0x20] sm:$0xff] %vm4554, %v4650
        %v4655 = vld [vmem:[%s4629 + $0x1] sm:$0xf]
        %v4656 = vld [vmem:[%s4629 + $0x9] sm:$0xf]
        %v4657 = vld [vmem:[%s4629 + $0x11] sm:$0xf]
        %v4658 = vld [vmem:[%s4629 + $0x19] sm:$0xf]
        %4663 = vst [vmem:[#allocation1] ss:$2 sm:$0xff] %v4655
        %s4664 = scalar_lea.vmem [#allocation1], 1
        %4665 = vst [vmem:[%s4664] ss:$2 sm:$0xff] %v4656
        %s4666 = scalar_lea.vmem [#allocation1], 16
        %4667 = vst [vmem:[%s4666] ss:$2 sm:$0xff] %v4657
        %s4668 = scalar_lea.vmem [#allocation1], 17
        %4669 = vst [vmem:[%s4668] ss:$2 sm:$0xff] %v4658
        %v4670 = vld.sshfl [vmem:[#allocation1] sm:$0xff pattern:$0x75316420]
        %v4671 = vld.sshfl [vmem:[#allocation1 + $0x10] sm:$0xff pattern:$0x75316420]
        %4672 = vrot.lane.b32.xlu0 %v4670, 96
        %v4673 = vpop.permute.xlu0 %4672
        %4674 = vrot.lane.b32.xlu0 %v4671, 96
        %v4675 = vpop.permute.xlu0 %4674
        %4678 = vst.msk [vmem:[#allocation7 + $0x8] sm:$0xff] %vm4580, %v4673
        %4679 = vst.msk [vmem:[#allocation7 + $0x20] sm:$0xff] %vm4580, %v4675
        %v4680 = vld [vmem:[%s4629 + $0x2] sm:$0xf]
        %v4681 = vld [vmem:[%s4629 + $0xa] sm:$0xf]
        %v4682 = vld [vmem:[%s4629 + $0x12] sm:$0xf]
        %v4683 = vld [vmem:[%s4629 + $0x1a] sm:$0xf]
        %4688 = vst [vmem:[#allocation1] ss:$2 sm:$0xff] %v4680
        %s4689 = scalar_lea.vmem [#allocation1], 1
        %4690 = vst [vmem:[%s4689] ss:$2 sm:$0xff] %v4681
        %s4691 = scalar_lea.vmem [#allocation1], 16
        %4692 = vst [vmem:[%s4691] ss:$2 sm:$0xff] %v4682
        %s4693 = scalar_lea.vmem [#allocation1], 17
        %4694 = vst [vmem:[%s4693] ss:$2 sm:$0xff] %v4683
        %v4695 = vld.sshfl [vmem:[#allocation1] sm:$0xff pattern:$0x75316420]
        %v4696 = vld.sshfl [vmem:[#allocation1 + $0x10] sm:$0xff pattern:$0x75316420]
        %4699 = vst.msk [vmem:[#allocation7 + $0x10] sm:$0xff] %vm4502, %v4695
        %4700 = vst.msk [vmem:[#allocation7 + $0x28] sm:$0xff] %vm4502, %v4696
        %v4701 = vld [vmem:[#allocation7] sm:$0xff]
        %v4702 = vld [vmem:[#allocation7 + $0x8] sm:$0xff]
        %v4703 = vld [vmem:[#allocation7 + $0x10] sm:$0xff]
        %v4704 = vld [vmem:[#allocation7 + $0x18] sm:$0xff]
        %v4705 = vld [vmem:[#allocation7 + $0x20] sm:$0xff]
        %v4706 = vld [vmem:[#allocation7 + $0x28] sm:$0xff]
        %v4708 = vsel %vm4502, %v4703, 0
        %v4711 = vsel %vm4502, %v4706, 0
        %4713 = vmatpush.msra.mxu0 %v3824
        %4714 = vmatpush.msra.mxu0 %v3823
        %4715 = vmatpush.msra.mxu0 %v3822
        %4716 = vmatpush.msra.mxu0 %v3821
        %4717 = vmatpush.msra.mxu0 %v3820
        %4718 = vmatpush.msra.mxu0 %v3819
        %4719 = vmatpush.msra.mxu0 %v3818
        %4720 = vmatpush.msra.mxu0 %v3817
        %4721 = vmatpush.msra.mxu0 %v3816
        %4722 = vmatpush.msra.mxu0 %v3815
        %4723 = vmatpush.msra.mxu0 %v3814
        %4724 = vmatpush.msra.mxu0 %v3813
        %4725 = vmatpush.msra.mxu0 %v3812
        %4726 = vmatpush.msra.mxu0 %v3811
        %4727 = vmatpush.msra.mxu0 %v3810
        %4728 = vmatpush.msra.mxu0 %v3809
        %4729 = vmatmul.f32.gmra.mxu0 %v4701
        %v4730 = vpop.f32.mrf.mxu0
        %v4731 = vadd.f32 0.0, %v4730
        %4732 = vmatmul.f32.gmra.mxu0 %v4704
        %v4733 = vpop.f32.mrf.mxu0
        %v4734 = vadd.f32 0.0, %v4733
        %4735 = vdwg.mxu0
        %4736 = vmatpush.msra.mxu0 %v3840
        %4737 = vmatpush.msra.mxu0 %v3839
        %4738 = vmatpush.msra.mxu0 %v3838
        %4739 = vmatpush.msra.mxu0 %v3837
        %4740 = vmatpush.msra.mxu0 %v3836
        %4741 = vmatpush.msra.mxu0 %v3835
        %4742 = vmatpush.msra.mxu0 %v3834
        %4743 = vmatpush.msra.mxu0 %v3833
        %4744 = vmatpush.msra.mxu0 %v3832
        %4745 = vmatpush.msra.mxu0 %v3831
        %4746 = vmatpush.msra.mxu0 %v3830
        %4747 = vmatpush.msra.mxu0 %v3829
        %4748 = vmatpush.msra.mxu0 %v3828
        %4749 = vmatpush.msra.mxu0 %v3827
        %4750 = vmatpush.msra.mxu0 %v3826
        %4751 = vmatpush.msra.mxu0 %v3825
        %4752 = vmatmul.f32.gmra.mxu0 %v4702
        %v4753 = vpop.f32.mrf.mxu0
        %v4754 = vadd.f32 %v4731, %v4753
        %4755 = vmatmul.f32.gmra.mxu0 %v4705
        %v4756 = vpop.f32.mrf.mxu0
        %v4757 = vadd.f32 %v4734, %v4756
        %4758 = vdwg.mxu0
        %4759 = vmatpush.msra.mxu0 0.0
        %4760 = vmatpush.msra.mxu0 0.0
        %4761 = vmatpush.msra.mxu0 0.0
        %4762 = vmatpush.msra.mxu0 0.0
        %4763 = vmatpush.msra.mxu0 0.0
        %4764 = vmatpush.msra.mxu0 0.0
        %4765 = vmatpush.msra.mxu0 0.0
        %4766 = vmatpush.msra.mxu0 0.0
        %4767 = vmatpush.msra.mxu0 0.0
        %4768 = vmatpush.msra.mxu0 0.0
        %4769 = vmatpush.msra.mxu0 0.0
        %4770 = vmatpush.msra.mxu0 0.0
        %4771 = vmatpush.msra.mxu0 %v3844
        %4772 = vmatpush.msra.mxu0 %v3843
        %4773 = vmatpush.msra.mxu0 %v3842
        %4774 = vmatpush.msra.mxu0 %v3841
        %4775 = vmatmul.f32.gmra.mxu0 %v4708
        %v4776 = vpop.f32.mrf.mxu0
        %v4777 = vadd.f32 %v4754, %v4776
        %4778 = vmatmul.f32.gmra.mxu0 %v4711
        %v4779 = vpop.f32.mrf.mxu0
        %v4780 = vadd.f32 %v4757, %v4779
        %4781 = vdwg.mxu0
        %v4782 = vstv %s3788
        %v4783 = vmul.f32 %v4777, %v4782
        %v4784 = vmul.f32 %v4780, %v4782
        %v4785 = vstv %s3787
        %v4786 = vadd.f32 %v4783, %v4785
        %v4787 = vadd.f32 %v4784, %v4785
        %v4788 = vadd.f32 %v4786, %v4454
        %v4789 = vadd.f32 %v4787, %v4457
        %v4790 = vmax.f32 %v4788, 0.0
        %v4791 = vmax.f32 %v4789, 0.0
        %v4794 = vrot.slane %v4790, 4
        %v4795 = vrot.slane %v4791, 4
        %s4798 = sld [smem:[#allocation9 + $0xa]]
        %s4799 = sld [smem:[#allocation9 + $0xb]]
        %s4800 = sld [smem:[#allocation9 + $0xc]]
        %s4801 = sld [smem:[#allocation9 + $0xd]]
        %s4802 = sld [smem:[#allocation9 + $0xe]]
        %v4803 = vld [vmem:[%s10] sm:$0xf]
        %v4804 = vld [vmem:[%s11] sm:$0xff]
        %v4805 = vld [vmem:[%s11 + $0x8] sm:$0xff]
        %v4806 = vld [vmem:[%s11 + $0x10] sm:$0xff]
        %v4807 = vld [vmem:[%s11 + $0x18] sm:$0xff]
        %v4808 = vld [vmem:[%s11 + $0x20] sm:$0xff]
        %v4809 = vld [vmem:[%s11 + $0x28] sm:$0xff]
        %v4810 = vld [vmem:[%s11 + $0x30] sm:$0xff]
        %v4811 = vld [vmem:[%s11 + $0x38] sm:$0xff]
        %v4812 = vld [vmem:[%s11 + $0x40] sm:$0xff]
        %v4813 = vld [vmem:[%s11 + $0x48] sm:$0xff]
        %v4814 = vld [vmem:[%s11 + $0x50] sm:$0xff]
        %v4815 = vld [vmem:[%s11 + $0x58] sm:$0xff]
        %v4816 = vld [vmem:[%s11 + $0x60] sm:$0xff]
        %v4817 = vld [vmem:[%s11 + $0x68] sm:$0xff]
        %v4818 = vld [vmem:[%s11 + $0x70] sm:$0xff]
        %v4819 = vld [vmem:[%s11 + $0x78] sm:$0xff]
        %v4820 = vld [vmem:[%s11 + $0x80] sm:$0xff]
        %v4821 = vld [vmem:[%s11 + $0x88] sm:$0xff]
        %v4822 = vld [vmem:[%s11 + $0x90] sm:$0xff]
        %v4823 = vld [vmem:[%s11 + $0x98] sm:$0xff]
        %v4824 = vld [vmem:[%s11 + $0xa0] sm:$0xff]
        %v4825 = vld [vmem:[%s11 + $0xa8] sm:$0xff]
        %v4826 = vld [vmem:[%s11 + $0xb0] sm:$0xff]
        %v4827 = vld [vmem:[%s11 + $0xb8] sm:$0xff]
        %v4828 = vld [vmem:[%s11 + $0xc0] sm:$0xff]
        %v4829 = vld [vmem:[%s11 + $0xc8] sm:$0xff]
        %v4830 = vld [vmem:[%s11 + $0xd0] sm:$0xff]
        %v4831 = vld [vmem:[%s11 + $0xd8] sm:$0xff]
        %v4832 = vld [vmem:[%s11 + $0xe0] sm:$0xff]
        %v4833 = vld [vmem:[%s11 + $0xe8] sm:$0xff]
        %v4834 = vld [vmem:[%s11 + $0xf0] sm:$0xff]
        %v4835 = vld [vmem:[%s11 + $0xf8] sm:$0xff]
        %v4836 = vld [vmem:[%s11 + $0x100] sm:$0xff]
        %v4837 = vld [vmem:[%s11 + $0x108] sm:$0xff]
        %v4838 = vld [vmem:[%s11 + $0x110] sm:$0xff]
        %v4839 = vld [vmem:[%s11 + $0x118] sm:$0xff]
        %v4840 = vld [vmem:[%s12] sm:$0xff]
        %v4841 = vld [vmem:[%s12 + $0x8] sm:$0xff]
        %v4842 = vld [vmem:[%s12 + $0x10] sm:$0xff]
        %v4843 = vld [vmem:[%s12 + $0x18] sm:$0xff]
        %v4844 = vld [vmem:[%s12 + $0x20] sm:$0xff]
        %v4845 = vld [vmem:[%s12 + $0x28] sm:$0xff]
        %v4846 = vld [vmem:[%s12 + $0x30] sm:$0xff]
        %v4847 = vld [vmem:[%s12 + $0x38] sm:$0xff]
        %v4848 = vld [vmem:[%s12 + $0x40] sm:$0xff]
        %v4849 = vld [vmem:[%s12 + $0x48] sm:$0xff]
        %v4850 = vld [vmem:[%s12 + $0x50] sm:$0xff]
        %v4851 = vld [vmem:[%s12 + $0x58] sm:$0xff]
        %v4852 = vld [vmem:[%s12 + $0x60] sm:$0xff]
        %v4853 = vld [vmem:[%s12 + $0x68] sm:$0xff]
        %v4854 = vld [vmem:[%s12 + $0x70] sm:$0xff]
        %v4855 = vld [vmem:[%s12 + $0x78] sm:$0xff]
        %v4856 = vld [vmem:[%s12 + $0x80] sm:$0xff]
        %v4857 = vld [vmem:[%s12 + $0x88] sm:$0xff]
        %v4858 = vld [vmem:[%s12 + $0x90] sm:$0xff]
        %v4859 = vld [vmem:[%s12 + $0x98] sm:$0xff]
        %v4860 = vld [vmem:[%s12 + $0xa0] sm:$0xff]
        %v4861 = vld [vmem:[%s12 + $0xa8] sm:$0xff]
        %v4862 = vld [vmem:[%s12 + $0xb0] sm:$0xff]
        %v4863 = vld [vmem:[%s12 + $0xb8] sm:$0xff]
        %v4864 = vld [vmem:[%s12 + $0xc0] sm:$0xff]
        %v4865 = vld [vmem:[%s12 + $0xc8] sm:$0xff]
        %v4866 = vld [vmem:[%s12 + $0xd0] sm:$0xff]
        %v4867 = vld [vmem:[%s12 + $0xd8] sm:$0xff]
        %v4868 = vld [vmem:[%s12 + $0xe0] sm:$0xff]
        %v4869 = vld [vmem:[%s12 + $0xe8] sm:$0xff]
        %v4870 = vld [vmem:[%s12 + $0xf0] sm:$0xff]
        %v4871 = vld [vmem:[%s12 + $0xf8] sm:$0xff]
        %v4872 = vld [vmem:[%s12 + $0x100] sm:$0xff]
        %v4873 = vld [vmem:[%s12 + $0x108] sm:$0xff]
        %v4874 = vld [vmem:[%s12 + $0x110] sm:$0xff]
        %v4875 = vld [vmem:[%s12 + $0x118] sm:$0xff]
        %v4876 = vld [vmem:[%s13] sm:$0xff]
        %v4877 = vld [vmem:[%s13 + $0x8] sm:$0xff]
        %v4878 = vld [vmem:[%s13 + $0x10] sm:$0xff]
        %v4879 = vld [vmem:[%s13 + $0x18] sm:$0xff]
        %v4880 = vstv %s4798
        %v4881 = vadd.f32 %v4790, %v4880
        %v4882 = vadd.f32 %v4794, %v4880
        %v4883 = vadd.f32 %v4791, %v4880
        %v4884 = vadd.f32 %v4795, %v4880
        %4885 = vst.msk [vmem:[#allocation4] sm:$0x3f] %vm4470, 0.0
        %4886 = vst.msk [vmem:[#allocation4 + $0x8] sm:$0x3f] %vm4470, 0.0
        %4887 = vst.msk [vmem:[#allocation4 + $0x10] sm:$0x3f] %vm4470, 0.0
        %4888 = vst.msk [vmem:[#allocation4 + $0x18] sm:$0x3f] %vm4470, 0.0
        %4889 = vst.msk [vmem:[#allocation4 + $0x20] sm:$0x3f] %vm4470, 0.0
        %4890 = vst.msk [vmem:[#allocation4 + $0x28] sm:$0x3f] %vm4470, 0.0
        %4891 = vst.msk [vmem:[%s4477 + $0x1] sm:$0xf] %vm4478, %v4881
        %4892 = vst.msk [vmem:[%s4477 + $0x9] sm:$0xf] %vm4478, %v4882
        %4893 = vst.msk [vmem:[%s4477 + $0x11] sm:$0xf] %vm4478, %v4883
        %4894 = vst.msk [vmem:[%s4477 + $0x19] sm:$0xf] %vm4478, %v4884
        %v4895 = vld [vmem:[#allocation4] sm:$0xf]
        %v4896 = vld [vmem:[#allocation4 + $0x8] sm:$0xf]
        %v4897 = vld [vmem:[#allocation4 + $0x10] sm:$0xf]
        %v4898 = vld [vmem:[#allocation4 + $0x18] sm:$0xf]
        %4903 = vst [vmem:[#allocation1] ss:$2 sm:$0xff] %v4895
        %s4904 = scalar_lea.vmem [#allocation1], 1
        %4905 = vst [vmem:[%s4904] ss:$2 sm:$0xff] %v4896
        %s4906 = scalar_lea.vmem [#allocation1], 16
        %4907 = vst [vmem:[%s4906] ss:$2 sm:$0xff] %v4897
        %s4908 = scalar_lea.vmem [#allocation1], 17
        %4909 = vst [vmem:[%s4908] ss:$2 sm:$0xff] %v4898
        %v4910 = vld.sshfl [vmem:[#allocation1] sm:$0xff pattern:$0x75316420]
        %v4911 = vld.sshfl [vmem:[#allocation1 + $0x10] sm:$0xff pattern:$0x75316420]
        %4914 = vst.msk [vmem:[#allocation7] sm:$0xff] %vm4502, %v4910
        %4915 = vst.msk [vmem:[#allocation7 + $0x18] sm:$0xff] %vm4502, %v4911
        %v4916 = vld [vmem:[#allocation4 + $0x1] sm:$0xf]
        %v4917 = vld [vmem:[#allocation4 + $0x9] sm:$0xf]
        %v4918 = vld [vmem:[#allocation4 + $0x11] sm:$0xf]
        %v4919 = vld [vmem:[#allocation4 + $0x19] sm:$0xf]
        %4924 = vst [vmem:[#allocation1] ss:$2 sm:$0xff] %v4916
        %s4925 = scalar_lea.vmem [#allocation1], 1
        %4926 = vst [vmem:[%s4925] ss:$2 sm:$0xff] %v4917
        %s4927 = scalar_lea.vmem [#allocation1], 16
        %4928 = vst [vmem:[%s4927] ss:$2 sm:$0xff] %v4918
        %s4929 = scalar_lea.vmem [#allocation1], 17
        %4930 = vst [vmem:[%s4929] ss:$2 sm:$0xff] %v4919
        %v4931 = vld.sshfl [vmem:[#allocation1] sm:$0xff pattern:$0x75316420]
        %v4932 = vld.sshfl [vmem:[#allocation1 + $0x10] sm:$0xff pattern:$0x75316420]
        %4933 = vrot.lane.b32.xlu0 %v4931, 32
        %v4934 = vpop.permute.xlu0 %4933
        %4935 = vrot.lane.b32.xlu0 %v4932, 32
        %v4936 = vpop.permute.xlu0 %4935
        %4939 = vst.msk [vmem:[#allocation7] sm:$0xff] %vm4528, %v4934
        %4940 = vst.msk [vmem:[#allocation7 + $0x18] sm:$0xff] %vm4528, %v4936
        %v4941 = vld [vmem:[#allocation4 + $0x2] sm:$0xf]
        %v4942 = vld [vmem:[#allocation4 + $0xa] sm:$0xf]
        %v4943 = vld [vmem:[#allocation4 + $0x12] sm:$0xf]
        %v4944 = vld [vmem:[#allocation4 + $0x1a] sm:$0xf]
        %4949 = vst [vmem:[#allocation1] ss:$2 sm:$0xff] %v4941
        %s4950 = scalar_lea.vmem [#allocation1], 1
        %4951 = vst [vmem:[%s4950] ss:$2 sm:$0xff] %v4942
        %s4952 = scalar_lea.vmem [#allocation1], 16
        %4953 = vst [vmem:[%s4952] ss:$2 sm:$0xff] %v4943
        %s4954 = scalar_lea.vmem [#allocation1], 17
        %4955 = vst [vmem:[%s4954] ss:$2 sm:$0xff] %v4944
        %v4956 = vld.sshfl [vmem:[#allocation1] sm:$0xff pattern:$0x75316420]
        %v4957 = vld.sshfl [vmem:[#allocation1 + $0x10] sm:$0xff pattern:$0x75316420]
        %4958 = vrot.lane.b32.xlu0 %v4956, 64
        %v4959 = vpop.permute.xlu0 %4958
        %4960 = vrot.lane.b32.xlu0 %v4957, 64
        %v4961 = vpop.permute.xlu0 %4960
        %4964 = vst.msk [vmem:[#allocation7] sm:$0xff] %vm4554, %v4959
        %4965 = vst.msk [vmem:[#allocation7 + $0x18] sm:$0xff] %vm4554, %v4961
        %v4966 = vld [vmem:[%s4477] sm:$0xf]
        %v4967 = vld [vmem:[%s4477 + $0x8] sm:$0xf]
        %v4968 = vld [vmem:[%s4477 + $0x10] sm:$0xf]
        %v4969 = vld [vmem:[%s4477 + $0x18] sm:$0xf]
        %4974 = vst [vmem:[#allocation1] ss:$2 sm:$0xff] %v4966
        %s4975 = scalar_lea.vmem [#allocation1], 1
        %4976 = vst [vmem:[%s4975] ss:$2 sm:$0xff] %v4967
        %s4977 = scalar_lea.vmem [#allocation1], 16
        %4978 = vst [vmem:[%s4977] ss:$2 sm:$0xff] %v4968
        %s4979 = scalar_lea.vmem [#allocation1], 17
        %4980 = vst [vmem:[%s4979] ss:$2 sm:$0xff] %v4969
        %v4981 = vld.sshfl [vmem:[#allocation1] sm:$0xff pattern:$0x75316420]
        %v4982 = vld.sshfl [vmem:[#allocation1 + $0x10] sm:$0xff pattern:$0x75316420]
        %4983 = vrot.lane.b32.xlu0 %v4981, 96
        %v4984 = vpop.permute.xlu0 %4983
        %4985 = vrot.lane.b32.xlu0 %v4982, 96
        %v4986 = vpop.permute.xlu0 %4985
        %4989 = vst.msk [vmem:[#allocation7] sm:$0xff] %vm4580, %v4984
        %4990 = vst.msk [vmem:[#allocation7 + $0x18] sm:$0xff] %vm4580, %v4986
        %v4991 = vld [vmem:[%s4477 + $0x1] sm:$0xf]
        %v4992 = vld [vmem:[%s4477 + $0x9] sm:$0xf]
        %v4993 = vld [vmem:[%s4477 + $0x11] sm:$0xf]
        %v4994 = vld [vmem:[%s4477 + $0x19] sm:$0xf]
        %4999 = vst [vmem:[#allocation1] ss:$2 sm:$0xff] %v4991
        %s5000 = scalar_lea.vmem [#allocation1], 1
        %5001 = vst [vmem:[%s5000] ss:$2 sm:$0xff] %v4992
        %s5002 = scalar_lea.vmem [#allocation1], 16
        %5003 = vst [vmem:[%s5002] ss:$2 sm:$0xff] %v4993
        %s5004 = scalar_lea.vmem [#allocation1], 17
        %5005 = vst [vmem:[%s5004] ss:$2 sm:$0xff] %v4994
        %v5006 = vld.sshfl [vmem:[#allocation1] sm:$0xff pattern:$0x75316420]
        %v5007 = vld.sshfl [vmem:[#allocation1 + $0x10] sm:$0xff pattern:$0x75316420]
        %5010 = vst.msk [vmem:[#allocation7 + $0x8] sm:$0xff] %vm4502, %v5006
        %5011 = vst.msk [vmem:[#allocation7 + $0x20] sm:$0xff] %vm4502, %v5007
        %v5012 = vld [vmem:[%s4477 + $0x2] sm:$0xf]
        %v5013 = vld [vmem:[%s4477 + $0xa] sm:$0xf]
        %v5014 = vld [vmem:[%s4477 + $0x12] sm:$0xf]
        %v5015 = vld [vmem:[%s4477 + $0x1a] sm:$0xf]
        %5020 = vst [vmem:[#allocation1] ss:$2 sm:$0xff] %v5012
        %s5021 = scalar_lea.vmem [#allocation1], 1
        %5022 = vst [vmem:[%s5021] ss:$2 sm:$0xff] %v5013
        %s5023 = scalar_lea.vmem [#allocation1], 16
        %5024 = vst [vmem:[%s5023] ss:$2 sm:$0xff] %v5014
        %s5025 = scalar_lea.vmem [#allocation1], 17
        %5026 = vst [vmem:[%s5025] ss:$2 sm:$0xff] %v5015
        %v5027 = vld.sshfl [vmem:[#allocation1] sm:$0xff pattern:$0x75316420]
        %v5028 = vld.sshfl [vmem:[#allocation1 + $0x10] sm:$0xff pattern:$0x75316420]
        %5029 = vrot.lane.b32.xlu0 %v5027, 32
        %v5030 = vpop.permute.xlu0 %5029
        %5031 = vrot.lane.b32.xlu0 %v5028, 32
        %v5032 = vpop.permute.xlu0 %5031
        %5035 = vst.msk [vmem:[#allocation7 + $0x8] sm:$0xff] %vm4528, %v5030
        %5036 = vst.msk [vmem:[#allocation7 + $0x20] sm:$0xff] %vm4528, %v5032
        %v5037 = vld [vmem:[%s4629] sm:$0xf]
        %v5038 = vld [vmem:[%s4629 + $0x8] sm:$0xf]
        %v5039 = vld [vmem:[%s4629 + $0x10] sm:$0xf]
        %v5040 = vld [vmem:[%s4629 + $0x18] sm:$0xf]
        %5045 = vst [vmem:[#allocation1] ss:$2 sm:$0xff] %v5037
        %s5046 = scalar_lea.vmem [#allocation1], 1
        %5047 = vst [vmem:[%s5046] ss:$2 sm:$0xff] %v5038
        %s5048 = scalar_lea.vmem [#allocation1], 16
        %5049 = vst [vmem:[%s5048] ss:$2 sm:$0xff] %v5039
        %s5050 = scalar_lea.vmem [#allocation1], 17
        %5051 = vst [vmem:[%s5050] ss:$2 sm:$0xff] %v5040
        %v5052 = vld.sshfl [vmem:[#allocation1] sm:$0xff pattern:$0x75316420]
        %v5053 = vld.sshfl [vmem:[#allocation1 + $0x10] sm:$0xff pattern:$0x75316420]
        %5054 = vrot.lane.b32.xlu0 %v5052, 64
        %v5055 = vpop.permute.xlu0 %5054
        %5056 = vrot.lane.b32.xlu0 %v5053, 64
        %v5057 = vpop.permute.xlu0 %5056
        %5060 = vst.msk [vmem:[#allocation7 + $0x8] sm:$0xff] %vm4554, %v5055
        %5061 = vst.msk [vmem:[#allocation7 + $0x20] sm:$0xff] %vm4554, %v5057
        %v5062 = vld [vmem:[%s4629 + $0x1] sm:$0xf]
        %v5063 = vld [vmem:[%s4629 + $0x9] sm:$0xf]
        %v5064 = vld [vmem:[%s4629 + $0x11] sm:$0xf]
        %v5065 = vld [vmem:[%s4629 + $0x19] sm:$0xf]
        %5070 = vst [vmem:[#allocation1] ss:$2 sm:$0xff] %v5062
        %s5071 = scalar_lea.vmem [#allocation1], 1
        %5072 = vst [vmem:[%s5071] ss:$2 sm:$0xff] %v5063
        %s5073 = scalar_lea.vmem [#allocation1], 16
        %5074 = vst [vmem:[%s5073] ss:$2 sm:$0xff] %v5064
        %s5075 = scalar_lea.vmem [#allocation1], 17
        %5076 = vst [vmem:[%s5075] ss:$2 sm:$0xff] %v5065
        %v5077 = vld.sshfl [vmem:[#allocation1] sm:$0xff pattern:$0x75316420]
        %v5078 = vld.sshfl [vmem:[#allocation1 + $0x10] sm:$0xff pattern:$0x75316420]
        %5079 = vrot.lane.b32.xlu0 %v5077, 96
        %v5080 = vpop.permute.xlu0 %5079
        %5081 = vrot.lane.b32.xlu0 %v5078, 96
        %v5082 = vpop.permute.xlu0 %5081
        %5085 = vst.msk [vmem:[#allocation7 + $0x8] sm:$0xff] %vm4580, %v5080
        %5086 = vst.msk [vmem:[#allocation7 + $0x20] sm:$0xff] %vm4580, %v5082
        %v5087 = vld [vmem:[%s4629 + $0x2] sm:$0xf]
        %v5088 = vld [vmem:[%s4629 + $0xa] sm:$0xf]
        %v5089 = vld [vmem:[%s4629 + $0x12] sm:$0xf]
        %v5090 = vld [vmem:[%s4629 + $0x1a] sm:$0xf]
        %5095 = vst [vmem:[#allocation1] ss:$2 sm:$0xff] %v5087
        %s5096 = scalar_lea.vmem [#allocation1], 1
        %5097 = vst [vmem:[%s5096] ss:$2 sm:$0xff] %v5088
        %s5098 = scalar_lea.vmem [#allocation1], 16
        %5099 = vst [vmem:[%s5098] ss:$2 sm:$0xff] %v5089
        %s5100 = scalar_lea.vmem [#allocation1], 17
        %5101 = vst [vmem:[%s5100] ss:$2 sm:$0xff] %v5090
        %v5102 = vld.sshfl [vmem:[#allocation1] sm:$0xff pattern:$0x75316420]
        %v5103 = vld.sshfl [vmem:[#allocation1 + $0x10] sm:$0xff pattern:$0x75316420]
        %5106 = vst.msk [vmem:[#allocation7 + $0x10] sm:$0xff] %vm4502, %v5102
        %5107 = vst.msk [vmem:[#allocation7 + $0x28] sm:$0xff] %vm4502, %v5103
        %v5108 = vld [vmem:[#allocation7] sm:$0xff]
        %v5109 = vld [vmem:[#allocation7 + $0x8] sm:$0xff]
        %v5110 = vld [vmem:[#allocation7 + $0x10] sm:$0xff]
        %v5111 = vld [vmem:[#allocation7 + $0x18] sm:$0xff]
        %v5112 = vld [vmem:[#allocation7 + $0x20] sm:$0xff]
        %v5113 = vld [vmem:[#allocation7 + $0x28] sm:$0xff]
        %v5115 = vsel %vm4502, %v5110, 0
        %v5118 = vsel %vm4502, %v5113, 0
        %5120 = vmatpush.msra.mxu0 %v4819
        %5121 = vmatpush.msra.mxu0 %v4818
        %5122 = vmatpush.msra.mxu0 %v4817
        %5123 = vmatpush.msra.mxu0 %v4816
        %5124 = vmatpush.msra.mxu0 %v4815
        %5125 = vmatpush.msra.mxu0 %v4814
        %5126 = vmatpush.msra.mxu0 %v4813
        %5127 = vmatpush.msra.mxu0 %v4812
        %5128 = vmatpush.msra.mxu0 %v4811
        %5129 = vmatpush.msra.mxu0 %v4810
        %5130 = vmatpush.msra.mxu0 %v4809
        %5131 = vmatpush.msra.mxu0 %v4808
        %5132 = vmatpush.msra.mxu0 %v4807
        %5133 = vmatpush.msra.mxu0 %v4806
        %5134 = vmatpush.msra.mxu0 %v4805
        %5135 = vmatpush.msra.mxu0 %v4804
        %5136 = vmatmul.f32.gmra.mxu0 %v5108
        %v5137 = vpop.f32.mrf.mxu0
        %v5138 = vadd.f32 0.0, %v5137
        %5139 = vmatmul.f32.gmra.mxu0 %v5111
        %v5140 = vpop.f32.mrf.mxu0
        %v5141 = vadd.f32 0.0, %v5140
        %5142 = vdwg.mxu0
        %5143 = vmatpush.msra.mxu0 %v4835
        %5144 = vmatpush.msra.mxu0 %v4834
        %5145 = vmatpush.msra.mxu0 %v4833
        %5146 = vmatpush.msra.mxu0 %v4832
        %5147 = vmatpush.msra.mxu0 %v4831
        %5148 = vmatpush.msra.mxu0 %v4830
        %5149 = vmatpush.msra.mxu0 %v4829
        %5150 = vmatpush.msra.mxu0 %v4828
        %5151 = vmatpush.msra.mxu0 %v4827
        %5152 = vmatpush.msra.mxu0 %v4826
        %5153 = vmatpush.msra.mxu0 %v4825
        %5154 = vmatpush.msra.mxu0 %v4824
        %5155 = vmatpush.msra.mxu0 %v4823
        %5156 = vmatpush.msra.mxu0 %v4822
        %5157 = vmatpush.msra.mxu0 %v4821
        %5158 = vmatpush.msra.mxu0 %v4820
        %5159 = vmatmul.f32.gmra.mxu0 %v5109
        %v5160 = vpop.f32.mrf.mxu0
        %v5161 = vadd.f32 %v5138, %v5160
        %5162 = vmatmul.f32.gmra.mxu0 %v5112
        %v5163 = vpop.f32.mrf.mxu0
        %v5164 = vadd.f32 %v5141, %v5163
        %5165 = vdwg.mxu0
        %5166 = vmatpush.msra.mxu0 0.0
        %5167 = vmatpush.msra.mxu0 0.0
        %5168 = vmatpush.msra.mxu0 0.0
        %5169 = vmatpush.msra.mxu0 0.0
        %5170 = vmatpush.msra.mxu0 0.0
        %5171 = vmatpush.msra.mxu0 0.0
        %5172 = vmatpush.msra.mxu0 0.0
        %5173 = vmatpush.msra.mxu0 0.0
        %5174 = vmatpush.msra.mxu0 0.0
        %5175 = vmatpush.msra.mxu0 0.0
        %5176 = vmatpush.msra.mxu0 0.0
        %5177 = vmatpush.msra.mxu0 0.0
        %5178 = vmatpush.msra.mxu0 %v4839
        %5179 = vmatpush.msra.mxu0 %v4838
        %5180 = vmatpush.msra.mxu0 %v4837
        %5181 = vmatpush.msra.mxu0 %v4836
        %5182 = vmatmul.f32.gmra.mxu0 %v5115
        %v5183 = vpop.f32.mrf.mxu0
        %v5184 = vadd.f32 %v5161, %v5183
        %5185 = vmatmul.f32.gmra.mxu0 %v5118
        %v5186 = vpop.f32.mrf.mxu0
        %v5187 = vadd.f32 %v5164, %v5186
        %5188 = vdwg.mxu0
        %v5189 = vstv %s4799
        %v5191 = vsel %vm3221, %v4803, 0
        %5193 = vmatpush.msra.mxu0 0.0
        %5194 = vmatpush.msra.mxu0 0.0
        %5195 = vmatpush.msra.mxu0 0.0
        %5196 = vmatpush.msra.mxu0 0.0
        %5197 = vmatpush.msra.mxu0 0.0
        %5198 = vmatpush.msra.mxu0 0.0
        %5199 = vmatpush.msra.mxu0 0.0
        %5200 = vmatpush.msra.mxu0 0.0
        %5201 = vmatpush.msra.mxu0 0.0
        %5202 = vmatpush.msra.mxu0 0.0
        %5203 = vmatpush.msra.mxu0 0.0
        %5204 = vmatpush.msra.mxu0 0.0
        %5205 = vmatpush.msra.mxu0 0.0
        %5206 = vmatpush.msra.mxu0 0.0
        %5207 = vmatpush.msra.mxu0 %v5187
        %5208 = vmatpush.msra.mxu0 %v5184
        %5209 = vmatmul.f32.gmra.mxu0 %v5191
        %v5210 = vpop.f32.mrf.mxu0
        %v5211 = vadd.f32 %v5189, %v5210
        %5212 = vdwg.mxu0
        %v5213 = vmax.f32 %v5211, 0.0
        %5218 = vst [vmem:[#allocation1] ss:$2 sm:$0xff] %v4881
        %s5219 = scalar_lea.vmem [#allocation1], 1
        %5220 = vst [vmem:[%s5219] ss:$2 sm:$0xff] %v4882
        %s5221 = scalar_lea.vmem [#allocation1], 16
        %5222 = vst [vmem:[%s5221] ss:$2 sm:$0xff] %v4883
        %s5223 = scalar_lea.vmem [#allocation1], 17
        %5224 = vst [vmem:[%s5223] ss:$2 sm:$0xff] %v4884
        %v5225 = vld.sshfl [vmem:[#allocation1] sm:$0xff pattern:$0x75316420]
        %v5226 = vld.sshfl [vmem:[#allocation1 + $0x10] sm:$0xff pattern:$0x75316420]
        %5229 = vmatpush.msra.mxu0 0.0
        %5230 = vmatpush.msra.mxu0 0.0
        %5231 = vmatpush.msra.mxu0 0.0
        %5232 = vmatpush.msra.mxu0 0.0
        %5233 = vmatpush.msra.mxu0 0.0
        %5234 = vmatpush.msra.mxu0 0.0
        %5235 = vmatpush.msra.mxu0 0.0
        %5236 = vmatpush.msra.mxu0 0.0
        %5237 = vmatpush.msra.mxu0 0.0
        %5238 = vmatpush.msra.mxu0 0.0
        %5239 = vmatpush.msra.mxu0 0.0
        %5240 = vmatpush.msra.mxu0 0.0
        %5241 = vmatpush.msra.mxu0 0.0
        %5242 = vmatpush.msra.mxu0 0.0
        %5243 = vmatpush.msra.mxu0 %v5226
        %5244 = vmatpush.msra.mxu0 %v5225
        %5245 = vmatmul.f32.gmra.mxu0 %v5191
        %v5246 = vpop.f32.mrf.mxu0
        %v5247 = vadd.f32 0.0, %v5246
        %5248 = vdwg.mxu0
        %v5250 = vsel %vm4502, %v5247, 0
        %5252 = vmatpush.msra.mxu0 0.0
        %5253 = vmatpush.msra.mxu0 0.0
        %5254 = vmatpush.msra.mxu0 0.0
        %5255 = vmatpush.msra.mxu0 0.0
        %5256 = vmatpush.msra.mxu0 0.0
        %5257 = vmatpush.msra.mxu0 0.0
        %5258 = vmatpush.msra.mxu0 0.0
        %5259 = vmatpush.msra.mxu0 0.0
        %5260 = vmatpush.msra.mxu0 0.0
        %5261 = vmatpush.msra.mxu0 0.0
        %5262 = vmatpush.msra.mxu0 0.0
        %5263 = vmatpush.msra.mxu0 0.0
        %5264 = vmatpush.msra.mxu0 %v4879
        %5265 = vmatpush.msra.mxu0 %v4878
        %5266 = vmatpush.msra.mxu0 %v4877
        %5267 = vmatpush.msra.mxu0 %v4876
        %5268 = vmatmul.f32.gmra.mxu0 %v5250
        %v5269 = vpop.f32.mrf.mxu0
        %v5270 = vadd.f32 0.0, %v5269
        %5271 = vdwg.mxu0
        %v5273 = vrot.slane %v5213, 2
        %v5275 = vstv %s4800
        %v5276 = vadd.f32 %v5213, %v5275
        %v5277 = vadd.f32 %v5273, %v5275
        %5278 = vst.msk [vmem:[#allocation5] sm:$0xf] %vm4478, 0.0
        %5279 = vst.msk [vmem:[#allocation5 + $0x4] sm:$0xf] %vm4478, 0.0
        %5280 = vst.msk [vmem:[#allocation5 + $0x8] sm:$0xf] %vm4478, 0.0
        %5281 = vst.msk [vmem:[#allocation5 + $0xc] sm:$0xf] %vm4478, 0.0
        %s5282 = scalar_lea.vmem [#allocation5], 4
        %vm5283 = vcmask 254976
        %5284 = vst.msk [vmem:[%s5282 + $0x1] sm:$0x3] %vm5283, %v5276
        %5285 = vst.msk [vmem:[%s5282 + $0x5] sm:$0x3] %vm5283, %v5277
        %v5286 = vld [vmem:[#allocation5] sm:$0x3]
        %v5287 = vld [vmem:[#allocation5 + $0x4] sm:$0x3]
        %5290 = vst [vmem:[#allocation1] ss:$2 sm:$0xff] %v5286
        %s5291 = scalar_lea.vmem [#allocation1], 1
        %5292 = vst [vmem:[%s5291] ss:$2 sm:$0xff] %v5287
        %v5293 = vld.sshfl [vmem:[#allocation1] sm:$0xff pattern:$0x75643120]
        %5295 = vst.msk [vmem:[#allocation8] sm:$0xf] %vm4478, %v5293
        %v5296 = vld [vmem:[#allocation5 + $0x1] sm:$0x3]
        %v5297 = vld [vmem:[#allocation5 + $0x5] sm:$0x3]
        %5300 = vst [vmem:[#allocation1] ss:$2 sm:$0xff] %v5296
        %s5301 = scalar_lea.vmem [#allocation1], 1
        %5302 = vst [vmem:[%s5301] ss:$2 sm:$0xff] %v5297
        %v5303 = vld.sshfl [vmem:[#allocation1] sm:$0xff pattern:$0x75643120]
        %5304 = vrot.lane.b32.xlu0 %v5303, 32
        %v5305 = vpop.permute.xlu0 %5304
        %vm5307 = vcmask 519424
        %5308 = vst.msk [vmem:[#allocation8] sm:$0xf] %vm5307, %v5305
        %v5309 = vld [vmem:[#allocation5 + $0x2] sm:$0x3]
        %v5310 = vld [vmem:[#allocation5 + $0x6] sm:$0x3]
        %5313 = vst [vmem:[#allocation1] ss:$2 sm:$0xff] %v5309
        %s5314 = scalar_lea.vmem [#allocation1], 1
        %5315 = vst [vmem:[%s5314] ss:$2 sm:$0xff] %v5310
        %v5316 = vld.sshfl [vmem:[#allocation1] sm:$0xff pattern:$0x75643120]
        %5317 = vrot.lane.b32.xlu0 %v5316, 64
        %v5318 = vpop.permute.xlu0 %5317
        %vm5320 = vcmask 781824
        %5321 = vst.msk [vmem:[#allocation8] sm:$0xf] %vm5320, %v5318
        %v5322 = vld [vmem:[%s5282] sm:$0x3]
        %v5323 = vld [vmem:[%s5282 + $0x4] sm:$0x3]
        %5326 = vst [vmem:[#allocation1] ss:$2 sm:$0xff] %v5322
        %s5327 = scalar_lea.vmem [#allocation1], 1
        %5328 = vst [vmem:[%s5327] ss:$2 sm:$0xff] %v5323
        %v5329 = vld.sshfl [vmem:[#allocation1] sm:$0xff pattern:$0x75643120]
        %5330 = vrot.lane.b32.xlu0 %v5329, 96
        %v5331 = vpop.permute.xlu0 %5330
        %vm5333 = vcmask 1044224
        %5334 = vst.msk [vmem:[#allocation8] sm:$0xf] %vm5333, %v5331
        %v5335 = vld [vmem:[%s5282 + $0x1] sm:$0x3]
        %v5336 = vld [vmem:[%s5282 + $0x5] sm:$0x3]
        %5339 = vst [vmem:[#allocation1] ss:$2 sm:$0xff] %v5335
        %s5340 = scalar_lea.vmem [#allocation1], 1
        %5341 = vst [vmem:[%s5340] ss:$2 sm:$0xff] %v5336
        %v5342 = vld.sshfl [vmem:[#allocation1] sm:$0xff pattern:$0x75643120]
        %5344 = vst.msk [vmem:[#allocation8 + $0x4] sm:$0xf] %vm4478, %v5342
        %v5345 = vld [vmem:[%s5282 + $0x2] sm:$0x3]
        %v5346 = vld [vmem:[%s5282 + $0x6] sm:$0x3]
        %5349 = vst [vmem:[#allocation1] ss:$2 sm:$0xff] %v5345
        %s5350 = scalar_lea.vmem [#allocation1], 1
        %5351 = vst [vmem:[%s5350] ss:$2 sm:$0xff] %v5346
        %v5352 = vld.sshfl [vmem:[#allocation1] sm:$0xff pattern:$0x75643120]
        %5353 = vrot.lane.b32.xlu0 %v5352, 32
        %v5354 = vpop.permute.xlu0 %5353
        %5356 = vst.msk [vmem:[#allocation8 + $0x4] sm:$0xf] %vm5307, %v5354
        %s5357 = scalar_lea.vmem [#allocation5], 8
        %v5358 = vld [vmem:[%s5357] sm:$0x3]
        %v5359 = vld [vmem:[%s5357 + $0x4] sm:$0x3]
        %5362 = vst [vmem:[#allocation1] ss:$2 sm:$0xff] %v5358
        %s5363 = scalar_lea.vmem [#allocation1], 1
        %5364 = vst [vmem:[%s5363] ss:$2 sm:$0xff] %v5359
        %v5365 = vld.sshfl [vmem:[#allocation1] sm:$0xff pattern:$0x75643120]
        %5366 = vrot.lane.b32.xlu0 %v5365, 64
        %v5367 = vpop.permute.xlu0 %5366
        %5369 = vst.msk [vmem:[#allocation8 + $0x4] sm:$0xf] %vm5320, %v5367
        %v5370 = vld [vmem:[%s5357 + $0x1] sm:$0x3]
        %v5371 = vld [vmem:[%s5357 + $0x5] sm:$0x3]
        %5374 = vst [vmem:[#allocation1] ss:$2 sm:$0xff] %v5370
        %s5375 = scalar_lea.vmem [#allocation1], 1
        %5376 = vst [vmem:[%s5375] ss:$2 sm:$0xff] %v5371
        %v5377 = vld.sshfl [vmem:[#allocation1] sm:$0xff pattern:$0x75643120]
        %5378 = vrot.lane.b32.xlu0 %v5377, 96
        %v5379 = vpop.permute.xlu0 %5378
        %5381 = vst.msk [vmem:[#allocation8 + $0x4] sm:$0xf] %vm5333, %v5379
        %v5382 = vld [vmem:[%s5357 + $0x2] sm:$0x3]
        %v5383 = vld [vmem:[%s5357 + $0x6] sm:$0x3]
        %5386 = vst [vmem:[#allocation1] ss:$2 sm:$0xff] %v5382
        %s5387 = scalar_lea.vmem [#allocation1], 1
        %5388 = vst [vmem:[%s5387] ss:$2 sm:$0xff] %v5383
        %v5389 = vld.sshfl [vmem:[#allocation1] sm:$0xff pattern:$0x75643120]
        %5391 = vst.msk [vmem:[#allocation8 + $0x8] sm:$0xf] %vm4478, %v5389
        %v5392 = vld [vmem:[#allocation8] sm:$0xff]
        %v5393 = vld [vmem:[#allocation8 + $0x8] sm:$0xf]
        %5396 = vst [vmem:[#allocation1] ss:$2 sm:$0xff] %v5392
        %s5397 = scalar_lea.vmem [#allocation1], 16
        %5398 = vst [vmem:[%s5397] ss:$2 sm:$0xff] %v5393
        %v5399 = vld.sshfl [vmem:[#allocation1] sm:$0xff pattern:$0x75316420]
        %v5400 = vld.sshfl [vmem:[#allocation1 + $0x8] sm:$0xff pattern:$0x75316420]
        %v5401 = vld.sshfl [vmem:[#allocation1 + $0x10] sm:$0xff pattern:$0x75316420]
        %v5404 = vsel %vm4502, %v5401, 0
        %5406 = vmatpush.msra.mxu0 %v4855
        %5407 = vmatpush.msra.mxu0 %v4854
        %5408 = vmatpush.msra.mxu0 %v4853
        %5409 = vmatpush.msra.mxu0 %v4852
        %5410 = vmatpush.msra.mxu0 %v4851
        %5411 = vmatpush.msra.mxu0 %v4850
        %5412 = vmatpush.msra.mxu0 %v4849
        %5413 = vmatpush.msra.mxu0 %v4848
        %5414 = vmatpush.msra.mxu0 %v4847
        %5415 = vmatpush.msra.mxu0 %v4846
        %5416 = vmatpush.msra.mxu0 %v4845
        %5417 = vmatpush.msra.mxu0 %v4844
        %5418 = vmatpush.msra.mxu0 %v4843
        %5419 = vmatpush.msra.mxu0 %v4842
        %5420 = vmatpush.msra.mxu0 %v4841
        %5421 = vmatpush.msra.mxu0 %v4840
        %5422 = vmatmul.f32.gmra.mxu0 %v5399
        %v5423 = vpop.f32.mrf.mxu0
        %v5424 = vadd.f32 0.0, %v5423
        %5425 = vdwg.mxu0
        %5426 = vmatpush.msra.mxu0 %v4871
        %5427 = vmatpush.msra.mxu0 %v4870
        %5428 = vmatpush.msra.mxu0 %v4869
        %5429 = vmatpush.msra.mxu0 %v4868
        %5430 = vmatpush.msra.mxu0 %v4867
        %5431 = vmatpush.msra.mxu0 %v4866
        %5432 = vmatpush.msra.mxu0 %v4865
        %5433 = vmatpush.msra.mxu0 %v4864
        %5434 = vmatpush.msra.mxu0 %v4863
        %5435 = vmatpush.msra.mxu0 %v4862
        %5436 = vmatpush.msra.mxu0 %v4861
        %5437 = vmatpush.msra.mxu0 %v4860
        %5438 = vmatpush.msra.mxu0 %v4859
        %5439 = vmatpush.msra.mxu0 %v4858
        %5440 = vmatpush.msra.mxu0 %v4857
        %5441 = vmatpush.msra.mxu0 %v4856
        %5442 = vmatmul.f32.gmra.mxu0 %v5400
        %v5443 = vpop.f32.mrf.mxu0
        %v5444 = vadd.f32 %v5424, %v5443
        %5445 = vdwg.mxu0
        %5446 = vmatpush.msra.mxu0 0.0
        %5447 = vmatpush.msra.mxu0 0.0
        %5448 = vmatpush.msra.mxu0 0.0
        %5449 = vmatpush.msra.mxu0 0.0
        %5450 = vmatpush.msra.mxu0 0.0
        %5451 = vmatpush.msra.mxu0 0.0
        %5452 = vmatpush.msra.mxu0 0.0
        %5453 = vmatpush.msra.mxu0 0.0
        %5454 = vmatpush.msra.mxu0 0.0
        %5455 = vmatpush.msra.mxu0 0.0
        %5456 = vmatpush.msra.mxu0 0.0
        %5457 = vmatpush.msra.mxu0 0.0
        %5458 = vmatpush.msra.mxu0 %v4875
        %5459 = vmatpush.msra.mxu0 %v4874
        %5460 = vmatpush.msra.mxu0 %v4873
        %5461 = vmatpush.msra.mxu0 %v4872
        %5462 = vmatmul.f32.gmra.mxu0 %v5404
        %v5463 = vpop.f32.mrf.mxu0
        %v5464 = vadd.f32 %v5444, %v5463
        %5465 = vdwg.mxu0
        %v5466 = vstv %s4802
        %v5467 = vmul.f32 %v5464, %v5466
        %v5468 = vstv %s4801
        %v5469 = vadd.f32 %v5467, %v5468
        %v5470 = vadd.f32 %v5469, %v5270
        %v5471 = vmax.f32 %v5470, 0.0
        %v5472 = vsel %vm4478, %v5471, 0.0
        %v5473 = vrot.slane %v5472, 4
        %v5474 = vadd.f32 %v5472, %v5473
        %v5475 = vrot.slane %v5474, 2
        %v5476 = vadd.f32 %v5474, %v5475
        %v5477 = vrot.slane %v5476, 1
        %v5478 = vadd.f32 %v5476, %v5477
        %v5479 = vmul.f32 %v5478, 0.25
        %vm5480 = vcmask 253952
        %5481 = vst.msk [vmem:[%s477] sm:$0x1] %vm5480, %v5479
        %p5482 = scmp.lt.s32.totalorder %s26, 3
        %s5483 = scalar_select %p5482, %s26, 3
        %s5484 = scalar_lea.vmem %s14, %s5483
        // Predicated region
        $region81: #{classify_pair.2} parent=75 // pred_check
          %p5485 = pneg %p343
        $region82: #{classify_pair.2} parent=75 // pred_check_branch
          %5487 = sbr.rel (%p5485) target = $region84
        $region83: #{classify_pair.2} parent=75 // pred_region
          _
        $region84: #{classify_pair.2} parent=75 // pred_fallthru
          _
      $region76: #{classify_pair.2} parent=5 // pred_fallthru
        _
      %p5488 = scmp.le.s32.totalorder 2, %s21
      // Predicated region
      $region85: #{classify_pair.2} parent=5 // pred_check
        %p5489 = pneg %p5488
      $region86: #{classify_pair.2} parent=5 // pred_check_branch
        %5491 = sbr.rel (%p5489) target = $region88
      $region87: #{classify_pair.2} parent=5 // pred_region
        %s5492 = ssub.s32 %s21, 2
        // Predicated region
        $region89: #{classify_pair.2} parent=87 // pred_check
          %p5493 = pneg %p349
        $region90: #{classify_pair.2} parent=87 // pred_check_branch
          %5495 = sbr.rel (%p5493) target = $region92
        $region91: #{classify_pair.2} parent=87 // pred_region
          %p5496 = scmp.lt.s32.totalorder %s27, 3
          %s5497 = scalar_select %p5496, %s27, 3
          %s5498 = scalar_lea.vmem %s14, %s5497
        $region92: #{classify_pair.2} parent=87 // pred_fallthru
          _
      $region88: #{classify_pair.2} parent=5 // pred_fallthru
        _
    $region6: #{classify_pair.2} parent=1 // loop_footer
      %s25 = sadd.s32 1, %s21
    $region7: #{classify_pair.2} parent=1 // loop_footer_branch
      %20 = sbr.rel target = $region3
    $region8: #{classify_pair.2} parent=1 // loop_exit
      _
    %5499 = vsyncpa [#allocation10], 1
    %s5500 = scalar_lea.sflag [#allocation10], 1
    %5501 = vsyncpa %s5500, 1

</llo_original>
